<compile_context>
chip_gen: v7x
topology: tpu7x:2x2x1
jax: 0.10.0
libtpu: 0.0.40
codegen_flags: <defaults>
</compile_context>

<pallas_src>
from functools import partial

import jax
import jax.numpy as jnp
from jax.experimental import pallas as pl
from jax.experimental.pallas import tpu as pltpu


def _round_up(x, m):
    return (x + m - 1) // m * m


def _cdiv(a, b):
    return -(-a // b)


# ----------------------------------------------------------------------------
# Pallas kernels
# ----------------------------------------------------------------------------
def _pool_branch_matmul_kernel(p_ref, w_ref, o_ref):
    """Block 1: per-branch im2col matmul + ReLU + running max (= 2x2 maxpool).

    p_ref: (4, TM, K) bf16 -- one im2col row block per 2x2-pool window branch.
    w_ref: (K, Cout) bf16.  o_ref: (TM, Cout) bf16.
    """
    w = w_ref[...]
    out = None
    for br in range(4):                                   # static unroll
        y = jnp.dot(p_ref[br], w, preferred_element_type=jnp.float32)
        y = jnp.maximum(y, 0.0)                           # ReLU (f32)
        out = y if out is None else jnp.maximum(out, y)   # 2x2 max-pool
    o_ref[...] = out.astype(o_ref.dtype)


def _conv3x3_fused_kernel(num_img, tap_offsets, x_ref, w_ref, scale_ref,
                          shift_ref, o_ref):
    """Blocks 2/3: 3x3 valid conv as 9 offset matmuls + BN affine + ReLU.

    x_ref: (G, R_in, 128) bf16 -- per-image flat rows (row = oy*W + ox) with
                                  trailing zero halo rows.
    w_ref: (9, 128, 128) bf16  -- tap-major (ky*3 + kx) weights.
    scale_ref / shift_ref: (1, 128) f32 (conv bias folded into shift).
    o_ref: (G, N_out, 128) bf16 -- conv+affine+ReLU rows (same flat indexing).
    """
    n_out = o_ref.shape[1]
    scale = scale_ref[...]
    shift = shift_ref[...]
    for g in range(num_img):                              # static unroll, small
        acc = jnp.zeros((n_out, o_ref.shape[2]), jnp.float32)
        for t, off in enumerate(tap_offsets):             # 9 static offsets
            acc += jnp.dot(x_ref[g, off:off + n_out, :], w_ref[t],
                           preferred_element_type=jnp.float32)
        y = jnp.maximum(acc * scale + shift, 0.0)
        o_ref[g, :, :] = y.astype(o_ref.dtype)


def _fc_multitask_kernel(num_task, x_ref, task_ref, w_ref, b_ref, o_ref):
    """Multi-task linear head; per-row task routing via jnp.where."""
    x = x_ref[...]                                        # (TB, LIN) bf16
    acc = jnp.zeros(o_ref.shape, jnp.float32)             # (TB, 128)
    for t in range(num_task):                             # static loop
        y = jnp.dot(x, w_ref[t], preferred_element_type=jnp.float32) + b_ref[t]
        acc = acc + jnp.where(task_ref[...] == t, y, 0.0)
    o_ref[...] = acc
    # TODO(synk): for large num_task, route rows per task via scalar prefetch
    # instead of computing every task's matmul for every row.


# ----------------------------------------------------------------------------
# Wrappers around pallas_call
# ----------------------------------------------------------------------------
def conv1_block(x_nhwc, w, *, tm_cap=512):
    """conv1 (3x3, bias-free) + ReLU + 2x2 maxpool via pooled im2col branches."""
    B, H, W, C = x_nhwc.shape
    K = 9 * C
    Ho, Wo = H - 2, W - 2
    Hp, Wp = Ho // 2, Wo // 2
    x = x_nhwc.astype(jnp.bfloat16)                       # cast before any glue

    # Branch (py, px): im2col rows of the conv outputs surviving at pool
    # position (py, px).  Built directly as (4, M, K): no full-resolution
    # patch tensor and no interleave transpose.
    branches = []
    for py in range(2):
        for px in range(2):
            taps = [x[:, py + ky: py + ky + 2 * Hp: 2,
                      px + kx: px + kx + 2 * Wp: 2, :]
                    for ky in range(3) for kx in range(3)]
            branches.append(
                jnp.concatenate(taps, axis=-1).reshape(B * Hp * Wp, K))
    patches = jnp.stack(branches, axis=0)                 # (4, M, K) bf16

    M = B * Hp * Wp
    n_t = max(_cdiv(M, tm_cap), 2 if M >= 32 else 1)      # >=2 steps for v7x
    TM = _round_up(_cdiv(M, n_t), 16)                     # bf16 tile multiple
    Mp = n_t * TM
    if Mp != M:
        patches = jnp.pad(patches, ((0, 0), (0, Mp - M), (0, 0)))

    Cout = w.shape[1]
    out = pl.pallas_call(
        _pool_branch_matmul_kernel,
        out_shape=jax.ShapeDtypeStruct((Mp, Cout), jnp.bfloat16),
        grid=(n_t,),
        in_specs=[pl.BlockSpec((4, TM, K), lambda i: (0, i, 0)),
                  pl.BlockSpec((K, Cout), lambda i: (0, 0))],
        out_specs=pl.BlockSpec((TM, Cout), lambda i: (i, 0)),
        compiler_params=pltpu.CompilerParams(
            dimension_semantics=("parallel",)),
    )(patches, w)
    return out[:M].reshape(B, Hp, Wp, Cout)               # (B, Hp, Wp, 128)


def conv3x3_block(x, w9, scale, shift, *, rows_target=2048):
    """3x3 conv (in-kernel offset matmuls) + BN affine + ReLU; 2x2 pool on host.

    x: (B, H, W, 128) bf16 (padded channels are zero).
    """
    B, H, W, C = x.shape
    Ho, Wo = H - 2, W - 2
    Hp, Wp = Ho // 2, Wo // 2
    d_max = 2 * W + 2                                     # largest tap offset
    n_out = _round_up(Ho * W, 16)                         # conv rows computed
    r_in = _round_up(max(H * W, n_out + d_max), 8)        # per-image input rows

    # Images per grid step: large enough to amortize per-step overhead, but
    # at least 2 grid steps when B > 1 so both v7x TensorCores get work.
    G = max(1, min(B, rows_target // r_in))
    if B > 1 and _cdiv(B, G) < 2:
        G = _cdiv(B, 2)
    n_b = _cdiv(B, G)
    Bp = n_b * G

    xf = x.reshape(B, H * W, C)
    xf = jnp.pad(xf, ((0, Bp - B), (0, r_in - H * W), (0, 0)))

    tap_offsets = tuple(ky * W + kx for ky in range(3) for kx in range(3))
    y = pl.pallas_call(
        partial(_conv3x3_fused_kernel, G, tap_offsets),
        out_shape=jax.ShapeDtypeStruct((Bp, n_out, C), jnp.bfloat16),
        grid=(n_b,),
        in_specs=[pl.BlockSpec((G, r_in, C), lambda i: (i, 0, 0)),
                  pl.BlockSpec((9, C, C), lambda i: (0, 0, 0)),
                  pl.BlockSpec((1, C), lambda i: (0, 0)),
                  pl.BlockSpec((1, C), lambda i: (0, 0))],
        out_specs=pl.BlockSpec((G, n_out, C), lambda i: (i, 0, 0)),
        compiler_params=pltpu.CompilerParams(
            dimension_semantics=("parallel",)),
    )(xf, w9, scale, shift)

    # Drop batch/row padding and garbage (ox >= Wo) columns, then 2x2/2 pool.
    # ReLU already applied in-kernel; max-pool commutes with ReLU.
    y = y[:B, :Ho * W, :].reshape(B, Ho, W, C)[:, :, :Wo, :]
    y = y[:, :2 * Hp, :2 * Wp, :].reshape(B, Hp, 2, Wp, 2, C).max(axis=(2, 4))
    return y                                              # (B, Hp, Wp, 128) bf16


def fc_multitask(feat, tasks, w, b, num_cls=10, *, tb_cap=256):
    B, lin = feat.shape
    num_task, _, cpad = w.shape                           # cpad = 128
    n_t = _cdiv(B, tb_cap)
    TB = _round_up(_cdiv(B, n_t), 16)
    Bp = n_t * TB
    feat = jnp.pad(feat, ((0, Bp - B), (0, 0)))
    task_col = jnp.pad(tasks.astype(jnp.int32), (0, Bp - B)).reshape(Bp, 1)

    out = pl.pallas_call(
        partial(_fc_multitask_kernel, num_task),
        out_shape=jax.ShapeDtypeStruct((Bp, cpad), jnp.float32),
        grid=(n_t,),
        in_specs=[pl.BlockSpec((TB, lin), lambda i: (i, 0)),
                  pl.BlockSpec((TB, 1), lambda i: (i, 0)),
                  pl.BlockSpec((num_task, lin, cpad), lambda i: (0, 0, 0)),
                  pl.BlockSpec((num_task, 1, cpad), lambda i: (0, 0, 0))],
        out_specs=pl.BlockSpec((TB, cpad), lambda i: (i, 0)),
        compiler_params=pltpu.CompilerParams(
            dimension_semantics=("parallel",)),
    )(feat, task_col, w, b)
    return out[:B, :num_cls]


# ----------------------------------------------------------------------------
# Parameter construction (shapes mirror SmallConv.__init__)
# ----------------------------------------------------------------------------
def init_params(key, channels=3, num_task=1, num_cls=10, cpad=128):
    keys = jax.random.split(key, 8)

    # conv1: torch (80, cin, 3, 3), bias=False
    w1_t = (jax.random.normal(keys[0], (80, channels, 3, 3), jnp.float32)
            * 0.1).astype(jnp.bfloat16)
    w1_hwio = jnp.transpose(w1_t, (2, 3, 1, 0)).astype(jnp.float32)
    w1_k = jnp.pad(jnp.transpose(w1_t, (2, 3, 1, 0)),
                   ((0, 0), (0, 0), (0, 0), (0, cpad - 80)))
    w1_k = w1_k.reshape(9 * channels, cpad)               # (27, 128) bf16

    def conv_mid(kw, kb):
        wt = (jax.random.normal(kw, (80, 80, 3, 3), jnp.float32)
              * 0.1).astype(jnp.bfloat16)
        bias = jax.random.normal(kb, (80,), jnp.float32) * 0.1
        w_hwio = jnp.transpose(wt, (2, 3, 1, 0)).astype(jnp.float32)
        wk = jnp.pad(jnp.transpose(wt, (2, 3, 1, 0)),
                     ((0, 0), (0, 0), (0, cpad - 80), (0, cpad - 80)))
        wk = wk.reshape(9, cpad, cpad)                    # tap-major (ky*3+kx)
        return wk, w_hwio, bias

    w2_k, w2_hwio, b2 = conv_mid(keys[1], keys[2])
    w3_k, w3_hwio, b3 = conv_mid(keys[3], keys[4])

    def bn_fold(k, bias):
        # Eval-mode BN folded with the conv bias: y*scale + shift.
        kg, kb_, km, kv = jax.random.split(k, 4)
        gamma = 1.0 + 0.1 * jax.random.normal(kg, (80,), jnp.float32)
        beta = 0.1 * jax.random.normal(kb_, (80,), jnp.float32)
        mean = 0.1 * jax.random.normal(km, (80,), jnp.float32)
        var = jnp.abs(jax.random.normal(kv, (80,), jnp.float32)) + 0.5
        scale = gamma * jax.lax.rsqrt(var + 1e-5)
        shift = (bias - mean) * scale + beta
        return scale, shift

    s2, t2 = bn_fold(keys[5], b2)
    s3, t3 = bn_fold(keys[6], b3)

    def lane_pad(v):
        return jnp.pad(v, (0, cpad - 80)).reshape(1, cpad)

    # fc: num_task x Linear(320, num_cls); torch weight (num_cls, 320), bias 0.
    fc_t = (jax.random.normal(keys[7], (num_task, num_cls, 320), jnp.float32)
            * 0.05).astype(jnp.bfloat16)
    # Fold the NCHW flatten (index c*4 + h*2 + w) and the 80->128 / 10->128
    # lane padding into the weight: rows indexed by h*(2*128) + w*128 + c.
    fc_k = fc_t.reshape(num_task, num_cls, 80, 2, 2)      # [task, cls, c, h, w]
    fc_k = jnp.transpose(fc_k, (0, 3, 4, 2, 1))           # [task, h, w, c, cls]
    fc_k = jnp.pad(fc_k, ((0, 0), (0, 0), (0, 0),
                          (0, cpad - 80), (0, cpad - num_cls)))
    fc_k = fc_k.reshape(num_task, 2 * 2 * cpad, cpad)     # (task, 512, 128) bf16

    params = {
        "w1": w1_k, "w2": w2_k, "w3": w3_k,
        "s2": lane_pad(s2), "t2": lane_pad(t2),
        "s3": lane_pad(s3), "t3": lane_pad(t3),
        "fc_w": fc_k,
        "fc_b": jnp.zeros((num_task, 1, cpad), jnp.float32),
    }
    # Reference-layout copies of the *same* (bf16-rounded) values.
    ref = {
        "w1": w1_hwio, "w2": w2_hwio, "w3": w3_hwio,
        "s2": s2, "t2": t2, "s3": s3, "t3": t3,
        "fc_w": fc_t.astype(jnp.float32),
    }
    return params, ref


# ----------------------------------------------------------------------------
# Full forward pass (mirrors SmallConv.forward)
# ----------------------------------------------------------------------------
def small_conv_forward(params, x_nchw, tasks, num_cls=10):
    x = jnp.transpose(x_nchw, (0, 2, 3, 1))               # NCHW -> NHWC
    x = conv1_block(x, params["w1"])                                   # (B,15,15,128)
    x = conv3x3_block(x, params["w2"], params["s2"], params["t2"])     # (B, 6, 6,128)
    x = conv3x3_block(x, params["w3"], params["s3"], params["t3"])     # (B, 2, 2,128)
    B, Hf, Wf, Cf = x.shape
    feat = x.reshape(B, Hf * Wf * Cf)                     # lane-dense flatten (512)
    return fc_multitask(feat, tasks, params["fc_w"], params["fc_b"], num_cls)


# ----------------------------------------------------------------------------
# Pure-JAX reference (torch semantics, f32 path with the same bf16 weights)
# ----------------------------------------------------------------------------
def reference_forward(ref, x_nchw, tasks, num_cls=10):
    def conv(x, w):
        return jax.lax.conv_general_dilated(
            x, w, (1, 1), "VALID", dimension_numbers=("NHWC", "HWIO", "NHWC"))

    def pool(y):
        B, H, W, C = y.shape
        Hp, Wp = H // 2, W // 2
        return y[:, :2 * Hp, :2 * Wp, :].reshape(B, Hp, 2, Wp, 2, C).max(axis=(2, 4))

    x = jnp.transpose(x_nchw, (0, 2, 3, 1)).astype(jnp.float32)
    x = pool(jnp.maximum(conv(x, ref["w1"]), 0.0))
    x = pool(jnp.maximum(conv(x, ref["w2"]) * ref["s2"] + ref["t2"], 0.0))
    x = pool(jnp.maximum(conv(x, ref["w3"]) * ref["s3"] + ref["t3"], 0.0))
    feat = jnp.transpose(x, (0, 3, 1, 2)).reshape(x.shape[0], -1)   # torch flatten
    logits = jnp.zeros((feat.shape[0], num_cls), jnp.float32)
    for t in range(ref["fc_w"].shape[0]):
        yt = feat @ ref["fc_w"][t].T
        logits = jnp.where((tasks == t)[:, None], yt, logits)
    return logits


if __name__ == "__main__":
    key = jax.random.PRNGKey(0)
    kp, kx = jax.random.split(key)
    params, ref = init_params(kp)

    # PyTorch NCHW input (B=2, 3, 32, 32): 32x32 makes the flatten land on the
    # module's default lin_size = 80 * 2 * 2 = 320.
    x = jax.random.normal(kx, (2, 3, 32, 32), jnp.float32)
    tasks = jnp.zeros((2,), jnp.int32)                    # both samples -> task 0

    logits = jax.jit(small_conv_forward)(params, x, tasks)
    jax.block_until_ready(logits)
    assert logits.shape == (2, 10) and logits.dtype == jnp.float32

    # Self-check against the pure-JAX reference (same bf16-rounded weights);
    # loose tolerance for the bf16 activation path.
    expect = reference_forward(ref, x, tasks)
    err = float(jnp.max(jnp.abs(logits - expect)))
    scale = float(jnp.max(jnp.abs(expect)))
    assert err <= 0.1 * scale + 0.1, (err, scale)

    print("KERNEL_OK")
</pallas_src>

<mosaic_0001>
module attributes {stable_mosaic.version = 11 : i64} {
  func.func @_pool_branch_matmul_kernel(%arg0: i32, %arg1: memref<4x240x27xbf16, #tpu.memory_space<vmem>>, %arg2: memref<27x128xbf16, #tpu.memory_space<vmem>>, %arg3: memref<240x128xbf16, #tpu.memory_space<vmem>>) attributes {dimension_semantics = [#tpu.dimension_semantics<parallel>], iteration_bounds = array<i64: 2>, scalar_prefetch = 0 : i64, scratch_operands = 0 : i64, tpu.core_type = #tpu.core_type<tc>, window_params = [{transform_indices = @transform_0, window_bounds = array<i64: 4, 240, 27>}, {pipeline_mode = #tpu.pipeline_mode<synchronous>, transform_indices = @transform_1, window_bounds = array<i64: 27, 128>}, {transform_indices = @transform_2, window_bounds = array<i64: 240, 128>}]} {
    %c0 = arith.constant 0 : index
    %c0_0 = arith.constant 0 : index
    %0 = vector.load %arg2[%c0, %c0_0] : memref<27x128xbf16, #tpu.memory_space<vmem>>, vector<27x128xbf16>
    %c0_1 = arith.constant 0 : index
    %c0_2 = arith.constant 0 : index
    %c0_3 = arith.constant 0 : index
    %1 = vector.load %arg1[%c0_1, %c0_2, %c0_3] : memref<4x240x27xbf16, #tpu.memory_space<vmem>>, vector<1x240x27xbf16>
    %2 = vector.shape_cast %1 : vector<1x240x27xbf16> to vector<240x27xbf16>
    %cst = arith.constant dense<0.000000e+00> : vector<240x128xf32>
    %3 = tpu.matmul %2, %0, %cst {dimension_numbers = #tpu.dot_dimension_numbers<[1], [0], [0], [1], [0, 0, 1, 1], [], []>} : vector<240x27xbf16>, vector<27x128xbf16>, vector<240x128xf32> -> vector<240x128xf32>
    %cst_4 = arith.constant 0.000000e+00 : f32
    %4 = vector.broadcast %cst_4 : f32 to vector<240x128xf32>
    %5 = arith.maximumf %3, %4 : vector<240x128xf32>
    %c1 = arith.constant 1 : index
    %c0_5 = arith.constant 0 : index
    %c0_6 = arith.constant 0 : index
    %6 = vector.load %arg1[%c1, %c0_5, %c0_6] : memref<4x240x27xbf16, #tpu.memory_space<vmem>>, vector<1x240x27xbf16>
    %7 = vector.shape_cast %6 : vector<1x240x27xbf16> to vector<240x27xbf16>
    %cst_7 = arith.constant dense<0.000000e+00> : vector<240x128xf32>
    %8 = tpu.matmul %7, %0, %cst_7 {dimension_numbers = #tpu.dot_dimension_numbers<[1], [0], [0], [1], [0, 0, 1, 1], [], []>} : vector<240x27xbf16>, vector<27x128xbf16>, vector<240x128xf32> -> vector<240x128xf32>
    %cst_8 = arith.constant 0.000000e+00 : f32
    %9 = vector.broadcast %cst_8 : f32 to vector<240x128xf32>
    %10 = arith.maximumf %8, %9 : vector<240x128xf32>
    %11 = arith.maximumf %5, %10 : vector<240x128xf32>
    %c2 = arith.constant 2 : index
    %c0_9 = arith.constant 0 : index
    %c0_10 = arith.constant 0 : index
    %12 = vector.load %arg1[%c2, %c0_9, %c0_10] : memref<4x240x27xbf16, #tpu.memory_space<vmem>>, vector<1x240x27xbf16>
    %13 = vector.shape_cast %12 : vector<1x240x27xbf16> to vector<240x27xbf16>
    %cst_11 = arith.constant dense<0.000000e+00> : vector<240x128xf32>
    %14 = tpu.matmul %13, %0, %cst_11 {dimension_numbers = #tpu.dot_dimension_numbers<[1], [0], [0], [1], [0, 0, 1, 1], [], []>} : vector<240x27xbf16>, vector<27x128xbf16>, vector<240x128xf32> -> vector<240x128xf32>
    %cst_12 = arith.constant 0.000000e+00 : f32
    %15 = vector.broadcast %cst_12 : f32 to vector<240x128xf32>
    %16 = arith.maximumf %14, %15 : vector<240x128xf32>
    %17 = arith.maximumf %11, %16 : vector<240x128xf32>
    %c3 = arith.constant 3 : index
    %c0_13 = arith.constant 0 : index
    %c0_14 = arith.constant 0 : index
    %18 = vector.load %arg1[%c3, %c0_13, %c0_14] : memref<4x240x27xbf16, #tpu.memory_space<vmem>>, vector<1x240x27xbf16>
    %19 = vector.shape_cast %18 : vector<1x240x27xbf16> to vector<240x27xbf16>
    %cst_15 = arith.constant dense<0.000000e+00> : vector<240x128xf32>
    %20 = tpu.matmul %19, %0, %cst_15 {dimension_numbers = #tpu.dot_dimension_numbers<[1], [0], [0], [1], [0, 0, 1, 1], [], []>} : vector<240x27xbf16>, vector<27x128xbf16>, vector<240x128xf32> -> vector<240x128xf32>
    %cst_16 = arith.constant 0.000000e+00 : f32
    %21 = vector.broadcast %cst_16 : f32 to vector<240x128xf32>
    %22 = arith.maximumf %20, %21 : vector<240x128xf32>
    %23 = arith.maximumf %17, %22 : vector<240x128xf32>
    %24 = arith.truncf %23 : vector<240x128xf32> to vector<240x128xbf16>
    %c0_17 = arith.constant 0 : index
    %c0_18 = arith.constant 0 : index
    %25 = vector.load %arg3[%c0_17, %c0_18] : memref<240x128xbf16, #tpu.memory_space<vmem>>, vector<240x128xbf16>
    tpu.vector_store %arg3[%c0_17, %c0_18], %24 {strides = array<i32>} : memref<240x128xbf16, #tpu.memory_space<vmem>>, vector<240x128xbf16>,
    return
  }
  func.func @transform_0(%arg0: i32) -> (i32, i32, i32) {
    %c0_i32 = arith.constant 0 : i32
    %c0_i32_0 = arith.constant 0 : i32
    %c0_i32_1 = arith.constant 0 : i32
    return %c0_i32, %arg0, %c0_i32_0 : i32, i32, i32
  }
  func.func @transform_1(%arg0: i32) -> (i32, i32) {
    %c0_i32 = arith.constant 0 : i32
    %c0_i32_0 = arith.constant 0 : i32
    %c0_i32_1 = arith.constant 0 : i32
    return %c0_i32, %c0_i32_0 : i32, i32
  }
  func.func @transform_2(%arg0: i32) -> (i32, i32) {
    %c0_i32 = arith.constant 0 : i32
    %c0_i32_0 = arith.constant 0 : i32
    return %arg0, %c0_i32 : i32, i32
  }
}

module attributes {stable_mosaic.version = 11 : i64} {
  func.func @_conv3x3_fused_kernel(%arg0: i32, %arg1: memref<1x240x128xbf16, #tpu.memory_space<vmem>>, %arg2: memref<9x128x128xbf16, #tpu.memory_space<vmem>>, %arg3: memref<1x128xf32, #tpu.memory_space<vmem>>, %arg4: memref<1x128xf32, #tpu.memory_space<vmem>>, %arg5: memref<1x208x128xbf16, #tpu.memory_space<vmem>>) attributes {dimension_semantics = [#tpu.dimension_semantics<parallel>], iteration_bounds = array<i64: 2>, scalar_prefetch = 0 : i64, scratch_operands = 0 : i64, tpu.core_type = #tpu.core_type<tc>, window_params = [{transform_indices = @transform_0, window_bounds = array<i64: 1, 240, 128>}, {pipeline_mode = #tpu.pipeline_mode<synchronous>, transform_indices = @transform_1, window_bounds = array<i64: 9, 128, 128>}, {pipeline_mode = #tpu.pipeline_mode<synchronous>, transform_indices = @transform_2, window_bounds = array<i64: 1, 128>}, {pipeline_mode = #tpu.pipeline_mode<synchronous>, transform_indices = @transform_3, window_bounds = array<i64: 1, 128>}, {transform_indices = @transform_4, window_bounds = array<i64: 1, 208, 128>}]} {
    %c0 = arith.constant 0 : index
    %c0_0 = arith.constant 0 : index
    %0 = vector.load %arg3[%c0, %c0_0] : memref<1x128xf32, #tpu.memory_space<vmem>>, vector<1x128xf32>
    %c0_1 = arith.constant 0 : index
    %c0_2 = arith.constant 0 : index
    %1 = vector.load %arg4[%c0_1, %c0_2] : memref<1x128xf32, #tpu.memory_space<vmem>>, vector<1x128xf32>
    %cst = arith.constant 0.000000e+00 : f32
    %2 = vector.broadcast %cst : f32 to vector<208x128xf32>
    %c0_3 = arith.constant 0 : index
    %c0_4 = arith.constant 0 : index
    %c0_5 = arith.constant 0 : index
    %3 = vector.load %arg1[%c0_3, %c0_4, %c0_5] : memref<1x240x128xbf16, #tpu.memory_space<vmem>>, vector<1x208x128xbf16>
    %4 = vector.shape_cast %3 : vector<1x208x128xbf16> to vector<208x128xbf16>
    %c0_6 = arith.constant 0 : index
    %c0_7 = arith.constant 0 : index
    %c0_8 = arith.constant 0 : index
    %5 = vector.load %arg2[%c0_6, %c0_7, %c0_8] : memref<9x128x128xbf16, #tpu.memory_space<vmem>>, vector<1x128x128xbf16>
    %6 = vector.shape_cast %5 : vector<1x128x128xbf16> to vector<128x128xbf16>
    %cst_9 = arith.constant dense<0.000000e+00> : vector<208x128xf32>
    %7 = tpu.matmul %4, %6, %cst_9 {dimension_numbers = #tpu.dot_dimension_numbers<[1], [0], [0], [1], [0, 0, 1, 1], [], []>} : vector<208x128xbf16>, vector<128x128xbf16>, vector<208x128xf32> -> vector<208x128xf32>
    %8 = arith.addf %2, %7 : vector<208x128xf32>
    %c0_10 = arith.constant 0 : index
    %c1 = arith.constant 1 : index
    %c0_11 = arith.constant 0 : index
    %9 = vector.load %arg1[%c0_10, %c1, %c0_11] : memref<1x240x128xbf16, #tpu.memory_space<vmem>>, vector<1x208x128xbf16>
    %10 = vector.shape_cast %9 : vector<1x208x128xbf16> to vector<208x128xbf16>
    %c1_12 = arith.constant 1 : index
    %c0_13 = arith.constant 0 : index
    %c0_14 = arith.constant 0 : index
    %11 = vector.load %arg2[%c1_12, %c0_13, %c0_14] : memref<9x128x128xbf16, #tpu.memory_space<vmem>>, vector<1x128x128xbf16>
    %12 = vector.shape_cast %11 : vector<1x128x128xbf16> to vector<128x128xbf16>
    %cst_15 = arith.constant dense<0.000000e+00> : vector<208x128xf32>
    %13 = tpu.matmul %10, %12, %cst_15 {dimension_numbers = #tpu.dot_dimension_numbers<[1], [0], [0], [1], [0, 0, 1, 1], [], []>} : vector<208x128xbf16>, vector<128x128xbf16>, vector<208x128xf32> -> vector<208x128xf32>
    %14 = arith.addf %8, %13 : vector<208x128xf32>
    %c0_16 = arith.constant 0 : index
    %c2 = arith.constant 2 : index
    %c0_17 = arith.constant 0 : index
    %15 = vector.load %arg1[%c0_16, %c2, %c0_17] : memref<1x240x128xbf16, #tpu.memory_space<vmem>>, vector<1x208x128xbf16>
    %16 = vector.shape_cast %15 : vector<1x208x128xbf16> to vector<208x128xbf16>
    %c2_18 = arith.constant 2 : index
    %c0_19 = arith.constant 0 : index
    %c0_20 = arith.constant 0 : index
    %17 = vector.load %arg2[%c2_18, %c0_19, %c0_20] : memref<9x128x128xbf16, #tpu.memory_space<vmem>>, vector<1x128x128xbf16>
    %18 = vector.shape_cast %17 : vector<1x128x128xbf16> to vector<128x128xbf16>
    %cst_21 = arith.constant dense<0.000000e+00> : vector<208x128xf32>
    %19 = tpu.matmul %16, %18, %cst_21 {dimension_numbers = #tpu.dot_dimension_numbers<[1], [0], [0], [1], [0, 0, 1, 1], [], []>} : vector<208x128xbf16>, vector<128x128xbf16>, vector<208x128xf32> -> vector<208x128xf32>
    %20 = arith.addf %14, %19 : vector<208x128xf32>
    %c0_22 = arith.constant 0 : index
    %c15 = arith.constant 15 : index
    %c0_23 = arith.constant 0 : index
    %21 = vector.load %arg1[%c0_22, %c15, %c0_23] : memref<1x240x128xbf16, #tpu.memory_space<vmem>>, vector<1x208x128xbf16>
    %22 = vector.shape_cast %21 : vector<1x208x128xbf16> to vector<208x128xbf16>
    %c3 = arith.constant 3 : index
    %c0_24 = arith.constant 0 : index
    %c0_25 = arith.constant 0 : index
    %23 = vector.load %arg2[%c3, %c0_24, %c0_25] : memref<9x128x128xbf16, #tpu.memory_space<vmem>>, vector<1x128x128xbf16>
    %24 = vector.shape_cast %23 : vector<1x128x128xbf16> to vector<128x128xbf16>
    %cst_26 = arith.constant dense<0.000000e+00> : vector<208x128xf32>
    %25 = tpu.matmul %22, %24, %cst_26 {dimension_numbers = #tpu.dot_dimension_numbers<[1], [0], [0], [1], [0, 0, 1, 1], [], []>} : vector<208x128xbf16>, vector<128x128xbf16>, vector<208x128xf32> -> vector<208x128xf32>
    %26 = arith.addf %20, %25 : vector<208x128xf32>
    %c0_27 = arith.constant 0 : index
    %c16 = arith.constant 16 : index
    %c0_28 = arith.constant 0 : index
    %27 = vector.load %arg1[%c0_27, %c16, %c0_28] : memref<1x240x128xbf16, #tpu.memory_space<vmem>>, vector<1x208x128xbf16>
    %28 = vector.shape_cast %27 : vector<1x208x128xbf16> to vector<208x128xbf16>
    %c4 = arith.constant 4 : index
    %c0_29 = arith.constant 0 : index
    %c0_30 = arith.constant 0 : index
    %29 = vector.load %arg2[%c4, %c0_29, %c0_30] : memref<9x128x128xbf16, #tpu.memory_space<vmem>>, vector<1x128x128xbf16>
    %30 = vector.shape_cast %29 : vector<1x128x128xbf16> to vector<128x128xbf16>
    %cst_31 = arith.constant dense<0.000000e+00> : vector<208x128xf32>
    %31 = tpu.matmul %28, %30, %cst_31 {dimension_numbers = #tpu.dot_dimension_numbers<[1], [0], [0], [1], [0, 0, 1, 1], [], []>} : vector<208x128xbf16>, vector<128x128xbf16>, vector<208x128xf32> -> vector<208x128xf32>
    %32 = arith.addf %26, %31 : vector<208x128xf32>
    %c0_32 = arith.constant 0 : index
    %c17 = arith.constant 17 : index
    %c0_33 = arith.constant 0 : index
    %33 = vector.load %arg1[%c0_32, %c17, %c0_33] : memref<1x240x128xbf16, #tpu.memory_space<vmem>>, vector<1x208x128xbf16>
    %34 = vector.shape_cast %33 : vector<1x208x128xbf16> to vector<208x128xbf16>
    %c5 = arith.constant 5 : index
    %c0_34 = arith.constant 0 : index
    %c0_35 = arith.constant 0 : index
    %35 = vector.load %arg2[%c5, %c0_34, %c0_35] : memref<9x128x128xbf16, #tpu.memory_space<vmem>>, vector<1x128x128xbf16>
    %36 = vector.shape_cast %35 : vector<1x128x128xbf16> to vector<128x128xbf16>
    %cst_36 = arith.constant dense<0.000000e+00> : vector<208x128xf32>
    %37 = tpu.matmul %34, %36, %cst_36 {dimension_numbers = #tpu.dot_dimension_numbers<[1], [0], [0], [1], [0, 0, 1, 1], [], []>} : vector<208x128xbf16>, vector<128x128xbf16>, vector<208x128xf32> -> vector<208x128xf32>
    %38 = arith.addf %32, %37 : vector<208x128xf32>
    %c0_37 = arith.constant 0 : index
    %c30 = arith.constant 30 : index
    %c0_38 = arith.constant 0 : index
    %39 = vector.load %arg1[%c0_37, %c30, %c0_38] : memref<1x240x128xbf16, #tpu.memory_space<vmem>>, vector<1x208x128xbf16>
    %40 = vector.shape_cast %39 : vector<1x208x128xbf16> to vector<208x128xbf16>
    %c6 = arith.constant 6 : index
    %c0_39 = arith.constant 0 : index
    %c0_40 = arith.constant 0 : index
    %41 = vector.load %arg2[%c6, %c0_39, %c0_40] : memref<9x128x128xbf16, #tpu.memory_space<vmem>>, vector<1x128x128xbf16>
    %42 = vector.shape_cast %41 : vector<1x128x128xbf16> to vector<128x128xbf16>
    %cst_41 = arith.constant dense<0.000000e+00> : vector<208x128xf32>
    %43 = tpu.matmul %40, %42, %cst_41 {dimension_numbers = #tpu.dot_dimension_numbers<[1], [0], [0], [1], [0, 0, 1, 1], [], []>} : vector<208x128xbf16>, vector<128x128xbf16>, vector<208x128xf32> -> vector<208x128xf32>
    %44 = arith.addf %38, %43 : vector<208x128xf32>
    %c0_42 = arith.constant 0 : index
    %c31 = arith.constant 31 : index
    %c0_43 = arith.constant 0 : index
    %45 = vector.load %arg1[%c0_42, %c31, %c0_43] : memref<1x240x128xbf16, #tpu.memory_space<vmem>>, vector<1x208x128xbf16>
    %46 = vector.shape_cast %45 : vector<1x208x128xbf16> to vector<208x128xbf16>
    %c7 = arith.constant 7 : index
    %c0_44 = arith.constant 0 : index
    %c0_45 = arith.constant 0 : index
    %47 = vector.load %arg2[%c7, %c0_44, %c0_45] : memref<9x128x128xbf16, #tpu.memory_space<vmem>>, vector<1x128x128xbf16>
    %48 = vector.shape_cast %47 : vector<1x128x128xbf16> to vector<128x128xbf16>
    %cst_46 = arith.constant dense<0.000000e+00> : vector<208x128xf32>
    %49 = tpu.matmul %46, %48, %cst_46 {dimension_numbers = #tpu.dot_dimension_numbers<[1], [0], [0], [1], [0, 0, 1, 1], [], []>} : vector<208x128xbf16>, vector<128x128xbf16>, vector<208x128xf32> -> vector<208x128xf32>
    %50 = arith.addf %44, %49 : vector<208x128xf32>
    %c0_47 = arith.constant 0 : index
    %c32 = arith.constant 32 : index
    %c0_48 = arith.constant 0 : index
    %51 = vector.load %arg1[%c0_47, %c32, %c0_48] : memref<1x240x128xbf16, #tpu.memory_space<vmem>>, vector<1x208x128xbf16>
    %52 = vector.shape_cast %51 : vector<1x208x128xbf16> to vector<208x128xbf16>
    %c8 = arith.constant 8 : index
    %c0_49 = arith.constant 0 : index
    %c0_50 = arith.constant 0 : index
    %53 = vector.load %arg2[%c8, %c0_49, %c0_50] : memref<9x128x128xbf16, #tpu.memory_space<vmem>>, vector<1x128x128xbf16>
    %54 = vector.shape_cast %53 : vector<1x128x128xbf16> to vector<128x128xbf16>
    %cst_51 = arith.constant dense<0.000000e+00> : vector<208x128xf32>
    %55 = tpu.matmul %52, %54, %cst_51 {dimension_numbers = #tpu.dot_dimension_numbers<[1], [0], [0], [1], [0, 0, 1, 1], [], []>} : vector<208x128xbf16>, vector<128x128xbf16>, vector<208x128xf32> -> vector<208x128xf32>
    %56 = arith.addf %50, %55 : vector<208x128xf32>
    %57 = vector.broadcast %0 : vector<1x128xf32> to vector<208x128xf32>
    %58 = arith.mulf %56, %57 : vector<208x128xf32>
    %59 = vector.broadcast %1 : vector<1x128xf32> to vector<208x128xf32>
    %60 = arith.addf %58, %59 : vector<208x128xf32>
    %cst_52 = arith.constant 0.000000e+00 : f32
    %61 = vector.broadcast %cst_52 : f32 to vector<208x128xf32>
    %62 = arith.maximumf %60, %61 : vector<208x128xf32>
    %63 = arith.truncf %62 : vector<208x128xf32> to vector<208x128xbf16>
    %c0_53 = arith.constant 0 : index
    %c0_54 = arith.constant 0 : index
    %c0_55 = arith.constant 0 : index
    %64 = vector.load %arg5[%c0_53, %c0_54, %c0_55] : memref<1x208x128xbf16, #tpu.memory_space<vmem>>, vector<1x208x128xbf16>
    %65 = vector.shape_cast %64 : vector<1x208x128xbf16> to vector<208x128xbf16>
    %66 = vector.shape_cast %63 : vector<208x128xbf16> to vector<1x208x128xbf16>
    tpu.vector_store %arg5[%c0_53, %c0_54, %c0_55], %66 {strides = array<i32>} : memref<1x208x128xbf16, #tpu.memory_space<vmem>>, vector<1x208x128xbf16>,
    return
  }
  func.func @transform_0(%arg0: i32) -> (i32, i32, i32) {
    %c0_i32 = arith.constant 0 : i32
    %c0_i32_0 = arith.constant 0 : i32
    %c0_i32_1 = arith.constant 0 : i32
    return %arg0, %c0_i32, %c0_i32_0 : i32, i32, i32
  }
  func.func @transform_1(%arg0: i32) -> (i32, i32, i32) {
    %c0_i32 = arith.constant 0 : i32
    %c0_i32_0 = arith.constant 0 : i32
    %c0_i32_1 = arith.constant 0 : i32
    %c0_i32_2 = arith.constant 0 : i32
    return %c0_i32, %c0_i32_0, %c0_i32_1 : i32, i32, i32
  }
  func.func @transform_2(%arg0: i32) -> (i32, i32) {
    %c0_i32 = arith.constant 0 : i32
    %c0_i32_0 = arith.constant 0 : i32
    %c0_i32_1 = arith.constant 0 : i32
    return %c0_i32, %c0_i32_0 : i32, i32
  }
  func.func @transform_3(%arg0: i32) -> (i32, i32) {
    %c0_i32 = arith.constant 0 : i32
    %c0_i32_0 = arith.constant 0 : i32
    %c0_i32_1 = arith.constant 0 : i32
    return %c0_i32, %c0_i32_0 : i32, i32
  }
  func.func @transform_4(%arg0: i32) -> (i32, i32, i32) {
    %c0_i32 = arith.constant 0 : i32
    %c0_i32_0 = arith.constant 0 : i32
    %c0_i32_1 = arith.constant 0 : i32
    return %arg0, %c0_i32, %c0_i32_0 : i32, i32, i32
  }
}

module attributes {stable_mosaic.version = 11 : i64} {
  func.func @_conv3x3_fused_kernel(%arg0: i32, %arg1: memref<1x48x128xbf16, #tpu.memory_space<vmem>>, %arg2: memref<9x128x128xbf16, #tpu.memory_space<vmem>>, %arg3: memref<1x128xf32, #tpu.memory_space<vmem>>, %arg4: memref<1x128xf32, #tpu.memory_space<vmem>>, %arg5: memref<1x32x128xbf16, #tpu.memory_space<vmem>>) attributes {dimension_semantics = [#tpu.dimension_semantics<parallel>], iteration_bounds = array<i64: 2>, scalar_prefetch = 0 : i64, scratch_operands = 0 : i64, tpu.core_type = #tpu.core_type<tc>, window_params = [{transform_indices = @transform_0, window_bounds = array<i64: 1, 48, 128>}, {pipeline_mode = #tpu.pipeline_mode<synchronous>, transform_indices = @transform_1, window_bounds = array<i64: 9, 128, 128>}, {pipeline_mode = #tpu.pipeline_mode<synchronous>, transform_indices = @transform_2, window_bounds = array<i64: 1, 128>}, {pipeline_mode = #tpu.pipeline_mode<synchronous>, transform_indices = @transform_3, window_bounds = array<i64: 1, 128>}, {transform_indices = @transform_4, window_bounds = array<i64: 1, 32, 128>}]} {
    %c0 = arith.constant 0 : index
    %c0_0 = arith.constant 0 : index
    %0 = vector.load %arg3[%c0, %c0_0] : memref<1x128xf32, #tpu.memory_space<vmem>>, vector<1x128xf32>
    %c0_1 = arith.constant 0 : index
    %c0_2 = arith.constant 0 : index
    %1 = vector.load %arg4[%c0_1, %c0_2] : memref<1x128xf32, #tpu.memory_space<vmem>>, vector<1x128xf32>
    %cst = arith.constant 0.000000e+00 : f32
    %2 = vector.broadcast %cst : f32 to vector<32x128xf32>
    %c0_3 = arith.constant 0 : index
    %c0_4 = arith.constant 0 : index
    %c0_5 = arith.constant 0 : index
    %3 = vector.load %arg1[%c0_3, %c0_4, %c0_5] : memref<1x48x128xbf16, #tpu.memory_space<vmem>>, vector<1x32x128xbf16>
    %4 = vector.shape_cast %3 : vector<1x32x128xbf16> to vector<32x128xbf16>
    %c0_6 = arith.constant 0 : index
    %c0_7 = arith.constant 0 : index
    %c0_8 = arith.constant 0 : index
    %5 = vector.load %arg2[%c0_6, %c0_7, %c0_8] : memref<9x128x128xbf16, #tpu.memory_space<vmem>>, vector<1x128x128xbf16>
    %6 = vector.shape_cast %5 : vector<1x128x128xbf16> to vector<128x128xbf16>
    %cst_9 = arith.constant dense<0.000000e+00> : vector<32x128xf32>
    %7 = tpu.matmul %4, %6, %cst_9 {dimension_numbers = #tpu.dot_dimension_numbers<[1], [0], [0], [1], [0, 0, 1, 1], [], []>} : vector<32x128xbf16>, vector<128x128xbf16>, vector<32x128xf32> -> vector<32x128xf32>
    %8 = arith.addf %2, %7 : vector<32x128xf32>
    %c0_10 = arith.constant 0 : index
    %c1 = arith.constant 1 : index
    %c0_11 = arith.constant 0 : index
    %9 = vector.load %arg1[%c0_10, %c1, %c0_11] : memref<1x48x128xbf16, #tpu.memory_space<vmem>>, vector<1x32x128xbf16>
    %10 = vector.shape_cast %9 : vector<1x32x128xbf16> to vector<32x128xbf16>
    %c1_12 = arith.constant 1 : index
    %c0_13 = arith.constant 0 : index
    %c0_14 = arith.constant 0 : index
    %11 = vector.load %arg2[%c1_12, %c0_13, %c0_14] : memref<9x128x128xbf16, #tpu.memory_space<vmem>>, vector<1x128x128xbf16>
    %12 = vector.shape_cast %11 : vector<1x128x128xbf16> to vector<128x128xbf16>
    %cst_15 = arith.constant dense<0.000000e+00> : vector<32x128xf32>
    %13 = tpu.matmul %10, %12, %cst_15 {dimension_numbers = #tpu.dot_dimension_numbers<[1], [0], [0], [1], [0, 0, 1, 1], [], []>} : vector<32x128xbf16>, vector<128x128xbf16>, vector<32x128xf32> -> vector<32x128xf32>
    %14 = arith.addf %8, %13 : vector<32x128xf32>
    %c0_16 = arith.constant 0 : index
    %c2 = arith.constant 2 : index
    %c0_17 = arith.constant 0 : index
    %15 = vector.load %arg1[%c0_16, %c2, %c0_17] : memref<1x48x128xbf16, #tpu.memory_space<vmem>>, vector<1x32x128xbf16>
    %16 = vector.shape_cast %15 : vector<1x32x128xbf16> to vector<32x128xbf16>
    %c2_18 = arith.constant 2 : index
    %c0_19 = arith.constant 0 : index
    %c0_20 = arith.constant 0 : index
    %17 = vector.load %arg2[%c2_18, %c0_19, %c0_20] : memref<9x128x128xbf16, #tpu.memory_space<vmem>>, vector<1x128x128xbf16>
    %18 = vector.shape_cast %17 : vector<1x128x128xbf16> to vector<128x128xbf16>
    %cst_21 = arith.constant dense<0.000000e+00> : vector<32x128xf32>
    %19 = tpu.matmul %16, %18, %cst_21 {dimension_numbers = #tpu.dot_dimension_numbers<[1], [0], [0], [1], [0, 0, 1, 1], [], []>} : vector<32x128xbf16>, vector<128x128xbf16>, vector<32x128xf32> -> vector<32x128xf32>
    %20 = arith.addf %14, %19 : vector<32x128xf32>
    %c0_22 = arith.constant 0 : index
    %c6 = arith.constant 6 : index
    %c0_23 = arith.constant 0 : index
    %21 = vector.load %arg1[%c0_22, %c6, %c0_23] : memref<1x48x128xbf16, #tpu.memory_space<vmem>>, vector<1x32x128xbf16>
    %22 = vector.shape_cast %21 : vector<1x32x128xbf16> to vector<32x128xbf16>
    %c3 = arith.constant 3 : index
    %c0_24 = arith.constant 0 : index
    %c0_25 = arith.constant 0 : index
    %23 = vector.load %arg2[%c3, %c0_24, %c0_25] : memref<9x128x128xbf16, #tpu.memory_space<vmem>>, vector<1x128x128xbf16>
    %24 = vector.shape_cast %23 : vector<1x128x128xbf16> to vector<128x128xbf16>
    %cst_26 = arith.constant dense<0.000000e+00> : vector<32x128xf32>
    %25 = tpu.matmul %22, %24, %cst_26 {dimension_numbers = #tpu.dot_dimension_numbers<[1], [0], [0], [1], [0, 0, 1, 1], [], []>} : vector<32x128xbf16>, vector<128x128xbf16>, vector<32x128xf32> -> vector<32x128xf32>
    %26 = arith.addf %20, %25 : vector<32x128xf32>
    %c0_27 = arith.constant 0 : index
    %c7 = arith.constant 7 : index
    %c0_28 = arith.constant 0 : index
    %27 = vector.load %arg1[%c0_27, %c7, %c0_28] : memref<1x48x128xbf16, #tpu.memory_space<vmem>>, vector<1x32x128xbf16>
    %28 = vector.shape_cast %27 : vector<1x32x128xbf16> to vector<32x128xbf16>
    %c4 = arith.constant 4 : index
    %c0_29 = arith.constant 0 : index
    %c0_30 = arith.constant 0 : index
    %29 = vector.load %arg2[%c4, %c0_29, %c0_30] : memref<9x128x128xbf16, #tpu.memory_space<vmem>>, vector<1x128x128xbf16>
    %30 = vector.shape_cast %29 : vector<1x128x128xbf16> to vector<128x128xbf16>
    %cst_31 = arith.constant dense<0.000000e+00> : vector<32x128xf32>
    %31 = tpu.matmul %28, %30, %cst_31 {dimension_numbers = #tpu.dot_dimension_numbers<[1], [0], [0], [1], [0, 0, 1, 1], [], []>} : vector<32x128xbf16>, vector<128x128xbf16>, vector<32x128xf32> -> vector<32x128xf32>
    %32 = arith.addf %26, %31 : vector<32x128xf32>
    %c0_32 = arith.constant 0 : index
    %c8 = arith.constant 8 : index
    %c0_33 = arith.constant 0 : index
    %33 = vector.load %arg1[%c0_32, %c8, %c0_33] : memref<1x48x128xbf16, #tpu.memory_space<vmem>>, vector<1x32x128xbf16>
    %34 = vector.shape_cast %33 : vector<1x32x128xbf16> to vector<32x128xbf16>
    %c5 = arith.constant 5 : index
    %c0_34 = arith.constant 0 : index
    %c0_35 = arith.constant 0 : index
    %35 = vector.load %arg2[%c5, %c0_34, %c0_35] : memref<9x128x128xbf16, #tpu.memory_space<vmem>>, vector<1x128x128xbf16>
    %36 = vector.shape_cast %35 : vector<1x128x128xbf16> to vector<128x128xbf16>
    %cst_36 = arith.constant dense<0.000000e+00> : vector<32x128xf32>
    %37 = tpu.matmul %34, %36, %cst_36 {dimension_numbers = #tpu.dot_dimension_numbers<[1], [0], [0], [1], [0, 0, 1, 1], [], []>} : vector<32x128xbf16>, vector<128x128xbf16>, vector<32x128xf32> -> vector<32x128xf32>
    %38 = arith.addf %32, %37 : vector<32x128xf32>
    %c0_37 = arith.constant 0 : index
    %c12 = arith.constant 12 : index
    %c0_38 = arith.constant 0 : index
    %39 = vector.load %arg1[%c0_37, %c12, %c0_38] : memref<1x48x128xbf16, #tpu.memory_space<vmem>>, vector<1x32x128xbf16>
    %40 = vector.shape_cast %39 : vector<1x32x128xbf16> to vector<32x128xbf16>
    %c6_39 = arith.constant 6 : index
    %c0_40 = arith.constant 0 : index
    %c0_41 = arith.constant 0 : index
    %41 = vector.load %arg2[%c6_39, %c0_40, %c0_41] : memref<9x128x128xbf16, #tpu.memory_space<vmem>>, vector<1x128x128xbf16>
    %42 = vector.shape_cast %41 : vector<1x128x128xbf16> to vector<128x128xbf16>
    %cst_42 = arith.constant dense<0.000000e+00> : vector<32x128xf32>
    %43 = tpu.matmul %40, %42, %cst_42 {dimension_numbers = #tpu.dot_dimension_numbers<[1], [0], [0], [1], [0, 0, 1, 1], [], []>} : vector<32x128xbf16>, vector<128x128xbf16>, vector<32x128xf32> -> vector<32x128xf32>
    %44 = arith.addf %38, %43 : vector<32x128xf32>
    %c0_43 = arith.constant 0 : index
    %c13 = arith.constant 13 : index
    %c0_44 = arith.constant 0 : index
    %45 = vector.load %arg1[%c0_43, %c13, %c0_44] : memref<1x48x128xbf16, #tpu.memory_space<vmem>>, vector<1x32x128xbf16>
    %46 = vector.shape_cast %45 : vector<1x32x128xbf16> to vector<32x128xbf16>
    %c7_45 = arith.constant 7 : index
    %c0_46 = arith.constant 0 : index
    %c0_47 = arith.constant 0 : index
    %47 = vector.load %arg2[%c7_45, %c0_46, %c0_47] : memref<9x128x128xbf16, #tpu.memory_space<vmem>>, vector<1x128x128xbf16>
    %48 = vector.shape_cast %47 : vector<1x128x128xbf16> to vector<128x128xbf16>
    %cst_48 = arith.constant dense<0.000000e+00> : vector<32x128xf32>
    %49 = tpu.matmul %46, %48, %cst_48 {dimension_numbers = #tpu.dot_dimension_numbers<[1], [0], [0], [1], [0, 0, 1, 1], [], []>} : vector<32x128xbf16>, vector<128x128xbf16>, vector<32x128xf32> -> vector<32x128xf32>
    %50 = arith.addf %44, %49 : vector<32x128xf32>
    %c0_49 = arith.constant 0 : index
    %c14 = arith.constant 14 : index
    %c0_50 = arith.constant 0 : index
    %51 = vector.load %arg1[%c0_49, %c14, %c0_50] : memref<1x48x128xbf16, #tpu.memory_space<vmem>>, vector<1x32x128xbf16>
    %52 = vector.shape_cast %51 : vector<1x32x128xbf16> to vector<32x128xbf16>
    %c8_51 = arith.constant 8 : index
    %c0_52 = arith.constant 0 : index
    %c0_53 = arith.constant 0 : index
    %53 = vector.load %arg2[%c8_51, %c0_52, %c0_53] : memref<9x128x128xbf16, #tpu.memory_space<vmem>>, vector<1x128x128xbf16>
    %54 = vector.shape_cast %53 : vector<1x128x128xbf16> to vector<128x128xbf16>
    %cst_54 = arith.constant dense<0.000000e+00> : vector<32x128xf32>
    %55 = tpu.matmul %52, %54, %cst_54 {dimension_numbers = #tpu.dot_dimension_numbers<[1], [0], [0], [1], [0, 0, 1, 1], [], []>} : vector<32x128xbf16>, vector<128x128xbf16>, vector<32x128xf32> -> vector<32x128xf32>
    %56 = arith.addf %50, %55 : vector<32x128xf32>
    %57 = vector.broadcast %0 : vector<1x128xf32> to vector<32x128xf32>
    %58 = arith.mulf %56, %57 : vector<32x128xf32>
    %59 = vector.broadcast %1 : vector<1x128xf32> to vector<32x128xf32>
    %60 = arith.addf %58, %59 : vector<32x128xf32>
    %cst_55 = arith.constant 0.000000e+00 : f32
    %61 = vector.broadcast %cst_55 : f32 to vector<32x128xf32>
    %62 = arith.maximumf %60, %61 : vector<32x128xf32>
    %63 = arith.truncf %62 : vector<32x128xf32> to vector<32x128xbf16>
    %c0_56 = arith.constant 0 : index
    %c0_57 = arith.constant 0 : index
    %c0_58 = arith.constant 0 : index
    %64 = vector.load %arg5[%c0_56, %c0_57, %c0_58] : memref<1x32x128xbf16, #tpu.memory_space<vmem>>, vector<1x32x128xbf16>
    %65 = vector.shape_cast %64 : vector<1x32x128xbf16> to vector<32x128xbf16>
    %66 = vector.shape_cast %63 : vector<32x128xbf16> to vector<1x32x128xbf16>
    tpu.vector_store %arg5[%c0_56, %c0_57, %c0_58], %66 {strides = array<i32>} : memref<1x32x128xbf16, #tpu.memory_space<vmem>>, vector<1x32x128xbf16>,
    return
  }
  func.func @transform_0(%arg0: i32) -> (i32, i32, i32) {
    %c0_i32 = arith.constant 0 : i32
    %c0_i32_0 = arith.constant 0 : i32
    %c0_i32_1 = arith.constant 0 : i32
    return %arg0, %c0_i32, %c0_i32_0 : i32, i32, i32
  }
  func.func @transform_1(%arg0: i32) -> (i32, i32, i32) {
    %c0_i32 = arith.constant 0 : i32
    %c0_i32_0 = arith.constant 0 : i32
    %c0_i32_1 = arith.constant 0 : i32
    %c0_i32_2 = arith.constant 0 : i32
    return %c0_i32, %c0_i32_0, %c0_i32_1 : i32, i32, i32
  }
  func.func @transform_2(%arg0: i32) -> (i32, i32) {
    %c0_i32 = arith.constant 0 : i32
    %c0_i32_0 = arith.constant 0 : i32
    %c0_i32_1 = arith.constant 0 : i32
    return %c0_i32, %c0_i32_0 : i32, i32
  }
  func.func @transform_3(%arg0: i32) -> (i32, i32) {
    %c0_i32 = arith.constant 0 : i32
    %c0_i32_0 = arith.constant 0 : i32
    %c0_i32_1 = arith.constant 0 : i32
    return %c0_i32, %c0_i32_0 : i32, i32
  }
  func.func @transform_4(%arg0: i32) -> (i32, i32, i32) {
    %c0_i32 = arith.constant 0 : i32
    %c0_i32_0 = arith.constant 0 : i32
    %c0_i32_1 = arith.constant 0 : i32
    return %arg0, %c0_i32, %c0_i32_0 : i32, i32, i32
  }
}

module attributes {stable_mosaic.version = 11 : i64} {
  func.func @_fc_multitask_kernel(%arg0: i32, %arg1: memref<16x512xbf16, #tpu.memory_space<vmem>>, %arg2: memref<16x1xi32, #tpu.memory_space<vmem>>, %arg3: memref<1x512x128xbf16, #tpu.memory_space<vmem>>, %arg4: memref<1x1x128xf32, #tpu.memory_space<vmem>>, %arg5: memref<16x128xf32, #tpu.memory_space<vmem>>) attributes {dimension_semantics = [#tpu.dimension_semantics<parallel>], iteration_bounds = array<i64: 1>, scalar_prefetch = 0 : i64, scratch_operands = 0 : i64, tpu.core_type = #tpu.core_type<tc>, window_params = [{transform_indices = @transform_0, window_bounds = array<i64: 16, 512>}, {transform_indices = @transform_1, window_bounds = array<i64: 16, 1>}, {pipeline_mode = #tpu.pipeline_mode<synchronous>, transform_indices = @transform_2, window_bounds = array<i64: 1, 512, 128>}, {pipeline_mode = #tpu.pipeline_mode<synchronous>, transform_indices = @transform_3, window_bounds = array<i64: 1, 1, 128>}, {transform_indices = @transform_4, window_bounds = array<i64: 16, 128>}]} {
    %c0 = arith.constant 0 : index
    %c0_0 = arith.constant 0 : index
    %0 = vector.load %arg1[%c0, %c0_0] : memref<16x512xbf16, #tpu.memory_space<vmem>>, vector<16x512xbf16>
    %cst = arith.constant 0.000000e+00 : f32
    %1 = vector.broadcast %cst : f32 to vector<16x128xf32>
    %c0_1 = arith.constant 0 : index
    %c0_2 = arith.constant 0 : index
    %c0_3 = arith.constant 0 : index
    %2 = vector.load %arg3[%c0_1, %c0_2, %c0_3] : memref<1x512x128xbf16, #tpu.memory_space<vmem>>, vector<1x512x128xbf16>
    %3 = vector.shape_cast %2 : vector<1x512x128xbf16> to vector<512x128xbf16>
    %cst_4 = arith.constant dense<0.000000e+00> : vector<16x128xf32>
    %4 = tpu.matmul %0, %3, %cst_4 {dimension_numbers = #tpu.dot_dimension_numbers<[1], [0], [0], [1], [0, 0, 1, 1], [], []>} : vector<16x512xbf16>, vector<512x128xbf16>, vector<16x128xf32> -> vector<16x128xf32>
    %c0_5 = arith.constant 0 : index
    %c0_6 = arith.constant 0 : index
    %c0_7 = arith.constant 0 : index
    %5 = vector.load %arg4[%c0_5, %c0_6, %c0_7] : memref<1x1x128xf32, #tpu.memory_space<vmem>>, vector<1x1x128xf32>
    %6 = vector.shape_cast %5 : vector<1x1x128xf32> to vector<1x128xf32>
    %7 = vector.broadcast %6 : vector<1x128xf32> to vector<16x128xf32>
    %8 = arith.addf %4, %7 : vector<16x128xf32>
    %c0_8 = arith.constant 0 : index
    %c0_9 = arith.constant 0 : index
    %9 = vector.load %arg2[%c0_8, %c0_9] : memref<16x1xi32, #tpu.memory_space<vmem>>, vector<16x1xi32>
    %c0_i32 = arith.constant 0 : i32
    %10 = vector.broadcast %c0_i32 : i32 to vector<16x1xi32>
    %11 = arith.cmpi eq, %9, %10 : vector<16x1xi32>
    %cst_10 = arith.constant 0.000000e+00 : f32
    %12 = vector.shape_cast %11 : vector<16x1xi1> to vector<16x1xi1>
    %13 = vector.broadcast %12 : vector<16x1xi1> to vector<16x128xi1>
    %14 = vector.broadcast %cst_10 : f32 to vector<16x128xf32>
    %15 = arith.select %13, %8, %14 : vector<16x128xi1>, vector<16x128xf32>
    %16 = arith.addf %1, %15 : vector<16x128xf32>
    %c0_11 = arith.constant 0 : index
    %c0_12 = arith.constant 0 : index
    %17 = vector.load %arg5[%c0_11, %c0_12] : memref<16x128xf32, #tpu.memory_space<vmem>>, vector<16x128xf32>
    tpu.vector_store %arg5[%c0_11, %c0_12], %16 {strides = array<i32>} : memref<16x128xf32, #tpu.memory_space<vmem>>, vector<16x128xf32>,
    return
  }
  func.func @transform_0(%arg0: i32) -> (i32, i32) {
    %c0_i32 = arith.constant 0 : i32
    %c0_i32_0 = arith.constant 0 : i32
    return %arg0, %c0_i32 : i32, i32
  }
  func.func @transform_1(%arg0: i32) -> (i32, i32) {
    %c0_i32 = arith.constant 0 : i32
    %c0_i32_0 = arith.constant 0 : i32
    return %arg0, %c0_i32 : i32, i32
  }
  func.func @transform_2(%arg0: i32) -> (i32, i32, i32) {
    %c0_i32 = arith.constant 0 : i32
    %c0_i32_0 = arith.constant 0 : i32
    %c0_i32_1 = arith.constant 0 : i32
    %c0_i32_2 = arith.constant 0 : i32
    return %c0_i32, %c0_i32_0, %c0_i32_1 : i32, i32, i32
  }
  func.func @transform_3(%arg0: i32) -> (i32, i32, i32) {
    %c0_i32 = arith.constant 0 : i32
    %c0_i32_0 = arith.constant 0 : i32
    %c0_i32_1 = arith.constant 0 : i32
    %c0_i32_2 = arith.constant 0 : i32
    return %c0_i32, %c0_i32_0, %c0_i32_1 : i32, i32, i32
  }
  func.func @transform_4(%arg0: i32) -> (i32, i32) {
    %c0_i32 = arith.constant 0 : i32
    %c0_i32_0 = arith.constant 0 : i32
    return %arg0, %c0_i32 : i32, i32
  }
}

</mosaic_0001>

<llo_original>
// kernel: small_conv_forward.4
$region0: #{small_conv_forward.4}
  #allocation0 [shape = 'u32[]', space=smem, size = 0x4, offset = 0x4, fixed_abs, tag = 'smem constant byte address 0x4 - core index']
  #allocation1 [shape = 'u32[144,128]{1,0:T(1,128)}', space=vmem, size = 0x12000, scoped, tag = 'internal scratch']
  %s0 = inlined_call_operand.vmem [shape: bf16[4,480,27], index: 0, kind: input, shape index: {}]
  %s1 = inlined_call_operand.vmem [shape: bf16[27,128], index: 1, kind: input, shape index: {}]
  %s2 = inlined_call_operand.vmem [shape: bf16[480,128], index: 2, kind: output, shape index: {}]
  %s3 = sld [smem:[#allocation0]]
  $region82: #{small_conv_forward.4} parent=0
    _
  %s5 = ssub.s32 1, %s3
  %s6 = scalar_select 0, %s5, %s3
  $region1: #{small_conv_forward.4} parent=0
    #allocation2 [shape = 'u8[491520]{0}', space=vmem, size = 0x78000, scoped, tag = 'input window, operand 0']
    loop: start=0, step=1, limit=4
    $region2: #{small_conv_forward.4} parent=1 // loop_pre_header
      _
    $region3: #{small_conv_forward.4} parent=1 // loop_header
      %s8 = sphi 0, %s12
      %p9 = scmp.ge.s32.totalorder %s8, 4
      %s18 = sphi 0, %s20
      %s21 = sphi 0, %s18
      %s22 = sphi 0, %s21
      %s38 = sphi 0, %s22
      %s42 = sphi 0, %s42
      %s44 = sphi 0, %s42
      %s45 = sphi 0, %s44
      %s59 = sphi 0, %s45
      %s65 = sphi 0, %s67
      %s68 = sphi 0, %s65
      %s69 = sphi 0, %s68
      %s85 = sphi 0, %s69
    $region4: #{small_conv_forward.4} parent=1 // loop_header_branch
      %11 = sbr.rel (%p9) target = $region8
    $region5: #{small_conv_forward.4} parent=1 // loop_body
      %s13 = ssub.s32 %s8, 1
      %s14 = ssub.s32 %s8, 2
      %s15 = sadd.s32 %s8, 1
      %s16 = ssub.s32 %s8, %s15
      %p17 = scmp.eq.s32.totalorder %s16, 0
      %s19 = sadd.s32 %s18, 1
      %s20 = scalar_select %p17, %s18, %s19
      %p23 = pneg %p17
      %p24 = scmp.eq.s32.totalorder %s8, 1
      %p25 = por %p23, %p24
      %p26 = scmp.ne.s32.totalorder %s18, %s21
      %p27 = scmp.eq.s32.totalorder %s8, 0
      %p28 = por %p26, %p27
      %p29 = scmp.ne.s32.totalorder %s18, %s21
      %p30 = scmp.eq.s32.totalorder %s13, 1
      %p31 = por %p29, %p30
      %p32 = scmp.ne.s32.totalorder %s21, %s22
      %p33 = scmp.eq.s32.totalorder %s13, 0
      %p34 = por %p32, %p33
      %p35 = scmp.ne.s32.totalorder %s21, %s22
      %p36 = scmp.eq.s32.totalorder %s14, 1
      %p37 = por %p35, %p36
      %p39 = scmp.ne.s32.totalorder %s22, %s38
      %p40 = scmp.eq.s32.totalorder %s14, 0
      %p41 = por %p39, %p40
      %s43 = sadd.s32 %s42, 1
      %p46 = scmp.eq.s32.totalorder %s8, 1
      %p47 = scmp.ne.s32.totalorder %s42, %s44
      %p48 = scmp.eq.s32.totalorder %s8, 0
      %p49 = por %p47, %p48
      %p50 = scmp.ne.s32.totalorder %s42, %s44
      %p51 = scmp.eq.s32.totalorder %s13, 1
      %p52 = por %p50, %p51
      %p53 = scmp.ne.s32.totalorder %s44, %s45
      %p54 = scmp.eq.s32.totalorder %s13, 0
      %p55 = por %p53, %p54
      %p56 = scmp.ne.s32.totalorder %s44, %s45
      %p57 = scmp.eq.s32.totalorder %s14, 1
      %p58 = por %p56, %p57
      %p60 = scmp.ne.s32.totalorder %s45, %s59
      %p61 = scmp.eq.s32.totalorder %s14, 0
      %p62 = por %p60, %p61
      %s63 = ssub.s32 %s8, %s15
      %p64 = scmp.eq.s32.totalorder %s63, 0
      %s66 = sadd.s32 %s65, 1
      %s67 = scalar_select %p64, %s65, %s66
      %p70 = pneg %p64
      %p71 = scmp.eq.s32.totalorder %s8, 1
      %p72 = por %p70, %p71
      %p73 = scmp.ne.s32.totalorder %s65, %s68
      %p74 = scmp.eq.s32.totalorder %s8, 0
      %p75 = por %p73, %p74
      %p76 = scmp.ne.s32.totalorder %s65, %s68
      %p77 = scmp.eq.s32.totalorder %s13, 1
      %p78 = por %p76, %p77
      %p79 = scmp.ne.s32.totalorder %s68, %s69
      %p80 = scmp.eq.s32.totalorder %s13, 0
      %p81 = por %p79, %p80
      %p82 = scmp.ne.s32.totalorder %s68, %s69
      %p83 = scmp.eq.s32.totalorder %s14, 1
      %p84 = por %p82, %p83
      %p86 = scmp.ne.s32.totalorder %s69, %s85
      %p87 = scmp.eq.s32.totalorder %s14, 0
      %p88 = por %p86, %p87
      %p89 = scmp.le.s32.totalorder 1, %s8
      %p90 = scmp.lt.s32.totalorder %s8, 3
      %p91 = pnand %p89, %p90
      %p92 = pneg %p91
      // Predicated region
      $region9: #{small_conv_forward.4} parent=5 // pred_check
        _
      $region10: #{small_conv_forward.4} parent=5 // pred_check_branch
        %94 = sbr.rel (%p91) target = $region12
      $region11: #{small_conv_forward.4} parent=5 // pred_region
        %s95 = ssub.s32 %s8, 1
        // Predicated region
        $region13: #{small_conv_forward.4} parent=11 // pred_check
          %p96 = pneg %p55
        $region14: #{small_conv_forward.4} parent=11 // pred_check_branch
          %98 = sbr.rel (%p96) target = $region16
        $region15: #{small_conv_forward.4} parent=11 // pred_region
          _
        $region16: #{small_conv_forward.4} parent=11 // pred_fallthru
          _
      $region12: #{small_conv_forward.4} parent=5 // pred_fallthru
        _
      %p99 = scmp.lt.s32.totalorder %s8, 2
      // Predicated region
      $region17: #{small_conv_forward.4} parent=5 // pred_check
        %p100 = pneg %p99
      $region18: #{small_conv_forward.4} parent=5 // pred_check_branch
        %102 = sbr.rel (%p100) target = $region20
      $region19: #{small_conv_forward.4} parent=5 // pred_region
        // Predicated region
        $region21: #{small_conv_forward.4} parent=19 // pred_check
          %p103 = pneg %p28
        $region22: #{small_conv_forward.4} parent=19 // pred_check_branch
          %105 = sbr.rel (%p103) target = $region24
        $region23: #{small_conv_forward.4} parent=19 // pred_region
          %s106 = sand.u32 %s18, 1
          %s107 = sand.u32 %s18, 1
          %s108 = smul.addr %s107, 480
          %s109 = scalar_lea.vmem [#allocation2], %s108
          %s110 = smul.u32 30, %s8
          %s111 = smul.addr %s110, 4
          %s112 = scalar_lea.vmem %s0, %s111
          // Predicated region
          $region25: #{small_conv_forward.4} parent=23 // pred_check
            _
          $region26: #{small_conv_forward.4} parent=23 // pred_check_branch
            %114 = sbr.rel (0) target = $region28
          $region27: #{small_conv_forward.4} parent=23 // pred_region
            // Predicated region
            $region29: #{small_conv_forward.4} parent=27 // pred_check
              _
            $region30: #{small_conv_forward.4} parent=27 // pred_check_branch
              %116 = sbr.rel target = $region32
            $region31: #{small_conv_forward.4} parent=27 // pred_region
              // Predicated region
              $region44: #{small_conv_forward.4} parent=31 // pred_check
                _
              $region45: #{small_conv_forward.4} parent=31 // pred_check_branch
                %369 = sbr.rel (0) target = $region47
              $region46: #{small_conv_forward.4} parent=31 // pred_region
                loop: start=0, step=1, limit=1
                $region48: #{small_conv_forward.4} parent=46 // loop_pre_header
                  _
                $region49: #{small_conv_forward.4} parent=46 // loop_header
                  %s371 = sphi 0, %s375
                  %p372 = scmp.ge.s32.totalorder %s371, 1
                  %s376 = sphi %s112, %s112
                  %s377 = sphi %s109, %s109
                $region50: #{small_conv_forward.4} parent=46 // loop_header_branch
                  %374 = sbr.rel (%p372) target = $region54
                $region51: #{small_conv_forward.4} parent=46 // loop_body
                  _
                $region52: #{small_conv_forward.4} parent=46 // loop_footer
                  %s375 = sadd.s32 1, %s371
                $region53: #{small_conv_forward.4} parent=46 // loop_footer_branch
                  %370 = sbr.rel target = $region49
                $region54: #{small_conv_forward.4} parent=46 // loop_exit
                  _
                loop: start=0, step=1, limit=1
                $region55: #{small_conv_forward.4} parent=46 // loop_pre_header
                  _
                $region56: #{small_conv_forward.4} parent=46 // loop_header
                  %s380 = sphi 0, %s384
                  %p381 = scmp.ge.s32.totalorder %s380, 1
                  %s385 = sphi %s112, %s112
                  %s386 = sphi %s109, %s109
                $region57: #{small_conv_forward.4} parent=46 // loop_header_branch
                  %383 = sbr.rel (%p381) target = $region61
                $region58: #{small_conv_forward.4} parent=46 // loop_body
                  %v387 = vld [vmem:[%s385] sm:$0xf]
                  %388 = vst [vmem:[%s386] sm:$0xf] %v387
                  %v389 = vld [vmem:[%s385 + $0x4] sm:$0xf]
                  %390 = vst [vmem:[%s386 + $0x4] sm:$0xf] %v389
                  %v391 = vld [vmem:[%s385 + $0x8] sm:$0xf]
                  %392 = vst [vmem:[%s386 + $0x8] sm:$0xf] %v391
                  %v393 = vld [vmem:[%s385 + $0xc] sm:$0xf]
                  %394 = vst [vmem:[%s386 + $0xc] sm:$0xf] %v393
                  %v395 = vld [vmem:[%s385 + $0x10] sm:$0xf]
                  %396 = vst [vmem:[%s386 + $0x10] sm:$0xf] %v395
                  %v397 = vld [vmem:[%s385 + $0x14] sm:$0xf]
                  %398 = vst [vmem:[%s386 + $0x14] sm:$0xf] %v397
                  %v399 = vld [vmem:[%s385 + $0x18] sm:$0xf]
                  %400 = vst [vmem:[%s386 + $0x18] sm:$0xf] %v399
                  %v401 = vld [vmem:[%s385 + $0x1c] sm:$0xf]
                  %402 = vst [vmem:[%s386 + $0x1c] sm:$0xf] %v401
                  %v403 = vld [vmem:[%s385 + $0x20] sm:$0xf]
                  %404 = vst [vmem:[%s386 + $0x20] sm:$0xf] %v403
                  %v405 = vld [vmem:[%s385 + $0x24] sm:$0xf]
                  %406 = vst [vmem:[%s386 + $0x24] sm:$0xf] %v405
                  %v407 = vld [vmem:[%s385 + $0x28] sm:$0xf]
                  %408 = vst [vmem:[%s386 + $0x28] sm:$0xf] %v407
                  %v409 = vld [vmem:[%s385 + $0x2c] sm:$0xf]
                  %410 = vst [vmem:[%s386 + $0x2c] sm:$0xf] %v409
                  %v411 = vld [vmem:[%s385 + $0x30] sm:$0xf]
                  %412 = vst [vmem:[%s386 + $0x30] sm:$0xf] %v411
                  %v413 = vld [vmem:[%s385 + $0x34] sm:$0xf]
                  %414 = vst [vmem:[%s386 + $0x34] sm:$0xf] %v413
                  %v415 = vld [vmem:[%s385 + $0x38] sm:$0xf]
                  %416 = vst [vmem:[%s386 + $0x38] sm:$0xf] %v415
                  %v417 = vld [vmem:[%s385 + $0x3c] sm:$0xf]
                  %418 = vst [vmem:[%s386 + $0x3c] sm:$0xf] %v417
                  %v419 = vld [vmem:[%s385 + $0x40] sm:$0xf]
                  %420 = vst [vmem:[%s386 + $0x40] sm:$0xf] %v419
                  %v421 = vld [vmem:[%s385 + $0x44] sm:$0xf]
                  %422 = vst [vmem:[%s386 + $0x44] sm:$0xf] %v421
                  %v423 = vld [vmem:[%s385 + $0x48] sm:$0xf]
                  %424 = vst [vmem:[%s386 + $0x48] sm:$0xf] %v423
                  %v425 = vld [vmem:[%s385 + $0x4c] sm:$0xf]
                  %426 = vst [vmem:[%s386 + $0x4c] sm:$0xf] %v425
                  %v427 = vld [vmem:[%s385 + $0x50] sm:$0xf]
                  %428 = vst [vmem:[%s386 + $0x50] sm:$0xf] %v427
                  %v429 = vld [vmem:[%s385 + $0x54] sm:$0xf]
                  %430 = vst [vmem:[%s386 + $0x54] sm:$0xf] %v429
                  %v431 = vld [vmem:[%s385 + $0x58] sm:$0xf]
                  %432 = vst [vmem:[%s386 + $0x58] sm:$0xf] %v431
                  %v433 = vld [vmem:[%s385 + $0x5c] sm:$0xf]
                  %434 = vst [vmem:[%s386 + $0x5c] sm:$0xf] %v433
                  %v435 = vld [vmem:[%s385 + $0x60] sm:$0xf]
                  %436 = vst [vmem:[%s386 + $0x60] sm:$0xf] %v435
                  %v437 = vld [vmem:[%s385 + $0x64] sm:$0xf]
                  %438 = vst [vmem:[%s386 + $0x64] sm:$0xf] %v437
                  %v439 = vld [vmem:[%s385 + $0x68] sm:$0xf]
                  %440 = vst [vmem:[%s386 + $0x68] sm:$0xf] %v439
                  %v441 = vld [vmem:[%s385 + $0x6c] sm:$0xf]
                  %442 = vst [vmem:[%s386 + $0x6c] sm:$0xf] %v441
                  %v443 = vld [vmem:[%s385 + $0x70] sm:$0xf]
                  %444 = vst [vmem:[%s386 + $0x70] sm:$0xf] %v443
                  %v445 = vld [vmem:[%s385 + $0x74] sm:$0xf]
                  %446 = vst [vmem:[%s386 + $0x74] sm:$0xf] %v445
                  %v447 = vld [vmem:[%s385 + $0xf0] sm:$0xf]
                  %448 = vst [vmem:[%s386 + $0x78] sm:$0xf] %v447
                  %v449 = vld [vmem:[%s385 + $0xf4] sm:$0xf]
                  %450 = vst [vmem:[%s386 + $0x7c] sm:$0xf] %v449
                  %v451 = vld [vmem:[%s385 + $0xf8] sm:$0xf]
                  %452 = vst [vmem:[%s386 + $0x80] sm:$0xf] %v451
                  %v453 = vld [vmem:[%s385 + $0xfc] sm:$0xf]
                  %454 = vst [vmem:[%s386 + $0x84] sm:$0xf] %v453
                  %v455 = vld [vmem:[%s385 + $0x100] sm:$0xf]
                  %456 = vst [vmem:[%s386 + $0x88] sm:$0xf] %v455
                  %v457 = vld [vmem:[%s385 + $0x104] sm:$0xf]
                  %458 = vst [vmem:[%s386 + $0x8c] sm:$0xf] %v457
                  %v459 = vld [vmem:[%s385 + $0x108] sm:$0xf]
                  %460 = vst [vmem:[%s386 + $0x90] sm:$0xf] %v459
                  %v461 = vld [vmem:[%s385 + $0x10c] sm:$0xf]
                  %462 = vst [vmem:[%s386 + $0x94] sm:$0xf] %v461
                  %v463 = vld [vmem:[%s385 + $0x110] sm:$0xf]
                  %464 = vst [vmem:[%s386 + $0x98] sm:$0xf] %v463
                  %v465 = vld [vmem:[%s385 + $0x114] sm:$0xf]
                  %466 = vst [vmem:[%s386 + $0x9c] sm:$0xf] %v465
                  %v467 = vld [vmem:[%s385 + $0x118] sm:$0xf]
                  %468 = vst [vmem:[%s386 + $0xa0] sm:$0xf] %v467
                  %v469 = vld [vmem:[%s385 + $0x11c] sm:$0xf]
                  %470 = vst [vmem:[%s386 + $0xa4] sm:$0xf] %v469
                  %v471 = vld [vmem:[%s385 + $0x120] sm:$0xf]
                  %472 = vst [vmem:[%s386 + $0xa8] sm:$0xf] %v471
                  %v473 = vld [vmem:[%s385 + $0x124] sm:$0xf]
                  %474 = vst [vmem:[%s386 + $0xac] sm:$0xf] %v473
                  %v475 = vld [vmem:[%s385 + $0x128] sm:$0xf]
                  %476 = vst [vmem:[%s386 + $0xb0] sm:$0xf] %v475
                  %v477 = vld [vmem:[%s385 + $0x12c] sm:$0xf]
                  %478 = vst [vmem:[%s386 + $0xb4] sm:$0xf] %v477
                  %v479 = vld [vmem:[%s385 + $0x130] sm:$0xf]
                  %480 = vst [vmem:[%s386 + $0xb8] sm:$0xf] %v479
                  %v481 = vld [vmem:[%s385 + $0x134] sm:$0xf]
                  %482 = vst [vmem:[%s386 + $0xbc] sm:$0xf] %v481
                  %v483 = vld [vmem:[%s385 + $0x138] sm:$0xf]
                  %484 = vst [vmem:[%s386 + $0xc0] sm:$0xf] %v483
                  %v485 = vld [vmem:[%s385 + $0x13c] sm:$0xf]
                  %486 = vst [vmem:[%s386 + $0xc4] sm:$0xf] %v485
                  %v487 = vld [vmem:[%s385 + $0x140] sm:$0xf]
                  %488 = vst [vmem:[%s386 + $0xc8] sm:$0xf] %v487
                  %v489 = vld [vmem:[%s385 + $0x144] sm:$0xf]
                  %490 = vst [vmem:[%s386 + $0xcc] sm:$0xf] %v489
                  %v491 = vld [vmem:[%s385 + $0x148] sm:$0xf]
                  %492 = vst [vmem:[%s386 + $0xd0] sm:$0xf] %v491
                  %v493 = vld [vmem:[%s385 + $0x14c] sm:$0xf]
                  %494 = vst [vmem:[%s386 + $0xd4] sm:$0xf] %v493
                  %v495 = vld [vmem:[%s385 + $0x150] sm:$0xf]
                  %496 = vst [vmem:[%s386 + $0xd8] sm:$0xf] %v495
                  %v497 = vld [vmem:[%s385 + $0x154] sm:$0xf]
                  %498 = vst [vmem:[%s386 + $0xdc] sm:$0xf] %v497
                  %v499 = vld [vmem:[%s385 + $0x158] sm:$0xf]
                  %500 = vst [vmem:[%s386 + $0xe0] sm:$0xf] %v499
                  %v501 = vld [vmem:[%s385 + $0x15c] sm:$0xf]
                  %502 = vst [vmem:[%s386 + $0xe4] sm:$0xf] %v501
                  %v503 = vld [vmem:[%s385 + $0x160] sm:$0xf]
                  %504 = vst [vmem:[%s386 + $0xe8] sm:$0xf] %v503
                  %v505 = vld [vmem:[%s385 + $0x164] sm:$0xf]
                  %506 = vst [vmem:[%s386 + $0xec] sm:$0xf] %v505
                  %v507 = vld [vmem:[%s385 + $0x1e0] sm:$0xf]
                  %508 = vst [vmem:[%s386 + $0xf0] sm:$0xf] %v507
                  %v509 = vld [vmem:[%s385 + $0x1e4] sm:$0xf]
                  %510 = vst [vmem:[%s386 + $0xf4] sm:$0xf] %v509
                  %v511 = vld [vmem:[%s385 + $0x1e8] sm:$0xf]
                  %512 = vst [vmem:[%s386 + $0xf8] sm:$0xf] %v511
                  %v513 = vld [vmem:[%s385 + $0x1ec] sm:$0xf]
                  %514 = vst [vmem:[%s386 + $0xfc] sm:$0xf] %v513
                  %v515 = vld [vmem:[%s385 + $0x1f0] sm:$0xf]
                  %516 = vst [vmem:[%s386 + $0x100] sm:$0xf] %v515
                  %v517 = vld [vmem:[%s385 + $0x1f4] sm:$0xf]
                  %518 = vst [vmem:[%s386 + $0x104] sm:$0xf] %v517
                  %v519 = vld [vmem:[%s385 + $0x1f8] sm:$0xf]
                  %520 = vst [vmem:[%s386 + $0x108] sm:$0xf] %v519
                  %v521 = vld [vmem:[%s385 + $0x1fc] sm:$0xf]
                  %522 = vst [vmem:[%s386 + $0x10c] sm:$0xf] %v521
                  %v523 = vld [vmem:[%s385 + $0x200] sm:$0xf]
                  %524 = vst [vmem:[%s386 + $0x110] sm:$0xf] %v523
                  %v525 = vld [vmem:[%s385 + $0x204] sm:$0xf]
                  %526 = vst [vmem:[%s386 + $0x114] sm:$0xf] %v525
                  %v527 = vld [vmem:[%s385 + $0x208] sm:$0xf]
                  %528 = vst [vmem:[%s386 + $0x118] sm:$0xf] %v527
                  %v529 = vld [vmem:[%s385 + $0x20c] sm:$0xf]
                  %530 = vst [vmem:[%s386 + $0x11c] sm:$0xf] %v529
                  %v531 = vld [vmem:[%s385 + $0x210] sm:$0xf]
                  %532 = vst [vmem:[%s386 + $0x120] sm:$0xf] %v531
                  %v533 = vld [vmem:[%s385 + $0x214] sm:$0xf]
                  %534 = vst [vmem:[%s386 + $0x124] sm:$0xf] %v533
                  %v535 = vld [vmem:[%s385 + $0x218] sm:$0xf]
                  %536 = vst [vmem:[%s386 + $0x128] sm:$0xf] %v535
                  %v537 = vld [vmem:[%s385 + $0x21c] sm:$0xf]
                  %538 = vst [vmem:[%s386 + $0x12c] sm:$0xf] %v537
                  %v539 = vld [vmem:[%s385 + $0x220] sm:$0xf]
                  %540 = vst [vmem:[%s386 + $0x130] sm:$0xf] %v539
                  %v541 = vld [vmem:[%s385 + $0x224] sm:$0xf]
                  %542 = vst [vmem:[%s386 + $0x134] sm:$0xf] %v541
                  %v543 = vld [vmem:[%s385 + $0x228] sm:$0xf]
                  %544 = vst [vmem:[%s386 + $0x138] sm:$0xf] %v543
                  %v545 = vld [vmem:[%s385 + $0x22c] sm:$0xf]
                  %546 = vst [vmem:[%s386 + $0x13c] sm:$0xf] %v545
                  %v547 = vld [vmem:[%s385 + $0x230] sm:$0xf]
                  %548 = vst [vmem:[%s386 + $0x140] sm:$0xf] %v547
                  %v549 = vld [vmem:[%s385 + $0x234] sm:$0xf]
                  %550 = vst [vmem:[%s386 + $0x144] sm:$0xf] %v549
                  %v551 = vld [vmem:[%s385 + $0x238] sm:$0xf]
                  %552 = vst [vmem:[%s386 + $0x148] sm:$0xf] %v551
                  %v553 = vld [vmem:[%s385 + $0x23c] sm:$0xf]
                  %554 = vst [vmem:[%s386 + $0x14c] sm:$0xf] %v553
                  %v555 = vld [vmem:[%s385 + $0x240] sm:$0xf]
                  %556 = vst [vmem:[%s386 + $0x150] sm:$0xf] %v555
                  %v557 = vld [vmem:[%s385 + $0x244] sm:$0xf]
                  %558 = vst [vmem:[%s386 + $0x154] sm:$0xf] %v557
                  %v559 = vld [vmem:[%s385 + $0x248] sm:$0xf]
                  %560 = vst [vmem:[%s386 + $0x158] sm:$0xf] %v559
                  %v561 = vld [vmem:[%s385 + $0x24c] sm:$0xf]
                  %562 = vst [vmem:[%s386 + $0x15c] sm:$0xf] %v561
                  %v563 = vld [vmem:[%s385 + $0x250] sm:$0xf]
                  %564 = vst [vmem:[%s386 + $0x160] sm:$0xf] %v563
                  %v565 = vld [vmem:[%s385 + $0x254] sm:$0xf]
                  %566 = vst [vmem:[%s386 + $0x164] sm:$0xf] %v565
                  %v567 = vld [vmem:[%s385 + $0x2d0] sm:$0xf]
                  %568 = vst [vmem:[%s386 + $0x168] sm:$0xf] %v567
                  %v569 = vld [vmem:[%s385 + $0x2d4] sm:$0xf]
                  %570 = vst [vmem:[%s386 + $0x16c] sm:$0xf] %v569
                  %v571 = vld [vmem:[%s385 + $0x2d8] sm:$0xf]
                  %572 = vst [vmem:[%s386 + $0x170] sm:$0xf] %v571
                  %v573 = vld [vmem:[%s385 + $0x2dc] sm:$0xf]
                  %574 = vst [vmem:[%s386 + $0x174] sm:$0xf] %v573
                  %v575 = vld [vmem:[%s385 + $0x2e0] sm:$0xf]
                  %576 = vst [vmem:[%s386 + $0x178] sm:$0xf] %v575
                  %v577 = vld [vmem:[%s385 + $0x2e4] sm:$0xf]
                  %578 = vst [vmem:[%s386 + $0x17c] sm:$0xf] %v577
                  %v579 = vld [vmem:[%s385 + $0x2e8] sm:$0xf]
                  %580 = vst [vmem:[%s386 + $0x180] sm:$0xf] %v579
                  %v581 = vld [vmem:[%s385 + $0x2ec] sm:$0xf]
                  %582 = vst [vmem:[%s386 + $0x184] sm:$0xf] %v581
                  %v583 = vld [vmem:[%s385 + $0x2f0] sm:$0xf]
                  %584 = vst [vmem:[%s386 + $0x188] sm:$0xf] %v583
                  %v585 = vld [vmem:[%s385 + $0x2f4] sm:$0xf]
                  %586 = vst [vmem:[%s386 + $0x18c] sm:$0xf] %v585
                  %v587 = vld [vmem:[%s385 + $0x2f8] sm:$0xf]
                  %588 = vst [vmem:[%s386 + $0x190] sm:$0xf] %v587
                  %v589 = vld [vmem:[%s385 + $0x2fc] sm:$0xf]
                  %590 = vst [vmem:[%s386 + $0x194] sm:$0xf] %v589
                  %v591 = vld [vmem:[%s385 + $0x300] sm:$0xf]
                  %592 = vst [vmem:[%s386 + $0x198] sm:$0xf] %v591
                  %v593 = vld [vmem:[%s385 + $0x304] sm:$0xf]
                  %594 = vst [vmem:[%s386 + $0x19c] sm:$0xf] %v593
                  %v595 = vld [vmem:[%s385 + $0x308] sm:$0xf]
                  %596 = vst [vmem:[%s386 + $0x1a0] sm:$0xf] %v595
                  %v597 = vld [vmem:[%s385 + $0x30c] sm:$0xf]
                  %598 = vst [vmem:[%s386 + $0x1a4] sm:$0xf] %v597
                  %v599 = vld [vmem:[%s385 + $0x310] sm:$0xf]
                  %600 = vst [vmem:[%s386 + $0x1a8] sm:$0xf] %v599
                  %v601 = vld [vmem:[%s385 + $0x314] sm:$0xf]
                  %602 = vst [vmem:[%s386 + $0x1ac] sm:$0xf] %v601
                  %v603 = vld [vmem:[%s385 + $0x318] sm:$0xf]
                  %604 = vst [vmem:[%s386 + $0x1b0] sm:$0xf] %v603
                  %v605 = vld [vmem:[%s385 + $0x31c] sm:$0xf]
                  %606 = vst [vmem:[%s386 + $0x1b4] sm:$0xf] %v605
                  %v607 = vld [vmem:[%s385 + $0x320] sm:$0xf]
                  %608 = vst [vmem:[%s386 + $0x1b8] sm:$0xf] %v607
                  %v609 = vld [vmem:[%s385 + $0x324] sm:$0xf]
                  %610 = vst [vmem:[%s386 + $0x1bc] sm:$0xf] %v609
                  %v611 = vld [vmem:[%s385 + $0x328] sm:$0xf]
                  %612 = vst [vmem:[%s386 + $0x1c0] sm:$0xf] %v611
                  %v613 = vld [vmem:[%s385 + $0x32c] sm:$0xf]
                  %614 = vst [vmem:[%s386 + $0x1c4] sm:$0xf] %v613
                  %v615 = vld [vmem:[%s385 + $0x330] sm:$0xf]
                  %616 = vst [vmem:[%s386 + $0x1c8] sm:$0xf] %v615
                  %v617 = vld [vmem:[%s385 + $0x334] sm:$0xf]
                  %618 = vst [vmem:[%s386 + $0x1cc] sm:$0xf] %v617
                  %v619 = vld [vmem:[%s385 + $0x338] sm:$0xf]
                  %620 = vst [vmem:[%s386 + $0x1d0] sm:$0xf] %v619
                  %v621 = vld [vmem:[%s385 + $0x33c] sm:$0xf]
                  %622 = vst [vmem:[%s386 + $0x1d4] sm:$0xf] %v621
                  %v623 = vld [vmem:[%s385 + $0x340] sm:$0xf]
                  %624 = vst [vmem:[%s386 + $0x1d8] sm:$0xf] %v623
                  %v625 = vld [vmem:[%s385 + $0x344] sm:$0xf]
                  %626 = vst [vmem:[%s386 + $0x1dc] sm:$0xf] %v625
                $region59: #{small_conv_forward.4} parent=46 // loop_footer
                  %s384 = sadd.s32 1, %s380
                $region60: #{small_conv_forward.4} parent=46 // loop_footer_branch
                  %379 = sbr.rel target = $region56
                $region61: #{small_conv_forward.4} parent=46 // loop_exit
                  _
              $region47: #{small_conv_forward.4} parent=31 // pred_fallthru
                _
            $region32: #{small_conv_forward.4} parent=27 // pred_fallthru
              _
            // Predicated region
            $region33: #{small_conv_forward.4} parent=27 // pred_check
              _
            $region34: #{small_conv_forward.4} parent=27 // pred_check_branch
              %118 = sbr.rel (0) target = $region36
            $region35: #{small_conv_forward.4} parent=27 // pred_region
              loop: start=0, step=1, limit=1
              $region37: #{small_conv_forward.4} parent=35 // loop_pre_header
                _
              $region38: #{small_conv_forward.4} parent=35 // loop_header
                %s121 = sphi 0, %s125
                %p122 = scmp.ge.s32.totalorder %s121, 1
                %s126 = sphi %s112, %s112
                %s127 = sphi %s109, %s109
              $region39: #{small_conv_forward.4} parent=35 // loop_header_branch
                %124 = sbr.rel (%p122) target = $region43
              $region40: #{small_conv_forward.4} parent=35 // loop_body
                %v128 = vld [vmem:[%s126] sm:$0xf]
                %129 = vst [vmem:[%s127] sm:$0xf] %v128
                %v130 = vld [vmem:[%s126 + $0x4] sm:$0xf]
                %131 = vst [vmem:[%s127 + $0x4] sm:$0xf] %v130
                %v132 = vld [vmem:[%s126 + $0x8] sm:$0xf]
                %133 = vst [vmem:[%s127 + $0x8] sm:$0xf] %v132
                %v134 = vld [vmem:[%s126 + $0xc] sm:$0xf]
                %135 = vst [vmem:[%s127 + $0xc] sm:$0xf] %v134
                %v136 = vld [vmem:[%s126 + $0x10] sm:$0xf]
                %137 = vst [vmem:[%s127 + $0x10] sm:$0xf] %v136
                %v138 = vld [vmem:[%s126 + $0x14] sm:$0xf]
                %139 = vst [vmem:[%s127 + $0x14] sm:$0xf] %v138
                %v140 = vld [vmem:[%s126 + $0x18] sm:$0xf]
                %141 = vst [vmem:[%s127 + $0x18] sm:$0xf] %v140
                %v142 = vld [vmem:[%s126 + $0x1c] sm:$0xf]
                %143 = vst [vmem:[%s127 + $0x1c] sm:$0xf] %v142
                %v144 = vld [vmem:[%s126 + $0x20] sm:$0xf]
                %145 = vst [vmem:[%s127 + $0x20] sm:$0xf] %v144
                %v146 = vld [vmem:[%s126 + $0x24] sm:$0xf]
                %147 = vst [vmem:[%s127 + $0x24] sm:$0xf] %v146
                %v148 = vld [vmem:[%s126 + $0x28] sm:$0xf]
                %149 = vst [vmem:[%s127 + $0x28] sm:$0xf] %v148
                %v150 = vld [vmem:[%s126 + $0x2c] sm:$0xf]
                %151 = vst [vmem:[%s127 + $0x2c] sm:$0xf] %v150
                %v152 = vld [vmem:[%s126 + $0x30] sm:$0xf]
                %153 = vst [vmem:[%s127 + $0x30] sm:$0xf] %v152
                %v154 = vld [vmem:[%s126 + $0x34] sm:$0xf]
                %155 = vst [vmem:[%s127 + $0x34] sm:$0xf] %v154
                %v156 = vld [vmem:[%s126 + $0x38] sm:$0xf]
                %157 = vst [vmem:[%s127 + $0x38] sm:$0xf] %v156
                %v158 = vld [vmem:[%s126 + $0x3c] sm:$0xf]
                %159 = vst [vmem:[%s127 + $0x3c] sm:$0xf] %v158
                %v160 = vld [vmem:[%s126 + $0x40] sm:$0xf]
                %161 = vst [vmem:[%s127 + $0x40] sm:$0xf] %v160
                %v162 = vld [vmem:[%s126 + $0x44] sm:$0xf]
                %163 = vst [vmem:[%s127 + $0x44] sm:$0xf] %v162
                %v164 = vld [vmem:[%s126 + $0x48] sm:$0xf]
                %165 = vst [vmem:[%s127 + $0x48] sm:$0xf] %v164
                %v166 = vld [vmem:[%s126 + $0x4c] sm:$0xf]
                %167 = vst [vmem:[%s127 + $0x4c] sm:$0xf] %v166
                %v168 = vld [vmem:[%s126 + $0x50] sm:$0xf]
                %169 = vst [vmem:[%s127 + $0x50] sm:$0xf] %v168
                %v170 = vld [vmem:[%s126 + $0x54] sm:$0xf]
                %171 = vst [vmem:[%s127 + $0x54] sm:$0xf] %v170
                %v172 = vld [vmem:[%s126 + $0x58] sm:$0xf]
                %173 = vst [vmem:[%s127 + $0x58] sm:$0xf] %v172
                %v174 = vld [vmem:[%s126 + $0x5c] sm:$0xf]
                %175 = vst [vmem:[%s127 + $0x5c] sm:$0xf] %v174
                %v176 = vld [vmem:[%s126 + $0x60] sm:$0xf]
                %177 = vst [vmem:[%s127 + $0x60] sm:$0xf] %v176
                %v178 = vld [vmem:[%s126 + $0x64] sm:$0xf]
                %179 = vst [vmem:[%s127 + $0x64] sm:$0xf] %v178
                %v180 = vld [vmem:[%s126 + $0x68] sm:$0xf]
                %181 = vst [vmem:[%s127 + $0x68] sm:$0xf] %v180
                %v182 = vld [vmem:[%s126 + $0x6c] sm:$0xf]
                %183 = vst [vmem:[%s127 + $0x6c] sm:$0xf] %v182
                %v184 = vld [vmem:[%s126 + $0x70] sm:$0xf]
                %185 = vst [vmem:[%s127 + $0x70] sm:$0xf] %v184
                %v186 = vld [vmem:[%s126 + $0x74] sm:$0xf]
                %187 = vst [vmem:[%s127 + $0x74] sm:$0xf] %v186
                %v188 = vld [vmem:[%s126 + $0xf0] sm:$0xf]
                %189 = vst [vmem:[%s127 + $0x78] sm:$0xf] %v188
                %v190 = vld [vmem:[%s126 + $0xf4] sm:$0xf]
                %191 = vst [vmem:[%s127 + $0x7c] sm:$0xf] %v190
                %v192 = vld [vmem:[%s126 + $0xf8] sm:$0xf]
                %193 = vst [vmem:[%s127 + $0x80] sm:$0xf] %v192
                %v194 = vld [vmem:[%s126 + $0xfc] sm:$0xf]
                %195 = vst [vmem:[%s127 + $0x84] sm:$0xf] %v194
                %v196 = vld [vmem:[%s126 + $0x100] sm:$0xf]
                %197 = vst [vmem:[%s127 + $0x88] sm:$0xf] %v196
                %v198 = vld [vmem:[%s126 + $0x104] sm:$0xf]
                %199 = vst [vmem:[%s127 + $0x8c] sm:$0xf] %v198
                %v200 = vld [vmem:[%s126 + $0x108] sm:$0xf]
                %201 = vst [vmem:[%s127 + $0x90] sm:$0xf] %v200
                %v202 = vld [vmem:[%s126 + $0x10c] sm:$0xf]
                %203 = vst [vmem:[%s127 + $0x94] sm:$0xf] %v202
                %v204 = vld [vmem:[%s126 + $0x110] sm:$0xf]
                %205 = vst [vmem:[%s127 + $0x98] sm:$0xf] %v204
                %v206 = vld [vmem:[%s126 + $0x114] sm:$0xf]
                %207 = vst [vmem:[%s127 + $0x9c] sm:$0xf] %v206
                %v208 = vld [vmem:[%s126 + $0x118] sm:$0xf]
                %209 = vst [vmem:[%s127 + $0xa0] sm:$0xf] %v208
                %v210 = vld [vmem:[%s126 + $0x11c] sm:$0xf]
                %211 = vst [vmem:[%s127 + $0xa4] sm:$0xf] %v210
                %v212 = vld [vmem:[%s126 + $0x120] sm:$0xf]
                %213 = vst [vmem:[%s127 + $0xa8] sm:$0xf] %v212
                %v214 = vld [vmem:[%s126 + $0x124] sm:$0xf]
                %215 = vst [vmem:[%s127 + $0xac] sm:$0xf] %v214
                %v216 = vld [vmem:[%s126 + $0x128] sm:$0xf]
                %217 = vst [vmem:[%s127 + $0xb0] sm:$0xf] %v216
                %v218 = vld [vmem:[%s126 + $0x12c] sm:$0xf]
                %219 = vst [vmem:[%s127 + $0xb4] sm:$0xf] %v218
                %v220 = vld [vmem:[%s126 + $0x130] sm:$0xf]
                %221 = vst [vmem:[%s127 + $0xb8] sm:$0xf] %v220
                %v222 = vld [vmem:[%s126 + $0x134] sm:$0xf]
                %223 = vst [vmem:[%s127 + $0xbc] sm:$0xf] %v222
                %v224 = vld [vmem:[%s126 + $0x138] sm:$0xf]
                %225 = vst [vmem:[%s127 + $0xc0] sm:$0xf] %v224
                %v226 = vld [vmem:[%s126 + $0x13c] sm:$0xf]
                %227 = vst [vmem:[%s127 + $0xc4] sm:$0xf] %v226
                %v228 = vld [vmem:[%s126 + $0x140] sm:$0xf]
                %229 = vst [vmem:[%s127 + $0xc8] sm:$0xf] %v228
                %v230 = vld [vmem:[%s126 + $0x144] sm:$0xf]
                %231 = vst [vmem:[%s127 + $0xcc] sm:$0xf] %v230
                %v232 = vld [vmem:[%s126 + $0x148] sm:$0xf]
                %233 = vst [vmem:[%s127 + $0xd0] sm:$0xf] %v232
                %v234 = vld [vmem:[%s126 + $0x14c] sm:$0xf]
                %235 = vst [vmem:[%s127 + $0xd4] sm:$0xf] %v234
                %v236 = vld [vmem:[%s126 + $0x150] sm:$0xf]
                %237 = vst [vmem:[%s127 + $0xd8] sm:$0xf] %v236
                %v238 = vld [vmem:[%s126 + $0x154] sm:$0xf]
                %239 = vst [vmem:[%s127 + $0xdc] sm:$0xf] %v238
                %v240 = vld [vmem:[%s126 + $0x158] sm:$0xf]
                %241 = vst [vmem:[%s127 + $0xe0] sm:$0xf] %v240
                %v242 = vld [vmem:[%s126 + $0x15c] sm:$0xf]
                %243 = vst [vmem:[%s127 + $0xe4] sm:$0xf] %v242
                %v244 = vld [vmem:[%s126 + $0x160] sm:$0xf]
                %245 = vst [vmem:[%s127 + $0xe8] sm:$0xf] %v244
                %v246 = vld [vmem:[%s126 + $0x164] sm:$0xf]
                %247 = vst [vmem:[%s127 + $0xec] sm:$0xf] %v246
                %v248 = vld [vmem:[%s126 + $0x1e0] sm:$0xf]
                %249 = vst [vmem:[%s127 + $0xf0] sm:$0xf] %v248
                %v250 = vld [vmem:[%s126 + $0x1e4] sm:$0xf]
                %251 = vst [vmem:[%s127 + $0xf4] sm:$0xf] %v250
                %v252 = vld [vmem:[%s126 + $0x1e8] sm:$0xf]
                %253 = vst [vmem:[%s127 + $0xf8] sm:$0xf] %v252
                %v254 = vld [vmem:[%s126 + $0x1ec] sm:$0xf]
                %255 = vst [vmem:[%s127 + $0xfc] sm:$0xf] %v254
                %v256 = vld [vmem:[%s126 + $0x1f0] sm:$0xf]
                %257 = vst [vmem:[%s127 + $0x100] sm:$0xf] %v256
                %v258 = vld [vmem:[%s126 + $0x1f4] sm:$0xf]
                %259 = vst [vmem:[%s127 + $0x104] sm:$0xf] %v258
                %v260 = vld [vmem:[%s126 + $0x1f8] sm:$0xf]
                %261 = vst [vmem:[%s127 + $0x108] sm:$0xf] %v260
                %v262 = vld [vmem:[%s126 + $0x1fc] sm:$0xf]
                %263 = vst [vmem:[%s127 + $0x10c] sm:$0xf] %v262
                %v264 = vld [vmem:[%s126 + $0x200] sm:$0xf]
                %265 = vst [vmem:[%s127 + $0x110] sm:$0xf] %v264
                %v266 = vld [vmem:[%s126 + $0x204] sm:$0xf]
                %267 = vst [vmem:[%s127 + $0x114] sm:$0xf] %v266
                %v268 = vld [vmem:[%s126 + $0x208] sm:$0xf]
                %269 = vst [vmem:[%s127 + $0x118] sm:$0xf] %v268
                %v270 = vld [vmem:[%s126 + $0x20c] sm:$0xf]
                %271 = vst [vmem:[%s127 + $0x11c] sm:$0xf] %v270
                %v272 = vld [vmem:[%s126 + $0x210] sm:$0xf]
                %273 = vst [vmem:[%s127 + $0x120] sm:$0xf] %v272
                %v274 = vld [vmem:[%s126 + $0x214] sm:$0xf]
                %275 = vst [vmem:[%s127 + $0x124] sm:$0xf] %v274
                %v276 = vld [vmem:[%s126 + $0x218] sm:$0xf]
                %277 = vst [vmem:[%s127 + $0x128] sm:$0xf] %v276
                %v278 = vld [vmem:[%s126 + $0x21c] sm:$0xf]
                %279 = vst [vmem:[%s127 + $0x12c] sm:$0xf] %v278
                %v280 = vld [vmem:[%s126 + $0x220] sm:$0xf]
                %281 = vst [vmem:[%s127 + $0x130] sm:$0xf] %v280
                %v282 = vld [vmem:[%s126 + $0x224] sm:$0xf]
                %283 = vst [vmem:[%s127 + $0x134] sm:$0xf] %v282
                %v284 = vld [vmem:[%s126 + $0x228] sm:$0xf]
                %285 = vst [vmem:[%s127 + $0x138] sm:$0xf] %v284
                %v286 = vld [vmem:[%s126 + $0x22c] sm:$0xf]
                %287 = vst [vmem:[%s127 + $0x13c] sm:$0xf] %v286
                %v288 = vld [vmem:[%s126 + $0x230] sm:$0xf]
                %289 = vst [vmem:[%s127 + $0x140] sm:$0xf] %v288
                %v290 = vld [vmem:[%s126 + $0x234] sm:$0xf]
                %291 = vst [vmem:[%s127 + $0x144] sm:$0xf] %v290
                %v292 = vld [vmem:[%s126 + $0x238] sm:$0xf]
                %293 = vst [vmem:[%s127 + $0x148] sm:$0xf] %v292
                %v294 = vld [vmem:[%s126 + $0x23c] sm:$0xf]
                %295 = vst [vmem:[%s127 + $0x14c] sm:$0xf] %v294
                %v296 = vld [vmem:[%s126 + $0x240] sm:$0xf]
                %297 = vst [vmem:[%s127 + $0x150] sm:$0xf] %v296
                %v298 = vld [vmem:[%s126 + $0x244] sm:$0xf]
                %299 = vst [vmem:[%s127 + $0x154] sm:$0xf] %v298
                %v300 = vld [vmem:[%s126 + $0x248] sm:$0xf]
                %301 = vst [vmem:[%s127 + $0x158] sm:$0xf] %v300
                %v302 = vld [vmem:[%s126 + $0x24c] sm:$0xf]
                %303 = vst [vmem:[%s127 + $0x15c] sm:$0xf] %v302
                %v304 = vld [vmem:[%s126 + $0x250] sm:$0xf]
                %305 = vst [vmem:[%s127 + $0x160] sm:$0xf] %v304
                %v306 = vld [vmem:[%s126 + $0x254] sm:$0xf]
                %307 = vst [vmem:[%s127 + $0x164] sm:$0xf] %v306
                %v308 = vld [vmem:[%s126 + $0x2d0] sm:$0xf]
                %309 = vst [vmem:[%s127 + $0x168] sm:$0xf] %v308
                %v310 = vld [vmem:[%s126 + $0x2d4] sm:$0xf]
                %311 = vst [vmem:[%s127 + $0x16c] sm:$0xf] %v310
                %v312 = vld [vmem:[%s126 + $0x2d8] sm:$0xf]
                %313 = vst [vmem:[%s127 + $0x170] sm:$0xf] %v312
                %v314 = vld [vmem:[%s126 + $0x2dc] sm:$0xf]
                %315 = vst [vmem:[%s127 + $0x174] sm:$0xf] %v314
                %v316 = vld [vmem:[%s126 + $0x2e0] sm:$0xf]
                %317 = vst [vmem:[%s127 + $0x178] sm:$0xf] %v316
                %v318 = vld [vmem:[%s126 + $0x2e4] sm:$0xf]
                %319 = vst [vmem:[%s127 + $0x17c] sm:$0xf] %v318
                %v320 = vld [vmem:[%s126 + $0x2e8] sm:$0xf]
                %321 = vst [vmem:[%s127 + $0x180] sm:$0xf] %v320
                %v322 = vld [vmem:[%s126 + $0x2ec] sm:$0xf]
                %323 = vst [vmem:[%s127 + $0x184] sm:$0xf] %v322
                %v324 = vld [vmem:[%s126 + $0x2f0] sm:$0xf]
                %325 = vst [vmem:[%s127 + $0x188] sm:$0xf] %v324
                %v326 = vld [vmem:[%s126 + $0x2f4] sm:$0xf]
                %327 = vst [vmem:[%s127 + $0x18c] sm:$0xf] %v326
                %v328 = vld [vmem:[%s126 + $0x2f8] sm:$0xf]
                %329 = vst [vmem:[%s127 + $0x190] sm:$0xf] %v328
                %v330 = vld [vmem:[%s126 + $0x2fc] sm:$0xf]
                %331 = vst [vmem:[%s127 + $0x194] sm:$0xf] %v330
                %v332 = vld [vmem:[%s126 + $0x300] sm:$0xf]
                %333 = vst [vmem:[%s127 + $0x198] sm:$0xf] %v332
                %v334 = vld [vmem:[%s126 + $0x304] sm:$0xf]
                %335 = vst [vmem:[%s127 + $0x19c] sm:$0xf] %v334
                %v336 = vld [vmem:[%s126 + $0x308] sm:$0xf]
                %337 = vst [vmem:[%s127 + $0x1a0] sm:$0xf] %v336
                %v338 = vld [vmem:[%s126 + $0x30c] sm:$0xf]
                %339 = vst [vmem:[%s127 + $0x1a4] sm:$0xf] %v338
                %v340 = vld [vmem:[%s126 + $0x310] sm:$0xf]
                %341 = vst [vmem:[%s127 + $0x1a8] sm:$0xf] %v340
                %v342 = vld [vmem:[%s126 + $0x314] sm:$0xf]
                %343 = vst [vmem:[%s127 + $0x1ac] sm:$0xf] %v342
                %v344 = vld [vmem:[%s126 + $0x318] sm:$0xf]
                %345 = vst [vmem:[%s127 + $0x1b0] sm:$0xf] %v344
                %v346 = vld [vmem:[%s126 + $0x31c] sm:$0xf]
                %347 = vst [vmem:[%s127 + $0x1b4] sm:$0xf] %v346
                %v348 = vld [vmem:[%s126 + $0x320] sm:$0xf]
                %349 = vst [vmem:[%s127 + $0x1b8] sm:$0xf] %v348
                %v350 = vld [vmem:[%s126 + $0x324] sm:$0xf]
                %351 = vst [vmem:[%s127 + $0x1bc] sm:$0xf] %v350
                %v352 = vld [vmem:[%s126 + $0x328] sm:$0xf]
                %353 = vst [vmem:[%s127 + $0x1c0] sm:$0xf] %v352
                %v354 = vld [vmem:[%s126 + $0x32c] sm:$0xf]
                %355 = vst [vmem:[%s127 + $0x1c4] sm:$0xf] %v354
                %v356 = vld [vmem:[%s126 + $0x330] sm:$0xf]
                %357 = vst [vmem:[%s127 + $0x1c8] sm:$0xf] %v356
                %v358 = vld [vmem:[%s126 + $0x334] sm:$0xf]
                %359 = vst [vmem:[%s127 + $0x1cc] sm:$0xf] %v358
                %v360 = vld [vmem:[%s126 + $0x338] sm:$0xf]
                %361 = vst [vmem:[%s127 + $0x1d0] sm:$0xf] %v360
                %v362 = vld [vmem:[%s126 + $0x33c] sm:$0xf]
                %363 = vst [vmem:[%s127 + $0x1d4] sm:$0xf] %v362
                %v364 = vld [vmem:[%s126 + $0x340] sm:$0xf]
                %365 = vst [vmem:[%s127 + $0x1d8] sm:$0xf] %v364
                %v366 = vld [vmem:[%s126 + $0x344] sm:$0xf]
                %367 = vst [vmem:[%s127 + $0x1dc] sm:$0xf] %v366
              $region41: #{small_conv_forward.4} parent=35 // loop_footer
                %s125 = sadd.s32 1, %s121
              $region42: #{small_conv_forward.4} parent=35 // loop_footer_branch
                %120 = sbr.rel target = $region38
              $region43: #{small_conv_forward.4} parent=35 // loop_exit
                _
            $region36: #{small_conv_forward.4} parent=27 // pred_fallthru
              _
          $region28: #{small_conv_forward.4} parent=23 // pred_fallthru
            _
          %627 = vnop
        $region24: #{small_conv_forward.4} parent=19 // pred_fallthru
          _
      $region20: #{small_conv_forward.4} parent=5 // pred_fallthru
        _
      %p628 = scmp.le.s32.totalorder 1, %s8
      %p629 = scmp.lt.s32.totalorder %s8, 3
      %p630 = pnand %p628, %p629
      %p631 = pneg %p630
      // Predicated region
      $region62: #{small_conv_forward.4} parent=5 // pred_check
        _
      $region63: #{small_conv_forward.4} parent=5 // pred_check_branch
        %633 = sbr.rel (%p630) target = $region65
      $region64: #{small_conv_forward.4} parent=5 // pred_region
        %s634 = ssub.s32 %s8, 1
        %s635 = sand.u32 %s21, 1
        %s636 = sand.u32 %s21, 1
        %s637 = smul.addr %s636, 480
        %s638 = scalar_lea.vmem [#allocation2], %s637
        // Predicated region
        $region66: #{small_conv_forward.4} parent=64 // pred_check
          %p639 = pneg %p34
        $region67: #{small_conv_forward.4} parent=64 // pred_check_branch
          %641 = sbr.rel (%p639) target = $region69
        $region68: #{small_conv_forward.4} parent=64 // pred_region
          _
        $region69: #{small_conv_forward.4} parent=64 // pred_fallthru
          _
        %s642 = sand.u32 %s21, 1
        %s643 = sand.u32 %s21, 1
        %s644 = smul.addr %s643, 480
        %s645 = scalar_lea.vmem [#allocation2], %s644
        %p646 = pneg %p34
        %p647 = pneg %p31
        %p648 = pneg %p55
        %p649 = pneg %p52
        %p650 = pneg %p81
        %p651 = pneg %p78
        %s652 = smul.u32 30, %s13
        %p653 = scmp.lt.s32.totalorder %s652, 59
        %s654 = scalar_select %p653, %s652, 59
        %s655 = smul.addr %s654, 4
        %s656 = scalar_lea.vmem %s2, %s655
        %s657 = smul.u32 30, %s13
        %s658 = smul.u32 30, %s13
        %p659 = scmp.lt.s32.totalorder %s658, 59
        %s660 = scalar_select %p659, %s658, 59
        %s661 = smul.addr %s660, 4
        %s662 = scalar_lea.vmem %s2, %s661
        %s663 = smul.u32 30, %s13
        %v665 = vld [vmem:[%s1] sm:$0xf]
        %v666 = vld [vmem:[%s1 + $0x4] sm:$0xf]
        %v667 = vld [vmem:[%s1 + $0x8] sm:$0xf]
        %v668 = vld [vmem:[%s1 + $0xc] sm:$0x3]
        %v669 = vld [vmem:[%s638] sm:$0xf]
        %v670 = vld [vmem:[%s638 + $0x4] sm:$0xf]
        %v671 = vld [vmem:[%s638 + $0x8] sm:$0xf]
        %v672 = vld [vmem:[%s638 + $0xc] sm:$0xf]
        %v673 = vld [vmem:[%s638 + $0x10] sm:$0xf]
        %v674 = vld [vmem:[%s638 + $0x14] sm:$0xf]
        %v675 = vld [vmem:[%s638 + $0x18] sm:$0xf]
        %v676 = vld [vmem:[%s638 + $0x1c] sm:$0xf]
        %v677 = vld [vmem:[%s638 + $0x20] sm:$0xf]
        %v678 = vld [vmem:[%s638 + $0x24] sm:$0xf]
        %v679 = vld [vmem:[%s638 + $0x28] sm:$0xf]
        %v680 = vld [vmem:[%s638 + $0x2c] sm:$0xf]
        %v681 = vld [vmem:[%s638 + $0x30] sm:$0xf]
        %v682 = vld [vmem:[%s638 + $0x34] sm:$0xf]
        %v683 = vld [vmem:[%s638 + $0x38] sm:$0xf]
        %v684 = vld [vmem:[%s638 + $0x3c] sm:$0xf]
        %v685 = vld [vmem:[%s638 + $0x40] sm:$0xf]
        %v686 = vld [vmem:[%s638 + $0x44] sm:$0xf]
        %v687 = vld [vmem:[%s638 + $0x48] sm:$0xf]
        %v688 = vld [vmem:[%s638 + $0x4c] sm:$0xf]
        %v689 = vld [vmem:[%s638 + $0x50] sm:$0xf]
        %v690 = vld [vmem:[%s638 + $0x54] sm:$0xf]
        %v691 = vld [vmem:[%s638 + $0x58] sm:$0xf]
        %v692 = vld [vmem:[%s638 + $0x5c] sm:$0xf]
        %v693 = vld [vmem:[%s638 + $0x60] sm:$0xf]
        %v694 = vld [vmem:[%s638 + $0x64] sm:$0xf]
        %v695 = vld [vmem:[%s638 + $0x68] sm:$0xf]
        %v696 = vld [vmem:[%s638 + $0x6c] sm:$0xf]
        %v697 = vld [vmem:[%s638 + $0x70] sm:$0xf]
        %v698 = vld [vmem:[%s638 + $0x74] sm:$0xf]
        %v729 = vunpack.c.l.b16 %v669
        %v730 = vunpack.c.l.b16 %v670
        %v731 = vunpack.c.l.b16 %v671
        %v732 = vunpack.c.l.b16 %v672
        %v733 = vunpack.c.l.b16 %v673
        %v734 = vunpack.c.l.b16 %v674
        %v735 = vunpack.c.l.b16 %v675
        %v736 = vunpack.c.l.b16 %v676
        %v737 = vunpack.c.l.b16 %v677
        %v738 = vunpack.c.l.b16 %v678
        %v739 = vunpack.c.l.b16 %v679
        %v740 = vunpack.c.l.b16 %v680
        %v741 = vunpack.c.l.b16 %v681
        %v742 = vunpack.c.l.b16 %v682
        %v743 = vunpack.c.l.b16 %v683
        %v744 = vunpack.c.l.b16 %v684
        %v745 = vunpack.c.l.b16 %v685
        %v746 = vunpack.c.l.b16 %v686
        %v747 = vunpack.c.l.b16 %v687
        %v748 = vunpack.c.l.b16 %v688
        %v749 = vunpack.c.l.b16 %v689
        %v750 = vunpack.c.l.b16 %v690
        %v751 = vunpack.c.l.b16 %v691
        %v752 = vunpack.c.l.b16 %v692
        %v753 = vunpack.c.l.b16 %v693
        %v754 = vunpack.c.l.b16 %v694
        %v755 = vunpack.c.l.b16 %v695
        %v756 = vunpack.c.l.b16 %v696
        %v757 = vunpack.c.l.b16 %v697
        %v758 = vunpack.c.l.b16 %v698
        %v759 = vpack.c.b16 %v730, %v729
        %v760 = vpack.c.b16 %v732, %v731
        %v761 = vpack.c.b16 %v734, %v733
        %v762 = vpack.c.b16 %v736, %v735
        %v763 = vpack.c.b16 %v738, %v737
        %v764 = vpack.c.b16 %v740, %v739
        %v765 = vpack.c.b16 %v742, %v741
        %v766 = vpack.c.b16 %v744, %v743
        %v767 = vpack.c.b16 %v746, %v745
        %v768 = vpack.c.b16 %v748, %v747
        %v769 = vpack.c.b16 %v750, %v749
        %v770 = vpack.c.b16 %v752, %v751
        %v771 = vpack.c.b16 %v754, %v753
        %v772 = vpack.c.b16 %v756, %v755
        %v773 = vpack.c.b16 %v758, %v757
        %v778 = vunpack.c.l.b16 %v665
        %v779 = vunpack.c.l.b16 %v666
        %v780 = vunpack.c.l.b16 %v667
        %v781 = vunpack.c.l.b16 %v668
        %v782 = vpack.c.b16 %v779, %v778
        %v783 = vpack.c.b16 %v781, %v780
        %vm785 = vcmask 220160
        %v787 = vsel %vm785, %v759, 0
        %v790 = vsel %vm785, %v760, 0
        %v793 = vsel %vm785, %v761, 0
        %v796 = vsel %vm785, %v762, 0
        %v799 = vsel %vm785, %v763, 0
        %v802 = vsel %vm785, %v764, 0
        %v805 = vsel %vm785, %v765, 0
        %v808 = vsel %vm785, %v766, 0
        %v811 = vsel %vm785, %v767, 0
        %v814 = vsel %vm785, %v768, 0
        %v817 = vsel %vm785, %v769, 0
        %v820 = vsel %vm785, %v770, 0
        %v823 = vsel %vm785, %v771, 0
        %v826 = vsel %vm785, %v772, 0
        %v829 = vsel %vm785, %v773, 0
        %vm831 = vcmask 1044480
        %vm832 = vcmask 1045504
        %v833 = vsel %vm831, 4294967295, 65535
        %v834 = vsel %vm832, %v833, 0
        %v836 = vand.u32 %v783, %v834
        %838 = vmatprep.subr.bf16.mxu0 0
        %839 = vmatpush1.bf16.msra.mxu0 %v782
        %840 = vmatprep.subr.bf16.mxu0 0
        %841 = vmatpush1.bf16.msra.mxu0 %v836
        %842 = vmatprep.subr.bf16.mxu0 0
        %843 = vmatpush1.bf16.msra.mxu0 0
        %844 = vmatprep.subr.bf16.mxu0 0
        %845 = vmatpush1.bf16.msra.mxu0 0
        %846 = vmatprep.subr.bf16.mxu0 0
        %847 = vmatpush1.bf16.msra.mxu0 0
        %848 = vmatprep.subr.bf16.mxu0 0
        %849 = vmatpush1.bf16.msra.mxu0 0
        %850 = vmatprep.subr.bf16.mxu0 0
        %851 = vmatpush1.bf16.msra.mxu0 0
        %852 = vmatprep.subr.bf16.mxu0 0
        %853 = vmatpush1.bf16.msra.mxu0 0
        %854 = vmatprep.subr.bf16.mxu0 0
        %855 = vmatpush1.bf16.msra.mxu0 0
        %856 = vmatprep.subr.bf16.mxu0 0
        %857 = vmatpush1.bf16.msra.mxu0 0
        %858 = vmatprep.subr.bf16.mxu0 0
        %859 = vmatpush1.bf16.msra.mxu0 0
        %860 = vmatprep.subr.bf16.mxu0 0
        %861 = vmatpush1.bf16.msra.mxu0 0
        %862 = vmatprep.subr.bf16.mxu0 0
        %863 = vmatpush1.bf16.msra.mxu0 0
        %864 = vmatprep.subr.bf16.mxu0 0
        %865 = vmatpush1.bf16.msra.mxu0 0
        %866 = vmatprep.subr.bf16.mxu0 0
        %867 = vmatpush1.bf16.msra.mxu0 0
        %868 = vmatprep.subr.bf16.mxu0 0
        %869 = vmatpush1.bf16.msra.mxu0 0
        %870 = vmatprep.mubr.bf16.mxu0 0
        %871 = vmatmul.mubr.bf16.gmra.mrb[0].mxu0 %v787
        %v872 = vpop.f32.mrb[0].mxu0
        %v873 = vadd.f32 0.0, %v872
        %v874 = vpop.f32.mrb[0].mxu0
        %v875 = vpop.f32.mrb[0].mxu0
        %v876 = vadd.f32 0.0, %v875
        %v877 = vpop.f32.mrb[0].mxu0
        %878 = vmatprep.mubr.bf16.mxu0 0
        %879 = vmatmul.mubr.bf16.gmra.mrb[0].mxu0 %v790
        %v880 = vpop.f32.mrb[0].mxu0
        %v881 = vadd.f32 0.0, %v880
        %v882 = vpop.f32.mrb[0].mxu0
        %v883 = vpop.f32.mrb[0].mxu0
        %v884 = vadd.f32 0.0, %v883
        %v885 = vpop.f32.mrb[0].mxu0
        %886 = vmatprep.mubr.bf16.mxu0 0
        %887 = vmatmul.mubr.bf16.gmra.mrb[0].mxu0 %v793
        %v888 = vpop.f32.mrb[0].mxu0
        %v889 = vadd.f32 0.0, %v888
        %v890 = vpop.f32.mrb[0].mxu0
        %v891 = vpop.f32.mrb[0].mxu0
        %v892 = vadd.f32 0.0, %v891
        %v893 = vpop.f32.mrb[0].mxu0
        %894 = vmatprep.mubr.bf16.mxu0 0
        %895 = vmatmul.mubr.bf16.gmra.mrb[0].mxu0 %v796
        %v896 = vpop.f32.mrb[0].mxu0
        %v897 = vadd.f32 0.0, %v896
        %v898 = vpop.f32.mrb[0].mxu0
        %v899 = vpop.f32.mrb[0].mxu0
        %v900 = vadd.f32 0.0, %v899
        %v901 = vpop.f32.mrb[0].mxu0
        %902 = vmatprep.mubr.bf16.mxu0 0
        %903 = vmatmul.mubr.bf16.gmra.mrb[0].mxu0 %v799
        %v904 = vpop.f32.mrb[0].mxu0
        %v905 = vadd.f32 0.0, %v904
        %v906 = vpop.f32.mrb[0].mxu0
        %v907 = vpop.f32.mrb[0].mxu0
        %v908 = vadd.f32 0.0, %v907
        %v909 = vpop.f32.mrb[0].mxu0
        %910 = vmatprep.mubr.bf16.mxu0 0
        %911 = vmatmul.mubr.bf16.gmra.mrb[0].mxu0 %v802
        %v912 = vpop.f32.mrb[0].mxu0
        %v913 = vadd.f32 0.0, %v912
        %v914 = vpop.f32.mrb[0].mxu0
        %v915 = vpop.f32.mrb[0].mxu0
        %v916 = vadd.f32 0.0, %v915
        %v917 = vpop.f32.mrb[0].mxu0
        %918 = vmatprep.mubr.bf16.mxu0 0
        %919 = vmatmul.mubr.bf16.gmra.mrb[0].mxu0 %v805
        %v920 = vpop.f32.mrb[0].mxu0
        %v921 = vadd.f32 0.0, %v920
        %v922 = vpop.f32.mrb[0].mxu0
        %v923 = vpop.f32.mrb[0].mxu0
        %v924 = vadd.f32 0.0, %v923
        %v925 = vpop.f32.mrb[0].mxu0
        %926 = vmatprep.mubr.bf16.mxu0 0
        %927 = vmatmul.mubr.bf16.gmra.mrb[0].mxu0 %v808
        %v928 = vpop.f32.mrb[0].mxu0
        %v929 = vadd.f32 0.0, %v928
        %v930 = vpop.f32.mrb[0].mxu0
        %v931 = vpop.f32.mrb[0].mxu0
        %v932 = vadd.f32 0.0, %v931
        %v933 = vpop.f32.mrb[0].mxu0
        %934 = vmatprep.mubr.bf16.mxu0 0
        %935 = vmatmul.mubr.bf16.gmra.mrb[0].mxu0 %v811
        %v936 = vpop.f32.mrb[0].mxu0
        %v937 = vadd.f32 0.0, %v936
        %v938 = vpop.f32.mrb[0].mxu0
        %v939 = vpop.f32.mrb[0].mxu0
        %v940 = vadd.f32 0.0, %v939
        %v941 = vpop.f32.mrb[0].mxu0
        %942 = vmatprep.mubr.bf16.mxu0 0
        %943 = vmatmul.mubr.bf16.gmra.mrb[0].mxu0 %v814
        %v944 = vpop.f32.mrb[0].mxu0
        %v945 = vadd.f32 0.0, %v944
        %v946 = vpop.f32.mrb[0].mxu0
        %v947 = vpop.f32.mrb[0].mxu0
        %v948 = vadd.f32 0.0, %v947
        %v949 = vpop.f32.mrb[0].mxu0
        %950 = vmatprep.mubr.bf16.mxu0 0
        %951 = vmatmul.mubr.bf16.gmra.mrb[0].mxu0 %v817
        %v952 = vpop.f32.mrb[0].mxu0
        %v953 = vadd.f32 0.0, %v952
        %v954 = vpop.f32.mrb[0].mxu0
        %v955 = vpop.f32.mrb[0].mxu0
        %v956 = vadd.f32 0.0, %v955
        %v957 = vpop.f32.mrb[0].mxu0
        %958 = vmatprep.mubr.bf16.mxu0 0
        %959 = vmatmul.mubr.bf16.gmra.mrb[0].mxu0 %v820
        %v960 = vpop.f32.mrb[0].mxu0
        %v961 = vadd.f32 0.0, %v960
        %v962 = vpop.f32.mrb[0].mxu0
        %v963 = vpop.f32.mrb[0].mxu0
        %v964 = vadd.f32 0.0, %v963
        %v965 = vpop.f32.mrb[0].mxu0
        %966 = vmatprep.mubr.bf16.mxu0 0
        %967 = vmatmul.mubr.bf16.gmra.mrb[0].mxu0 %v823
        %v968 = vpop.f32.mrb[0].mxu0
        %v969 = vadd.f32 0.0, %v968
        %v970 = vpop.f32.mrb[0].mxu0
        %v971 = vpop.f32.mrb[0].mxu0
        %v972 = vadd.f32 0.0, %v971
        %v973 = vpop.f32.mrb[0].mxu0
        %974 = vmatprep.mubr.bf16.mxu0 0
        %975 = vmatmul.mubr.bf16.gmra.mrb[0].mxu0 %v826
        %v976 = vpop.f32.mrb[0].mxu0
        %v977 = vadd.f32 0.0, %v976
        %v978 = vpop.f32.mrb[0].mxu0
        %v979 = vpop.f32.mrb[0].mxu0
        %v980 = vadd.f32 0.0, %v979
        %v981 = vpop.f32.mrb[0].mxu0
        %982 = vmatprep.mubr.bf16.mxu0 0
        %983 = vmatmul.mubr.bf16.gmra.mrb[0].mxu0 %v829
        %v984 = vpop.f32.mrb[0].mxu0
        %v985 = vadd.f32 0.0, %v984
        %v986 = vpop.f32.mrb[0].mxu0
        %v987 = vpop.f32.mrb[0].mxu0
        %v988 = vadd.f32 0.0, %v987
        %v989 = vpop.f32.mrb[0].mxu0
        %990 = vdwg.mxu0
        %v991 = vmax.f32 %v873, 0.0
        %v992 = vmax.f32 %v876, 0.0
        %v993 = vmax.f32 %v881, 0.0
        %v994 = vmax.f32 %v884, 0.0
        %v995 = vmax.f32 %v889, 0.0
        %v996 = vmax.f32 %v892, 0.0
        %v997 = vmax.f32 %v897, 0.0
        %v998 = vmax.f32 %v900, 0.0
        %v999 = vmax.f32 %v905, 0.0
        %v1000 = vmax.f32 %v908, 0.0
        %v1001 = vmax.f32 %v913, 0.0
        %v1002 = vmax.f32 %v916, 0.0
        %v1003 = vmax.f32 %v921, 0.0
        %v1004 = vmax.f32 %v924, 0.0
        %v1005 = vmax.f32 %v929, 0.0
        %v1006 = vmax.f32 %v932, 0.0
        %v1007 = vmax.f32 %v937, 0.0
        %v1008 = vmax.f32 %v940, 0.0
        %v1009 = vmax.f32 %v945, 0.0
        %v1010 = vmax.f32 %v948, 0.0
        %v1011 = vmax.f32 %v953, 0.0
        %v1012 = vmax.f32 %v956, 0.0
        %v1013 = vmax.f32 %v961, 0.0
        %v1014 = vmax.f32 %v964, 0.0
        %v1015 = vmax.f32 %v969, 0.0
        %v1016 = vmax.f32 %v972, 0.0
        %v1017 = vmax.f32 %v977, 0.0
        %v1018 = vmax.f32 %v980, 0.0
        %v1019 = vmax.f32 %v985, 0.0
        %v1020 = vmax.f32 %v988, 0.0
        %s1021 = scalar_lea.vmem %s638, 120 [#allocation2]
        %v1022 = vld [vmem:[%s1021] sm:$0xf]
        %v1023 = vld [vmem:[%s1021 + $0x4] sm:$0xf]
        %v1024 = vld [vmem:[%s1021 + $0x8] sm:$0xf]
        %v1025 = vld [vmem:[%s1021 + $0xc] sm:$0xf]
        %v1026 = vld [vmem:[%s1021 + $0x10] sm:$0xf]
        %v1027 = vld [vmem:[%s1021 + $0x14] sm:$0xf]
        %v1028 = vld [vmem:[%s1021 + $0x18] sm:$0xf]
        %v1029 = vld [vmem:[%s1021 + $0x1c] sm:$0xf]
        %v1030 = vld [vmem:[%s1021 + $0x20] sm:$0xf]
        %v1031 = vld [vmem:[%s1021 + $0x24] sm:$0xf]
        %v1032 = vld [vmem:[%s1021 + $0x28] sm:$0xf]
        %v1033 = vld [vmem:[%s1021 + $0x2c] sm:$0xf]
        %v1034 = vld [vmem:[%s1021 + $0x30] sm:$0xf]
        %v1035 = vld [vmem:[%s1021 + $0x34] sm:$0xf]
        %v1036 = vld [vmem:[%s1021 + $0x38] sm:$0xf]
        %v1037 = vld [vmem:[%s1021 + $0x3c] sm:$0xf]
        %v1038 = vld [vmem:[%s1021 + $0x40] sm:$0xf]
        %v1039 = vld [vmem:[%s1021 + $0x44] sm:$0xf]
        %v1040 = vld [vmem:[%s1021 + $0x48] sm:$0xf]
        %v1041 = vld [vmem:[%s1021 + $0x4c] sm:$0xf]
        %v1042 = vld [vmem:[%s1021 + $0x50] sm:$0xf]
        %v1043 = vld [vmem:[%s1021 + $0x54] sm:$0xf]
        %v1044 = vld [vmem:[%s1021 + $0x58] sm:$0xf]
        %v1045 = vld [vmem:[%s1021 + $0x5c] sm:$0xf]
        %v1046 = vld [vmem:[%s1021 + $0x60] sm:$0xf]
        %v1047 = vld [vmem:[%s1021 + $0x64] sm:$0xf]
        %v1048 = vld [vmem:[%s1021 + $0x68] sm:$0xf]
        %v1049 = vld [vmem:[%s1021 + $0x6c] sm:$0xf]
        %v1050 = vld [vmem:[%s1021 + $0x70] sm:$0xf]
        %v1051 = vld [vmem:[%s1021 + $0x74] sm:$0xf]
        %v1082 = vunpack.c.l.b16 %v1022
        %v1083 = vunpack.c.l.b16 %v1023
        %v1084 = vunpack.c.l.b16 %v1024
        %v1085 = vunpack.c.l.b16 %v1025
        %v1086 = vunpack.c.l.b16 %v1026
        %v1087 = vunpack.c.l.b16 %v1027
        %v1088 = vunpack.c.l.b16 %v1028
        %v1089 = vunpack.c.l.b16 %v1029
        %v1090 = vunpack.c.l.b16 %v1030
        %v1091 = vunpack.c.l.b16 %v1031
        %v1092 = vunpack.c.l.b16 %v1032
        %v1093 = vunpack.c.l.b16 %v1033
        %v1094 = vunpack.c.l.b16 %v1034
        %v1095 = vunpack.c.l.b16 %v1035
        %v1096 = vunpack.c.l.b16 %v1036
        %v1097 = vunpack.c.l.b16 %v1037
        %v1098 = vunpack.c.l.b16 %v1038
        %v1099 = vunpack.c.l.b16 %v1039
        %v1100 = vunpack.c.l.b16 %v1040
        %v1101 = vunpack.c.l.b16 %v1041
        %v1102 = vunpack.c.l.b16 %v1042
        %v1103 = vunpack.c.l.b16 %v1043
        %v1104 = vunpack.c.l.b16 %v1044
        %v1105 = vunpack.c.l.b16 %v1045
        %v1106 = vunpack.c.l.b16 %v1046
        %v1107 = vunpack.c.l.b16 %v1047
        %v1108 = vunpack.c.l.b16 %v1048
        %v1109 = vunpack.c.l.b16 %v1049
        %v1110 = vunpack.c.l.b16 %v1050
        %v1111 = vunpack.c.l.b16 %v1051
        %v1112 = vpack.c.b16 %v1083, %v1082
        %v1113 = vpack.c.b16 %v1085, %v1084
        %v1114 = vpack.c.b16 %v1087, %v1086
        %v1115 = vpack.c.b16 %v1089, %v1088
        %v1116 = vpack.c.b16 %v1091, %v1090
        %v1117 = vpack.c.b16 %v1093, %v1092
        %v1118 = vpack.c.b16 %v1095, %v1094
        %v1119 = vpack.c.b16 %v1097, %v1096
        %v1120 = vpack.c.b16 %v1099, %v1098
        %v1121 = vpack.c.b16 %v1101, %v1100
        %v1122 = vpack.c.b16 %v1103, %v1102
        %v1123 = vpack.c.b16 %v1105, %v1104
        %v1124 = vpack.c.b16 %v1107, %v1106
        %v1125 = vpack.c.b16 %v1109, %v1108
        %v1126 = vpack.c.b16 %v1111, %v1110
        %v1128 = vsel %vm785, %v1112, 0
        %v1131 = vsel %vm785, %v1113, 0
        %v1134 = vsel %vm785, %v1114, 0
        %v1137 = vsel %vm785, %v1115, 0
        %v1140 = vsel %vm785, %v1116, 0
        %v1143 = vsel %vm785, %v1117, 0
        %v1146 = vsel %vm785, %v1118, 0
        %v1149 = vsel %vm785, %v1119, 0
        %v1152 = vsel %vm785, %v1120, 0
        %v1155 = vsel %vm785, %v1121, 0
        %v1158 = vsel %vm785, %v1122, 0
        %v1161 = vsel %vm785, %v1123, 0
        %v1164 = vsel %vm785, %v1124, 0
        %v1167 = vsel %vm785, %v1125, 0
        %v1170 = vsel %vm785, %v1126, 0
        %1172 = vmatprep.subr.bf16.mxu0 0
        %1173 = vmatpush1.bf16.msra.mxu0 %v782
        %1174 = vmatprep.subr.bf16.mxu0 0
        %1175 = vmatpush1.bf16.msra.mxu0 %v836
        %1176 = vmatprep.subr.bf16.mxu0 0
        %1177 = vmatpush1.bf16.msra.mxu0 0
        %1178 = vmatprep.subr.bf16.mxu0 0
        %1179 = vmatpush1.bf16.msra.mxu0 0
        %1180 = vmatprep.subr.bf16.mxu0 0
        %1181 = vmatpush1.bf16.msra.mxu0 0
        %1182 = vmatprep.subr.bf16.mxu0 0
        %1183 = vmatpush1.bf16.msra.mxu0 0
        %1184 = vmatprep.subr.bf16.mxu0 0
        %1185 = vmatpush1.bf16.msra.mxu0 0
        %1186 = vmatprep.subr.bf16.mxu0 0
        %1187 = vmatpush1.bf16.msra.mxu0 0
        %1188 = vmatprep.subr.bf16.mxu0 0
        %1189 = vmatpush1.bf16.msra.mxu0 0
        %1190 = vmatprep.subr.bf16.mxu0 0
        %1191 = vmatpush1.bf16.msra.mxu0 0
        %1192 = vmatprep.subr.bf16.mxu0 0
        %1193 = vmatpush1.bf16.msra.mxu0 0
        %1194 = vmatprep.subr.bf16.mxu0 0
        %1195 = vmatpush1.bf16.msra.mxu0 0
        %1196 = vmatprep.subr.bf16.mxu0 0
        %1197 = vmatpush1.bf16.msra.mxu0 0
        %1198 = vmatprep.subr.bf16.mxu0 0
        %1199 = vmatpush1.bf16.msra.mxu0 0
        %1200 = vmatprep.subr.bf16.mxu0 0
        %1201 = vmatpush1.bf16.msra.mxu0 0
        %1202 = vmatprep.subr.bf16.mxu0 0
        %1203 = vmatpush1.bf16.msra.mxu0 0
        %1204 = vmatprep.mubr.bf16.mxu0 0
        %1205 = vmatmul.mubr.bf16.gmra.mrb[0].mxu0 %v1128
        %v1206 = vpop.f32.mrb[0].mxu0
        %v1207 = vadd.f32 0.0, %v1206
        %v1208 = vpop.f32.mrb[0].mxu0
        %v1209 = vpop.f32.mrb[0].mxu0
        %v1210 = vadd.f32 0.0, %v1209
        %v1211 = vpop.f32.mrb[0].mxu0
        %1212 = vmatprep.mubr.bf16.mxu0 0
        %1213 = vmatmul.mubr.bf16.gmra.mrb[0].mxu0 %v1131
        %v1214 = vpop.f32.mrb[0].mxu0
        %v1215 = vadd.f32 0.0, %v1214
        %v1216 = vpop.f32.mrb[0].mxu0
        %v1217 = vpop.f32.mrb[0].mxu0
        %v1218 = vadd.f32 0.0, %v1217
        %v1219 = vpop.f32.mrb[0].mxu0
        %1220 = vmatprep.mubr.bf16.mxu0 0
        %1221 = vmatmul.mubr.bf16.gmra.mrb[0].mxu0 %v1134
        %v1222 = vpop.f32.mrb[0].mxu0
        %v1223 = vadd.f32 0.0, %v1222
        %v1224 = vpop.f32.mrb[0].mxu0
        %v1225 = vpop.f32.mrb[0].mxu0
        %v1226 = vadd.f32 0.0, %v1225
        %v1227 = vpop.f32.mrb[0].mxu0
        %1228 = vmatprep.mubr.bf16.mxu0 0
        %1229 = vmatmul.mubr.bf16.gmra.mrb[0].mxu0 %v1137
        %v1230 = vpop.f32.mrb[0].mxu0
        %v1231 = vadd.f32 0.0, %v1230
        %v1232 = vpop.f32.mrb[0].mxu0
        %v1233 = vpop.f32.mrb[0].mxu0
        %v1234 = vadd.f32 0.0, %v1233
        %v1235 = vpop.f32.mrb[0].mxu0
        %1236 = vmatprep.mubr.bf16.mxu0 0
        %1237 = vmatmul.mubr.bf16.gmra.mrb[0].mxu0 %v1140
        %v1238 = vpop.f32.mrb[0].mxu0
        %v1239 = vadd.f32 0.0, %v1238
        %v1240 = vpop.f32.mrb[0].mxu0
        %v1241 = vpop.f32.mrb[0].mxu0
        %v1242 = vadd.f32 0.0, %v1241
        %v1243 = vpop.f32.mrb[0].mxu0
        %1244 = vmatprep.mubr.bf16.mxu0 0
        %1245 = vmatmul.mubr.bf16.gmra.mrb[0].mxu0 %v1143
        %v1246 = vpop.f32.mrb[0].mxu0
        %v1247 = vadd.f32 0.0, %v1246
        %v1248 = vpop.f32.mrb[0].mxu0
        %v1249 = vpop.f32.mrb[0].mxu0
        %v1250 = vadd.f32 0.0, %v1249
        %v1251 = vpop.f32.mrb[0].mxu0
        %1252 = vmatprep.mubr.bf16.mxu0 0
        %1253 = vmatmul.mubr.bf16.gmra.mrb[0].mxu0 %v1146
        %v1254 = vpop.f32.mrb[0].mxu0
        %v1255 = vadd.f32 0.0, %v1254
        %v1256 = vpop.f32.mrb[0].mxu0
        %v1257 = vpop.f32.mrb[0].mxu0
        %v1258 = vadd.f32 0.0, %v1257
        %v1259 = vpop.f32.mrb[0].mxu0
        %1260 = vmatprep.mubr.bf16.mxu0 0
        %1261 = vmatmul.mubr.bf16.gmra.mrb[0].mxu0 %v1149
        %v1262 = vpop.f32.mrb[0].mxu0
        %v1263 = vadd.f32 0.0, %v1262
        %v1264 = vpop.f32.mrb[0].mxu0
        %v1265 = vpop.f32.mrb[0].mxu0
        %v1266 = vadd.f32 0.0, %v1265
        %v1267 = vpop.f32.mrb[0].mxu0
        %1268 = vmatprep.mubr.bf16.mxu0 0
        %1269 = vmatmul.mubr.bf16.gmra.mrb[0].mxu0 %v1152
        %v1270 = vpop.f32.mrb[0].mxu0
        %v1271 = vadd.f32 0.0, %v1270
        %v1272 = vpop.f32.mrb[0].mxu0
        %v1273 = vpop.f32.mrb[0].mxu0
        %v1274 = vadd.f32 0.0, %v1273
        %v1275 = vpop.f32.mrb[0].mxu0
        %1276 = vmatprep.mubr.bf16.mxu0 0
        %1277 = vmatmul.mubr.bf16.gmra.mrb[0].mxu0 %v1155
        %v1278 = vpop.f32.mrb[0].mxu0
        %v1279 = vadd.f32 0.0, %v1278
        %v1280 = vpop.f32.mrb[0].mxu0
        %v1281 = vpop.f32.mrb[0].mxu0
        %v1282 = vadd.f32 0.0, %v1281
        %v1283 = vpop.f32.mrb[0].mxu0
        %1284 = vmatprep.mubr.bf16.mxu0 0
        %1285 = vmatmul.mubr.bf16.gmra.mrb[0].mxu0 %v1158
        %v1286 = vpop.f32.mrb[0].mxu0
        %v1287 = vadd.f32 0.0, %v1286
        %v1288 = vpop.f32.mrb[0].mxu0
        %v1289 = vpop.f32.mrb[0].mxu0
        %v1290 = vadd.f32 0.0, %v1289
        %v1291 = vpop.f32.mrb[0].mxu0
        %1292 = vmatprep.mubr.bf16.mxu0 0
        %1293 = vmatmul.mubr.bf16.gmra.mrb[0].mxu0 %v1161
        %v1294 = vpop.f32.mrb[0].mxu0
        %v1295 = vadd.f32 0.0, %v1294
        %v1296 = vpop.f32.mrb[0].mxu0
        %v1297 = vpop.f32.mrb[0].mxu0
        %v1298 = vadd.f32 0.0, %v1297
        %v1299 = vpop.f32.mrb[0].mxu0
        %1300 = vmatprep.mubr.bf16.mxu0 0
        %1301 = vmatmul.mubr.bf16.gmra.mrb[0].mxu0 %v1164
        %v1302 = vpop.f32.mrb[0].mxu0
        %v1303 = vadd.f32 0.0, %v1302
        %v1304 = vpop.f32.mrb[0].mxu0
        %v1305 = vpop.f32.mrb[0].mxu0
        %v1306 = vadd.f32 0.0, %v1305
        %v1307 = vpop.f32.mrb[0].mxu0
        %1308 = vmatprep.mubr.bf16.mxu0 0
        %1309 = vmatmul.mubr.bf16.gmra.mrb[0].mxu0 %v1167
        %v1310 = vpop.f32.mrb[0].mxu0
        %v1311 = vadd.f32 0.0, %v1310
        %v1312 = vpop.f32.mrb[0].mxu0
        %v1313 = vpop.f32.mrb[0].mxu0
        %v1314 = vadd.f32 0.0, %v1313
        %v1315 = vpop.f32.mrb[0].mxu0
        %1316 = vmatprep.mubr.bf16.mxu0 0
        %1317 = vmatmul.mubr.bf16.gmra.mrb[0].mxu0 %v1170
        %v1318 = vpop.f32.mrb[0].mxu0
        %v1319 = vadd.f32 0.0, %v1318
        %v1320 = vpop.f32.mrb[0].mxu0
        %v1321 = vpop.f32.mrb[0].mxu0
        %v1322 = vadd.f32 0.0, %v1321
        %v1323 = vpop.f32.mrb[0].mxu0
        %1324 = vdwg.mxu0
        %v1325 = vmax.f32 %v1207, 0.0
        %v1326 = vmax.f32 %v1210, 0.0
        %v1327 = vmax.f32 %v1215, 0.0
        %v1328 = vmax.f32 %v1218, 0.0
        %v1329 = vmax.f32 %v1223, 0.0
        %v1330 = vmax.f32 %v1226, 0.0
        %v1331 = vmax.f32 %v1231, 0.0
        %v1332 = vmax.f32 %v1234, 0.0
        %v1333 = vmax.f32 %v1239, 0.0
        %v1334 = vmax.f32 %v1242, 0.0
        %v1335 = vmax.f32 %v1247, 0.0
        %v1336 = vmax.f32 %v1250, 0.0
        %v1337 = vmax.f32 %v1255, 0.0
        %v1338 = vmax.f32 %v1258, 0.0
        %v1339 = vmax.f32 %v1263, 0.0
        %v1340 = vmax.f32 %v1266, 0.0
        %v1341 = vmax.f32 %v1271, 0.0
        %v1342 = vmax.f32 %v1274, 0.0
        %v1343 = vmax.f32 %v1279, 0.0
        %v1344 = vmax.f32 %v1282, 0.0
        %v1345 = vmax.f32 %v1287, 0.0
        %v1346 = vmax.f32 %v1290, 0.0
        %v1347 = vmax.f32 %v1295, 0.0
        %v1348 = vmax.f32 %v1298, 0.0
        %v1349 = vmax.f32 %v1303, 0.0
        %v1350 = vmax.f32 %v1306, 0.0
        %v1351 = vmax.f32 %v1311, 0.0
        %v1352 = vmax.f32 %v1314, 0.0
        %v1353 = vmax.f32 %v1319, 0.0
        %v1354 = vmax.f32 %v1322, 0.0
        %v1355 = vmax.f32 %v991, %v1325
        %v1356 = vmax.f32 %v992, %v1326
        %v1357 = vmax.f32 %v993, %v1327
        %v1358 = vmax.f32 %v994, %v1328
        %v1359 = vmax.f32 %v995, %v1329
        %v1360 = vmax.f32 %v996, %v1330
        %v1361 = vmax.f32 %v997, %v1331
        %v1362 = vmax.f32 %v998, %v1332
        %v1363 = vmax.f32 %v999, %v1333
        %v1364 = vmax.f32 %v1000, %v1334
        %v1365 = vmax.f32 %v1001, %v1335
        %v1366 = vmax.f32 %v1002, %v1336
        %v1367 = vmax.f32 %v1003, %v1337
        %v1368 = vmax.f32 %v1004, %v1338
        %v1369 = vmax.f32 %v1005, %v1339
        %v1370 = vmax.f32 %v1006, %v1340
        %v1371 = vmax.f32 %v1007, %v1341
        %v1372 = vmax.f32 %v1008, %v1342
        %v1373 = vmax.f32 %v1009, %v1343
        %v1374 = vmax.f32 %v1010, %v1344
        %v1375 = vmax.f32 %v1011, %v1345
        %v1376 = vmax.f32 %v1012, %v1346
        %v1377 = vmax.f32 %v1013, %v1347
        %v1378 = vmax.f32 %v1014, %v1348
        %v1379 = vmax.f32 %v1015, %v1349
        %v1380 = vmax.f32 %v1016, %v1350
        %v1381 = vmax.f32 %v1017, %v1351
        %v1382 = vmax.f32 %v1018, %v1352
        %v1383 = vmax.f32 %v1019, %v1353
        %v1384 = vmax.f32 %v1020, %v1354
        %s1385 = scalar_lea.vmem %s638, 240 [#allocation2]
        %v1386 = vld [vmem:[%s1385] sm:$0xf]
        %v1387 = vld [vmem:[%s1385 + $0x4] sm:$0xf]
        %v1388 = vld [vmem:[%s1385 + $0x8] sm:$0xf]
        %v1389 = vld [vmem:[%s1385 + $0xc] sm:$0xf]
        %v1390 = vld [vmem:[%s1385 + $0x10] sm:$0xf]
        %v1391 = vld [vmem:[%s1385 + $0x14] sm:$0xf]
        %v1392 = vld [vmem:[%s1385 + $0x18] sm:$0xf]
        %v1393 = vld [vmem:[%s1385 + $0x1c] sm:$0xf]
        %v1394 = vld [vmem:[%s1385 + $0x20] sm:$0xf]
        %v1395 = vld [vmem:[%s1385 + $0x24] sm:$0xf]
        %v1396 = vld [vmem:[%s1385 + $0x28] sm:$0xf]
        %v1397 = vld [vmem:[%s1385 + $0x2c] sm:$0xf]
        %v1398 = vld [vmem:[%s1385 + $0x30] sm:$0xf]
        %v1399 = vld [vmem:[%s1385 + $0x34] sm:$0xf]
        %v1400 = vld [vmem:[%s1385 + $0x38] sm:$0xf]
        %v1401 = vld [vmem:[%s1385 + $0x3c] sm:$0xf]
        %v1402 = vld [vmem:[%s1385 + $0x40] sm:$0xf]
        %v1403 = vld [vmem:[%s1385 + $0x44] sm:$0xf]
        %v1404 = vld [vmem:[%s1385 + $0x48] sm:$0xf]
        %v1405 = vld [vmem:[%s1385 + $0x4c] sm:$0xf]
        %v1406 = vld [vmem:[%s1385 + $0x50] sm:$0xf]
        %v1407 = vld [vmem:[%s1385 + $0x54] sm:$0xf]
        %v1408 = vld [vmem:[%s1385 + $0x58] sm:$0xf]
        %v1409 = vld [vmem:[%s1385 + $0x5c] sm:$0xf]
        %v1410 = vld [vmem:[%s1385 + $0x60] sm:$0xf]
        %v1411 = vld [vmem:[%s1385 + $0x64] sm:$0xf]
        %v1412 = vld [vmem:[%s1385 + $0x68] sm:$0xf]
        %v1413 = vld [vmem:[%s1385 + $0x6c] sm:$0xf]
        %v1414 = vld [vmem:[%s1385 + $0x70] sm:$0xf]
        %v1415 = vld [vmem:[%s1385 + $0x74] sm:$0xf]
        %v1446 = vunpack.c.l.b16 %v1386
        %v1447 = vunpack.c.l.b16 %v1387
        %v1448 = vunpack.c.l.b16 %v1388
        %v1449 = vunpack.c.l.b16 %v1389
        %v1450 = vunpack.c.l.b16 %v1390
        %v1451 = vunpack.c.l.b16 %v1391
        %v1452 = vunpack.c.l.b16 %v1392
        %v1453 = vunpack.c.l.b16 %v1393
        %v1454 = vunpack.c.l.b16 %v1394
        %v1455 = vunpack.c.l.b16 %v1395
        %v1456 = vunpack.c.l.b16 %v1396
        %v1457 = vunpack.c.l.b16 %v1397
        %v1458 = vunpack.c.l.b16 %v1398
        %v1459 = vunpack.c.l.b16 %v1399
        %v1460 = vunpack.c.l.b16 %v1400
        %v1461 = vunpack.c.l.b16 %v1401
        %v1462 = vunpack.c.l.b16 %v1402
        %v1463 = vunpack.c.l.b16 %v1403
        %v1464 = vunpack.c.l.b16 %v1404
        %v1465 = vunpack.c.l.b16 %v1405
        %v1466 = vunpack.c.l.b16 %v1406
        %v1467 = vunpack.c.l.b16 %v1407
        %v1468 = vunpack.c.l.b16 %v1408
        %v1469 = vunpack.c.l.b16 %v1409
        %v1470 = vunpack.c.l.b16 %v1410
        %v1471 = vunpack.c.l.b16 %v1411
        %v1472 = vunpack.c.l.b16 %v1412
        %v1473 = vunpack.c.l.b16 %v1413
        %v1474 = vunpack.c.l.b16 %v1414
        %v1475 = vunpack.c.l.b16 %v1415
        %v1476 = vpack.c.b16 %v1447, %v1446
        %v1477 = vpack.c.b16 %v1449, %v1448
        %v1478 = vpack.c.b16 %v1451, %v1450
        %v1479 = vpack.c.b16 %v1453, %v1452
        %v1480 = vpack.c.b16 %v1455, %v1454
        %v1481 = vpack.c.b16 %v1457, %v1456
        %v1482 = vpack.c.b16 %v1459, %v1458
        %v1483 = vpack.c.b16 %v1461, %v1460
        %v1484 = vpack.c.b16 %v1463, %v1462
        %v1485 = vpack.c.b16 %v1465, %v1464
        %v1486 = vpack.c.b16 %v1467, %v1466
        %v1487 = vpack.c.b16 %v1469, %v1468
        %v1488 = vpack.c.b16 %v1471, %v1470
        %v1489 = vpack.c.b16 %v1473, %v1472
        %v1490 = vpack.c.b16 %v1475, %v1474
        %v1492 = vsel %vm785, %v1476, 0
        %v1495 = vsel %vm785, %v1477, 0
        %v1498 = vsel %vm785, %v1478, 0
        %v1501 = vsel %vm785, %v1479, 0
        %v1504 = vsel %vm785, %v1480, 0
        %v1507 = vsel %vm785, %v1481, 0
        %v1510 = vsel %vm785, %v1482, 0
        %v1513 = vsel %vm785, %v1483, 0
        %v1516 = vsel %vm785, %v1484, 0
        %v1519 = vsel %vm785, %v1485, 0
        %v1522 = vsel %vm785, %v1486, 0
        %v1525 = vsel %vm785, %v1487, 0
        %v1528 = vsel %vm785, %v1488, 0
        %v1531 = vsel %vm785, %v1489, 0
        %v1534 = vsel %vm785, %v1490, 0
        %1536 = vmatprep.subr.bf16.mxu0 0
        %1537 = vmatpush1.bf16.msra.mxu0 %v782
        %1538 = vmatprep.subr.bf16.mxu0 0
        %1539 = vmatpush1.bf16.msra.mxu0 %v836
        %1540 = vmatprep.subr.bf16.mxu0 0
        %1541 = vmatpush1.bf16.msra.mxu0 0
        %1542 = vmatprep.subr.bf16.mxu0 0
        %1543 = vmatpush1.bf16.msra.mxu0 0
        %1544 = vmatprep.subr.bf16.mxu0 0
        %1545 = vmatpush1.bf16.msra.mxu0 0
        %1546 = vmatprep.subr.bf16.mxu0 0
        %1547 = vmatpush1.bf16.msra.mxu0 0
        %1548 = vmatprep.subr.bf16.mxu0 0
        %1549 = vmatpush1.bf16.msra.mxu0 0
        %1550 = vmatprep.subr.bf16.mxu0 0
        %1551 = vmatpush1.bf16.msra.mxu0 0
        %1552 = vmatprep.subr.bf16.mxu0 0
        %1553 = vmatpush1.bf16.msra.mxu0 0
        %1554 = vmatprep.subr.bf16.mxu0 0
        %1555 = vmatpush1.bf16.msra.mxu0 0
        %1556 = vmatprep.subr.bf16.mxu0 0
        %1557 = vmatpush1.bf16.msra.mxu0 0
        %1558 = vmatprep.subr.bf16.mxu0 0
        %1559 = vmatpush1.bf16.msra.mxu0 0
        %1560 = vmatprep.subr.bf16.mxu0 0
        %1561 = vmatpush1.bf16.msra.mxu0 0
        %1562 = vmatprep.subr.bf16.mxu0 0
        %1563 = vmatpush1.bf16.msra.mxu0 0
        %1564 = vmatprep.subr.bf16.mxu0 0
        %1565 = vmatpush1.bf16.msra.mxu0 0
        %1566 = vmatprep.subr.bf16.mxu0 0
        %1567 = vmatpush1.bf16.msra.mxu0 0
        %1568 = vmatprep.mubr.bf16.mxu0 0
        %1569 = vmatmul.mubr.bf16.gmra.mrb[0].mxu0 %v1492
        %v1570 = vpop.f32.mrb[0].mxu0
        %v1571 = vadd.f32 0.0, %v1570
        %v1572 = vpop.f32.mrb[0].mxu0
        %v1573 = vpop.f32.mrb[0].mxu0
        %v1574 = vadd.f32 0.0, %v1573
        %v1575 = vpop.f32.mrb[0].mxu0
        %1576 = vmatprep.mubr.bf16.mxu0 0
        %1577 = vmatmul.mubr.bf16.gmra.mrb[0].mxu0 %v1495
        %v1578 = vpop.f32.mrb[0].mxu0
        %v1579 = vadd.f32 0.0, %v1578
        %v1580 = vpop.f32.mrb[0].mxu0
        %v1581 = vpop.f32.mrb[0].mxu0
        %v1582 = vadd.f32 0.0, %v1581
        %v1583 = vpop.f32.mrb[0].mxu0
        %1584 = vmatprep.mubr.bf16.mxu0 0
        %1585 = vmatmul.mubr.bf16.gmra.mrb[0].mxu0 %v1498
        %v1586 = vpop.f32.mrb[0].mxu0
        %v1587 = vadd.f32 0.0, %v1586
        %v1588 = vpop.f32.mrb[0].mxu0
        %v1589 = vpop.f32.mrb[0].mxu0
        %v1590 = vadd.f32 0.0, %v1589
        %v1591 = vpop.f32.mrb[0].mxu0
        %1592 = vmatprep.mubr.bf16.mxu0 0
        %1593 = vmatmul.mubr.bf16.gmra.mrb[0].mxu0 %v1501
        %v1594 = vpop.f32.mrb[0].mxu0
        %v1595 = vadd.f32 0.0, %v1594
        %v1596 = vpop.f32.mrb[0].mxu0
        %v1597 = vpop.f32.mrb[0].mxu0
        %v1598 = vadd.f32 0.0, %v1597
        %v1599 = vpop.f32.mrb[0].mxu0
        %1600 = vmatprep.mubr.bf16.mxu0 0
        %1601 = vmatmul.mubr.bf16.gmra.mrb[0].mxu0 %v1504
        %v1602 = vpop.f32.mrb[0].mxu0
        %v1603 = vadd.f32 0.0, %v1602
        %v1604 = vpop.f32.mrb[0].mxu0
        %v1605 = vpop.f32.mrb[0].mxu0
        %v1606 = vadd.f32 0.0, %v1605
        %v1607 = vpop.f32.mrb[0].mxu0
        %1608 = vmatprep.mubr.bf16.mxu0 0
        %1609 = vmatmul.mubr.bf16.gmra.mrb[0].mxu0 %v1507
        %v1610 = vpop.f32.mrb[0].mxu0
        %v1611 = vadd.f32 0.0, %v1610
        %v1612 = vpop.f32.mrb[0].mxu0
        %v1613 = vpop.f32.mrb[0].mxu0
        %v1614 = vadd.f32 0.0, %v1613
        %v1615 = vpop.f32.mrb[0].mxu0
        %1616 = vmatprep.mubr.bf16.mxu0 0
        %1617 = vmatmul.mubr.bf16.gmra.mrb[0].mxu0 %v1510
        %v1618 = vpop.f32.mrb[0].mxu0
        %v1619 = vadd.f32 0.0, %v1618
        %v1620 = vpop.f32.mrb[0].mxu0
        %v1621 = vpop.f32.mrb[0].mxu0
        %v1622 = vadd.f32 0.0, %v1621
        %v1623 = vpop.f32.mrb[0].mxu0
        %1624 = vmatprep.mubr.bf16.mxu0 0
        %1625 = vmatmul.mubr.bf16.gmra.mrb[0].mxu0 %v1513
        %v1626 = vpop.f32.mrb[0].mxu0
        %v1627 = vadd.f32 0.0, %v1626
        %v1628 = vpop.f32.mrb[0].mxu0
        %v1629 = vpop.f32.mrb[0].mxu0
        %v1630 = vadd.f32 0.0, %v1629
        %v1631 = vpop.f32.mrb[0].mxu0
        %1632 = vmatprep.mubr.bf16.mxu0 0
        %1633 = vmatmul.mubr.bf16.gmra.mrb[0].mxu0 %v1516
        %v1634 = vpop.f32.mrb[0].mxu0
        %v1635 = vadd.f32 0.0, %v1634
        %v1636 = vpop.f32.mrb[0].mxu0
        %v1637 = vpop.f32.mrb[0].mxu0
        %v1638 = vadd.f32 0.0, %v1637
        %v1639 = vpop.f32.mrb[0].mxu0
        %1640 = vmatprep.mubr.bf16.mxu0 0
        %1641 = vmatmul.mubr.bf16.gmra.mrb[0].mxu0 %v1519
        %v1642 = vpop.f32.mrb[0].mxu0
        %v1643 = vadd.f32 0.0, %v1642
        %v1644 = vpop.f32.mrb[0].mxu0
        %v1645 = vpop.f32.mrb[0].mxu0
        %v1646 = vadd.f32 0.0, %v1645
        %v1647 = vpop.f32.mrb[0].mxu0
        %1648 = vmatprep.mubr.bf16.mxu0 0
        %1649 = vmatmul.mubr.bf16.gmra.mrb[0].mxu0 %v1522
        %v1650 = vpop.f32.mrb[0].mxu0
        %v1651 = vadd.f32 0.0, %v1650
        %v1652 = vpop.f32.mrb[0].mxu0
        %v1653 = vpop.f32.mrb[0].mxu0
        %v1654 = vadd.f32 0.0, %v1653
        %v1655 = vpop.f32.mrb[0].mxu0
        %1656 = vmatprep.mubr.bf16.mxu0 0
        %1657 = vmatmul.mubr.bf16.gmra.mrb[0].mxu0 %v1525
        %v1658 = vpop.f32.mrb[0].mxu0
        %v1659 = vadd.f32 0.0, %v1658
        %v1660 = vpop.f32.mrb[0].mxu0
        %v1661 = vpop.f32.mrb[0].mxu0
        %v1662 = vadd.f32 0.0, %v1661
        %v1663 = vpop.f32.mrb[0].mxu0
        %1664 = vmatprep.mubr.bf16.mxu0 0
        %1665 = vmatmul.mubr.bf16.gmra.mrb[0].mxu0 %v1528
        %v1666 = vpop.f32.mrb[0].mxu0
        %v1667 = vadd.f32 0.0, %v1666
        %v1668 = vpop.f32.mrb[0].mxu0
        %v1669 = vpop.f32.mrb[0].mxu0
        %v1670 = vadd.f32 0.0, %v1669
        %v1671 = vpop.f32.mrb[0].mxu0
        %1672 = vmatprep.mubr.bf16.mxu0 0
        %1673 = vmatmul.mubr.bf16.gmra.mrb[0].mxu0 %v1531
        %v1674 = vpop.f32.mrb[0].mxu0
        %v1675 = vadd.f32 0.0, %v1674
        %v1676 = vpop.f32.mrb[0].mxu0
        %v1677 = vpop.f32.mrb[0].mxu0
        %v1678 = vadd.f32 0.0, %v1677
        %v1679 = vpop.f32.mrb[0].mxu0
        %1680 = vmatprep.mubr.bf16.mxu0 0
        %1681 = vmatmul.mubr.bf16.gmra.mrb[0].mxu0 %v1534
        %v1682 = vpop.f32.mrb[0].mxu0
        %v1683 = vadd.f32 0.0, %v1682
        %v1684 = vpop.f32.mrb[0].mxu0
        %v1685 = vpop.f32.mrb[0].mxu0
        %v1686 = vadd.f32 0.0, %v1685
        %v1687 = vpop.f32.mrb[0].mxu0
        %1688 = vdwg.mxu0
        %v1689 = vmax.f32 %v1571, 0.0
        %v1690 = vmax.f32 %v1574, 0.0
        %v1691 = vmax.f32 %v1579, 0.0
        %v1692 = vmax.f32 %v1582, 0.0
        %v1693 = vmax.f32 %v1587, 0.0
        %v1694 = vmax.f32 %v1590, 0.0
        %v1695 = vmax.f32 %v1595, 0.0
        %v1696 = vmax.f32 %v1598, 0.0
        %v1697 = vmax.f32 %v1603, 0.0
        %v1698 = vmax.f32 %v1606, 0.0
        %v1699 = vmax.f32 %v1611, 0.0
        %v1700 = vmax.f32 %v1614, 0.0
        %v1701 = vmax.f32 %v1619, 0.0
        %v1702 = vmax.f32 %v1622, 0.0
        %v1703 = vmax.f32 %v1627, 0.0
        %v1704 = vmax.f32 %v1630, 0.0
        %v1705 = vmax.f32 %v1635, 0.0
        %v1706 = vmax.f32 %v1638, 0.0
        %v1707 = vmax.f32 %v1643, 0.0
        %v1708 = vmax.f32 %v1646, 0.0
        %v1709 = vmax.f32 %v1651, 0.0
        %v1710 = vmax.f32 %v1654, 0.0
        %v1711 = vmax.f32 %v1659, 0.0
        %v1712 = vmax.f32 %v1662, 0.0
        %v1713 = vmax.f32 %v1667, 0.0
        %v1714 = vmax.f32 %v1670, 0.0
        %v1715 = vmax.f32 %v1675, 0.0
        %v1716 = vmax.f32 %v1678, 0.0
        %v1717 = vmax.f32 %v1683, 0.0
        %v1718 = vmax.f32 %v1686, 0.0
        %v1719 = vmax.f32 %v1355, %v1689
        %v1720 = vmax.f32 %v1356, %v1690
        %v1721 = vmax.f32 %v1357, %v1691
        %v1722 = vmax.f32 %v1358, %v1692
        %v1723 = vmax.f32 %v1359, %v1693
        %v1724 = vmax.f32 %v1360, %v1694
        %v1725 = vmax.f32 %v1361, %v1695
        %v1726 = vmax.f32 %v1362, %v1696
        %v1727 = vmax.f32 %v1363, %v1697
        %v1728 = vmax.f32 %v1364, %v1698
        %v1729 = vmax.f32 %v1365, %v1699
        %v1730 = vmax.f32 %v1366, %v1700
        %v1731 = vmax.f32 %v1367, %v1701
        %v1732 = vmax.f32 %v1368, %v1702
        %v1733 = vmax.f32 %v1369, %v1703
        %v1734 = vmax.f32 %v1370, %v1704
        %v1735 = vmax.f32 %v1371, %v1705
        %v1736 = vmax.f32 %v1372, %v1706
        %v1737 = vmax.f32 %v1373, %v1707
        %v1738 = vmax.f32 %v1374, %v1708
        %v1739 = vmax.f32 %v1375, %v1709
        %v1740 = vmax.f32 %v1376, %v1710
        %v1741 = vmax.f32 %v1377, %v1711
        %v1742 = vmax.f32 %v1378, %v1712
        %v1743 = vmax.f32 %v1379, %v1713
        %v1744 = vmax.f32 %v1380, %v1714
        %v1745 = vmax.f32 %v1381, %v1715
        %v1746 = vmax.f32 %v1382, %v1716
        %v1747 = vmax.f32 %v1383, %v1717
        %v1748 = vmax.f32 %v1384, %v1718
        %s1749 = scalar_lea.vmem %s638, 360 [#allocation2]
        %v1750 = vld [vmem:[%s1749] sm:$0xf]
        %v1751 = vld [vmem:[%s1749 + $0x4] sm:$0xf]
        %v1752 = vld [vmem:[%s1749 + $0x8] sm:$0xf]
        %v1753 = vld [vmem:[%s1749 + $0xc] sm:$0xf]
        %v1754 = vld [vmem:[%s1749 + $0x10] sm:$0xf]
        %v1755 = vld [vmem:[%s1749 + $0x14] sm:$0xf]
        %v1756 = vld [vmem:[%s1749 + $0x18] sm:$0xf]
        %v1757 = vld [vmem:[%s1749 + $0x1c] sm:$0xf]
        %v1758 = vld [vmem:[%s1749 + $0x20] sm:$0xf]
        %v1759 = vld [vmem:[%s1749 + $0x24] sm:$0xf]
        %v1760 = vld [vmem:[%s1749 + $0x28] sm:$0xf]
        %v1761 = vld [vmem:[%s1749 + $0x2c] sm:$0xf]
        %v1762 = vld [vmem:[%s1749 + $0x30] sm:$0xf]
        %v1763 = vld [vmem:[%s1749 + $0x34] sm:$0xf]
        %v1764 = vld [vmem:[%s1749 + $0x38] sm:$0xf]
        %v1765 = vld [vmem:[%s1749 + $0x3c] sm:$0xf]
        %v1766 = vld [vmem:[%s1749 + $0x40] sm:$0xf]
        %v1767 = vld [vmem:[%s1749 + $0x44] sm:$0xf]
        %v1768 = vld [vmem:[%s1749 + $0x48] sm:$0xf]
        %v1769 = vld [vmem:[%s1749 + $0x4c] sm:$0xf]
        %v1770 = vld [vmem:[%s1749 + $0x50] sm:$0xf]
        %v1771 = vld [vmem:[%s1749 + $0x54] sm:$0xf]
        %v1772 = vld [vmem:[%s1749 + $0x58] sm:$0xf]
        %v1773 = vld [vmem:[%s1749 + $0x5c] sm:$0xf]
        %v1774 = vld [vmem:[%s1749 + $0x60] sm:$0xf]
        %v1775 = vld [vmem:[%s1749 + $0x64] sm:$0xf]
        %v1776 = vld [vmem:[%s1749 + $0x68] sm:$0xf]
        %v1777 = vld [vmem:[%s1749 + $0x6c] sm:$0xf]
        %v1778 = vld [vmem:[%s1749 + $0x70] sm:$0xf]
        %v1779 = vld [vmem:[%s1749 + $0x74] sm:$0xf]
        %v1810 = vunpack.c.l.b16 %v1750
        %v1811 = vunpack.c.l.b16 %v1751
        %v1812 = vunpack.c.l.b16 %v1752
        %v1813 = vunpack.c.l.b16 %v1753
        %v1814 = vunpack.c.l.b16 %v1754
        %v1815 = vunpack.c.l.b16 %v1755
        %v1816 = vunpack.c.l.b16 %v1756
        %v1817 = vunpack.c.l.b16 %v1757
        %v1818 = vunpack.c.l.b16 %v1758
        %v1819 = vunpack.c.l.b16 %v1759
        %v1820 = vunpack.c.l.b16 %v1760
        %v1821 = vunpack.c.l.b16 %v1761
        %v1822 = vunpack.c.l.b16 %v1762
        %v1823 = vunpack.c.l.b16 %v1763
        %v1824 = vunpack.c.l.b16 %v1764
        %v1825 = vunpack.c.l.b16 %v1765
        %v1826 = vunpack.c.l.b16 %v1766
        %v1827 = vunpack.c.l.b16 %v1767
        %v1828 = vunpack.c.l.b16 %v1768
        %v1829 = vunpack.c.l.b16 %v1769
        %v1830 = vunpack.c.l.b16 %v1770
        %v1831 = vunpack.c.l.b16 %v1771
        %v1832 = vunpack.c.l.b16 %v1772
        %v1833 = vunpack.c.l.b16 %v1773
        %v1834 = vunpack.c.l.b16 %v1774
        %v1835 = vunpack.c.l.b16 %v1775
        %v1836 = vunpack.c.l.b16 %v1776
        %v1837 = vunpack.c.l.b16 %v1777
        %v1838 = vunpack.c.l.b16 %v1778
        %v1839 = vunpack.c.l.b16 %v1779
        %v1840 = vpack.c.b16 %v1811, %v1810
        %v1841 = vpack.c.b16 %v1813, %v1812
        %v1842 = vpack.c.b16 %v1815, %v1814
        %v1843 = vpack.c.b16 %v1817, %v1816
        %v1844 = vpack.c.b16 %v1819, %v1818
        %v1845 = vpack.c.b16 %v1821, %v1820
        %v1846 = vpack.c.b16 %v1823, %v1822
        %v1847 = vpack.c.b16 %v1825, %v1824
        %v1848 = vpack.c.b16 %v1827, %v1826
        %v1849 = vpack.c.b16 %v1829, %v1828
        %v1850 = vpack.c.b16 %v1831, %v1830
        %v1851 = vpack.c.b16 %v1833, %v1832
        %v1852 = vpack.c.b16 %v1835, %v1834
        %v1853 = vpack.c.b16 %v1837, %v1836
        %v1854 = vpack.c.b16 %v1839, %v1838
        %v1856 = vsel %vm785, %v1840, 0
        %v1859 = vsel %vm785, %v1841, 0
        %v1862 = vsel %vm785, %v1842, 0
        %v1865 = vsel %vm785, %v1843, 0
        %v1868 = vsel %vm785, %v1844, 0
        %v1871 = vsel %vm785, %v1845, 0
        %v1874 = vsel %vm785, %v1846, 0
        %v1877 = vsel %vm785, %v1847, 0
        %v1880 = vsel %vm785, %v1848, 0
        %v1883 = vsel %vm785, %v1849, 0
        %v1886 = vsel %vm785, %v1850, 0
        %v1889 = vsel %vm785, %v1851, 0
        %v1892 = vsel %vm785, %v1852, 0
        %v1895 = vsel %vm785, %v1853, 0
        %v1898 = vsel %vm785, %v1854, 0
        %1900 = vmatprep.subr.bf16.mxu0 0
        %1901 = vmatpush1.bf16.msra.mxu0 %v782
        %1902 = vmatprep.subr.bf16.mxu0 0
        %1903 = vmatpush1.bf16.msra.mxu0 %v836
        %1904 = vmatprep.subr.bf16.mxu0 0
        %1905 = vmatpush1.bf16.msra.mxu0 0
        %1906 = vmatprep.subr.bf16.mxu0 0
        %1907 = vmatpush1.bf16.msra.mxu0 0
        %1908 = vmatprep.subr.bf16.mxu0 0
        %1909 = vmatpush1.bf16.msra.mxu0 0
        %1910 = vmatprep.subr.bf16.mxu0 0
        %1911 = vmatpush1.bf16.msra.mxu0 0
        %1912 = vmatprep.subr.bf16.mxu0 0
        %1913 = vmatpush1.bf16.msra.mxu0 0
        %1914 = vmatprep.subr.bf16.mxu0 0
        %1915 = vmatpush1.bf16.msra.mxu0 0
        %1916 = vmatprep.subr.bf16.mxu0 0
        %1917 = vmatpush1.bf16.msra.mxu0 0
        %1918 = vmatprep.subr.bf16.mxu0 0
        %1919 = vmatpush1.bf16.msra.mxu0 0
        %1920 = vmatprep.subr.bf16.mxu0 0
        %1921 = vmatpush1.bf16.msra.mxu0 0
        %1922 = vmatprep.subr.bf16.mxu0 0
        %1923 = vmatpush1.bf16.msra.mxu0 0
        %1924 = vmatprep.subr.bf16.mxu0 0
        %1925 = vmatpush1.bf16.msra.mxu0 0
        %1926 = vmatprep.subr.bf16.mxu0 0
        %1927 = vmatpush1.bf16.msra.mxu0 0
        %1928 = vmatprep.subr.bf16.mxu0 0
        %1929 = vmatpush1.bf16.msra.mxu0 0
        %1930 = vmatprep.subr.bf16.mxu0 0
        %1931 = vmatpush1.bf16.msra.mxu0 0
        %1932 = vmatprep.mubr.bf16.mxu0 0
        %1933 = vmatmul.mubr.bf16.gmra.mrb[0].mxu0 %v1856
        %v1934 = vpop.f32.mrb[0].mxu0
        %v1935 = vadd.f32 0.0, %v1934
        %v1936 = vpop.f32.mrb[0].mxu0
        %v1937 = vpop.f32.mrb[0].mxu0
        %v1938 = vadd.f32 0.0, %v1937
        %v1939 = vpop.f32.mrb[0].mxu0
        %1940 = vmatprep.mubr.bf16.mxu0 0
        %1941 = vmatmul.mubr.bf16.gmra.mrb[0].mxu0 %v1859
        %v1942 = vpop.f32.mrb[0].mxu0
        %v1943 = vadd.f32 0.0, %v1942
        %v1944 = vpop.f32.mrb[0].mxu0
        %v1945 = vpop.f32.mrb[0].mxu0
        %v1946 = vadd.f32 0.0, %v1945
        %v1947 = vpop.f32.mrb[0].mxu0
        %1948 = vmatprep.mubr.bf16.mxu0 0
        %1949 = vmatmul.mubr.bf16.gmra.mrb[0].mxu0 %v1862
        %v1950 = vpop.f32.mrb[0].mxu0
        %v1951 = vadd.f32 0.0, %v1950
        %v1952 = vpop.f32.mrb[0].mxu0
        %v1953 = vpop.f32.mrb[0].mxu0
        %v1954 = vadd.f32 0.0, %v1953
        %v1955 = vpop.f32.mrb[0].mxu0
        %1956 = vmatprep.mubr.bf16.mxu0 0
        %1957 = vmatmul.mubr.bf16.gmra.mrb[0].mxu0 %v1865
        %v1958 = vpop.f32.mrb[0].mxu0
        %v1959 = vadd.f32 0.0, %v1958
        %v1960 = vpop.f32.mrb[0].mxu0
        %v1961 = vpop.f32.mrb[0].mxu0
        %v1962 = vadd.f32 0.0, %v1961
        %v1963 = vpop.f32.mrb[0].mxu0
        %1964 = vmatprep.mubr.bf16.mxu0 0
        %1965 = vmatmul.mubr.bf16.gmra.mrb[0].mxu0 %v1868
        %v1966 = vpop.f32.mrb[0].mxu0
        %v1967 = vadd.f32 0.0, %v1966
        %v1968 = vpop.f32.mrb[0].mxu0
        %v1969 = vpop.f32.mrb[0].mxu0
        %v1970 = vadd.f32 0.0, %v1969
        %v1971 = vpop.f32.mrb[0].mxu0
        %1972 = vmatprep.mubr.bf16.mxu0 0
        %1973 = vmatmul.mubr.bf16.gmra.mrb[0].mxu0 %v1871
        %v1974 = vpop.f32.mrb[0].mxu0
        %v1975 = vadd.f32 0.0, %v1974
        %v1976 = vpop.f32.mrb[0].mxu0
        %v1977 = vpop.f32.mrb[0].mxu0
        %v1978 = vadd.f32 0.0, %v1977
        %v1979 = vpop.f32.mrb[0].mxu0
        %1980 = vmatprep.mubr.bf16.mxu0 0
        %1981 = vmatmul.mubr.bf16.gmra.mrb[0].mxu0 %v1874
        %v1982 = vpop.f32.mrb[0].mxu0
        %v1983 = vadd.f32 0.0, %v1982
        %v1984 = vpop.f32.mrb[0].mxu0
        %v1985 = vpop.f32.mrb[0].mxu0
        %v1986 = vadd.f32 0.0, %v1985
        %v1987 = vpop.f32.mrb[0].mxu0
        %1988 = vmatprep.mubr.bf16.mxu0 0
        %1989 = vmatmul.mubr.bf16.gmra.mrb[0].mxu0 %v1877
        %v1990 = vpop.f32.mrb[0].mxu0
        %v1991 = vadd.f32 0.0, %v1990
        %v1992 = vpop.f32.mrb[0].mxu0
        %v1993 = vpop.f32.mrb[0].mxu0
        %v1994 = vadd.f32 0.0, %v1993
        %v1995 = vpop.f32.mrb[0].mxu0
        %1996 = vmatprep.mubr.bf16.mxu0 0
        %1997 = vmatmul.mubr.bf16.gmra.mrb[0].mxu0 %v1880
        %v1998 = vpop.f32.mrb[0].mxu0
        %v1999 = vadd.f32 0.0, %v1998
        %v2000 = vpop.f32.mrb[0].mxu0
        %v2001 = vpop.f32.mrb[0].mxu0
        %v2002 = vadd.f32 0.0, %v2001
        %v2003 = vpop.f32.mrb[0].mxu0
        %2004 = vmatprep.mubr.bf16.mxu0 0
        %2005 = vmatmul.mubr.bf16.gmra.mrb[0].mxu0 %v1883
        %v2006 = vpop.f32.mrb[0].mxu0
        %v2007 = vadd.f32 0.0, %v2006
        %v2008 = vpop.f32.mrb[0].mxu0
        %v2009 = vpop.f32.mrb[0].mxu0
        %v2010 = vadd.f32 0.0, %v2009
        %v2011 = vpop.f32.mrb[0].mxu0
        %2012 = vmatprep.mubr.bf16.mxu0 0
        %2013 = vmatmul.mubr.bf16.gmra.mrb[0].mxu0 %v1886
        %v2014 = vpop.f32.mrb[0].mxu0
        %v2015 = vadd.f32 0.0, %v2014
        %v2016 = vpop.f32.mrb[0].mxu0
        %v2017 = vpop.f32.mrb[0].mxu0
        %v2018 = vadd.f32 0.0, %v2017
        %v2019 = vpop.f32.mrb[0].mxu0
        %2020 = vmatprep.mubr.bf16.mxu0 0
        %2021 = vmatmul.mubr.bf16.gmra.mrb[0].mxu0 %v1889
        %v2022 = vpop.f32.mrb[0].mxu0
        %v2023 = vadd.f32 0.0, %v2022
        %v2024 = vpop.f32.mrb[0].mxu0
        %v2025 = vpop.f32.mrb[0].mxu0
        %v2026 = vadd.f32 0.0, %v2025
        %v2027 = vpop.f32.mrb[0].mxu0
        %2028 = vmatprep.mubr.bf16.mxu0 0
        %2029 = vmatmul.mubr.bf16.gmra.mrb[0].mxu0 %v1892
        %v2030 = vpop.f32.mrb[0].mxu0
        %v2031 = vadd.f32 0.0, %v2030
        %v2032 = vpop.f32.mrb[0].mxu0
        %v2033 = vpop.f32.mrb[0].mxu0
        %v2034 = vadd.f32 0.0, %v2033
        %v2035 = vpop.f32.mrb[0].mxu0
        %2036 = vmatprep.mubr.bf16.mxu0 0
        %2037 = vmatmul.mubr.bf16.gmra.mrb[0].mxu0 %v1895
        %v2038 = vpop.f32.mrb[0].mxu0
        %v2039 = vadd.f32 0.0, %v2038
        %v2040 = vpop.f32.mrb[0].mxu0
        %v2041 = vpop.f32.mrb[0].mxu0
        %v2042 = vadd.f32 0.0, %v2041
        %v2043 = vpop.f32.mrb[0].mxu0
        %2044 = vmatprep.mubr.bf16.mxu0 0
        %2045 = vmatmul.mubr.bf16.gmra.mrb[0].mxu0 %v1898
        %v2046 = vpop.f32.mrb[0].mxu0
        %v2047 = vadd.f32 0.0, %v2046
        %v2048 = vpop.f32.mrb[0].mxu0
        %v2049 = vpop.f32.mrb[0].mxu0
        %v2050 = vadd.f32 0.0, %v2049
        %v2051 = vpop.f32.mrb[0].mxu0
        %2052 = vdwg.mxu0
        %v2053 = vmax.f32 %v1935, 0.0
        %v2054 = vmax.f32 %v1938, 0.0
        %v2055 = vmax.f32 %v1943, 0.0
        %v2056 = vmax.f32 %v1946, 0.0
        %v2057 = vmax.f32 %v1951, 0.0
        %v2058 = vmax.f32 %v1954, 0.0
        %v2059 = vmax.f32 %v1959, 0.0
        %v2060 = vmax.f32 %v1962, 0.0
        %v2061 = vmax.f32 %v1967, 0.0
        %v2062 = vmax.f32 %v1970, 0.0
        %v2063 = vmax.f32 %v1975, 0.0
        %v2064 = vmax.f32 %v1978, 0.0
        %v2065 = vmax.f32 %v1983, 0.0
        %v2066 = vmax.f32 %v1986, 0.0
        %v2067 = vmax.f32 %v1991, 0.0
        %v2068 = vmax.f32 %v1994, 0.0
        %v2069 = vmax.f32 %v1999, 0.0
        %v2070 = vmax.f32 %v2002, 0.0
        %v2071 = vmax.f32 %v2007, 0.0
        %v2072 = vmax.f32 %v2010, 0.0
        %v2073 = vmax.f32 %v2015, 0.0
        %v2074 = vmax.f32 %v2018, 0.0
        %v2075 = vmax.f32 %v2023, 0.0
        %v2076 = vmax.f32 %v2026, 0.0
        %v2077 = vmax.f32 %v2031, 0.0
        %v2078 = vmax.f32 %v2034, 0.0
        %v2079 = vmax.f32 %v2039, 0.0
        %v2080 = vmax.f32 %v2042, 0.0
        %v2081 = vmax.f32 %v2047, 0.0
        %v2082 = vmax.f32 %v2050, 0.0
        %v2083 = vmax.f32 %v1719, %v2053
        %v2084 = vmax.f32 %v1720, %v2054
        %v2085 = vmax.f32 %v1721, %v2055
        %v2086 = vmax.f32 %v1722, %v2056
        %v2087 = vmax.f32 %v1723, %v2057
        %v2088 = vmax.f32 %v1724, %v2058
        %v2089 = vmax.f32 %v1725, %v2059
        %v2090 = vmax.f32 %v1726, %v2060
        %v2091 = vmax.f32 %v1727, %v2061
        %v2092 = vmax.f32 %v1728, %v2062
        %v2093 = vmax.f32 %v1729, %v2063
        %v2094 = vmax.f32 %v1730, %v2064
        %v2095 = vmax.f32 %v1731, %v2065
        %v2096 = vmax.f32 %v1732, %v2066
        %v2097 = vmax.f32 %v1733, %v2067
        %v2098 = vmax.f32 %v1734, %v2068
        %v2099 = vmax.f32 %v1735, %v2069
        %v2100 = vmax.f32 %v1736, %v2070
        %v2101 = vmax.f32 %v1737, %v2071
        %v2102 = vmax.f32 %v1738, %v2072
        %v2103 = vmax.f32 %v1739, %v2073
        %v2104 = vmax.f32 %v1740, %v2074
        %v2105 = vmax.f32 %v1741, %v2075
        %v2106 = vmax.f32 %v1742, %v2076
        %v2107 = vmax.f32 %v1743, %v2077
        %v2108 = vmax.f32 %v1744, %v2078
        %v2109 = vmax.f32 %v1745, %v2079
        %v2110 = vmax.f32 %v1746, %v2080
        %v2111 = vmax.f32 %v1747, %v2081
        %v2112 = vmax.f32 %v1748, %v2082
        %v2113 = vpack.c.bf16 %v2084, %v2083
        %v2114 = vpack.c.bf16 %v2086, %v2085
        %v2115 = vpack.c.bf16 %v2088, %v2087
        %v2116 = vpack.c.bf16 %v2090, %v2089
        %v2117 = vpack.c.bf16 %v2092, %v2091
        %v2118 = vpack.c.bf16 %v2094, %v2093
        %v2119 = vpack.c.bf16 %v2096, %v2095
        %v2120 = vpack.c.bf16 %v2098, %v2097
        %v2121 = vpack.c.bf16 %v2100, %v2099
        %v2122 = vpack.c.bf16 %v2102, %v2101
        %v2123 = vpack.c.bf16 %v2104, %v2103
        %v2124 = vpack.c.bf16 %v2106, %v2105
        %v2125 = vpack.c.bf16 %v2108, %v2107
        %v2126 = vpack.c.bf16 %v2110, %v2109
        %v2127 = vpack.c.bf16 %v2112, %v2111
        %v2143 = vunpack.c.l.b16 %v2113
        %v2144 = vunpack.c.h.b16 %v2113
        %v2145 = vunpack.c.l.b16 %v2114
        %v2146 = vunpack.c.h.b16 %v2114
        %v2147 = vunpack.c.l.b16 %v2115
        %v2148 = vunpack.c.h.b16 %v2115
        %v2149 = vunpack.c.l.b16 %v2116
        %v2150 = vunpack.c.h.b16 %v2116
        %v2151 = vunpack.c.l.b16 %v2117
        %v2152 = vunpack.c.h.b16 %v2117
        %v2153 = vunpack.c.l.b16 %v2118
        %v2154 = vunpack.c.h.b16 %v2118
        %v2155 = vunpack.c.l.b16 %v2119
        %v2156 = vunpack.c.h.b16 %v2119
        %v2157 = vunpack.c.l.b16 %v2120
        %v2158 = vunpack.c.h.b16 %v2120
        %v2159 = vunpack.c.l.b16 %v2121
        %v2160 = vunpack.c.h.b16 %v2121
        %v2161 = vunpack.c.l.b16 %v2122
        %v2162 = vunpack.c.h.b16 %v2122
        %v2163 = vunpack.c.l.b16 %v2123
        %v2164 = vunpack.c.h.b16 %v2123
        %v2165 = vunpack.c.l.b16 %v2124
        %v2166 = vunpack.c.h.b16 %v2124
        %v2167 = vunpack.c.l.b16 %v2125
        %v2168 = vunpack.c.h.b16 %v2125
        %v2169 = vunpack.c.l.b16 %v2126
        %v2170 = vunpack.c.h.b16 %v2126
        %v2171 = vunpack.c.l.b16 %v2127
        %v2172 = vunpack.c.h.b16 %v2127
        %v2173 = vpack.c.b16 %v2143, %v2143
        %v2174 = vpack.c.b16 %v2144, %v2144
        %v2175 = vpack.c.b16 %v2145, %v2145
        %v2176 = vpack.c.b16 %v2146, %v2146
        %v2177 = vpack.c.b16 %v2147, %v2147
        %v2178 = vpack.c.b16 %v2148, %v2148
        %v2179 = vpack.c.b16 %v2149, %v2149
        %v2180 = vpack.c.b16 %v2150, %v2150
        %v2181 = vpack.c.b16 %v2151, %v2151
        %v2182 = vpack.c.b16 %v2152, %v2152
        %v2183 = vpack.c.b16 %v2153, %v2153
        %v2184 = vpack.c.b16 %v2154, %v2154
        %v2185 = vpack.c.b16 %v2155, %v2155
        %v2186 = vpack.c.b16 %v2156, %v2156
        %v2187 = vpack.c.b16 %v2157, %v2157
        %v2188 = vpack.c.b16 %v2158, %v2158
        %v2189 = vpack.c.b16 %v2159, %v2159
        %v2190 = vpack.c.b16 %v2160, %v2160
        %v2191 = vpack.c.b16 %v2161, %v2161
        %v2192 = vpack.c.b16 %v2162, %v2162
        %v2193 = vpack.c.b16 %v2163, %v2163
        %v2194 = vpack.c.b16 %v2164, %v2164
        %v2195 = vpack.c.b16 %v2165, %v2165
        %v2196 = vpack.c.b16 %v2166, %v2166
        %v2197 = vpack.c.b16 %v2167, %v2167
        %v2198 = vpack.c.b16 %v2168, %v2168
        %v2199 = vpack.c.b16 %v2169, %v2169
        %v2200 = vpack.c.b16 %v2170, %v2170
        %v2201 = vpack.c.b16 %v2171, %v2171
        %v2202 = vpack.c.b16 %v2172, %v2172
        %2233 = vst [vmem:[%s662] sm:$0xf] %v2173
        %2234 = vst [vmem:[%s662 + $0x4] sm:$0xf] %v2174
        %2235 = vst [vmem:[%s662 + $0x8] sm:$0xf] %v2175
        %2236 = vst [vmem:[%s662 + $0xc] sm:$0xf] %v2176
        %2237 = vst [vmem:[%s662 + $0x10] sm:$0xf] %v2177
        %2238 = vst [vmem:[%s662 + $0x14] sm:$0xf] %v2178
        %2239 = vst [vmem:[%s662 + $0x18] sm:$0xf] %v2179
        %2240 = vst [vmem:[%s662 + $0x1c] sm:$0xf] %v2180
        %2241 = vst [vmem:[%s662 + $0x20] sm:$0xf] %v2181
        %2242 = vst [vmem:[%s662 + $0x24] sm:$0xf] %v2182
        %2243 = vst [vmem:[%s662 + $0x28] sm:$0xf] %v2183
        %2244 = vst [vmem:[%s662 + $0x2c] sm:$0xf] %v2184
        %2245 = vst [vmem:[%s662 + $0x30] sm:$0xf] %v2185
        %2246 = vst [vmem:[%s662 + $0x34] sm:$0xf] %v2186
        %2247 = vst [vmem:[%s662 + $0x38] sm:$0xf] %v2187
        %2248 = vst [vmem:[%s662 + $0x3c] sm:$0xf] %v2188
        %2249 = vst [vmem:[%s662 + $0x40] sm:$0xf] %v2189
        %2250 = vst [vmem:[%s662 + $0x44] sm:$0xf] %v2190
        %2251 = vst [vmem:[%s662 + $0x48] sm:$0xf] %v2191
        %2252 = vst [vmem:[%s662 + $0x4c] sm:$0xf] %v2192
        %2253 = vst [vmem:[%s662 + $0x50] sm:$0xf] %v2193
        %2254 = vst [vmem:[%s662 + $0x54] sm:$0xf] %v2194
        %2255 = vst [vmem:[%s662 + $0x58] sm:$0xf] %v2195
        %2256 = vst [vmem:[%s662 + $0x5c] sm:$0xf] %v2196
        %2257 = vst [vmem:[%s662 + $0x60] sm:$0xf] %v2197
        %2258 = vst [vmem:[%s662 + $0x64] sm:$0xf] %v2198
        %2259 = vst [vmem:[%s662 + $0x68] sm:$0xf] %v2199
        %2260 = vst [vmem:[%s662 + $0x6c] sm:$0xf] %v2200
        %2261 = vst [vmem:[%s662 + $0x70] sm:$0xf] %v2201
        %2262 = vst [vmem:[%s662 + $0x74] sm:$0xf] %v2202
        %s2263 = smul.u32 30, %s13
        %p2264 = scmp.lt.s32.totalorder %s2263, 59
        %s2265 = scalar_select %p2264, %s2263, 59
        %s2266 = smul.addr %s2265, 4
        %s2267 = scalar_lea.vmem %s2, %s2266
        // Predicated region
        $region70: #{small_conv_forward.4} parent=64 // pred_check
          %p2268 = pneg %p78
        $region71: #{small_conv_forward.4} parent=64 // pred_check_branch
          %2270 = sbr.rel (%p2268) target = $region73
        $region72: #{small_conv_forward.4} parent=64 // pred_region
          %s2271 = smul.u32 30, %s13
        $region73: #{small_conv_forward.4} parent=64 // pred_fallthru
          _
      $region65: #{small_conv_forward.4} parent=5 // pred_fallthru
        _
      %p2272 = scmp.le.s32.totalorder 2, %s8
      // Predicated region
      $region74: #{small_conv_forward.4} parent=5 // pred_check
        %p2273 = pneg %p2272
      $region75: #{small_conv_forward.4} parent=5 // pred_check_branch
        %2275 = sbr.rel (%p2273) target = $region77
      $region76: #{small_conv_forward.4} parent=5 // pred_region
        %s2276 = ssub.s32 %s8, 2
        // Predicated region
        $region78: #{small_conv_forward.4} parent=76 // pred_check
          %p2277 = pneg %p84
        $region79: #{small_conv_forward.4} parent=76 // pred_check_branch
          %2279 = sbr.rel (%p2277) target = $region81
        $region80: #{small_conv_forward.4} parent=76 // pred_region
          %s2280 = smul.u32 30, %s14
          %p2281 = scmp.lt.s32.totalorder %s2280, 59
          %s2282 = scalar_select %p2281, %s2280, 59
          %s2283 = smul.addr %s2282, 4
          %s2284 = scalar_lea.vmem %s2, %s2283
        $region81: #{small_conv_forward.4} parent=76 // pred_fallthru
          _
      $region77: #{small_conv_forward.4} parent=5 // pred_fallthru
        _
    $region6: #{small_conv_forward.4} parent=1 // loop_footer
      %s12 = sadd.s32 1, %s8
    $region7: #{small_conv_forward.4} parent=1 // loop_footer_branch
      %7 = sbr.rel target = $region3
    $region8: #{small_conv_forward.4} parent=1 // loop_exit
      _

// kernel: small_conv_forward.6
$region0: #{small_conv_forward.6}
  #allocation0 [shape = 'u32[]', space=smem, size = 0x4, offset = 0x4, fixed_abs, tag = 'smem constant byte address 0x4 - core index']
  #allocation1 [shape = 'u32[144,128]{1,0:T(1,128)}', space=vmem, size = 0x12000, scoped, tag = 'internal scratch']
  %s0 = inlined_call_operand.vmem [shape: bf16[2,48,128], index: 0, kind: input, shape index: {}]
  %s1 = inlined_call_operand.vmem [shape: bf16[9,128,128], index: 1, kind: input, shape index: {}]
  %s2 = inlined_call_operand.vmem [shape: f32[1,128], index: 2, kind: input, shape index: {}]
  %s3 = inlined_call_operand.vmem [shape: f32[1,128], index: 3, kind: input, shape index: {}]
  %s4 = inlined_call_operand.vmem [shape: bf16[2,32,128], index: 4, kind: output, shape index: {}]
  %s5 = sld [smem:[#allocation0]]
  $region49: #{small_conv_forward.6} parent=0
    _
  %s7 = ssub.s32 1, %s5
  %s8 = scalar_select 0, %s7, %s5
  loop: start=0, step=1, limit=4
  $region2: #{small_conv_forward.6} parent=0 // loop_pre_header
    _
  $region3: #{small_conv_forward.6} parent=0 // loop_header
    %s10 = sphi 0, %s14
    %p11 = scmp.ge.s32.totalorder %s10, 4
    %s20 = sphi 0, %s22
    %s23 = sphi 0, %s20
    %s24 = sphi 0, %s23
    %s40 = sphi 0, %s24
    %s44 = sphi 0, %s44
    %s46 = sphi 0, %s44
    %s47 = sphi 0, %s46
    %s61 = sphi 0, %s47
    %s65 = sphi 0, %s65
    %s67 = sphi 0, %s65
    %s68 = sphi 0, %s67
    %s82 = sphi 0, %s68
    %s86 = sphi 0, %s86
    %s88 = sphi 0, %s86
    %s89 = sphi 0, %s88
    %s103 = sphi 0, %s89
    %s109 = sphi 0, %s111
    %s112 = sphi 0, %s109
    %s113 = sphi 0, %s112
    %s129 = sphi 0, %s113
  $region4: #{small_conv_forward.6} parent=0 // loop_header_branch
    %13 = sbr.rel (%p11) target = $region8
  $region5: #{small_conv_forward.6} parent=0 // loop_body
    %s15 = ssub.s32 %s10, 1
    %s16 = ssub.s32 %s10, 2
    %s17 = sadd.s32 %s10, 1
    %s18 = ssub.s32 %s10, %s17
    %p19 = scmp.eq.s32.totalorder %s18, 0
    %s21 = sadd.s32 %s20, 1
    %s22 = scalar_select %p19, %s20, %s21
    %p25 = pneg %p19
    %p26 = scmp.eq.s32.totalorder %s10, 1
    %p27 = por %p25, %p26
    %p28 = scmp.ne.s32.totalorder %s20, %s23
    %p29 = scmp.eq.s32.totalorder %s10, 0
    %p30 = por %p28, %p29
    %p31 = scmp.ne.s32.totalorder %s20, %s23
    %p32 = scmp.eq.s32.totalorder %s15, 1
    %p33 = por %p31, %p32
    %p34 = scmp.ne.s32.totalorder %s23, %s24
    %p35 = scmp.eq.s32.totalorder %s15, 0
    %p36 = por %p34, %p35
    %p37 = scmp.ne.s32.totalorder %s23, %s24
    %p38 = scmp.eq.s32.totalorder %s16, 1
    %p39 = por %p37, %p38
    %p41 = scmp.ne.s32.totalorder %s24, %s40
    %p42 = scmp.eq.s32.totalorder %s16, 0
    %p43 = por %p41, %p42
    %s45 = sadd.s32 %s44, 1
    %p48 = scmp.eq.s32.totalorder %s10, 1
    %p49 = scmp.ne.s32.totalorder %s44, %s46
    %p50 = scmp.eq.s32.totalorder %s10, 0
    %p51 = por %p49, %p50
    %p52 = scmp.ne.s32.totalorder %s44, %s46
    %p53 = scmp.eq.s32.totalorder %s15, 1
    %p54 = por %p52, %p53
    %p55 = scmp.ne.s32.totalorder %s46, %s47
    %p56 = scmp.eq.s32.totalorder %s15, 0
    %p57 = por %p55, %p56
    %p58 = scmp.ne.s32.totalorder %s46, %s47
    %p59 = scmp.eq.s32.totalorder %s16, 1
    %p60 = por %p58, %p59
    %p62 = scmp.ne.s32.totalorder %s47, %s61
    %p63 = scmp.eq.s32.totalorder %s16, 0
    %p64 = por %p62, %p63
    %s66 = sadd.s32 %s65, 1
    %p69 = scmp.eq.s32.totalorder %s10, 1
    %p70 = scmp.ne.s32.totalorder %s65, %s67
    %p71 = scmp.eq.s32.totalorder %s10, 0
    %p72 = por %p70, %p71
    %p73 = scmp.ne.s32.totalorder %s65, %s67
    %p74 = scmp.eq.s32.totalorder %s15, 1
    %p75 = por %p73, %p74
    %p76 = scmp.ne.s32.totalorder %s67, %s68
    %p77 = scmp.eq.s32.totalorder %s15, 0
    %p78 = por %p76, %p77
    %p79 = scmp.ne.s32.totalorder %s67, %s68
    %p80 = scmp.eq.s32.totalorder %s16, 1
    %p81 = por %p79, %p80
    %p83 = scmp.ne.s32.totalorder %s68, %s82
    %p84 = scmp.eq.s32.totalorder %s16, 0
    %p85 = por %p83, %p84
    %s87 = sadd.s32 %s86, 1
    %p90 = scmp.eq.s32.totalorder %s10, 1
    %p91 = scmp.ne.s32.totalorder %s86, %s88
    %p92 = scmp.eq.s32.totalorder %s10, 0
    %p93 = por %p91, %p92
    %p94 = scmp.ne.s32.totalorder %s86, %s88
    %p95 = scmp.eq.s32.totalorder %s15, 1
    %p96 = por %p94, %p95
    %p97 = scmp.ne.s32.totalorder %s88, %s89
    %p98 = scmp.eq.s32.totalorder %s15, 0
    %p99 = por %p97, %p98
    %p100 = scmp.ne.s32.totalorder %s88, %s89
    %p101 = scmp.eq.s32.totalorder %s16, 1
    %p102 = por %p100, %p101
    %p104 = scmp.ne.s32.totalorder %s89, %s103
    %p105 = scmp.eq.s32.totalorder %s16, 0
    %p106 = por %p104, %p105
    %s107 = ssub.s32 %s10, %s17
    %p108 = scmp.eq.s32.totalorder %s107, 0
    %s110 = sadd.s32 %s109, 1
    %s111 = scalar_select %p108, %s109, %s110
    %p114 = pneg %p108
    %p115 = scmp.eq.s32.totalorder %s10, 1
    %p116 = por %p114, %p115
    %p117 = scmp.ne.s32.totalorder %s109, %s112
    %p118 = scmp.eq.s32.totalorder %s10, 0
    %p119 = por %p117, %p118
    %p120 = scmp.ne.s32.totalorder %s109, %s112
    %p121 = scmp.eq.s32.totalorder %s15, 1
    %p122 = por %p120, %p121
    %p123 = scmp.ne.s32.totalorder %s112, %s113
    %p124 = scmp.eq.s32.totalorder %s15, 0
    %p125 = por %p123, %p124
    %p126 = scmp.ne.s32.totalorder %s112, %s113
    %p127 = scmp.eq.s32.totalorder %s16, 1
    %p128 = por %p126, %p127
    %p130 = scmp.ne.s32.totalorder %s113, %s129
    %p131 = scmp.eq.s32.totalorder %s16, 0
    %p132 = por %p130, %p131
    %p133 = scmp.le.s32.totalorder 1, %s10
    %p134 = scmp.lt.s32.totalorder %s10, 3
    %p135 = pnand %p133, %p134
    %p136 = pneg %p135
    // Predicated region
    $region9: #{small_conv_forward.6} parent=5 // pred_check
      _
    $region10: #{small_conv_forward.6} parent=5 // pred_check_branch
      %138 = sbr.rel (%p135) target = $region12
    $region11: #{small_conv_forward.6} parent=5 // pred_region
      %s139 = ssub.s32 %s10, 1
      // Predicated region
      $region13: #{small_conv_forward.6} parent=11 // pred_check
        %p140 = pneg %p57
      $region14: #{small_conv_forward.6} parent=11 // pred_check_branch
        %142 = sbr.rel (%p140) target = $region16
      $region15: #{small_conv_forward.6} parent=11 // pred_region
        _
      $region16: #{small_conv_forward.6} parent=11 // pred_fallthru
        _
      // Predicated region
      $region17: #{small_conv_forward.6} parent=11 // pred_check
        %p143 = pneg %p78
      $region18: #{small_conv_forward.6} parent=11 // pred_check_branch
        %145 = sbr.rel (%p143) target = $region20
      $region19: #{small_conv_forward.6} parent=11 // pred_region
        _
      $region20: #{small_conv_forward.6} parent=11 // pred_fallthru
        _
      // Predicated region
      $region21: #{small_conv_forward.6} parent=11 // pred_check
        %p146 = pneg %p99
      $region22: #{small_conv_forward.6} parent=11 // pred_check_branch
        %148 = sbr.rel (%p146) target = $region24
      $region23: #{small_conv_forward.6} parent=11 // pred_region
        _
      $region24: #{small_conv_forward.6} parent=11 // pred_fallthru
        _
    $region12: #{small_conv_forward.6} parent=5 // pred_fallthru
      _
    %p149 = scmp.lt.s32.totalorder %s10, 2
    // Predicated region
    $region25: #{small_conv_forward.6} parent=5 // pred_check
      %p150 = pneg %p149
    $region26: #{small_conv_forward.6} parent=5 // pred_check_branch
      %152 = sbr.rel (%p150) target = $region28
    $region27: #{small_conv_forward.6} parent=5 // pred_region
      // Predicated region
      $region29: #{small_conv_forward.6} parent=27 // pred_check
        %p153 = pneg %p30
      $region30: #{small_conv_forward.6} parent=27 // pred_check_branch
        %155 = sbr.rel (%p153) target = $region32
      $region31: #{small_conv_forward.6} parent=27 // pred_region
        %p156 = scmp.lt.s32.totalorder %s10, 1
        %s157 = scalar_select %p156, %s10, 1
        %s158 = smul.addr %s157, 6
        %s159 = smul.addr %s158, 4
        %s160 = scalar_lea.vmem %s0, %s159
      $region32: #{small_conv_forward.6} parent=27 // pred_fallthru
        _
    $region28: #{small_conv_forward.6} parent=5 // pred_fallthru
      _
    %p161 = scmp.le.s32.totalorder 1, %s10
    %p162 = scmp.lt.s32.totalorder %s10, 3
    %p163 = pnand %p161, %p162
    %p164 = pneg %p163
    // Predicated region
    $region33: #{small_conv_forward.6} parent=5 // pred_check
      _
    $region34: #{small_conv_forward.6} parent=5 // pred_check_branch
      %166 = sbr.rel (%p163) target = $region36
    $region35: #{small_conv_forward.6} parent=5 // pred_region
      %s167 = ssub.s32 %s10, 1
      %p168 = scmp.lt.s32.totalorder %s15, 1
      %s169 = scalar_select %p168, %s15, 1
      %s170 = smul.addr %s169, 6
      %s171 = smul.addr %s170, 4
      %s172 = scalar_lea.vmem %s0, %s171
      %p173 = pneg %p36
      %p174 = pneg %p33
      %p175 = pneg %p57
      %p176 = pneg %p54
      %p177 = pneg %p78
      %p178 = pneg %p75
      %p179 = pneg %p99
      %p180 = pneg %p96
      %p181 = pneg %p125
      %p182 = pneg %p122
      %p183 = scmp.lt.s32.totalorder %s15, 1
      %s184 = scalar_select %p183, %s15, 1
      %s185 = smul.addr %s184, 4
      %s186 = smul.addr %s185, 4
      %s187 = scalar_lea.vmem %s4, %s186
      %p188 = scmp.lt.s32.totalorder %s15, 1
      %s189 = scalar_select %p188, %s15, 1
      %s190 = smul.addr %s189, 6
      %s191 = smul.addr %s190, 4
      %s192 = scalar_lea.vmem %s0, %s191
      %p193 = scmp.lt.s32.totalorder %s15, 1
      %s194 = scalar_select %p193, %s15, 1
      %s195 = smul.addr %s194, 4
      %s196 = smul.addr %s195, 4
      %s197 = scalar_lea.vmem %s4, %s196
      %v199 = vld [vmem:[%s2] sm:$0x1]
      %v200 = vld [vmem:[%s3] sm:$0x1]
      %v201 = vld [vmem:[%s192] sm:$0xf]
      %v202 = vld [vmem:[%s192 + $0x4] sm:$0xf]
      %v203 = vld [vmem:[%s192 + $0x8] sm:$0xf]
      %v204 = vld [vmem:[%s192 + $0xc] sm:$0xf]
      %v205 = vld [vmem:[%s1] sm:$0xf]
      %v206 = vld [vmem:[%s1 + $0x4] sm:$0xf]
      %v207 = vld [vmem:[%s1 + $0x8] sm:$0xf]
      %v208 = vld [vmem:[%s1 + $0xc] sm:$0xf]
      %v209 = vld [vmem:[%s1 + $0x10] sm:$0xf]
      %v210 = vld [vmem:[%s1 + $0x14] sm:$0xf]
      %v211 = vld [vmem:[%s1 + $0x18] sm:$0xf]
      %v212 = vld [vmem:[%s1 + $0x1c] sm:$0xf]
      %v213 = vld [vmem:[%s1 + $0x20] sm:$0xf]
      %v214 = vld [vmem:[%s1 + $0x24] sm:$0xf]
      %v215 = vld [vmem:[%s1 + $0x28] sm:$0xf]
      %v216 = vld [vmem:[%s1 + $0x2c] sm:$0xf]
      %v217 = vld [vmem:[%s1 + $0x30] sm:$0xf]
      %v218 = vld [vmem:[%s1 + $0x34] sm:$0xf]
      %v219 = vld [vmem:[%s1 + $0x38] sm:$0xf]
      %v220 = vld [vmem:[%s1 + $0x3c] sm:$0xf]
      %v221 = vld [vmem:[%s192 + $0x10] sm:$0x1]
      %s222 = scalar_lea.vmem %s1, 64
      %v223 = vld [vmem:[%s222] sm:$0xf]
      %v224 = vld [vmem:[%s222 + $0x4] sm:$0xf]
      %v225 = vld [vmem:[%s222 + $0x8] sm:$0xf]
      %v226 = vld [vmem:[%s222 + $0xc] sm:$0xf]
      %v227 = vld [vmem:[%s222 + $0x10] sm:$0xf]
      %v228 = vld [vmem:[%s222 + $0x14] sm:$0xf]
      %v229 = vld [vmem:[%s222 + $0x18] sm:$0xf]
      %v230 = vld [vmem:[%s222 + $0x1c] sm:$0xf]
      %v231 = vld [vmem:[%s222 + $0x20] sm:$0xf]
      %v232 = vld [vmem:[%s222 + $0x24] sm:$0xf]
      %v233 = vld [vmem:[%s222 + $0x28] sm:$0xf]
      %v234 = vld [vmem:[%s222 + $0x2c] sm:$0xf]
      %v235 = vld [vmem:[%s222 + $0x30] sm:$0xf]
      %v236 = vld [vmem:[%s222 + $0x34] sm:$0xf]
      %v237 = vld [vmem:[%s222 + $0x38] sm:$0xf]
      %v238 = vld [vmem:[%s222 + $0x3c] sm:$0xf]
      %v244 = vunpack.c.l.b16 %v201
      %v245 = vunpack.c.l.b16 %v202
      %v246 = vunpack.c.l.b16 %v203
      %v247 = vunpack.c.l.b16 %v204
      %v248 = vunpack.c.l.b16 %v221
      %v249 = vpack.c.b16 %v245, %v244
      %v250 = vpack.c.b16 %v247, %v246
      %v251 = vpack.c.b16 %v248, %v248
      %vm252 = vsmask.f32 7424
      %v254 = vshrl.u32 %v249, 16
      %v256 = vshll.u32 %v249, 16
      %v258 = vrot.slane %v256, 1
      %v259 = vor.u32 %v254, %v258
      %v261 = vshll.u32 %v250, 16
      %v263 = vrot.slane %v261, 1
      %v264 = vsel %vm252, %v259, %v263
      %v265 = vshrl.u32 %v250, 16
      %v267 = vor.u32 %v265, %v263
      %v269 = vshll.u32 %v251, 16
      %v271 = vrot.slane %v269, 1
      %v272 = vsel %vm252, %v267, %v271
      %v291 = vunpack.c.l.b16 %v223
      %v292 = vunpack.c.l.b16 %v224
      %v293 = vunpack.c.l.b16 %v225
      %v294 = vunpack.c.l.b16 %v226
      %v295 = vunpack.c.l.b16 %v227
      %v296 = vunpack.c.l.b16 %v228
      %v297 = vunpack.c.l.b16 %v229
      %v298 = vunpack.c.l.b16 %v230
      %v299 = vunpack.c.l.b16 %v231
      %v300 = vunpack.c.l.b16 %v232
      %v301 = vunpack.c.l.b16 %v233
      %v302 = vunpack.c.l.b16 %v234
      %v303 = vunpack.c.l.b16 %v235
      %v304 = vunpack.c.l.b16 %v236
      %v305 = vunpack.c.l.b16 %v237
      %v306 = vunpack.c.l.b16 %v238
      %v307 = vpack.c.b16 %v292, %v291
      %v308 = vpack.c.b16 %v294, %v293
      %v309 = vpack.c.b16 %v296, %v295
      %v310 = vpack.c.b16 %v298, %v297
      %v311 = vpack.c.b16 %v300, %v299
      %v312 = vpack.c.b16 %v302, %v301
      %v313 = vpack.c.b16 %v304, %v303
      %v314 = vpack.c.b16 %v306, %v305
      %323 = vmatprep.subr.bf16.mxu0 0
      %324 = vmatpush1.bf16.msra.mxu0 %v307
      %325 = vmatprep.subr.bf16.mxu0 0
      %326 = vmatpush1.bf16.msra.mxu0 %v308
      %327 = vmatprep.subr.bf16.mxu0 0
      %328 = vmatpush1.bf16.msra.mxu0 %v309
      %329 = vmatprep.subr.bf16.mxu0 0
      %330 = vmatpush1.bf16.msra.mxu0 %v310
      %331 = vmatprep.subr.bf16.mxu0 0
      %332 = vmatpush1.bf16.msra.mxu0 %v311
      %333 = vmatprep.subr.bf16.mxu0 0
      %334 = vmatpush1.bf16.msra.mxu0 %v312
      %335 = vmatprep.subr.bf16.mxu0 0
      %336 = vmatpush1.bf16.msra.mxu0 %v313
      %337 = vmatprep.subr.bf16.mxu0 0
      %338 = vmatpush1.bf16.msra.mxu0 %v314
      %339 = vmatprep.subr.bf16.mxu0 0
      %340 = vmatpush1.bf16.msra.mxu0 0
      %341 = vmatprep.subr.bf16.mxu0 0
      %342 = vmatpush1.bf16.msra.mxu0 0
      %343 = vmatprep.subr.bf16.mxu0 0
      %344 = vmatpush1.bf16.msra.mxu0 0
      %345 = vmatprep.subr.bf16.mxu0 0
      %346 = vmatpush1.bf16.msra.mxu0 0
      %347 = vmatprep.subr.bf16.mxu0 0
      %348 = vmatpush1.bf16.msra.mxu0 0
      %349 = vmatprep.subr.bf16.mxu0 0
      %350 = vmatpush1.bf16.msra.mxu0 0
      %351 = vmatprep.subr.bf16.mxu0 0
      %352 = vmatpush1.bf16.msra.mxu0 0
      %353 = vmatprep.subr.bf16.mxu0 0
      %354 = vmatpush1.bf16.msra.mxu0 0
      %355 = vmatprep.mubr.bf16.mxu0 0
      %356 = vmatmul.mubr.bf16.gmra.mrb[0].mxu0 %v264
      %v357 = vpop.f32.mrb[0].mxu0
      %v358 = vadd.f32 0.0, %v357
      %v359 = vpop.f32.mrb[0].mxu0
      %v360 = vpop.f32.mrb[0].mxu0
      %v361 = vadd.f32 0.0, %v360
      %v362 = vpop.f32.mrb[0].mxu0
      %363 = vmatprep.mubr.bf16.mxu0 0
      %364 = vmatmul.mubr.bf16.gmra.mrb[0].mxu0 %v272
      %v365 = vpop.f32.mrb[0].mxu0
      %v366 = vadd.f32 0.0, %v365
      %v367 = vpop.f32.mrb[0].mxu0
      %v368 = vpop.f32.mrb[0].mxu0
      %v369 = vadd.f32 0.0, %v368
      %v370 = vpop.f32.mrb[0].mxu0
      %371 = vdwg.mxu0
      %v390 = vunpack.c.l.b16 %v205
      %v391 = vunpack.c.l.b16 %v206
      %v392 = vunpack.c.l.b16 %v207
      %v393 = vunpack.c.l.b16 %v208
      %v394 = vunpack.c.l.b16 %v209
      %v395 = vunpack.c.l.b16 %v210
      %v396 = vunpack.c.l.b16 %v211
      %v397 = vunpack.c.l.b16 %v212
      %v398 = vunpack.c.l.b16 %v213
      %v399 = vunpack.c.l.b16 %v214
      %v400 = vunpack.c.l.b16 %v215
      %v401 = vunpack.c.l.b16 %v216
      %v402 = vunpack.c.l.b16 %v217
      %v403 = vunpack.c.l.b16 %v218
      %v404 = vunpack.c.l.b16 %v219
      %v405 = vunpack.c.l.b16 %v220
      %v406 = vpack.c.b16 %v391, %v390
      %v407 = vpack.c.b16 %v393, %v392
      %v408 = vpack.c.b16 %v395, %v394
      %v409 = vpack.c.b16 %v397, %v396
      %v410 = vpack.c.b16 %v399, %v398
      %v411 = vpack.c.b16 %v401, %v400
      %v412 = vpack.c.b16 %v403, %v402
      %v413 = vpack.c.b16 %v405, %v404
      %422 = vmatprep.subr.bf16.mxu0 0
      %423 = vmatpush1.bf16.msra.mxu0 %v406
      %424 = vmatprep.subr.bf16.mxu0 0
      %425 = vmatpush1.bf16.msra.mxu0 %v407
      %426 = vmatprep.subr.bf16.mxu0 0
      %427 = vmatpush1.bf16.msra.mxu0 %v408
      %428 = vmatprep.subr.bf16.mxu0 0
      %429 = vmatpush1.bf16.msra.mxu0 %v409
      %430 = vmatprep.subr.bf16.mxu0 0
      %431 = vmatpush1.bf16.msra.mxu0 %v410
      %432 = vmatprep.subr.bf16.mxu0 0
      %433 = vmatpush1.bf16.msra.mxu0 %v411
      %434 = vmatprep.subr.bf16.mxu0 0
      %435 = vmatpush1.bf16.msra.mxu0 %v412
      %436 = vmatprep.subr.bf16.mxu0 0
      %437 = vmatpush1.bf16.msra.mxu0 %v413
      %438 = vmatprep.subr.bf16.mxu0 0
      %439 = vmatpush1.bf16.msra.mxu0 0
      %440 = vmatprep.subr.bf16.mxu0 0
      %441 = vmatpush1.bf16.msra.mxu0 0
      %442 = vmatprep.subr.bf16.mxu0 0
      %443 = vmatpush1.bf16.msra.mxu0 0
      %444 = vmatprep.subr.bf16.mxu0 0
      %445 = vmatpush1.bf16.msra.mxu0 0
      %446 = vmatprep.subr.bf16.mxu0 0
      %447 = vmatpush1.bf16.msra.mxu0 0
      %448 = vmatprep.subr.bf16.mxu0 0
      %449 = vmatpush1.bf16.msra.mxu0 0
      %450 = vmatprep.subr.bf16.mxu0 0
      %451 = vmatpush1.bf16.msra.mxu0 0
      %452 = vmatprep.subr.bf16.mxu0 0
      %453 = vmatpush1.bf16.msra.mxu0 0
      %454 = vmatprep.mubr.bf16.mxu0 0
      %455 = vmatmul.mubr.bf16.gmra.mrb[0].mxu0 %v249
      %v456 = vpop.f32.mrb[0].mxu0
      %v457 = vadd.f32 %v358, %v456
      %v458 = vpop.f32.mrb[0].mxu0
      %v459 = vpop.f32.mrb[0].mxu0
      %v460 = vadd.f32 %v361, %v459
      %v461 = vpop.f32.mrb[0].mxu0
      %462 = vmatprep.mubr.bf16.mxu0 0
      %463 = vmatmul.mubr.bf16.gmra.mrb[0].mxu0 %v250
      %v464 = vpop.f32.mrb[0].mxu0
      %v465 = vadd.f32 %v366, %v464
      %v466 = vpop.f32.mrb[0].mxu0
      %v467 = vpop.f32.mrb[0].mxu0
      %v468 = vadd.f32 %v369, %v467
      %v469 = vpop.f32.mrb[0].mxu0
      %470 = vdwg.mxu0
      %v471 = vld [vmem:[%s192] sm:$0xe]
      %s472 = scalar_lea.vmem %s1, 128
      %v473 = vld [vmem:[%s472] sm:$0xf]
      %v474 = vld [vmem:[%s472 + $0x4] sm:$0xf]
      %v475 = vld [vmem:[%s472 + $0x8] sm:$0xf]
      %v476 = vld [vmem:[%s472 + $0xc] sm:$0xf]
      %v477 = vld [vmem:[%s472 + $0x10] sm:$0xf]
      %v478 = vld [vmem:[%s472 + $0x14] sm:$0xf]
      %v479 = vld [vmem:[%s472 + $0x18] sm:$0xf]
      %v480 = vld [vmem:[%s472 + $0x1c] sm:$0xf]
      %v481 = vld [vmem:[%s472 + $0x20] sm:$0xf]
      %v482 = vld [vmem:[%s472 + $0x24] sm:$0xf]
      %v483 = vld [vmem:[%s472 + $0x28] sm:$0xf]
      %v484 = vld [vmem:[%s472 + $0x2c] sm:$0xf]
      %v485 = vld [vmem:[%s472 + $0x30] sm:$0xf]
      %v486 = vld [vmem:[%s472 + $0x34] sm:$0xf]
      %v487 = vld [vmem:[%s472 + $0x38] sm:$0xf]
      %v488 = vld [vmem:[%s472 + $0x3c] sm:$0xf]
      %v490 = vunpack.c.l.b16 %v471
      %v491 = vpack.c.b16 %v245, %v490
      %vm492 = vcmask 1046528
      %v493 = vrot.slane %v491, 1
      %v494 = vrot.slane %v250, 1
      %v495 = vsel %vm492, %v493, %v494
      %v496 = vrot.slane %v251, 1
      %v497 = vsel %vm492, %v494, %v496
      %v516 = vunpack.c.l.b16 %v473
      %v517 = vunpack.c.l.b16 %v474
      %v518 = vunpack.c.l.b16 %v475
      %v519 = vunpack.c.l.b16 %v476
      %v520 = vunpack.c.l.b16 %v477
      %v521 = vunpack.c.l.b16 %v478
      %v522 = vunpack.c.l.b16 %v479
      %v523 = vunpack.c.l.b16 %v480
      %v524 = vunpack.c.l.b16 %v481
      %v525 = vunpack.c.l.b16 %v482
      %v526 = vunpack.c.l.b16 %v483
      %v527 = vunpack.c.l.b16 %v484
      %v528 = vunpack.c.l.b16 %v485
      %v529 = vunpack.c.l.b16 %v486
      %v530 = vunpack.c.l.b16 %v487
      %v531 = vunpack.c.l.b16 %v488
      %v532 = vpack.c.b16 %v517, %v516
      %v533 = vpack.c.b16 %v519, %v518
      %v534 = vpack.c.b16 %v521, %v520
      %v535 = vpack.c.b16 %v523, %v522
      %v536 = vpack.c.b16 %v525, %v524
      %v537 = vpack.c.b16 %v527, %v526
      %v538 = vpack.c.b16 %v529, %v528
      %v539 = vpack.c.b16 %v531, %v530
      %548 = vmatprep.subr.bf16.mxu0 0
      %549 = vmatpush1.bf16.msra.mxu0 %v532
      %550 = vmatprep.subr.bf16.mxu0 0
      %551 = vmatpush1.bf16.msra.mxu0 %v533
      %552 = vmatprep.subr.bf16.mxu0 0
      %553 = vmatpush1.bf16.msra.mxu0 %v534
      %554 = vmatprep.subr.bf16.mxu0 0
      %555 = vmatpush1.bf16.msra.mxu0 %v535
      %556 = vmatprep.subr.bf16.mxu0 0
      %557 = vmatpush1.bf16.msra.mxu0 %v536
      %558 = vmatprep.subr.bf16.mxu0 0
      %559 = vmatpush1.bf16.msra.mxu0 %v537
      %560 = vmatprep.subr.bf16.mxu0 0
      %561 = vmatpush1.bf16.msra.mxu0 %v538
      %562 = vmatprep.subr.bf16.mxu0 0
      %563 = vmatpush1.bf16.msra.mxu0 %v539
      %564 = vmatprep.subr.bf16.mxu0 0
      %565 = vmatpush1.bf16.msra.mxu0 0
      %566 = vmatprep.subr.bf16.mxu0 0
      %567 = vmatpush1.bf16.msra.mxu0 0
      %568 = vmatprep.subr.bf16.mxu0 0
      %569 = vmatpush1.bf16.msra.mxu0 0
      %570 = vmatprep.subr.bf16.mxu0 0
      %571 = vmatpush1.bf16.msra.mxu0 0
      %572 = vmatprep.subr.bf16.mxu0 0
      %573 = vmatpush1.bf16.msra.mxu0 0
      %574 = vmatprep.subr.bf16.mxu0 0
      %575 = vmatpush1.bf16.msra.mxu0 0
      %576 = vmatprep.subr.bf16.mxu0 0
      %577 = vmatpush1.bf16.msra.mxu0 0
      %578 = vmatprep.subr.bf16.mxu0 0
      %579 = vmatpush1.bf16.msra.mxu0 0
      %580 = vmatprep.mubr.bf16.mxu0 0
      %581 = vmatmul.mubr.bf16.gmra.mrb[0].mxu0 %v495
      %v582 = vpop.f32.mrb[0].mxu0
      %v583 = vadd.f32 0.0, %v582
      %v584 = vpop.f32.mrb[0].mxu0
      %v585 = vpop.f32.mrb[0].mxu0
      %v586 = vadd.f32 0.0, %v585
      %v587 = vpop.f32.mrb[0].mxu0
      %588 = vmatprep.mubr.bf16.mxu0 0
      %589 = vmatmul.mubr.bf16.gmra.mrb[0].mxu0 %v497
      %v590 = vpop.f32.mrb[0].mxu0
      %v591 = vadd.f32 0.0, %v590
      %v592 = vpop.f32.mrb[0].mxu0
      %v593 = vpop.f32.mrb[0].mxu0
      %v594 = vadd.f32 0.0, %v593
      %v595 = vpop.f32.mrb[0].mxu0
      %596 = vdwg.mxu0
      %v597 = vadd.f32 %v457, %v583
      %v598 = vadd.f32 %v460, %v586
      %v599 = vadd.f32 %v465, %v591
      %v600 = vadd.f32 %v468, %v594
      %v601 = vld [vmem:[%s192] sm:$0x8]
      %v602 = vld [vmem:[%s192 + $0x10] sm:$0x7]
      %s603 = scalar_lea.vmem %s1, 192
      %v604 = vld [vmem:[%s603] sm:$0xf]
      %v605 = vld [vmem:[%s603 + $0x4] sm:$0xf]
      %v606 = vld [vmem:[%s603 + $0x8] sm:$0xf]
      %v607 = vld [vmem:[%s603 + $0xc] sm:$0xf]
      %v608 = vld [vmem:[%s603 + $0x10] sm:$0xf]
      %v609 = vld [vmem:[%s603 + $0x14] sm:$0xf]
      %v610 = vld [vmem:[%s603 + $0x18] sm:$0xf]
      %v611 = vld [vmem:[%s603 + $0x1c] sm:$0xf]
      %v612 = vld [vmem:[%s603 + $0x20] sm:$0xf]
      %v613 = vld [vmem:[%s603 + $0x24] sm:$0xf]
      %v614 = vld [vmem:[%s603 + $0x28] sm:$0xf]
      %v615 = vld [vmem:[%s603 + $0x2c] sm:$0xf]
      %v616 = vld [vmem:[%s603 + $0x30] sm:$0xf]
      %v617 = vld [vmem:[%s603 + $0x34] sm:$0xf]
      %v618 = vld [vmem:[%s603 + $0x38] sm:$0xf]
      %v619 = vld [vmem:[%s603 + $0x3c] sm:$0xf]
      %v622 = vunpack.c.l.b16 %v601
      %v623 = vunpack.c.l.b16 %v602
      %v624 = vpack.c.b16 %v245, %v622
      %v625 = vpack.c.b16 %v623, %v623
      %vm626 = vcmask 1044480
      %v627 = vrot.slane %v624, 3
      %v628 = vrot.slane %v250, 3
      %v629 = vsel %vm626, %v627, %v628
      %v630 = vrot.slane %v625, 3
      %v631 = vsel %vm626, %v628, %v630
      %v650 = vunpack.c.l.b16 %v604
      %v651 = vunpack.c.l.b16 %v605
      %v652 = vunpack.c.l.b16 %v606
      %v653 = vunpack.c.l.b16 %v607
      %v654 = vunpack.c.l.b16 %v608
      %v655 = vunpack.c.l.b16 %v609
      %v656 = vunpack.c.l.b16 %v610
      %v657 = vunpack.c.l.b16 %v611
      %v658 = vunpack.c.l.b16 %v612
      %v659 = vunpack.c.l.b16 %v613
      %v660 = vunpack.c.l.b16 %v614
      %v661 = vunpack.c.l.b16 %v615
      %v662 = vunpack.c.l.b16 %v616
      %v663 = vunpack.c.l.b16 %v617
      %v664 = vunpack.c.l.b16 %v618
      %v665 = vunpack.c.l.b16 %v619
      %v666 = vpack.c.b16 %v651, %v650
      %v667 = vpack.c.b16 %v653, %v652
      %v668 = vpack.c.b16 %v655, %v654
      %v669 = vpack.c.b16 %v657, %v656
      %v670 = vpack.c.b16 %v659, %v658
      %v671 = vpack.c.b16 %v661, %v660
      %v672 = vpack.c.b16 %v663, %v662
      %v673 = vpack.c.b16 %v665, %v664
      %682 = vmatprep.subr.bf16.mxu0 0
      %683 = vmatpush1.bf16.msra.mxu0 %v666
      %684 = vmatprep.subr.bf16.mxu0 0
      %685 = vmatpush1.bf16.msra.mxu0 %v667
      %686 = vmatprep.subr.bf16.mxu0 0
      %687 = vmatpush1.bf16.msra.mxu0 %v668
      %688 = vmatprep.subr.bf16.mxu0 0
      %689 = vmatpush1.bf16.msra.mxu0 %v669
      %690 = vmatprep.subr.bf16.mxu0 0
      %691 = vmatpush1.bf16.msra.mxu0 %v670
      %692 = vmatprep.subr.bf16.mxu0 0
      %693 = vmatpush1.bf16.msra.mxu0 %v671
      %694 = vmatprep.subr.bf16.mxu0 0
      %695 = vmatpush1.bf16.msra.mxu0 %v672
      %696 = vmatprep.subr.bf16.mxu0 0
      %697 = vmatpush1.bf16.msra.mxu0 %v673
      %698 = vmatprep.subr.bf16.mxu0 0
      %699 = vmatpush1.bf16.msra.mxu0 0
      %700 = vmatprep.subr.bf16.mxu0 0
      %701 = vmatpush1.bf16.msra.mxu0 0
      %702 = vmatprep.subr.bf16.mxu0 0
      %703 = vmatpush1.bf16.msra.mxu0 0
      %704 = vmatprep.subr.bf16.mxu0 0
      %705 = vmatpush1.bf16.msra.mxu0 0
      %706 = vmatprep.subr.bf16.mxu0 0
      %707 = vmatpush1.bf16.msra.mxu0 0
      %708 = vmatprep.subr.bf16.mxu0 0
      %709 = vmatpush1.bf16.msra.mxu0 0
      %710 = vmatprep.subr.bf16.mxu0 0
      %711 = vmatpush1.bf16.msra.mxu0 0
      %712 = vmatprep.subr.bf16.mxu0 0
      %713 = vmatpush1.bf16.msra.mxu0 0
      %714 = vmatprep.mubr.bf16.mxu0 0
      %715 = vmatmul.mubr.bf16.gmra.mrb[0].mxu0 %v629
      %v716 = vpop.f32.mrb[0].mxu0
      %v717 = vadd.f32 0.0, %v716
      %v718 = vpop.f32.mrb[0].mxu0
      %v719 = vpop.f32.mrb[0].mxu0
      %v720 = vadd.f32 0.0, %v719
      %v721 = vpop.f32.mrb[0].mxu0
      %722 = vmatprep.mubr.bf16.mxu0 0
      %723 = vmatmul.mubr.bf16.gmra.mrb[0].mxu0 %v631
      %v724 = vpop.f32.mrb[0].mxu0
      %v725 = vadd.f32 0.0, %v724
      %v726 = vpop.f32.mrb[0].mxu0
      %v727 = vpop.f32.mrb[0].mxu0
      %v728 = vadd.f32 0.0, %v727
      %v729 = vpop.f32.mrb[0].mxu0
      %730 = vdwg.mxu0
      %v731 = vadd.f32 %v597, %v717
      %v732 = vadd.f32 %v598, %v720
      %v733 = vadd.f32 %v599, %v725
      %v734 = vadd.f32 %v600, %v728
      %v735 = vld [vmem:[%s192 + $0x10] sm:$0xf]
      %s736 = scalar_lea.vmem %s1, 256
      %v737 = vld [vmem:[%s736] sm:$0xf]
      %v738 = vld [vmem:[%s736 + $0x4] sm:$0xf]
      %v739 = vld [vmem:[%s736 + $0x8] sm:$0xf]
      %v740 = vld [vmem:[%s736 + $0xc] sm:$0xf]
      %v741 = vld [vmem:[%s736 + $0x10] sm:$0xf]
      %v742 = vld [vmem:[%s736 + $0x14] sm:$0xf]
      %v743 = vld [vmem:[%s736 + $0x18] sm:$0xf]
      %v744 = vld [vmem:[%s736 + $0x1c] sm:$0xf]
      %v745 = vld [vmem:[%s736 + $0x20] sm:$0xf]
      %v746 = vld [vmem:[%s736 + $0x24] sm:$0xf]
      %v747 = vld [vmem:[%s736 + $0x28] sm:$0xf]
      %v748 = vld [vmem:[%s736 + $0x2c] sm:$0xf]
      %v749 = vld [vmem:[%s736 + $0x30] sm:$0xf]
      %v750 = vld [vmem:[%s736 + $0x34] sm:$0xf]
      %v751 = vld [vmem:[%s736 + $0x38] sm:$0xf]
      %v752 = vld [vmem:[%s736 + $0x3c] sm:$0xf]
      %v754 = vunpack.c.l.b16 %v735
      %v755 = vpack.c.b16 %v754, %v754
      %vm756 = vsmask.f32 4352
      %v758 = vshrl.u32 %v624, 16
      %v760 = vrot.slane %v758, 3
      %v761 = vshll.u32 %v624, 16
      %v763 = vrot.slane %v761, 4
      %v764 = vor.u32 %v760, %v763
      %v765 = vrot.slane %v265, 3
      %v766 = vrot.slane %v261, 4
      %v767 = vor.u32 %v765, %v766
      %v768 = vsel %vm756, %v764, %v767
      %v770 = vshrl.u32 %v755, 16
      %v772 = vrot.slane %v770, 3
      %v773 = vshll.u32 %v755, 16
      %v775 = vrot.slane %v773, 4
      %v776 = vor.u32 %v772, %v775
      %v777 = vsel %vm756, %v767, %v776
      %v796 = vunpack.c.l.b16 %v737
      %v797 = vunpack.c.l.b16 %v738
      %v798 = vunpack.c.l.b16 %v739
      %v799 = vunpack.c.l.b16 %v740
      %v800 = vunpack.c.l.b16 %v741
      %v801 = vunpack.c.l.b16 %v742
      %v802 = vunpack.c.l.b16 %v743
      %v803 = vunpack.c.l.b16 %v744
      %v804 = vunpack.c.l.b16 %v745
      %v805 = vunpack.c.l.b16 %v746
      %v806 = vunpack.c.l.b16 %v747
      %v807 = vunpack.c.l.b16 %v748
      %v808 = vunpack.c.l.b16 %v749
      %v809 = vunpack.c.l.b16 %v750
      %v810 = vunpack.c.l.b16 %v751
      %v811 = vunpack.c.l.b16 %v752
      %v812 = vpack.c.b16 %v797, %v796
      %v813 = vpack.c.b16 %v799, %v798
      %v814 = vpack.c.b16 %v801, %v800
      %v815 = vpack.c.b16 %v803, %v802
      %v816 = vpack.c.b16 %v805, %v804
      %v817 = vpack.c.b16 %v807, %v806
      %v818 = vpack.c.b16 %v809, %v808
      %v819 = vpack.c.b16 %v811, %v810
      %828 = vmatprep.subr.bf16.mxu0 0
      %829 = vmatpush1.bf16.msra.mxu0 %v812
      %830 = vmatprep.subr.bf16.mxu0 0
      %831 = vmatpush1.bf16.msra.mxu0 %v813
      %832 = vmatprep.subr.bf16.mxu0 0
      %833 = vmatpush1.bf16.msra.mxu0 %v814
      %834 = vmatprep.subr.bf16.mxu0 0
      %835 = vmatpush1.bf16.msra.mxu0 %v815
      %836 = vmatprep.subr.bf16.mxu0 0
      %837 = vmatpush1.bf16.msra.mxu0 %v816
      %838 = vmatprep.subr.bf16.mxu0 0
      %839 = vmatpush1.bf16.msra.mxu0 %v817
      %840 = vmatprep.subr.bf16.mxu0 0
      %841 = vmatpush1.bf16.msra.mxu0 %v818
      %842 = vmatprep.subr.bf16.mxu0 0
      %843 = vmatpush1.bf16.msra.mxu0 %v819
      %844 = vmatprep.subr.bf16.mxu0 0
      %845 = vmatpush1.bf16.msra.mxu0 0
      %846 = vmatprep.subr.bf16.mxu0 0
      %847 = vmatpush1.bf16.msra.mxu0 0
      %848 = vmatprep.subr.bf16.mxu0 0
      %849 = vmatpush1.bf16.msra.mxu0 0
      %850 = vmatprep.subr.bf16.mxu0 0
      %851 = vmatpush1.bf16.msra.mxu0 0
      %852 = vmatprep.subr.bf16.mxu0 0
      %853 = vmatpush1.bf16.msra.mxu0 0
      %854 = vmatprep.subr.bf16.mxu0 0
      %855 = vmatpush1.bf16.msra.mxu0 0
      %856 = vmatprep.subr.bf16.mxu0 0
      %857 = vmatpush1.bf16.msra.mxu0 0
      %858 = vmatprep.subr.bf16.mxu0 0
      %859 = vmatpush1.bf16.msra.mxu0 0
      %860 = vmatprep.mubr.bf16.mxu0 0
      %861 = vmatmul.mubr.bf16.gmra.mrb[0].mxu0 %v768
      %v862 = vpop.f32.mrb[0].mxu0
      %v863 = vadd.f32 0.0, %v862
      %v864 = vpop.f32.mrb[0].mxu0
      %v865 = vpop.f32.mrb[0].mxu0
      %v866 = vadd.f32 0.0, %v865
      %v867 = vpop.f32.mrb[0].mxu0
      %868 = vmatprep.mubr.bf16.mxu0 0
      %869 = vmatmul.mubr.bf16.gmra.mrb[0].mxu0 %v777
      %v870 = vpop.f32.mrb[0].mxu0
      %v871 = vadd.f32 0.0, %v870
      %v872 = vpop.f32.mrb[0].mxu0
      %v873 = vpop.f32.mrb[0].mxu0
      %v874 = vadd.f32 0.0, %v873
      %v875 = vpop.f32.mrb[0].mxu0
      %876 = vdwg.mxu0
      %v877 = vadd.f32 %v731, %v863
      %v878 = vadd.f32 %v732, %v866
      %v879 = vadd.f32 %v733, %v871
      %v880 = vadd.f32 %v734, %v874
      %s881 = scalar_lea.vmem %s1, 320
      %v882 = vld [vmem:[%s881] sm:$0xf]
      %v883 = vld [vmem:[%s881 + $0x4] sm:$0xf]
      %v884 = vld [vmem:[%s881 + $0x8] sm:$0xf]
      %v885 = vld [vmem:[%s881 + $0xc] sm:$0xf]
      %v886 = vld [vmem:[%s881 + $0x10] sm:$0xf]
      %v887 = vld [vmem:[%s881 + $0x14] sm:$0xf]
      %v888 = vld [vmem:[%s881 + $0x18] sm:$0xf]
      %v889 = vld [vmem:[%s881 + $0x1c] sm:$0xf]
      %v890 = vld [vmem:[%s881 + $0x20] sm:$0xf]
      %v891 = vld [vmem:[%s881 + $0x24] sm:$0xf]
      %v892 = vld [vmem:[%s881 + $0x28] sm:$0xf]
      %v893 = vld [vmem:[%s881 + $0x2c] sm:$0xf]
      %v894 = vld [vmem:[%s881 + $0x30] sm:$0xf]
      %v895 = vld [vmem:[%s881 + $0x34] sm:$0xf]
      %v896 = vld [vmem:[%s881 + $0x38] sm:$0xf]
      %v897 = vld [vmem:[%s881 + $0x3c] sm:$0xf]
      %v898 = vpack.c.b16 %v246, %v245
      %v899 = vpack.c.b16 %v754, %v247
      %v918 = vunpack.c.l.b16 %v882
      %v919 = vunpack.c.l.b16 %v883
      %v920 = vunpack.c.l.b16 %v884
      %v921 = vunpack.c.l.b16 %v885
      %v922 = vunpack.c.l.b16 %v886
      %v923 = vunpack.c.l.b16 %v887
      %v924 = vunpack.c.l.b16 %v888
      %v925 = vunpack.c.l.b16 %v889
      %v926 = vunpack.c.l.b16 %v890
      %v927 = vunpack.c.l.b16 %v891
      %v928 = vunpack.c.l.b16 %v892
      %v929 = vunpack.c.l.b16 %v893
      %v930 = vunpack.c.l.b16 %v894
      %v931 = vunpack.c.l.b16 %v895
      %v932 = vunpack.c.l.b16 %v896
      %v933 = vunpack.c.l.b16 %v897
      %v934 = vpack.c.b16 %v919, %v918
      %v935 = vpack.c.b16 %v921, %v920
      %v936 = vpack.c.b16 %v923, %v922
      %v937 = vpack.c.b16 %v925, %v924
      %v938 = vpack.c.b16 %v927, %v926
      %v939 = vpack.c.b16 %v929, %v928
      %v940 = vpack.c.b16 %v931, %v930
      %v941 = vpack.c.b16 %v933, %v932
      %950 = vmatprep.subr.bf16.mxu0 0
      %951 = vmatpush1.bf16.msra.mxu0 %v934
      %952 = vmatprep.subr.bf16.mxu0 0
      %953 = vmatpush1.bf16.msra.mxu0 %v935
      %954 = vmatprep.subr.bf16.mxu0 0
      %955 = vmatpush1.bf16.msra.mxu0 %v936
      %956 = vmatprep.subr.bf16.mxu0 0
      %957 = vmatpush1.bf16.msra.mxu0 %v937
      %958 = vmatprep.subr.bf16.mxu0 0
      %959 = vmatpush1.bf16.msra.mxu0 %v938
      %960 = vmatprep.subr.bf16.mxu0 0
      %961 = vmatpush1.bf16.msra.mxu0 %v939
      %962 = vmatprep.subr.bf16.mxu0 0
      %963 = vmatpush1.bf16.msra.mxu0 %v940
      %964 = vmatprep.subr.bf16.mxu0 0
      %965 = vmatpush1.bf16.msra.mxu0 %v941
      %966 = vmatprep.subr.bf16.mxu0 0
      %967 = vmatpush1.bf16.msra.mxu0 0
      %968 = vmatprep.subr.bf16.mxu0 0
      %969 = vmatpush1.bf16.msra.mxu0 0
      %970 = vmatprep.subr.bf16.mxu0 0
      %971 = vmatpush1.bf16.msra.mxu0 0
      %972 = vmatprep.subr.bf16.mxu0 0
      %973 = vmatpush1.bf16.msra.mxu0 0
      %974 = vmatprep.subr.bf16.mxu0 0
      %975 = vmatpush1.bf16.msra.mxu0 0
      %976 = vmatprep.subr.bf16.mxu0 0
      %977 = vmatpush1.bf16.msra.mxu0 0
      %978 = vmatprep.subr.bf16.mxu0 0
      %979 = vmatpush1.bf16.msra.mxu0 0
      %980 = vmatprep.subr.bf16.mxu0 0
      %981 = vmatpush1.bf16.msra.mxu0 0
      %982 = vmatprep.mubr.bf16.mxu0 0
      %983 = vmatmul.mubr.bf16.gmra.mrb[0].mxu0 %v898
      %v984 = vpop.f32.mrb[0].mxu0
      %v985 = vadd.f32 0.0, %v984
      %v986 = vpop.f32.mrb[0].mxu0
      %v987 = vpop.f32.mrb[0].mxu0
      %v988 = vadd.f32 0.0, %v987
      %v989 = vpop.f32.mrb[0].mxu0
      %990 = vmatprep.mubr.bf16.mxu0 0
      %991 = vmatmul.mubr.bf16.gmra.mrb[0].mxu0 %v899
      %v992 = vpop.f32.mrb[0].mxu0
      %v993 = vadd.f32 0.0, %v992
      %v994 = vpop.f32.mrb[0].mxu0
      %v995 = vpop.f32.mrb[0].mxu0
      %v996 = vadd.f32 0.0, %v995
      %v997 = vpop.f32.mrb[0].mxu0
      %998 = vdwg.mxu0
      %v999 = vadd.f32 %v877, %v985
      %v1000 = vadd.f32 %v878, %v988
      %v1001 = vadd.f32 %v879, %v993
      %v1002 = vadd.f32 %v880, %v996
      %v1003 = vld [vmem:[%s192 + $0x4] sm:$0xc]
      %v1004 = vld [vmem:[%s192 + $0x8] sm:$0xf]
      %v1005 = vld [vmem:[%s192 + $0xc] sm:$0xf]
      %v1006 = vld [vmem:[%s192 + $0x10] sm:$0xf]
      %v1007 = vld [vmem:[%s192 + $0x14] sm:$0x3]
      %s1008 = scalar_lea.vmem %s1, 384
      %v1009 = vld [vmem:[%s1008] sm:$0xf]
      %v1010 = vld [vmem:[%s1008 + $0x4] sm:$0xf]
      %v1011 = vld [vmem:[%s1008 + $0x8] sm:$0xf]
      %v1012 = vld [vmem:[%s1008 + $0xc] sm:$0xf]
      %v1013 = vld [vmem:[%s1008 + $0x10] sm:$0xf]
      %v1014 = vld [vmem:[%s1008 + $0x14] sm:$0xf]
      %v1015 = vld [vmem:[%s1008 + $0x18] sm:$0xf]
      %v1016 = vld [vmem:[%s1008 + $0x1c] sm:$0xf]
      %v1017 = vld [vmem:[%s1008 + $0x20] sm:$0xf]
      %v1018 = vld [vmem:[%s1008 + $0x24] sm:$0xf]
      %v1019 = vld [vmem:[%s1008 + $0x28] sm:$0xf]
      %v1020 = vld [vmem:[%s1008 + $0x2c] sm:$0xf]
      %v1021 = vld [vmem:[%s1008 + $0x30] sm:$0xf]
      %v1022 = vld [vmem:[%s1008 + $0x34] sm:$0xf]
      %v1023 = vld [vmem:[%s1008 + $0x38] sm:$0xf]
      %v1024 = vld [vmem:[%s1008 + $0x3c] sm:$0xf]
      %v1030 = vunpack.c.l.b16 %v1003
      %v1031 = vunpack.c.l.b16 %v1004
      %v1032 = vunpack.c.l.b16 %v1005
      %v1033 = vunpack.c.l.b16 %v1006
      %v1034 = vunpack.c.l.b16 %v1007
      %v1035 = vpack.c.b16 %v1031, %v1030
      %v1036 = vpack.c.b16 %v1033, %v1032
      %v1037 = vpack.c.b16 %v1034, %v1034
      %vm1038 = vcmask 1045504
      %v1039 = vrot.slane %v1035, 2
      %v1040 = vrot.slane %v1036, 2
      %v1041 = vsel %vm1038, %v1039, %v1040
      %v1042 = vrot.slane %v1037, 2
      %v1043 = vsel %vm1038, %v1040, %v1042
      %v1062 = vunpack.c.l.b16 %v1009
      %v1063 = vunpack.c.l.b16 %v1010
      %v1064 = vunpack.c.l.b16 %v1011
      %v1065 = vunpack.c.l.b16 %v1012
      %v1066 = vunpack.c.l.b16 %v1013
      %v1067 = vunpack.c.l.b16 %v1014
      %v1068 = vunpack.c.l.b16 %v1015
      %v1069 = vunpack.c.l.b16 %v1016
      %v1070 = vunpack.c.l.b16 %v1017
      %v1071 = vunpack.c.l.b16 %v1018
      %v1072 = vunpack.c.l.b16 %v1019
      %v1073 = vunpack.c.l.b16 %v1020
      %v1074 = vunpack.c.l.b16 %v1021
      %v1075 = vunpack.c.l.b16 %v1022
      %v1076 = vunpack.c.l.b16 %v1023
      %v1077 = vunpack.c.l.b16 %v1024
      %v1078 = vpack.c.b16 %v1063, %v1062
      %v1079 = vpack.c.b16 %v1065, %v1064
      %v1080 = vpack.c.b16 %v1067, %v1066
      %v1081 = vpack.c.b16 %v1069, %v1068
      %v1082 = vpack.c.b16 %v1071, %v1070
      %v1083 = vpack.c.b16 %v1073, %v1072
      %v1084 = vpack.c.b16 %v1075, %v1074
      %v1085 = vpack.c.b16 %v1077, %v1076
      %1094 = vmatprep.subr.bf16.mxu0 0
      %1095 = vmatpush1.bf16.msra.mxu0 %v1078
      %1096 = vmatprep.subr.bf16.mxu0 0
      %1097 = vmatpush1.bf16.msra.mxu0 %v1079
      %1098 = vmatprep.subr.bf16.mxu0 0
      %1099 = vmatpush1.bf16.msra.mxu0 %v1080
      %1100 = vmatprep.subr.bf16.mxu0 0
      %1101 = vmatpush1.bf16.msra.mxu0 %v1081
      %1102 = vmatprep.subr.bf16.mxu0 0
      %1103 = vmatpush1.bf16.msra.mxu0 %v1082
      %1104 = vmatprep.subr.bf16.mxu0 0
      %1105 = vmatpush1.bf16.msra.mxu0 %v1083
      %1106 = vmatprep.subr.bf16.mxu0 0
      %1107 = vmatpush1.bf16.msra.mxu0 %v1084
      %1108 = vmatprep.subr.bf16.mxu0 0
      %1109 = vmatpush1.bf16.msra.mxu0 %v1085
      %1110 = vmatprep.subr.bf16.mxu0 0
      %1111 = vmatpush1.bf16.msra.mxu0 0
      %1112 = vmatprep.subr.bf16.mxu0 0
      %1113 = vmatpush1.bf16.msra.mxu0 0
      %1114 = vmatprep.subr.bf16.mxu0 0
      %1115 = vmatpush1.bf16.msra.mxu0 0
      %1116 = vmatprep.subr.bf16.mxu0 0
      %1117 = vmatpush1.bf16.msra.mxu0 0
      %1118 = vmatprep.subr.bf16.mxu0 0
      %1119 = vmatpush1.bf16.msra.mxu0 0
      %1120 = vmatprep.subr.bf16.mxu0 0
      %1121 = vmatpush1.bf16.msra.mxu0 0
      %1122 = vmatprep.subr.bf16.mxu0 0
      %1123 = vmatpush1.bf16.msra.mxu0 0
      %1124 = vmatprep.subr.bf16.mxu0 0
      %1125 = vmatpush1.bf16.msra.mxu0 0
      %1126 = vmatprep.mubr.bf16.mxu0 0
      %1127 = vmatmul.mubr.bf16.gmra.mrb[0].mxu0 %v1041
      %v1128 = vpop.f32.mrb[0].mxu0
      %v1129 = vadd.f32 0.0, %v1128
      %v1130 = vpop.f32.mrb[0].mxu0
      %v1131 = vpop.f32.mrb[0].mxu0
      %v1132 = vadd.f32 0.0, %v1131
      %v1133 = vpop.f32.mrb[0].mxu0
      %1134 = vmatprep.mubr.bf16.mxu0 0
      %1135 = vmatmul.mubr.bf16.gmra.mrb[0].mxu0 %v1043
      %v1136 = vpop.f32.mrb[0].mxu0
      %v1137 = vadd.f32 0.0, %v1136
      %v1138 = vpop.f32.mrb[0].mxu0
      %v1139 = vpop.f32.mrb[0].mxu0
      %v1140 = vadd.f32 0.0, %v1139
      %v1141 = vpop.f32.mrb[0].mxu0
      %1142 = vdwg.mxu0
      %v1143 = vadd.f32 %v999, %v1129
      %v1144 = vadd.f32 %v1000, %v1132
      %v1145 = vadd.f32 %v1001, %v1137
      %v1146 = vadd.f32 %v1002, %v1140
      %v1147 = vld [vmem:[%s192 + $0x14] sm:$0x7]
      %s1148 = scalar_lea.vmem %s1, 448
      %v1149 = vld [vmem:[%s1148] sm:$0xf]
      %v1150 = vld [vmem:[%s1148 + $0x4] sm:$0xf]
      %v1151 = vld [vmem:[%s1148 + $0x8] sm:$0xf]
      %v1152 = vld [vmem:[%s1148 + $0xc] sm:$0xf]
      %v1153 = vld [vmem:[%s1148 + $0x10] sm:$0xf]
      %v1154 = vld [vmem:[%s1148 + $0x14] sm:$0xf]
      %v1155 = vld [vmem:[%s1148 + $0x18] sm:$0xf]
      %v1156 = vld [vmem:[%s1148 + $0x1c] sm:$0xf]
      %v1157 = vld [vmem:[%s1148 + $0x20] sm:$0xf]
      %v1158 = vld [vmem:[%s1148 + $0x24] sm:$0xf]
      %v1159 = vld [vmem:[%s1148 + $0x28] sm:$0xf]
      %v1160 = vld [vmem:[%s1148 + $0x2c] sm:$0xf]
      %v1161 = vld [vmem:[%s1148 + $0x30] sm:$0xf]
      %v1162 = vld [vmem:[%s1148 + $0x34] sm:$0xf]
      %v1163 = vld [vmem:[%s1148 + $0x38] sm:$0xf]
      %v1164 = vld [vmem:[%s1148 + $0x3c] sm:$0xf]
      %v1166 = vunpack.c.l.b16 %v1147
      %v1167 = vpack.c.b16 %v1166, %v1166
      %vm1168 = vsmask.f32 5376
      %v1170 = vshrl.u32 %v1035, 16
      %v1172 = vrot.slane %v1170, 2
      %v1173 = vshll.u32 %v1035, 16
      %v1175 = vrot.slane %v1173, 3
      %v1176 = vor.u32 %v1172, %v1175
      %v1178 = vshrl.u32 %v1036, 16
      %v1180 = vrot.slane %v1178, 2
      %v1181 = vshll.u32 %v1036, 16
      %v1183 = vrot.slane %v1181, 3
      %v1184 = vor.u32 %v1180, %v1183
      %v1185 = vsel %vm1168, %v1176, %v1184
      %v1187 = vshrl.u32 %v1167, 16
      %v1189 = vrot.slane %v1187, 2
      %v1190 = vshll.u32 %v1167, 16
      %v1192 = vrot.slane %v1190, 3
      %v1193 = vor.u32 %v1189, %v1192
      %v1194 = vsel %vm1168, %v1184, %v1193
      %v1213 = vunpack.c.l.b16 %v1149
      %v1214 = vunpack.c.l.b16 %v1150
      %v1215 = vunpack.c.l.b16 %v1151
      %v1216 = vunpack.c.l.b16 %v1152
      %v1217 = vunpack.c.l.b16 %v1153
      %v1218 = vunpack.c.l.b16 %v1154
      %v1219 = vunpack.c.l.b16 %v1155
      %v1220 = vunpack.c.l.b16 %v1156
      %v1221 = vunpack.c.l.b16 %v1157
      %v1222 = vunpack.c.l.b16 %v1158
      %v1223 = vunpack.c.l.b16 %v1159
      %v1224 = vunpack.c.l.b16 %v1160
      %v1225 = vunpack.c.l.b16 %v1161
      %v1226 = vunpack.c.l.b16 %v1162
      %v1227 = vunpack.c.l.b16 %v1163
      %v1228 = vunpack.c.l.b16 %v1164
      %v1229 = vpack.c.b16 %v1214, %v1213
      %v1230 = vpack.c.b16 %v1216, %v1215
      %v1231 = vpack.c.b16 %v1218, %v1217
      %v1232 = vpack.c.b16 %v1220, %v1219
      %v1233 = vpack.c.b16 %v1222, %v1221
      %v1234 = vpack.c.b16 %v1224, %v1223
      %v1235 = vpack.c.b16 %v1226, %v1225
      %v1236 = vpack.c.b16 %v1228, %v1227
      %1245 = vmatprep.subr.bf16.mxu0 0
      %1246 = vmatpush1.bf16.msra.mxu0 %v1229
      %1247 = vmatprep.subr.bf16.mxu0 0
      %1248 = vmatpush1.bf16.msra.mxu0 %v1230
      %1249 = vmatprep.subr.bf16.mxu0 0
      %1250 = vmatpush1.bf16.msra.mxu0 %v1231
      %1251 = vmatprep.subr.bf16.mxu0 0
      %1252 = vmatpush1.bf16.msra.mxu0 %v1232
      %1253 = vmatprep.subr.bf16.mxu0 0
      %1254 = vmatpush1.bf16.msra.mxu0 %v1233
      %1255 = vmatprep.subr.bf16.mxu0 0
      %1256 = vmatpush1.bf16.msra.mxu0 %v1234
      %1257 = vmatprep.subr.bf16.mxu0 0
      %1258 = vmatpush1.bf16.msra.mxu0 %v1235
      %1259 = vmatprep.subr.bf16.mxu0 0
      %1260 = vmatpush1.bf16.msra.mxu0 %v1236
      %1261 = vmatprep.subr.bf16.mxu0 0
      %1262 = vmatpush1.bf16.msra.mxu0 0
      %1263 = vmatprep.subr.bf16.mxu0 0
      %1264 = vmatpush1.bf16.msra.mxu0 0
      %1265 = vmatprep.subr.bf16.mxu0 0
      %1266 = vmatpush1.bf16.msra.mxu0 0
      %1267 = vmatprep.subr.bf16.mxu0 0
      %1268 = vmatpush1.bf16.msra.mxu0 0
      %1269 = vmatprep.subr.bf16.mxu0 0
      %1270 = vmatpush1.bf16.msra.mxu0 0
      %1271 = vmatprep.subr.bf16.mxu0 0
      %1272 = vmatpush1.bf16.msra.mxu0 0
      %1273 = vmatprep.subr.bf16.mxu0 0
      %1274 = vmatpush1.bf16.msra.mxu0 0
      %1275 = vmatprep.subr.bf16.mxu0 0
      %1276 = vmatpush1.bf16.msra.mxu0 0
      %1277 = vmatprep.mubr.bf16.mxu0 0
      %1278 = vmatmul.mubr.bf16.gmra.mrb[0].mxu0 %v1185
      %v1279 = vpop.f32.mrb[0].mxu0
      %v1280 = vadd.f32 0.0, %v1279
      %v1281 = vpop.f32.mrb[0].mxu0
      %v1282 = vpop.f32.mrb[0].mxu0
      %v1283 = vadd.f32 0.0, %v1282
      %v1284 = vpop.f32.mrb[0].mxu0
      %1285 = vmatprep.mubr.bf16.mxu0 0
      %1286 = vmatmul.mubr.bf16.gmra.mrb[0].mxu0 %v1194
      %v1287 = vpop.f32.mrb[0].mxu0
      %v1288 = vadd.f32 0.0, %v1287
      %v1289 = vpop.f32.mrb[0].mxu0
      %v1290 = vpop.f32.mrb[0].mxu0
      %v1291 = vadd.f32 0.0, %v1290
      %v1292 = vpop.f32.mrb[0].mxu0
      %1293 = vdwg.mxu0
      %v1294 = vadd.f32 %v1143, %v1280
      %v1295 = vadd.f32 %v1144, %v1283
      %v1296 = vadd.f32 %v1145, %v1288
      %v1297 = vadd.f32 %v1146, %v1291
      %v1298 = vld [vmem:[%s192 + $0x4] sm:$0x8]
      %s1299 = scalar_lea.vmem %s1, 512
      %v1300 = vld [vmem:[%s1299] sm:$0xf]
      %v1301 = vld [vmem:[%s1299 + $0x4] sm:$0xf]
      %v1302 = vld [vmem:[%s1299 + $0x8] sm:$0xf]
      %v1303 = vld [vmem:[%s1299 + $0xc] sm:$0xf]
      %v1304 = vld [vmem:[%s1299 + $0x10] sm:$0xf]
      %v1305 = vld [vmem:[%s1299 + $0x14] sm:$0xf]
      %v1306 = vld [vmem:[%s1299 + $0x18] sm:$0xf]
      %v1307 = vld [vmem:[%s1299 + $0x1c] sm:$0xf]
      %v1308 = vld [vmem:[%s1299 + $0x20] sm:$0xf]
      %v1309 = vld [vmem:[%s1299 + $0x24] sm:$0xf]
      %v1310 = vld [vmem:[%s1299 + $0x28] sm:$0xf]
      %v1311 = vld [vmem:[%s1299 + $0x2c] sm:$0xf]
      %v1312 = vld [vmem:[%s1299 + $0x30] sm:$0xf]
      %v1313 = vld [vmem:[%s1299 + $0x34] sm:$0xf]
      %v1314 = vld [vmem:[%s1299 + $0x38] sm:$0xf]
      %v1315 = vld [vmem:[%s1299 + $0x3c] sm:$0xf]
      %v1317 = vunpack.c.l.b16 %v1298
      %v1318 = vpack.c.b16 %v1031, %v1317
      %v1319 = vrot.slane %v1318, 3
      %v1320 = vrot.slane %v1036, 3
      %v1321 = vsel %vm626, %v1319, %v1320
      %v1322 = vrot.slane %v1167, 3
      %v1323 = vsel %vm626, %v1320, %v1322
      %v1342 = vunpack.c.l.b16 %v1300
      %v1343 = vunpack.c.l.b16 %v1301
      %v1344 = vunpack.c.l.b16 %v1302
      %v1345 = vunpack.c.l.b16 %v1303
      %v1346 = vunpack.c.l.b16 %v1304
      %v1347 = vunpack.c.l.b16 %v1305
      %v1348 = vunpack.c.l.b16 %v1306
      %v1349 = vunpack.c.l.b16 %v1307
      %v1350 = vunpack.c.l.b16 %v1308
      %v1351 = vunpack.c.l.b16 %v1309
      %v1352 = vunpack.c.l.b16 %v1310
      %v1353 = vunpack.c.l.b16 %v1311
      %v1354 = vunpack.c.l.b16 %v1312
      %v1355 = vunpack.c.l.b16 %v1313
      %v1356 = vunpack.c.l.b16 %v1314
      %v1357 = vunpack.c.l.b16 %v1315
      %v1358 = vpack.c.b16 %v1343, %v1342
      %v1359 = vpack.c.b16 %v1345, %v1344
      %v1360 = vpack.c.b16 %v1347, %v1346
      %v1361 = vpack.c.b16 %v1349, %v1348
      %v1362 = vpack.c.b16 %v1351, %v1350
      %v1363 = vpack.c.b16 %v1353, %v1352
      %v1364 = vpack.c.b16 %v1355, %v1354
      %v1365 = vpack.c.b16 %v1357, %v1356
      %1374 = vmatprep.subr.bf16.mxu0 0
      %1375 = vmatpush1.bf16.msra.mxu0 %v1358
      %1376 = vmatprep.subr.bf16.mxu0 0
      %1377 = vmatpush1.bf16.msra.mxu0 %v1359
      %1378 = vmatprep.subr.bf16.mxu0 0
      %1379 = vmatpush1.bf16.msra.mxu0 %v1360
      %1380 = vmatprep.subr.bf16.mxu0 0
      %1381 = vmatpush1.bf16.msra.mxu0 %v1361
      %1382 = vmatprep.subr.bf16.mxu0 0
      %1383 = vmatpush1.bf16.msra.mxu0 %v1362
      %1384 = vmatprep.subr.bf16.mxu0 0
      %1385 = vmatpush1.bf16.msra.mxu0 %v1363
      %1386 = vmatprep.subr.bf16.mxu0 0
      %1387 = vmatpush1.bf16.msra.mxu0 %v1364
      %1388 = vmatprep.subr.bf16.mxu0 0
      %1389 = vmatpush1.bf16.msra.mxu0 %v1365
      %1390 = vmatprep.subr.bf16.mxu0 0
      %1391 = vmatpush1.bf16.msra.mxu0 0
      %1392 = vmatprep.subr.bf16.mxu0 0
      %1393 = vmatpush1.bf16.msra.mxu0 0
      %1394 = vmatprep.subr.bf16.mxu0 0
      %1395 = vmatpush1.bf16.msra.mxu0 0
      %1396 = vmatprep.subr.bf16.mxu0 0
      %1397 = vmatpush1.bf16.msra.mxu0 0
      %1398 = vmatprep.subr.bf16.mxu0 0
      %1399 = vmatpush1.bf16.msra.mxu0 0
      %1400 = vmatprep.subr.bf16.mxu0 0
      %1401 = vmatpush1.bf16.msra.mxu0 0
      %1402 = vmatprep.subr.bf16.mxu0 0
      %1403 = vmatpush1.bf16.msra.mxu0 0
      %1404 = vmatprep.subr.bf16.mxu0 0
      %1405 = vmatpush1.bf16.msra.mxu0 0
      %1406 = vmatprep.mubr.bf16.mxu0 0
      %1407 = vmatmul.mubr.bf16.gmra.mrb[0].mxu0 %v1321
      %v1408 = vpop.f32.mrb[0].mxu0
      %v1409 = vadd.f32 0.0, %v1408
      %v1410 = vpop.f32.mrb[0].mxu0
      %v1411 = vpop.f32.mrb[0].mxu0
      %v1412 = vadd.f32 0.0, %v1411
      %v1413 = vpop.f32.mrb[0].mxu0
      %1414 = vmatprep.mubr.bf16.mxu0 0
      %1415 = vmatmul.mubr.bf16.gmra.mrb[0].mxu0 %v1323
      %v1416 = vpop.f32.mrb[0].mxu0
      %v1417 = vadd.f32 0.0, %v1416
      %v1418 = vpop.f32.mrb[0].mxu0
      %v1419 = vpop.f32.mrb[0].mxu0
      %v1420 = vadd.f32 0.0, %v1419
      %v1421 = vpop.f32.mrb[0].mxu0
      %1422 = vdwg.mxu0
      %v1423 = vadd.f32 %v1294, %v1409
      %v1424 = vadd.f32 %v1295, %v1412
      %v1425 = vadd.f32 %v1296, %v1417
      %v1426 = vadd.f32 %v1297, %v1420
      %v1428 = vlaneseq
      %v1429 = vshrl.u32 %v1428, 7
      %v1430 = vsub.s32 0, %v1429
      %v1431 = vrot.slane %v199, %v1430
      %v1433 = vmul.f32 %v1423, %v1431
      %v1434 = vmul.f32 %v1424, %v1431
      %v1435 = vmul.f32 %v1425, %v1431
      %v1436 = vmul.f32 %v1426, %v1431
      %v1438 = vlaneseq
      %v1439 = vshrl.u32 %v1438, 7
      %v1440 = vsub.s32 0, %v1439
      %v1441 = vrot.slane %v200, %v1440
      %v1443 = vadd.f32 %v1433, %v1441
      %v1444 = vadd.f32 %v1434, %v1441
      %v1445 = vadd.f32 %v1435, %v1441
      %v1446 = vadd.f32 %v1436, %v1441
      %v1447 = vmax.f32 %v1443, 0.0
      %v1448 = vmax.f32 %v1444, 0.0
      %v1449 = vmax.f32 %v1445, 0.0
      %v1450 = vmax.f32 %v1446, 0.0
      %v1451 = vpack.c.bf16 %v1448, %v1447
      %v1452 = vpack.c.bf16 %v1450, %v1449
      %v1455 = vunpack.c.l.b16 %v1451
      %v1456 = vunpack.c.h.b16 %v1451
      %v1457 = vunpack.c.l.b16 %v1452
      %v1458 = vunpack.c.h.b16 %v1452
      %v1459 = vpack.c.b16 %v1455, %v1455
      %v1460 = vpack.c.b16 %v1456, %v1456
      %v1461 = vpack.c.b16 %v1457, %v1457
      %v1462 = vpack.c.b16 %v1458, %v1458
      %1467 = vst [vmem:[%s197] sm:$0xf] %v1459
      %1468 = vst [vmem:[%s197 + $0x4] sm:$0xf] %v1460
      %1469 = vst [vmem:[%s197 + $0x8] sm:$0xf] %v1461
      %1470 = vst [vmem:[%s197 + $0xc] sm:$0xf] %v1462
      %p1471 = scmp.lt.s32.totalorder %s15, 1
      %s1472 = scalar_select %p1471, %s15, 1
      %s1473 = smul.addr %s1472, 4
      %s1474 = smul.addr %s1473, 4
      %s1475 = scalar_lea.vmem %s4, %s1474
      // Predicated region
      $region37: #{small_conv_forward.6} parent=35 // pred_check
        %p1476 = pneg %p122
      $region38: #{small_conv_forward.6} parent=35 // pred_check_branch
        %1478 = sbr.rel (%p1476) target = $region40
      $region39: #{small_conv_forward.6} parent=35 // pred_region
        _
      $region40: #{small_conv_forward.6} parent=35 // pred_fallthru
        _
    $region36: #{small_conv_forward.6} parent=5 // pred_fallthru
      _
    %p1479 = scmp.le.s32.totalorder 2, %s10
    // Predicated region
    $region41: #{small_conv_forward.6} parent=5 // pred_check
      %p1480 = pneg %p1479
    $region42: #{small_conv_forward.6} parent=5 // pred_check_branch
      %1482 = sbr.rel (%p1480) target = $region44
    $region43: #{small_conv_forward.6} parent=5 // pred_region
      %s1483 = ssub.s32 %s10, 2
      // Predicated region
      $region45: #{small_conv_forward.6} parent=43 // pred_check
        %p1484 = pneg %p128
      $region46: #{small_conv_forward.6} parent=43 // pred_check_branch
        %1486 = sbr.rel (%p1484) target = $region48
      $region47: #{small_conv_forward.6} parent=43 // pred_region
        %p1487 = scmp.lt.s32.totalorder %s16, 1
        %s1488 = scalar_select %p1487, %s16, 1
        %s1489 = smul.addr %s1488, 4
        %s1490 = smul.addr %s1489, 4
        %s1491 = scalar_lea.vmem %s4, %s1490
      $region48: #{small_conv_forward.6} parent=43 // pred_fallthru
        _
    $region44: #{small_conv_forward.6} parent=5 // pred_fallthru
      _
  $region6: #{small_conv_forward.6} parent=0 // loop_footer
    %s14 = sadd.s32 1, %s10
  $region7: #{small_conv_forward.6} parent=0 // loop_footer_branch
    %9 = sbr.rel target = $region3
  $region8: #{small_conv_forward.6} parent=0 // loop_exit
    _

// kernel: small_conv_forward.7
$region0: #{small_conv_forward.7}
  #allocation0 [shape = 'u32[]', space=smem, size = 0x4, offset = 0x4, fixed_abs, tag = 'smem constant byte address 0x4 - core index']
  #allocation1 [shape = 'u32[144,128]{1,0:T(1,128)}', space=vmem, size = 0x12000, scoped, tag = 'internal scratch']
  %s0 = inlined_call_operand.vmem [shape: bf16[16,512], index: 0, kind: input, shape index: {}]
  %s1 = inlined_call_operand.vmem [shape: s32[16,1], index: 1, kind: input, shape index: {}]
  %s2 = inlined_call_operand.vmem [shape: bf16[1,512,128], index: 2, kind: input, shape index: {}]
  %s3 = inlined_call_operand.vmem [shape: f32[1,1,128], index: 3, kind: input, shape index: {}]
  %s4 = inlined_call_operand.vmem [shape: f32[16,128], index: 4, kind: output, shape index: {}]
  %s5 = sld [smem:[#allocation0]]
  $region26: #{small_conv_forward.7} parent=0
    _
  %s7 = ssub.s32 1, %s5
  %s8 = scalar_select 0, %s7, %s5
  // Predicated region
  $region2: #{small_conv_forward.7} parent=0 // pred_check
    _
  $region3: #{small_conv_forward.7} parent=0 // pred_check_branch
    %10 = sbr.rel (0) target = $region5
  $region4: #{small_conv_forward.7} parent=0 // pred_region
    _
  $region5: #{small_conv_forward.7} parent=0 // pred_fallthru
    _
  // Predicated region
  $region6: #{small_conv_forward.7} parent=0 // pred_check
    _
  $region7: #{small_conv_forward.7} parent=0 // pred_check_branch
    %12 = sbr.rel (0) target = $region9
  $region8: #{small_conv_forward.7} parent=0 // pred_region
    _
  $region9: #{small_conv_forward.7} parent=0 // pred_fallthru
    _
  // Predicated region
  $region10: #{small_conv_forward.7} parent=0 // pred_check
    _
  $region11: #{small_conv_forward.7} parent=0 // pred_check_branch
    %14 = sbr.rel (0) target = $region13
  $region12: #{small_conv_forward.7} parent=0 // pred_region
    _
  $region13: #{small_conv_forward.7} parent=0 // pred_fallthru
    _
  // Predicated region
  $region14: #{small_conv_forward.7} parent=0 // pred_check
    _
  $region15: #{small_conv_forward.7} parent=0 // pred_check_branch
    %16 = sbr.rel (0) target = $region17
  $region16: #{small_conv_forward.7} parent=0 // pred_region
    _
  $region17: #{small_conv_forward.7} parent=0 // pred_fallthru
    _
  %v18 = vld [vmem:[%s0] sm:$0xff]
  %v19 = vld [vmem:[%s0 + $0x8] sm:$0xff]
  %v20 = vld [vmem:[%s0 + $0x10] sm:$0xff]
  %v21 = vld [vmem:[%s0 + $0x18] sm:$0xff]
  %v22 = vld [vmem:[%s2] sm:$0xf]
  %v23 = vld [vmem:[%s2 + $0x4] sm:$0xf]
  %v24 = vld [vmem:[%s2 + $0x8] sm:$0xf]
  %v25 = vld [vmem:[%s2 + $0xc] sm:$0xf]
  %v26 = vld [vmem:[%s2 + $0x10] sm:$0xf]
  %v27 = vld [vmem:[%s2 + $0x14] sm:$0xf]
  %v28 = vld [vmem:[%s2 + $0x18] sm:$0xf]
  %v29 = vld [vmem:[%s2 + $0x1c] sm:$0xf]
  %v30 = vld [vmem:[%s2 + $0x20] sm:$0xf]
  %v31 = vld [vmem:[%s2 + $0x24] sm:$0xf]
  %v32 = vld [vmem:[%s2 + $0x28] sm:$0xf]
  %v33 = vld [vmem:[%s2 + $0x2c] sm:$0xf]
  %v34 = vld [vmem:[%s2 + $0x30] sm:$0xf]
  %v35 = vld [vmem:[%s2 + $0x34] sm:$0xf]
  %v36 = vld [vmem:[%s2 + $0x38] sm:$0xf]
  %v37 = vld [vmem:[%s2 + $0x3c] sm:$0xf]
  %v38 = vld [vmem:[%s2 + $0x40] sm:$0xf]
  %v39 = vld [vmem:[%s2 + $0x44] sm:$0xf]
  %v40 = vld [vmem:[%s2 + $0x48] sm:$0xf]
  %v41 = vld [vmem:[%s2 + $0x4c] sm:$0xf]
  %v42 = vld [vmem:[%s2 + $0x50] sm:$0xf]
  %v43 = vld [vmem:[%s2 + $0x54] sm:$0xf]
  %v44 = vld [vmem:[%s2 + $0x58] sm:$0xf]
  %v45 = vld [vmem:[%s2 + $0x5c] sm:$0xf]
  %v46 = vld [vmem:[%s2 + $0x60] sm:$0xf]
  %v47 = vld [vmem:[%s2 + $0x64] sm:$0xf]
  %v48 = vld [vmem:[%s2 + $0x68] sm:$0xf]
  %v49 = vld [vmem:[%s2 + $0x6c] sm:$0xf]
  %v50 = vld [vmem:[%s2 + $0x70] sm:$0xf]
  %v51 = vld [vmem:[%s2 + $0x74] sm:$0xf]
  %v52 = vld [vmem:[%s2 + $0x78] sm:$0xf]
  %v53 = vld [vmem:[%s2 + $0x7c] sm:$0xf]
  %v54 = vld [vmem:[%s2 + $0x80] sm:$0xf]
  %v55 = vld [vmem:[%s2 + $0x84] sm:$0xf]
  %v56 = vld [vmem:[%s2 + $0x88] sm:$0xf]
  %v57 = vld [vmem:[%s2 + $0x8c] sm:$0xf]
  %v58 = vld [vmem:[%s2 + $0x90] sm:$0xf]
  %v59 = vld [vmem:[%s2 + $0x94] sm:$0xf]
  %v60 = vld [vmem:[%s2 + $0x98] sm:$0xf]
  %v61 = vld [vmem:[%s2 + $0x9c] sm:$0xf]
  %v62 = vld [vmem:[%s2 + $0xa0] sm:$0xf]
  %v63 = vld [vmem:[%s2 + $0xa4] sm:$0xf]
  %v64 = vld [vmem:[%s2 + $0xa8] sm:$0xf]
  %v65 = vld [vmem:[%s2 + $0xac] sm:$0xf]
  %v66 = vld [vmem:[%s2 + $0xb0] sm:$0xf]
  %v67 = vld [vmem:[%s2 + $0xb4] sm:$0xf]
  %v68 = vld [vmem:[%s2 + $0xb8] sm:$0xf]
  %v69 = vld [vmem:[%s2 + $0xbc] sm:$0xf]
  %v70 = vld [vmem:[%s2 + $0xc0] sm:$0xf]
  %v71 = vld [vmem:[%s2 + $0xc4] sm:$0xf]
  %v72 = vld [vmem:[%s2 + $0xc8] sm:$0xf]
  %v73 = vld [vmem:[%s2 + $0xcc] sm:$0xf]
  %v74 = vld [vmem:[%s2 + $0xd0] sm:$0xf]
  %v75 = vld [vmem:[%s2 + $0xd4] sm:$0xf]
  %v76 = vld [vmem:[%s2 + $0xd8] sm:$0xf]
  %v77 = vld [vmem:[%s2 + $0xdc] sm:$0xf]
  %v78 = vld [vmem:[%s2 + $0xe0] sm:$0xf]
  %v79 = vld [vmem:[%s2 + $0xe4] sm:$0xf]
  %v80 = vld [vmem:[%s2 + $0xe8] sm:$0xf]
  %v81 = vld [vmem:[%s2 + $0xec] sm:$0xf]
  %v82 = vld [vmem:[%s2 + $0xf0] sm:$0xf]
  %v83 = vld [vmem:[%s2 + $0xf4] sm:$0xf]
  %v84 = vld [vmem:[%s2 + $0xf8] sm:$0xf]
  %v85 = vld [vmem:[%s2 + $0xfc] sm:$0xf]
  %v86 = vld [vmem:[%s3] sm:$0x1]
  %v88 = vlaneseq
  %v89 = vshrl.u32 %v88, 7
  %v90 = vsub.s32 0, %v89
  %v91 = vrot.slane %v86, %v90
  %v97 = vunpack.c.l.b16 %v18
  %v98 = vunpack.c.h.b16 %v18
  %v99 = vunpack.c.l.b16 %v19
  %v100 = vunpack.c.h.b16 %v19
  %v101 = vunpack.c.l.b16 %v20
  %v102 = vunpack.c.h.b16 %v20
  %v103 = vunpack.c.l.b16 %v21
  %v104 = vunpack.c.h.b16 %v21
  %v105 = vpack.c.b16 %v101, %v97
  %v106 = vpack.c.b16 %v102, %v98
  %v107 = vpack.c.b16 %v103, %v99
  %v108 = vpack.c.b16 %v104, %v100
  %v177 = vunpack.c.l.b16 %v22
  %v178 = vunpack.c.l.b16 %v23
  %v179 = vunpack.c.l.b16 %v24
  %v180 = vunpack.c.l.b16 %v25
  %v181 = vunpack.c.l.b16 %v26
  %v182 = vunpack.c.l.b16 %v27
  %v183 = vunpack.c.l.b16 %v28
  %v184 = vunpack.c.l.b16 %v29
  %v185 = vunpack.c.l.b16 %v30
  %v186 = vunpack.c.l.b16 %v31
  %v187 = vunpack.c.l.b16 %v32
  %v188 = vunpack.c.l.b16 %v33
  %v189 = vunpack.c.l.b16 %v34
  %v190 = vunpack.c.l.b16 %v35
  %v191 = vunpack.c.l.b16 %v36
  %v192 = vunpack.c.l.b16 %v37
  %v193 = vunpack.c.l.b16 %v38
  %v194 = vunpack.c.l.b16 %v39
  %v195 = vunpack.c.l.b16 %v40
  %v196 = vunpack.c.l.b16 %v41
  %v197 = vunpack.c.l.b16 %v42
  %v198 = vunpack.c.l.b16 %v43
  %v199 = vunpack.c.l.b16 %v44
  %v200 = vunpack.c.l.b16 %v45
  %v201 = vunpack.c.l.b16 %v46
  %v202 = vunpack.c.l.b16 %v47
  %v203 = vunpack.c.l.b16 %v48
  %v204 = vunpack.c.l.b16 %v49
  %v205 = vunpack.c.l.b16 %v50
  %v206 = vunpack.c.l.b16 %v51
  %v207 = vunpack.c.l.b16 %v52
  %v208 = vunpack.c.l.b16 %v53
  %v209 = vunpack.c.l.b16 %v54
  %v210 = vunpack.c.l.b16 %v55
  %v211 = vunpack.c.l.b16 %v56
  %v212 = vunpack.c.l.b16 %v57
  %v213 = vunpack.c.l.b16 %v58
  %v214 = vunpack.c.l.b16 %v59
  %v215 = vunpack.c.l.b16 %v60
  %v216 = vunpack.c.l.b16 %v61
  %v217 = vunpack.c.l.b16 %v62
  %v218 = vunpack.c.l.b16 %v63
  %v219 = vunpack.c.l.b16 %v64
  %v220 = vunpack.c.l.b16 %v65
  %v221 = vunpack.c.l.b16 %v66
  %v222 = vunpack.c.l.b16 %v67
  %v223 = vunpack.c.l.b16 %v68
  %v224 = vunpack.c.l.b16 %v69
  %v225 = vunpack.c.l.b16 %v70
  %v226 = vunpack.c.l.b16 %v71
  %v227 = vunpack.c.l.b16 %v72
  %v228 = vunpack.c.l.b16 %v73
  %v229 = vunpack.c.l.b16 %v74
  %v230 = vunpack.c.l.b16 %v75
  %v231 = vunpack.c.l.b16 %v76
  %v232 = vunpack.c.l.b16 %v77
  %v233 = vunpack.c.l.b16 %v78
  %v234 = vunpack.c.l.b16 %v79
  %v235 = vunpack.c.l.b16 %v80
  %v236 = vunpack.c.l.b16 %v81
  %v237 = vunpack.c.l.b16 %v82
  %v238 = vunpack.c.l.b16 %v83
  %v239 = vunpack.c.l.b16 %v84
  %v240 = vunpack.c.l.b16 %v85
  %v241 = vpack.c.b16 %v178, %v177
  %v242 = vpack.c.b16 %v180, %v179
  %v243 = vpack.c.b16 %v182, %v181
  %v244 = vpack.c.b16 %v184, %v183
  %v245 = vpack.c.b16 %v186, %v185
  %v246 = vpack.c.b16 %v188, %v187
  %v247 = vpack.c.b16 %v190, %v189
  %v248 = vpack.c.b16 %v192, %v191
  %v249 = vpack.c.b16 %v194, %v193
  %v250 = vpack.c.b16 %v196, %v195
  %v251 = vpack.c.b16 %v198, %v197
  %v252 = vpack.c.b16 %v200, %v199
  %v253 = vpack.c.b16 %v202, %v201
  %v254 = vpack.c.b16 %v204, %v203
  %v255 = vpack.c.b16 %v206, %v205
  %v256 = vpack.c.b16 %v208, %v207
  %v257 = vpack.c.b16 %v210, %v209
  %v258 = vpack.c.b16 %v212, %v211
  %v259 = vpack.c.b16 %v214, %v213
  %v260 = vpack.c.b16 %v216, %v215
  %v261 = vpack.c.b16 %v218, %v217
  %v262 = vpack.c.b16 %v220, %v219
  %v263 = vpack.c.b16 %v222, %v221
  %v264 = vpack.c.b16 %v224, %v223
  %v265 = vpack.c.b16 %v226, %v225
  %v266 = vpack.c.b16 %v228, %v227
  %v267 = vpack.c.b16 %v230, %v229
  %v268 = vpack.c.b16 %v232, %v231
  %v269 = vpack.c.b16 %v234, %v233
  %v270 = vpack.c.b16 %v236, %v235
  %v271 = vpack.c.b16 %v238, %v237
  %v272 = vpack.c.b16 %v240, %v239
  %305 = vmatprep.subr.bf16.mxu0 0
  %306 = vmatpush1.bf16.msra.mxu0 %v241
  %307 = vmatprep.subr.bf16.mxu0 0
  %308 = vmatpush1.bf16.msra.mxu0 %v242
  %309 = vmatprep.subr.bf16.mxu0 0
  %310 = vmatpush1.bf16.msra.mxu0 %v243
  %311 = vmatprep.subr.bf16.mxu0 0
  %312 = vmatpush1.bf16.msra.mxu0 %v244
  %313 = vmatprep.subr.bf16.mxu0 0
  %314 = vmatpush1.bf16.msra.mxu0 %v245
  %315 = vmatprep.subr.bf16.mxu0 0
  %316 = vmatpush1.bf16.msra.mxu0 %v246
  %317 = vmatprep.subr.bf16.mxu0 0
  %318 = vmatpush1.bf16.msra.mxu0 %v247
  %319 = vmatprep.subr.bf16.mxu0 0
  %320 = vmatpush1.bf16.msra.mxu0 %v248
  %321 = vmatprep.subr.bf16.mxu0 0
  %322 = vmatpush1.bf16.msra.mxu0 %v249
  %323 = vmatprep.subr.bf16.mxu0 0
  %324 = vmatpush1.bf16.msra.mxu0 %v250
  %325 = vmatprep.subr.bf16.mxu0 0
  %326 = vmatpush1.bf16.msra.mxu0 %v251
  %327 = vmatprep.subr.bf16.mxu0 0
  %328 = vmatpush1.bf16.msra.mxu0 %v252
  %329 = vmatprep.subr.bf16.mxu0 0
  %330 = vmatpush1.bf16.msra.mxu0 %v253
  %331 = vmatprep.subr.bf16.mxu0 0
  %332 = vmatpush1.bf16.msra.mxu0 %v254
  %333 = vmatprep.subr.bf16.mxu0 0
  %334 = vmatpush1.bf16.msra.mxu0 %v255
  %335 = vmatprep.subr.bf16.mxu0 0
  %336 = vmatpush1.bf16.msra.mxu0 %v256
  %337 = vmatprep.mubr.bf16.mxu0 %v106
  %338 = vmatmul.mubr.bf16.gmra.mrb[0].mxu0 %v105
  %v339 = vpop.f32.mrb[0].mxu0
  %v340 = vadd.f32 %v91, %v339
  %v341 = vpop.f32.mrb[0].mxu0
  %v342 = vpop.f32.mrb[0].mxu0
  %v343 = vadd.f32 %v91, %v342
  %v344 = vpop.f32.mrb[0].mxu0
  %345 = vdwg.mxu0
  %346 = vmatprep.subr.bf16.mxu0 0
  %347 = vmatpush1.bf16.msra.mxu0 %v257
  %348 = vmatprep.subr.bf16.mxu0 0
  %349 = vmatpush1.bf16.msra.mxu0 %v258
  %350 = vmatprep.subr.bf16.mxu0 0
  %351 = vmatpush1.bf16.msra.mxu0 %v259
  %352 = vmatprep.subr.bf16.mxu0 0
  %353 = vmatpush1.bf16.msra.mxu0 %v260
  %354 = vmatprep.subr.bf16.mxu0 0
  %355 = vmatpush1.bf16.msra.mxu0 %v261
  %356 = vmatprep.subr.bf16.mxu0 0
  %357 = vmatpush1.bf16.msra.mxu0 %v262
  %358 = vmatprep.subr.bf16.mxu0 0
  %359 = vmatpush1.bf16.msra.mxu0 %v263
  %360 = vmatprep.subr.bf16.mxu0 0
  %361 = vmatpush1.bf16.msra.mxu0 %v264
  %362 = vmatprep.subr.bf16.mxu0 0
  %363 = vmatpush1.bf16.msra.mxu0 %v265
  %364 = vmatprep.subr.bf16.mxu0 0
  %365 = vmatpush1.bf16.msra.mxu0 %v266
  %366 = vmatprep.subr.bf16.mxu0 0
  %367 = vmatpush1.bf16.msra.mxu0 %v267
  %368 = vmatprep.subr.bf16.mxu0 0
  %369 = vmatpush1.bf16.msra.mxu0 %v268
  %370 = vmatprep.subr.bf16.mxu0 0
  %371 = vmatpush1.bf16.msra.mxu0 %v269
  %372 = vmatprep.subr.bf16.mxu0 0
  %373 = vmatpush1.bf16.msra.mxu0 %v270
  %374 = vmatprep.subr.bf16.mxu0 0
  %375 = vmatpush1.bf16.msra.mxu0 %v271
  %376 = vmatprep.subr.bf16.mxu0 0
  %377 = vmatpush1.bf16.msra.mxu0 %v272
  %378 = vmatprep.mubr.bf16.mxu0 %v108
  %379 = vmatmul.mubr.bf16.gmra.mrb[0].mxu0 %v107
  %v380 = vpop.f32.mrb[0].mxu0
  %v381 = vadd.f32 %v340, %v380
  %v382 = vpop.f32.mrb[0].mxu0
  %v383 = vpop.f32.mrb[0].mxu0
  %v384 = vadd.f32 %v343, %v383
  %v385 = vpop.f32.mrb[0].mxu0
  %386 = vdwg.mxu0
  %v387 = vld [vmem:[%s1] sm:$0xff]
  %v388 = vld [vmem:[%s1 + $0x8] sm:$0xff]
  %vm389 = vcmp.eq.s32.totalorder %v387, 0
  %vm390 = vcmp.eq.s32.totalorder %v388, 0
  %v391 = vsel %vm389, 1, 0
  %v392 = vsel %vm390, 1, 0
  %393 = vset.pattern.permute.xlu0 0
  %394 = vperm.xlu0 %393, %v391
  %v395 = vpop.permute.xlu0 %394
  %396 = vset.pattern.permute.xlu0 0
  %397 = vperm.xlu0 %396, %v392
  %v398 = vpop.permute.xlu0 %397
  %vm399 = vcmp.eq.s32.totalorder %v395, 1
  %vm400 = vcmp.eq.s32.totalorder %v398, 1
  %v401 = vsel %vm399, %v381, 0.0
  %v402 = vsel %vm400, %v384, 0.0
  %v403 = vadd.f32 %v401, 0.0
  %v404 = vadd.f32 %v402, 0.0
  %405 = vst [vmem:[%s4] sm:$0xff] %v403
  %406 = vst [vmem:[%s4 + $0x8] sm:$0xff] %v404
  // Predicated region
  $region18: #{small_conv_forward.7} parent=0 // pred_check
    _
  $region19: #{small_conv_forward.7} parent=0 // pred_check_branch
    %408 = sbr.rel (0) target = $region21
  $region20: #{small_conv_forward.7} parent=0 // pred_region
    _
  $region21: #{small_conv_forward.7} parent=0 // pred_fallthru
    _
  // Predicated region
  $region22: #{small_conv_forward.7} parent=0 // pred_check
    _
  $region23: #{small_conv_forward.7} parent=0 // pred_check_branch
    %410 = sbr.rel (0) target = $region25
  $region24: #{small_conv_forward.7} parent=0 // pred_region
    _
  $region25: #{small_conv_forward.7} parent=0 // pred_fallthru
    _

// kernel: small_conv_forward.5
$region0: #{small_conv_forward.5}
  #allocation0 [shape = 'u32[]', space=smem, size = 0x4, offset = 0x4, fixed_abs, tag = 'smem constant byte address 0x4 - core index']
  #allocation1 [shape = 'u32[144,128]{1,0:T(1,128)}', space=vmem, size = 0x12000, scoped, tag = 'internal scratch']
  %s0 = inlined_call_operand.vmem [shape: bf16[2,240,128], index: 0, kind: input, shape index: {}]
  %s1 = inlined_call_operand.vmem [shape: bf16[9,128,128], index: 1, kind: input, shape index: {}]
  %s2 = inlined_call_operand.vmem [shape: f32[1,128], index: 2, kind: input, shape index: {}]
  %s3 = inlined_call_operand.vmem [shape: f32[1,128], index: 3, kind: input, shape index: {}]
  %s4 = inlined_call_operand.vmem [shape: bf16[2,208,128], index: 4, kind: output, shape index: {}]
  %s5 = sld [smem:[#allocation0]]
  $region49: #{small_conv_forward.5} parent=0
    _
  %s7 = ssub.s32 1, %s5
  %s8 = scalar_select 0, %s7, %s5
  loop: start=0, step=1, limit=4
  $region2: #{small_conv_forward.5} parent=0 // loop_pre_header
    _
  $region3: #{small_conv_forward.5} parent=0 // loop_header
    %s10 = sphi 0, %s14
    %p11 = scmp.ge.s32.totalorder %s10, 4
    %s20 = sphi 0, %s22
    %s23 = sphi 0, %s20
    %s24 = sphi 0, %s23
    %s40 = sphi 0, %s24
    %s44 = sphi 0, %s44
    %s46 = sphi 0, %s44
    %s47 = sphi 0, %s46
    %s61 = sphi 0, %s47
    %s65 = sphi 0, %s65
    %s67 = sphi 0, %s65
    %s68 = sphi 0, %s67
    %s82 = sphi 0, %s68
    %s86 = sphi 0, %s86
    %s88 = sphi 0, %s86
    %s89 = sphi 0, %s88
    %s103 = sphi 0, %s89
    %s109 = sphi 0, %s111
    %s112 = sphi 0, %s109
    %s113 = sphi 0, %s112
    %s129 = sphi 0, %s113
  $region4: #{small_conv_forward.5} parent=0 // loop_header_branch
    %13 = sbr.rel (%p11) target = $region8
  $region5: #{small_conv_forward.5} parent=0 // loop_body
    %s15 = ssub.s32 %s10, 1
    %s16 = ssub.s32 %s10, 2
    %s17 = sadd.s32 %s10, 1
    %s18 = ssub.s32 %s10, %s17
    %p19 = scmp.eq.s32.totalorder %s18, 0
    %s21 = sadd.s32 %s20, 1
    %s22 = scalar_select %p19, %s20, %s21
    %p25 = pneg %p19
    %p26 = scmp.eq.s32.totalorder %s10, 1
    %p27 = por %p25, %p26
    %p28 = scmp.ne.s32.totalorder %s20, %s23
    %p29 = scmp.eq.s32.totalorder %s10, 0
    %p30 = por %p28, %p29
    %p31 = scmp.ne.s32.totalorder %s20, %s23
    %p32 = scmp.eq.s32.totalorder %s15, 1
    %p33 = por %p31, %p32
    %p34 = scmp.ne.s32.totalorder %s23, %s24
    %p35 = scmp.eq.s32.totalorder %s15, 0
    %p36 = por %p34, %p35
    %p37 = scmp.ne.s32.totalorder %s23, %s24
    %p38 = scmp.eq.s32.totalorder %s16, 1
    %p39 = por %p37, %p38
    %p41 = scmp.ne.s32.totalorder %s24, %s40
    %p42 = scmp.eq.s32.totalorder %s16, 0
    %p43 = por %p41, %p42
    %s45 = sadd.s32 %s44, 1
    %p48 = scmp.eq.s32.totalorder %s10, 1
    %p49 = scmp.ne.s32.totalorder %s44, %s46
    %p50 = scmp.eq.s32.totalorder %s10, 0
    %p51 = por %p49, %p50
    %p52 = scmp.ne.s32.totalorder %s44, %s46
    %p53 = scmp.eq.s32.totalorder %s15, 1
    %p54 = por %p52, %p53
    %p55 = scmp.ne.s32.totalorder %s46, %s47
    %p56 = scmp.eq.s32.totalorder %s15, 0
    %p57 = por %p55, %p56
    %p58 = scmp.ne.s32.totalorder %s46, %s47
    %p59 = scmp.eq.s32.totalorder %s16, 1
    %p60 = por %p58, %p59
    %p62 = scmp.ne.s32.totalorder %s47, %s61
    %p63 = scmp.eq.s32.totalorder %s16, 0
    %p64 = por %p62, %p63
    %s66 = sadd.s32 %s65, 1
    %p69 = scmp.eq.s32.totalorder %s10, 1
    %p70 = scmp.ne.s32.totalorder %s65, %s67
    %p71 = scmp.eq.s32.totalorder %s10, 0
    %p72 = por %p70, %p71
    %p73 = scmp.ne.s32.totalorder %s65, %s67
    %p74 = scmp.eq.s32.totalorder %s15, 1
    %p75 = por %p73, %p74
    %p76 = scmp.ne.s32.totalorder %s67, %s68
    %p77 = scmp.eq.s32.totalorder %s15, 0
    %p78 = por %p76, %p77
    %p79 = scmp.ne.s32.totalorder %s67, %s68
    %p80 = scmp.eq.s32.totalorder %s16, 1
    %p81 = por %p79, %p80
    %p83 = scmp.ne.s32.totalorder %s68, %s82
    %p84 = scmp.eq.s32.totalorder %s16, 0
    %p85 = por %p83, %p84
    %s87 = sadd.s32 %s86, 1
    %p90 = scmp.eq.s32.totalorder %s10, 1
    %p91 = scmp.ne.s32.totalorder %s86, %s88
    %p92 = scmp.eq.s32.totalorder %s10, 0
    %p93 = por %p91, %p92
    %p94 = scmp.ne.s32.totalorder %s86, %s88
    %p95 = scmp.eq.s32.totalorder %s15, 1
    %p96 = por %p94, %p95
    %p97 = scmp.ne.s32.totalorder %s88, %s89
    %p98 = scmp.eq.s32.totalorder %s15, 0
    %p99 = por %p97, %p98
    %p100 = scmp.ne.s32.totalorder %s88, %s89
    %p101 = scmp.eq.s32.totalorder %s16, 1
    %p102 = por %p100, %p101
    %p104 = scmp.ne.s32.totalorder %s89, %s103
    %p105 = scmp.eq.s32.totalorder %s16, 0
    %p106 = por %p104, %p105
    %s107 = ssub.s32 %s10, %s17
    %p108 = scmp.eq.s32.totalorder %s107, 0
    %s110 = sadd.s32 %s109, 1
    %s111 = scalar_select %p108, %s109, %s110
    %p114 = pneg %p108
    %p115 = scmp.eq.s32.totalorder %s10, 1
    %p116 = por %p114, %p115
    %p117 = scmp.ne.s32.totalorder %s109, %s112
    %p118 = scmp.eq.s32.totalorder %s10, 0
    %p119 = por %p117, %p118
    %p120 = scmp.ne.s32.totalorder %s109, %s112
    %p121 = scmp.eq.s32.totalorder %s15, 1
    %p122 = por %p120, %p121
    %p123 = scmp.ne.s32.totalorder %s112, %s113
    %p124 = scmp.eq.s32.totalorder %s15, 0
    %p125 = por %p123, %p124
    %p126 = scmp.ne.s32.totalorder %s112, %s113
    %p127 = scmp.eq.s32.totalorder %s16, 1
    %p128 = por %p126, %p127
    %p130 = scmp.ne.s32.totalorder %s113, %s129
    %p131 = scmp.eq.s32.totalorder %s16, 0
    %p132 = por %p130, %p131
    %p133 = scmp.le.s32.totalorder 1, %s10
    %p134 = scmp.lt.s32.totalorder %s10, 3
    %p135 = pnand %p133, %p134
    %p136 = pneg %p135
    // Predicated region
    $region9: #{small_conv_forward.5} parent=5 // pred_check
      _
    $region10: #{small_conv_forward.5} parent=5 // pred_check_branch
      %138 = sbr.rel (%p135) target = $region12
    $region11: #{small_conv_forward.5} parent=5 // pred_region
      %s139 = ssub.s32 %s10, 1
      // Predicated region
      $region13: #{small_conv_forward.5} parent=11 // pred_check
        %p140 = pneg %p57
      $region14: #{small_conv_forward.5} parent=11 // pred_check_branch
        %142 = sbr.rel (%p140) target = $region16
      $region15: #{small_conv_forward.5} parent=11 // pred_region
        _
      $region16: #{small_conv_forward.5} parent=11 // pred_fallthru
        _
      // Predicated region
      $region17: #{small_conv_forward.5} parent=11 // pred_check
        %p143 = pneg %p78
      $region18: #{small_conv_forward.5} parent=11 // pred_check_branch
        %145 = sbr.rel (%p143) target = $region20
      $region19: #{small_conv_forward.5} parent=11 // pred_region
        _
      $region20: #{small_conv_forward.5} parent=11 // pred_fallthru
        _
      // Predicated region
      $region21: #{small_conv_forward.5} parent=11 // pred_check
        %p146 = pneg %p99
      $region22: #{small_conv_forward.5} parent=11 // pred_check_branch
        %148 = sbr.rel (%p146) target = $region24
      $region23: #{small_conv_forward.5} parent=11 // pred_region
        _
      $region24: #{small_conv_forward.5} parent=11 // pred_fallthru
        _
    $region12: #{small_conv_forward.5} parent=5 // pred_fallthru
      _
    %p149 = scmp.lt.s32.totalorder %s10, 2
    // Predicated region
    $region25: #{small_conv_forward.5} parent=5 // pred_check
      %p150 = pneg %p149
    $region26: #{small_conv_forward.5} parent=5 // pred_check_branch
      %152 = sbr.rel (%p150) target = $region28
    $region27: #{small_conv_forward.5} parent=5 // pred_region
      // Predicated region
      $region29: #{small_conv_forward.5} parent=27 // pred_check
        %p153 = pneg %p30
      $region30: #{small_conv_forward.5} parent=27 // pred_check_branch
        %155 = sbr.rel (%p153) target = $region32
      $region31: #{small_conv_forward.5} parent=27 // pred_region
        %p156 = scmp.lt.s32.totalorder %s10, 1
        %s157 = scalar_select %p156, %s10, 1
        %s158 = smul.addr %s157, 30
        %s159 = smul.addr %s158, 4
        %s160 = scalar_lea.vmem %s0, %s159
      $region32: #{small_conv_forward.5} parent=27 // pred_fallthru
        _
    $region28: #{small_conv_forward.5} parent=5 // pred_fallthru
      _
    %p161 = scmp.le.s32.totalorder 1, %s10
    %p162 = scmp.lt.s32.totalorder %s10, 3
    %p163 = pnand %p161, %p162
    %p164 = pneg %p163
    // Predicated region
    $region33: #{small_conv_forward.5} parent=5 // pred_check
      _
    $region34: #{small_conv_forward.5} parent=5 // pred_check_branch
      %166 = sbr.rel (%p163) target = $region36
    $region35: #{small_conv_forward.5} parent=5 // pred_region
      %s167 = ssub.s32 %s10, 1
      %p168 = scmp.lt.s32.totalorder %s15, 1
      %s169 = scalar_select %p168, %s15, 1
      %s170 = smul.addr %s169, 30
      %s171 = smul.addr %s170, 4
      %s172 = scalar_lea.vmem %s0, %s171
      %p173 = pneg %p36
      %p174 = pneg %p33
      %p175 = pneg %p57
      %p176 = pneg %p54
      %p177 = pneg %p78
      %p178 = pneg %p75
      %p179 = pneg %p99
      %p180 = pneg %p96
      %p181 = pneg %p125
      %p182 = pneg %p122
      %p183 = scmp.lt.s32.totalorder %s15, 1
      %s184 = scalar_select %p183, %s15, 1
      %s185 = smul.addr %s184, 26
      %s186 = smul.addr %s185, 4
      %s187 = scalar_lea.vmem %s4, %s186
      %p188 = scmp.lt.s32.totalorder %s15, 1
      %s189 = scalar_select %p188, %s15, 1
      %s190 = smul.addr %s189, 30
      %s191 = smul.addr %s190, 4
      %s192 = scalar_lea.vmem %s0, %s191
      %p193 = scmp.lt.s32.totalorder %s15, 1
      %s194 = scalar_select %p193, %s15, 1
      %s195 = smul.addr %s194, 26
      %s196 = smul.addr %s195, 4
      %s197 = scalar_lea.vmem %s4, %s196
      %v199 = vld [vmem:[%s2] sm:$0x1]
      %v200 = vld [vmem:[%s3] sm:$0x1]
      %v201 = vld [vmem:[%s192] sm:$0xf]
      %v202 = vld [vmem:[%s192 + $0x4] sm:$0xf]
      %v203 = vld [vmem:[%s192 + $0x8] sm:$0xf]
      %v204 = vld [vmem:[%s192 + $0xc] sm:$0xf]
      %v205 = vld [vmem:[%s192 + $0x10] sm:$0xf]
      %v206 = vld [vmem:[%s192 + $0x14] sm:$0xf]
      %v207 = vld [vmem:[%s192 + $0x18] sm:$0xf]
      %v208 = vld [vmem:[%s192 + $0x1c] sm:$0xf]
      %v209 = vld [vmem:[%s192 + $0x20] sm:$0xf]
      %v210 = vld [vmem:[%s192 + $0x24] sm:$0xf]
      %v211 = vld [vmem:[%s192 + $0x28] sm:$0xf]
      %v212 = vld [vmem:[%s192 + $0x2c] sm:$0xf]
      %v213 = vld [vmem:[%s192 + $0x30] sm:$0xf]
      %v214 = vld [vmem:[%s192 + $0x34] sm:$0xf]
      %v215 = vld [vmem:[%s192 + $0x38] sm:$0xf]
      %v216 = vld [vmem:[%s192 + $0x3c] sm:$0xf]
      %v217 = vld [vmem:[%s192 + $0x40] sm:$0xf]
      %v218 = vld [vmem:[%s192 + $0x44] sm:$0xf]
      %v219 = vld [vmem:[%s192 + $0x48] sm:$0xf]
      %v220 = vld [vmem:[%s192 + $0x4c] sm:$0xf]
      %v221 = vld [vmem:[%s192 + $0x50] sm:$0xf]
      %v222 = vld [vmem:[%s192 + $0x54] sm:$0xf]
      %v223 = vld [vmem:[%s192 + $0x58] sm:$0xf]
      %v224 = vld [vmem:[%s192 + $0x5c] sm:$0xf]
      %v225 = vld [vmem:[%s192 + $0x60] sm:$0xf]
      %v226 = vld [vmem:[%s192 + $0x64] sm:$0xf]
      %v227 = vld [vmem:[%s1] sm:$0xf]
      %v228 = vld [vmem:[%s1 + $0x4] sm:$0xf]
      %v229 = vld [vmem:[%s1 + $0x8] sm:$0xf]
      %v230 = vld [vmem:[%s1 + $0xc] sm:$0xf]
      %v231 = vld [vmem:[%s1 + $0x10] sm:$0xf]
      %v232 = vld [vmem:[%s1 + $0x14] sm:$0xf]
      %v233 = vld [vmem:[%s1 + $0x18] sm:$0xf]
      %v234 = vld [vmem:[%s1 + $0x1c] sm:$0xf]
      %v235 = vld [vmem:[%s1 + $0x20] sm:$0xf]
      %v236 = vld [vmem:[%s1 + $0x24] sm:$0xf]
      %v237 = vld [vmem:[%s1 + $0x28] sm:$0xf]
      %v238 = vld [vmem:[%s1 + $0x2c] sm:$0xf]
      %v239 = vld [vmem:[%s1 + $0x30] sm:$0xf]
      %v240 = vld [vmem:[%s1 + $0x34] sm:$0xf]
      %v241 = vld [vmem:[%s1 + $0x38] sm:$0xf]
      %v242 = vld [vmem:[%s1 + $0x3c] sm:$0xf]
      %v243 = vld [vmem:[%s192 + $0x68] sm:$0x1]
      %s244 = scalar_lea.vmem %s1, 64
      %v245 = vld [vmem:[%s244] sm:$0xf]
      %v246 = vld [vmem:[%s244 + $0x4] sm:$0xf]
      %v247 = vld [vmem:[%s244 + $0x8] sm:$0xf]
      %v248 = vld [vmem:[%s244 + $0xc] sm:$0xf]
      %v249 = vld [vmem:[%s244 + $0x10] sm:$0xf]
      %v250 = vld [vmem:[%s244 + $0x14] sm:$0xf]
      %v251 = vld [vmem:[%s244 + $0x18] sm:$0xf]
      %v252 = vld [vmem:[%s244 + $0x1c] sm:$0xf]
      %v253 = vld [vmem:[%s244 + $0x20] sm:$0xf]
      %v254 = vld [vmem:[%s244 + $0x24] sm:$0xf]
      %v255 = vld [vmem:[%s244 + $0x28] sm:$0xf]
      %v256 = vld [vmem:[%s244 + $0x2c] sm:$0xf]
      %v257 = vld [vmem:[%s244 + $0x30] sm:$0xf]
      %v258 = vld [vmem:[%s244 + $0x34] sm:$0xf]
      %v259 = vld [vmem:[%s244 + $0x38] sm:$0xf]
      %v260 = vld [vmem:[%s244 + $0x3c] sm:$0xf]
      %v288 = vunpack.c.l.b16 %v201
      %v289 = vunpack.c.l.b16 %v202
      %v290 = vunpack.c.l.b16 %v203
      %v291 = vunpack.c.l.b16 %v204
      %v292 = vunpack.c.l.b16 %v205
      %v293 = vunpack.c.l.b16 %v206
      %v294 = vunpack.c.l.b16 %v207
      %v295 = vunpack.c.l.b16 %v208
      %v296 = vunpack.c.l.b16 %v209
      %v297 = vunpack.c.l.b16 %v210
      %v298 = vunpack.c.l.b16 %v211
      %v299 = vunpack.c.l.b16 %v212
      %v300 = vunpack.c.l.b16 %v213
      %v301 = vunpack.c.l.b16 %v214
      %v302 = vunpack.c.l.b16 %v215
      %v303 = vunpack.c.l.b16 %v216
      %v304 = vunpack.c.l.b16 %v217
      %v305 = vunpack.c.l.b16 %v218
      %v306 = vunpack.c.l.b16 %v219
      %v307 = vunpack.c.l.b16 %v220
      %v308 = vunpack.c.l.b16 %v221
      %v309 = vunpack.c.l.b16 %v222
      %v310 = vunpack.c.l.b16 %v223
      %v311 = vunpack.c.l.b16 %v224
      %v312 = vunpack.c.l.b16 %v225
      %v313 = vunpack.c.l.b16 %v226
      %v314 = vunpack.c.l.b16 %v243
      %v315 = vpack.c.b16 %v289, %v288
      %v316 = vpack.c.b16 %v291, %v290
      %v317 = vpack.c.b16 %v293, %v292
      %v318 = vpack.c.b16 %v295, %v294
      %v319 = vpack.c.b16 %v297, %v296
      %v320 = vpack.c.b16 %v299, %v298
      %v321 = vpack.c.b16 %v301, %v300
      %v322 = vpack.c.b16 %v303, %v302
      %v323 = vpack.c.b16 %v305, %v304
      %v324 = vpack.c.b16 %v307, %v306
      %v325 = vpack.c.b16 %v309, %v308
      %v326 = vpack.c.b16 %v311, %v310
      %v327 = vpack.c.b16 %v313, %v312
      %v328 = vpack.c.b16 %v314, %v314
      %vm329 = vsmask.f32 7424
      %v331 = vshrl.u32 %v315, 16
      %v333 = vshll.u32 %v315, 16
      %v335 = vrot.slane %v333, 1
      %v336 = vor.u32 %v331, %v335
      %v338 = vshll.u32 %v316, 16
      %v340 = vrot.slane %v338, 1
      %v341 = vsel %vm329, %v336, %v340
      %v342 = vshrl.u32 %v316, 16
      %v344 = vor.u32 %v342, %v340
      %v346 = vshll.u32 %v317, 16
      %v348 = vrot.slane %v346, 1
      %v349 = vsel %vm329, %v344, %v348
      %v350 = vshrl.u32 %v317, 16
      %v352 = vor.u32 %v350, %v348
      %v354 = vshll.u32 %v318, 16
      %v356 = vrot.slane %v354, 1
      %v357 = vsel %vm329, %v352, %v356
      %v358 = vshrl.u32 %v318, 16
      %v360 = vor.u32 %v358, %v356
      %v362 = vshll.u32 %v319, 16
      %v364 = vrot.slane %v362, 1
      %v365 = vsel %vm329, %v360, %v364
      %v366 = vshrl.u32 %v319, 16
      %v368 = vor.u32 %v366, %v364
      %v370 = vshll.u32 %v320, 16
      %v372 = vrot.slane %v370, 1
      %v373 = vsel %vm329, %v368, %v372
      %v374 = vshrl.u32 %v320, 16
      %v376 = vor.u32 %v374, %v372
      %v378 = vshll.u32 %v321, 16
      %v380 = vrot.slane %v378, 1
      %v381 = vsel %vm329, %v376, %v380
      %v382 = vshrl.u32 %v321, 16
      %v384 = vor.u32 %v382, %v380
      %v386 = vshll.u32 %v322, 16
      %v388 = vrot.slane %v386, 1
      %v389 = vsel %vm329, %v384, %v388
      %v390 = vshrl.u32 %v322, 16
      %v392 = vor.u32 %v390, %v388
      %v394 = vshll.u32 %v323, 16
      %v396 = vrot.slane %v394, 1
      %v397 = vsel %vm329, %v392, %v396
      %v398 = vshrl.u32 %v323, 16
      %v400 = vor.u32 %v398, %v396
      %v402 = vshll.u32 %v324, 16
      %v404 = vrot.slane %v402, 1
      %v405 = vsel %vm329, %v400, %v404
      %v406 = vshrl.u32 %v324, 16
      %v408 = vor.u32 %v406, %v404
      %v410 = vshll.u32 %v325, 16
      %v412 = vrot.slane %v410, 1
      %v413 = vsel %vm329, %v408, %v412
      %v414 = vshrl.u32 %v325, 16
      %v416 = vor.u32 %v414, %v412
      %v418 = vshll.u32 %v326, 16
      %v420 = vrot.slane %v418, 1
      %v421 = vsel %vm329, %v416, %v420
      %v422 = vshrl.u32 %v326, 16
      %v424 = vor.u32 %v422, %v420
      %v426 = vshll.u32 %v327, 16
      %v428 = vrot.slane %v426, 1
      %v429 = vsel %vm329, %v424, %v428
      %v430 = vshrl.u32 %v327, 16
      %v432 = vor.u32 %v430, %v428
      %v434 = vshll.u32 %v328, 16
      %v436 = vrot.slane %v434, 1
      %v437 = vsel %vm329, %v432, %v436
      %v467 = vunpack.c.l.b16 %v245
      %v468 = vunpack.c.l.b16 %v246
      %v469 = vunpack.c.l.b16 %v247
      %v470 = vunpack.c.l.b16 %v248
      %v471 = vunpack.c.l.b16 %v249
      %v472 = vunpack.c.l.b16 %v250
      %v473 = vunpack.c.l.b16 %v251
      %v474 = vunpack.c.l.b16 %v252
      %v475 = vunpack.c.l.b16 %v253
      %v476 = vunpack.c.l.b16 %v254
      %v477 = vunpack.c.l.b16 %v255
      %v478 = vunpack.c.l.b16 %v256
      %v479 = vunpack.c.l.b16 %v257
      %v480 = vunpack.c.l.b16 %v258
      %v481 = vunpack.c.l.b16 %v259
      %v482 = vunpack.c.l.b16 %v260
      %v483 = vpack.c.b16 %v468, %v467
      %v484 = vpack.c.b16 %v470, %v469
      %v485 = vpack.c.b16 %v472, %v471
      %v486 = vpack.c.b16 %v474, %v473
      %v487 = vpack.c.b16 %v476, %v475
      %v488 = vpack.c.b16 %v478, %v477
      %v489 = vpack.c.b16 %v480, %v479
      %v490 = vpack.c.b16 %v482, %v481
      %499 = vmatprep.subr.bf16.mxu0 0
      %500 = vmatpush1.bf16.msra.mxu0 %v483
      %501 = vmatprep.subr.bf16.mxu0 0
      %502 = vmatpush1.bf16.msra.mxu0 %v484
      %503 = vmatprep.subr.bf16.mxu0 0
      %504 = vmatpush1.bf16.msra.mxu0 %v485
      %505 = vmatprep.subr.bf16.mxu0 0
      %506 = vmatpush1.bf16.msra.mxu0 %v486
      %507 = vmatprep.subr.bf16.mxu0 0
      %508 = vmatpush1.bf16.msra.mxu0 %v487
      %509 = vmatprep.subr.bf16.mxu0 0
      %510 = vmatpush1.bf16.msra.mxu0 %v488
      %511 = vmatprep.subr.bf16.mxu0 0
      %512 = vmatpush1.bf16.msra.mxu0 %v489
      %513 = vmatprep.subr.bf16.mxu0 0
      %514 = vmatpush1.bf16.msra.mxu0 %v490
      %515 = vmatprep.subr.bf16.mxu0 0
      %516 = vmatpush1.bf16.msra.mxu0 0
      %517 = vmatprep.subr.bf16.mxu0 0
      %518 = vmatpush1.bf16.msra.mxu0 0
      %519 = vmatprep.subr.bf16.mxu0 0
      %520 = vmatpush1.bf16.msra.mxu0 0
      %521 = vmatprep.subr.bf16.mxu0 0
      %522 = vmatpush1.bf16.msra.mxu0 0
      %523 = vmatprep.subr.bf16.mxu0 0
      %524 = vmatpush1.bf16.msra.mxu0 0
      %525 = vmatprep.subr.bf16.mxu0 0
      %526 = vmatpush1.bf16.msra.mxu0 0
      %527 = vmatprep.subr.bf16.mxu0 0
      %528 = vmatpush1.bf16.msra.mxu0 0
      %529 = vmatprep.subr.bf16.mxu0 0
      %530 = vmatpush1.bf16.msra.mxu0 0
      %531 = vmatprep.mubr.bf16.mxu0 0
      %532 = vmatmul.mubr.bf16.gmra.mrb[0].mxu0 %v341
      %v533 = vpop.f32.mrb[0].mxu0
      %v534 = vadd.f32 0.0, %v533
      %v535 = vpop.f32.mrb[0].mxu0
      %v536 = vpop.f32.mrb[0].mxu0
      %v537 = vadd.f32 0.0, %v536
      %v538 = vpop.f32.mrb[0].mxu0
      %539 = vmatprep.mubr.bf16.mxu0 0
      %540 = vmatmul.mubr.bf16.gmra.mrb[0].mxu0 %v349
      %v541 = vpop.f32.mrb[0].mxu0
      %v542 = vadd.f32 0.0, %v541
      %v543 = vpop.f32.mrb[0].mxu0
      %v544 = vpop.f32.mrb[0].mxu0
      %v545 = vadd.f32 0.0, %v544
      %v546 = vpop.f32.mrb[0].mxu0
      %547 = vmatprep.mubr.bf16.mxu0 0
      %548 = vmatmul.mubr.bf16.gmra.mrb[0].mxu0 %v357
      %v549 = vpop.f32.mrb[0].mxu0
      %v550 = vadd.f32 0.0, %v549
      %v551 = vpop.f32.mrb[0].mxu0
      %v552 = vpop.f32.mrb[0].mxu0
      %v553 = vadd.f32 0.0, %v552
      %v554 = vpop.f32.mrb[0].mxu0
      %555 = vmatprep.mubr.bf16.mxu0 0
      %556 = vmatmul.mubr.bf16.gmra.mrb[0].mxu0 %v365
      %v557 = vpop.f32.mrb[0].mxu0
      %v558 = vadd.f32 0.0, %v557
      %v559 = vpop.f32.mrb[0].mxu0
      %v560 = vpop.f32.mrb[0].mxu0
      %v561 = vadd.f32 0.0, %v560
      %v562 = vpop.f32.mrb[0].mxu0
      %563 = vmatprep.mubr.bf16.mxu0 0
      %564 = vmatmul.mubr.bf16.gmra.mrb[0].mxu0 %v373
      %v565 = vpop.f32.mrb[0].mxu0
      %v566 = vadd.f32 0.0, %v565
      %v567 = vpop.f32.mrb[0].mxu0
      %v568 = vpop.f32.mrb[0].mxu0
      %v569 = vadd.f32 0.0, %v568
      %v570 = vpop.f32.mrb[0].mxu0
      %571 = vmatprep.mubr.bf16.mxu0 0
      %572 = vmatmul.mubr.bf16.gmra.mrb[0].mxu0 %v381
      %v573 = vpop.f32.mrb[0].mxu0
      %v574 = vadd.f32 0.0, %v573
      %v575 = vpop.f32.mrb[0].mxu0
      %v576 = vpop.f32.mrb[0].mxu0
      %v577 = vadd.f32 0.0, %v576
      %v578 = vpop.f32.mrb[0].mxu0
      %579 = vmatprep.mubr.bf16.mxu0 0
      %580 = vmatmul.mubr.bf16.gmra.mrb[0].mxu0 %v389
      %v581 = vpop.f32.mrb[0].mxu0
      %v582 = vadd.f32 0.0, %v581
      %v583 = vpop.f32.mrb[0].mxu0
      %v584 = vpop.f32.mrb[0].mxu0
      %v585 = vadd.f32 0.0, %v584
      %v586 = vpop.f32.mrb[0].mxu0
      %587 = vmatprep.mubr.bf16.mxu0 0
      %588 = vmatmul.mubr.bf16.gmra.mrb[0].mxu0 %v397
      %v589 = vpop.f32.mrb[0].mxu0
      %v590 = vadd.f32 0.0, %v589
      %v591 = vpop.f32.mrb[0].mxu0
      %v592 = vpop.f32.mrb[0].mxu0
      %v593 = vadd.f32 0.0, %v592
      %v594 = vpop.f32.mrb[0].mxu0
      %595 = vmatprep.mubr.bf16.mxu0 0
      %596 = vmatmul.mubr.bf16.gmra.mrb[0].mxu0 %v405
      %v597 = vpop.f32.mrb[0].mxu0
      %v598 = vadd.f32 0.0, %v597
      %v599 = vpop.f32.mrb[0].mxu0
      %v600 = vpop.f32.mrb[0].mxu0
      %v601 = vadd.f32 0.0, %v600
      %v602 = vpop.f32.mrb[0].mxu0
      %603 = vmatprep.mubr.bf16.mxu0 0
      %604 = vmatmul.mubr.bf16.gmra.mrb[0].mxu0 %v413
      %v605 = vpop.f32.mrb[0].mxu0
      %v606 = vadd.f32 0.0, %v605
      %v607 = vpop.f32.mrb[0].mxu0
      %v608 = vpop.f32.mrb[0].mxu0
      %v609 = vadd.f32 0.0, %v608
      %v610 = vpop.f32.mrb[0].mxu0
      %611 = vmatprep.mubr.bf16.mxu0 0
      %612 = vmatmul.mubr.bf16.gmra.mrb[0].mxu0 %v421
      %v613 = vpop.f32.mrb[0].mxu0
      %v614 = vadd.f32 0.0, %v613
      %v615 = vpop.f32.mrb[0].mxu0
      %v616 = vpop.f32.mrb[0].mxu0
      %v617 = vadd.f32 0.0, %v616
      %v618 = vpop.f32.mrb[0].mxu0
      %619 = vmatprep.mubr.bf16.mxu0 0
      %620 = vmatmul.mubr.bf16.gmra.mrb[0].mxu0 %v429
      %v621 = vpop.f32.mrb[0].mxu0
      %v622 = vadd.f32 0.0, %v621
      %v623 = vpop.f32.mrb[0].mxu0
      %v624 = vpop.f32.mrb[0].mxu0
      %v625 = vadd.f32 0.0, %v624
      %v626 = vpop.f32.mrb[0].mxu0
      %627 = vmatprep.mubr.bf16.mxu0 0
      %628 = vmatmul.mubr.bf16.gmra.mrb[0].mxu0 %v437
      %v629 = vpop.f32.mrb[0].mxu0
      %v630 = vadd.f32 0.0, %v629
      %v631 = vpop.f32.mrb[0].mxu0
      %v632 = vpop.f32.mrb[0].mxu0
      %v633 = vadd.f32 0.0, %v632
      %v634 = vpop.f32.mrb[0].mxu0
      %635 = vdwg.mxu0
      %v665 = vunpack.c.l.b16 %v227
      %v666 = vunpack.c.l.b16 %v228
      %v667 = vunpack.c.l.b16 %v229
      %v668 = vunpack.c.l.b16 %v230
      %v669 = vunpack.c.l.b16 %v231
      %v670 = vunpack.c.l.b16 %v232
      %v671 = vunpack.c.l.b16 %v233
      %v672 = vunpack.c.l.b16 %v234
      %v673 = vunpack.c.l.b16 %v235
      %v674 = vunpack.c.l.b16 %v236
      %v675 = vunpack.c.l.b16 %v237
      %v676 = vunpack.c.l.b16 %v238
      %v677 = vunpack.c.l.b16 %v239
      %v678 = vunpack.c.l.b16 %v240
      %v679 = vunpack.c.l.b16 %v241
      %v680 = vunpack.c.l.b16 %v242
      %v681 = vpack.c.b16 %v666, %v665
      %v682 = vpack.c.b16 %v668, %v667
      %v683 = vpack.c.b16 %v670, %v669
      %v684 = vpack.c.b16 %v672, %v671
      %v685 = vpack.c.b16 %v674, %v673
      %v686 = vpack.c.b16 %v676, %v675
      %v687 = vpack.c.b16 %v678, %v677
      %v688 = vpack.c.b16 %v680, %v679
      %697 = vmatprep.subr.bf16.mxu0 0
      %698 = vmatpush1.bf16.msra.mxu0 %v681
      %699 = vmatprep.subr.bf16.mxu0 0
      %700 = vmatpush1.bf16.msra.mxu0 %v682
      %701 = vmatprep.subr.bf16.mxu0 0
      %702 = vmatpush1.bf16.msra.mxu0 %v683
      %703 = vmatprep.subr.bf16.mxu0 0
      %704 = vmatpush1.bf16.msra.mxu0 %v684
      %705 = vmatprep.subr.bf16.mxu0 0
      %706 = vmatpush1.bf16.msra.mxu0 %v685
      %707 = vmatprep.subr.bf16.mxu0 0
      %708 = vmatpush1.bf16.msra.mxu0 %v686
      %709 = vmatprep.subr.bf16.mxu0 0
      %710 = vmatpush1.bf16.msra.mxu0 %v687
      %711 = vmatprep.subr.bf16.mxu0 0
      %712 = vmatpush1.bf16.msra.mxu0 %v688
      %713 = vmatprep.subr.bf16.mxu0 0
      %714 = vmatpush1.bf16.msra.mxu0 0
      %715 = vmatprep.subr.bf16.mxu0 0
      %716 = vmatpush1.bf16.msra.mxu0 0
      %717 = vmatprep.subr.bf16.mxu0 0
      %718 = vmatpush1.bf16.msra.mxu0 0
      %719 = vmatprep.subr.bf16.mxu0 0
      %720 = vmatpush1.bf16.msra.mxu0 0
      %721 = vmatprep.subr.bf16.mxu0 0
      %722 = vmatpush1.bf16.msra.mxu0 0
      %723 = vmatprep.subr.bf16.mxu0 0
      %724 = vmatpush1.bf16.msra.mxu0 0
      %725 = vmatprep.subr.bf16.mxu0 0
      %726 = vmatpush1.bf16.msra.mxu0 0
      %727 = vmatprep.subr.bf16.mxu0 0
      %728 = vmatpush1.bf16.msra.mxu0 0
      %729 = vmatprep.mubr.bf16.mxu0 0
      %730 = vmatmul.mubr.bf16.gmra.mrb[0].mxu0 %v315
      %v731 = vpop.f32.mrb[0].mxu0
      %v732 = vadd.f32 %v534, %v731
      %v733 = vpop.f32.mrb[0].mxu0
      %v734 = vpop.f32.mrb[0].mxu0
      %v735 = vadd.f32 %v537, %v734
      %v736 = vpop.f32.mrb[0].mxu0
      %737 = vmatprep.mubr.bf16.mxu0 0
      %738 = vmatmul.mubr.bf16.gmra.mrb[0].mxu0 %v316
      %v739 = vpop.f32.mrb[0].mxu0
      %v740 = vadd.f32 %v542, %v739
      %v741 = vpop.f32.mrb[0].mxu0
      %v742 = vpop.f32.mrb[0].mxu0
      %v743 = vadd.f32 %v545, %v742
      %v744 = vpop.f32.mrb[0].mxu0
      %745 = vmatprep.mubr.bf16.mxu0 0
      %746 = vmatmul.mubr.bf16.gmra.mrb[0].mxu0 %v317
      %v747 = vpop.f32.mrb[0].mxu0
      %v748 = vadd.f32 %v550, %v747
      %v749 = vpop.f32.mrb[0].mxu0
      %v750 = vpop.f32.mrb[0].mxu0
      %v751 = vadd.f32 %v553, %v750
      %v752 = vpop.f32.mrb[0].mxu0
      %753 = vmatprep.mubr.bf16.mxu0 0
      %754 = vmatmul.mubr.bf16.gmra.mrb[0].mxu0 %v318
      %v755 = vpop.f32.mrb[0].mxu0
      %v756 = vadd.f32 %v558, %v755
      %v757 = vpop.f32.mrb[0].mxu0
      %v758 = vpop.f32.mrb[0].mxu0
      %v759 = vadd.f32 %v561, %v758
      %v760 = vpop.f32.mrb[0].mxu0
      %761 = vmatprep.mubr.bf16.mxu0 0
      %762 = vmatmul.mubr.bf16.gmra.mrb[0].mxu0 %v319
      %v763 = vpop.f32.mrb[0].mxu0
      %v764 = vadd.f32 %v566, %v763
      %v765 = vpop.f32.mrb[0].mxu0
      %v766 = vpop.f32.mrb[0].mxu0
      %v767 = vadd.f32 %v569, %v766
      %v768 = vpop.f32.mrb[0].mxu0
      %769 = vmatprep.mubr.bf16.mxu0 0
      %770 = vmatmul.mubr.bf16.gmra.mrb[0].mxu0 %v320
      %v771 = vpop.f32.mrb[0].mxu0
      %v772 = vadd.f32 %v574, %v771
      %v773 = vpop.f32.mrb[0].mxu0
      %v774 = vpop.f32.mrb[0].mxu0
      %v775 = vadd.f32 %v577, %v774
      %v776 = vpop.f32.mrb[0].mxu0
      %777 = vmatprep.mubr.bf16.mxu0 0
      %778 = vmatmul.mubr.bf16.gmra.mrb[0].mxu0 %v321
      %v779 = vpop.f32.mrb[0].mxu0
      %v780 = vadd.f32 %v582, %v779
      %v781 = vpop.f32.mrb[0].mxu0
      %v782 = vpop.f32.mrb[0].mxu0
      %v783 = vadd.f32 %v585, %v782
      %v784 = vpop.f32.mrb[0].mxu0
      %785 = vmatprep.mubr.bf16.mxu0 0
      %786 = vmatmul.mubr.bf16.gmra.mrb[0].mxu0 %v322
      %v787 = vpop.f32.mrb[0].mxu0
      %v788 = vadd.f32 %v590, %v787
      %v789 = vpop.f32.mrb[0].mxu0
      %v790 = vpop.f32.mrb[0].mxu0
      %v791 = vadd.f32 %v593, %v790
      %v792 = vpop.f32.mrb[0].mxu0
      %793 = vmatprep.mubr.bf16.mxu0 0
      %794 = vmatmul.mubr.bf16.gmra.mrb[0].mxu0 %v323
      %v795 = vpop.f32.mrb[0].mxu0
      %v796 = vadd.f32 %v598, %v795
      %v797 = vpop.f32.mrb[0].mxu0
      %v798 = vpop.f32.mrb[0].mxu0
      %v799 = vadd.f32 %v601, %v798
      %v800 = vpop.f32.mrb[0].mxu0
      %801 = vmatprep.mubr.bf16.mxu0 0
      %802 = vmatmul.mubr.bf16.gmra.mrb[0].mxu0 %v324
      %v803 = vpop.f32.mrb[0].mxu0
      %v804 = vadd.f32 %v606, %v803
      %v805 = vpop.f32.mrb[0].mxu0
      %v806 = vpop.f32.mrb[0].mxu0
      %v807 = vadd.f32 %v609, %v806
      %v808 = vpop.f32.mrb[0].mxu0
      %809 = vmatprep.mubr.bf16.mxu0 0
      %810 = vmatmul.mubr.bf16.gmra.mrb[0].mxu0 %v325
      %v811 = vpop.f32.mrb[0].mxu0
      %v812 = vadd.f32 %v614, %v811
      %v813 = vpop.f32.mrb[0].mxu0
      %v814 = vpop.f32.mrb[0].mxu0
      %v815 = vadd.f32 %v617, %v814
      %v816 = vpop.f32.mrb[0].mxu0
      %817 = vmatprep.mubr.bf16.mxu0 0
      %818 = vmatmul.mubr.bf16.gmra.mrb[0].mxu0 %v326
      %v819 = vpop.f32.mrb[0].mxu0
      %v820 = vadd.f32 %v622, %v819
      %v821 = vpop.f32.mrb[0].mxu0
      %v822 = vpop.f32.mrb[0].mxu0
      %v823 = vadd.f32 %v625, %v822
      %v824 = vpop.f32.mrb[0].mxu0
      %825 = vmatprep.mubr.bf16.mxu0 0
      %826 = vmatmul.mubr.bf16.gmra.mrb[0].mxu0 %v327
      %v827 = vpop.f32.mrb[0].mxu0
      %v828 = vadd.f32 %v630, %v827
      %v829 = vpop.f32.mrb[0].mxu0
      %v830 = vpop.f32.mrb[0].mxu0
      %v831 = vadd.f32 %v633, %v830
      %v832 = vpop.f32.mrb[0].mxu0
      %833 = vdwg.mxu0
      %v834 = vld [vmem:[%s192] sm:$0xe]
      %s835 = scalar_lea.vmem %s1, 128
      %v836 = vld [vmem:[%s835] sm:$0xf]
      %v837 = vld [vmem:[%s835 + $0x4] sm:$0xf]
      %v838 = vld [vmem:[%s835 + $0x8] sm:$0xf]
      %v839 = vld [vmem:[%s835 + $0xc] sm:$0xf]
      %v840 = vld [vmem:[%s835 + $0x10] sm:$0xf]
      %v841 = vld [vmem:[%s835 + $0x14] sm:$0xf]
      %v842 = vld [vmem:[%s835 + $0x18] sm:$0xf]
      %v843 = vld [vmem:[%s835 + $0x1c] sm:$0xf]
      %v844 = vld [vmem:[%s835 + $0x20] sm:$0xf]
      %v845 = vld [vmem:[%s835 + $0x24] sm:$0xf]
      %v846 = vld [vmem:[%s835 + $0x28] sm:$0xf]
      %v847 = vld [vmem:[%s835 + $0x2c] sm:$0xf]
      %v848 = vld [vmem:[%s835 + $0x30] sm:$0xf]
      %v849 = vld [vmem:[%s835 + $0x34] sm:$0xf]
      %v850 = vld [vmem:[%s835 + $0x38] sm:$0xf]
      %v851 = vld [vmem:[%s835 + $0x3c] sm:$0xf]
      %v853 = vunpack.c.l.b16 %v834
      %v854 = vpack.c.b16 %v289, %v853
      %vm855 = vcmask 1046528
      %v856 = vrot.slane %v854, 1
      %v857 = vrot.slane %v316, 1
      %v858 = vsel %vm855, %v856, %v857
      %v859 = vrot.slane %v317, 1
      %v860 = vsel %vm855, %v857, %v859
      %v861 = vrot.slane %v318, 1
      %v862 = vsel %vm855, %v859, %v861
      %v863 = vrot.slane %v319, 1
      %v864 = vsel %vm855, %v861, %v863
      %v865 = vrot.slane %v320, 1
      %v866 = vsel %vm855, %v863, %v865
      %v867 = vrot.slane %v321, 1
      %v868 = vsel %vm855, %v865, %v867
      %v869 = vrot.slane %v322, 1
      %v870 = vsel %vm855, %v867, %v869
      %v871 = vrot.slane %v323, 1
      %v872 = vsel %vm855, %v869, %v871
      %v873 = vrot.slane %v324, 1
      %v874 = vsel %vm855, %v871, %v873
      %v875 = vrot.slane %v325, 1
      %v876 = vsel %vm855, %v873, %v875
      %v877 = vrot.slane %v326, 1
      %v878 = vsel %vm855, %v875, %v877
      %v879 = vrot.slane %v327, 1
      %v880 = vsel %vm855, %v877, %v879
      %v881 = vrot.slane %v328, 1
      %v882 = vsel %vm855, %v879, %v881
      %v912 = vunpack.c.l.b16 %v836
      %v913 = vunpack.c.l.b16 %v837
      %v914 = vunpack.c.l.b16 %v838
      %v915 = vunpack.c.l.b16 %v839
      %v916 = vunpack.c.l.b16 %v840
      %v917 = vunpack.c.l.b16 %v841
      %v918 = vunpack.c.l.b16 %v842
      %v919 = vunpack.c.l.b16 %v843
      %v920 = vunpack.c.l.b16 %v844
      %v921 = vunpack.c.l.b16 %v845
      %v922 = vunpack.c.l.b16 %v846
      %v923 = vunpack.c.l.b16 %v847
      %v924 = vunpack.c.l.b16 %v848
      %v925 = vunpack.c.l.b16 %v849
      %v926 = vunpack.c.l.b16 %v850
      %v927 = vunpack.c.l.b16 %v851
      %v928 = vpack.c.b16 %v913, %v912
      %v929 = vpack.c.b16 %v915, %v914
      %v930 = vpack.c.b16 %v917, %v916
      %v931 = vpack.c.b16 %v919, %v918
      %v932 = vpack.c.b16 %v921, %v920
      %v933 = vpack.c.b16 %v923, %v922
      %v934 = vpack.c.b16 %v925, %v924
      %v935 = vpack.c.b16 %v927, %v926
      %944 = vmatprep.subr.bf16.mxu0 0
      %945 = vmatpush1.bf16.msra.mxu0 %v928
      %946 = vmatprep.subr.bf16.mxu0 0
      %947 = vmatpush1.bf16.msra.mxu0 %v929
      %948 = vmatprep.subr.bf16.mxu0 0
      %949 = vmatpush1.bf16.msra.mxu0 %v930
      %950 = vmatprep.subr.bf16.mxu0 0
      %951 = vmatpush1.bf16.msra.mxu0 %v931
      %952 = vmatprep.subr.bf16.mxu0 0
      %953 = vmatpush1.bf16.msra.mxu0 %v932
      %954 = vmatprep.subr.bf16.mxu0 0
      %955 = vmatpush1.bf16.msra.mxu0 %v933
      %956 = vmatprep.subr.bf16.mxu0 0
      %957 = vmatpush1.bf16.msra.mxu0 %v934
      %958 = vmatprep.subr.bf16.mxu0 0
      %959 = vmatpush1.bf16.msra.mxu0 %v935
      %960 = vmatprep.subr.bf16.mxu0 0
      %961 = vmatpush1.bf16.msra.mxu0 0
      %962 = vmatprep.subr.bf16.mxu0 0
      %963 = vmatpush1.bf16.msra.mxu0 0
      %964 = vmatprep.subr.bf16.mxu0 0
      %965 = vmatpush1.bf16.msra.mxu0 0
      %966 = vmatprep.subr.bf16.mxu0 0
      %967 = vmatpush1.bf16.msra.mxu0 0
      %968 = vmatprep.subr.bf16.mxu0 0
      %969 = vmatpush1.bf16.msra.mxu0 0
      %970 = vmatprep.subr.bf16.mxu0 0
      %971 = vmatpush1.bf16.msra.mxu0 0
      %972 = vmatprep.subr.bf16.mxu0 0
      %973 = vmatpush1.bf16.msra.mxu0 0
      %974 = vmatprep.subr.bf16.mxu0 0
      %975 = vmatpush1.bf16.msra.mxu0 0
      %976 = vmatprep.mubr.bf16.mxu0 0
      %977 = vmatmul.mubr.bf16.gmra.mrb[0].mxu0 %v858
      %v978 = vpop.f32.mrb[0].mxu0
      %v979 = vadd.f32 0.0, %v978
      %v980 = vpop.f32.mrb[0].mxu0
      %v981 = vpop.f32.mrb[0].mxu0
      %v982 = vadd.f32 0.0, %v981
      %v983 = vpop.f32.mrb[0].mxu0
      %984 = vmatprep.mubr.bf16.mxu0 0
      %985 = vmatmul.mubr.bf16.gmra.mrb[0].mxu0 %v860
      %v986 = vpop.f32.mrb[0].mxu0
      %v987 = vadd.f32 0.0, %v986
      %v988 = vpop.f32.mrb[0].mxu0
      %v989 = vpop.f32.mrb[0].mxu0
      %v990 = vadd.f32 0.0, %v989
      %v991 = vpop.f32.mrb[0].mxu0
      %992 = vmatprep.mubr.bf16.mxu0 0
      %993 = vmatmul.mubr.bf16.gmra.mrb[0].mxu0 %v862
      %v994 = vpop.f32.mrb[0].mxu0
      %v995 = vadd.f32 0.0, %v994
      %v996 = vpop.f32.mrb[0].mxu0
      %v997 = vpop.f32.mrb[0].mxu0
      %v998 = vadd.f32 0.0, %v997
      %v999 = vpop.f32.mrb[0].mxu0
      %1000 = vmatprep.mubr.bf16.mxu0 0
      %1001 = vmatmul.mubr.bf16.gmra.mrb[0].mxu0 %v864
      %v1002 = vpop.f32.mrb[0].mxu0
      %v1003 = vadd.f32 0.0, %v1002
      %v1004 = vpop.f32.mrb[0].mxu0
      %v1005 = vpop.f32.mrb[0].mxu0
      %v1006 = vadd.f32 0.0, %v1005
      %v1007 = vpop.f32.mrb[0].mxu0
      %1008 = vmatprep.mubr.bf16.mxu0 0
      %1009 = vmatmul.mubr.bf16.gmra.mrb[0].mxu0 %v866
      %v1010 = vpop.f32.mrb[0].mxu0
      %v1011 = vadd.f32 0.0, %v1010
      %v1012 = vpop.f32.mrb[0].mxu0
      %v1013 = vpop.f32.mrb[0].mxu0
      %v1014 = vadd.f32 0.0, %v1013
      %v1015 = vpop.f32.mrb[0].mxu0
      %1016 = vmatprep.mubr.bf16.mxu0 0
      %1017 = vmatmul.mubr.bf16.gmra.mrb[0].mxu0 %v868
      %v1018 = vpop.f32.mrb[0].mxu0
      %v1019 = vadd.f32 0.0, %v1018
      %v1020 = vpop.f32.mrb[0].mxu0
      %v1021 = vpop.f32.mrb[0].mxu0
      %v1022 = vadd.f32 0.0, %v1021
      %v1023 = vpop.f32.mrb[0].mxu0
      %1024 = vmatprep.mubr.bf16.mxu0 0
      %1025 = vmatmul.mubr.bf16.gmra.mrb[0].mxu0 %v870
      %v1026 = vpop.f32.mrb[0].mxu0
      %v1027 = vadd.f32 0.0, %v1026
      %v1028 = vpop.f32.mrb[0].mxu0
      %v1029 = vpop.f32.mrb[0].mxu0
      %v1030 = vadd.f32 0.0, %v1029
      %v1031 = vpop.f32.mrb[0].mxu0
      %1032 = vmatprep.mubr.bf16.mxu0 0
      %1033 = vmatmul.mubr.bf16.gmra.mrb[0].mxu0 %v872
      %v1034 = vpop.f32.mrb[0].mxu0
      %v1035 = vadd.f32 0.0, %v1034
      %v1036 = vpop.f32.mrb[0].mxu0
      %v1037 = vpop.f32.mrb[0].mxu0
      %v1038 = vadd.f32 0.0, %v1037
      %v1039 = vpop.f32.mrb[0].mxu0
      %1040 = vmatprep.mubr.bf16.mxu0 0
      %1041 = vmatmul.mubr.bf16.gmra.mrb[0].mxu0 %v874
      %v1042 = vpop.f32.mrb[0].mxu0
      %v1043 = vadd.f32 0.0, %v1042
      %v1044 = vpop.f32.mrb[0].mxu0
      %v1045 = vpop.f32.mrb[0].mxu0
      %v1046 = vadd.f32 0.0, %v1045
      %v1047 = vpop.f32.mrb[0].mxu0
      %1048 = vmatprep.mubr.bf16.mxu0 0
      %1049 = vmatmul.mubr.bf16.gmra.mrb[0].mxu0 %v876
      %v1050 = vpop.f32.mrb[0].mxu0
      %v1051 = vadd.f32 0.0, %v1050
      %v1052 = vpop.f32.mrb[0].mxu0
      %v1053 = vpop.f32.mrb[0].mxu0
      %v1054 = vadd.f32 0.0, %v1053
      %v1055 = vpop.f32.mrb[0].mxu0
      %1056 = vmatprep.mubr.bf16.mxu0 0
      %1057 = vmatmul.mubr.bf16.gmra.mrb[0].mxu0 %v878
      %v1058 = vpop.f32.mrb[0].mxu0
      %v1059 = vadd.f32 0.0, %v1058
      %v1060 = vpop.f32.mrb[0].mxu0
      %v1061 = vpop.f32.mrb[0].mxu0
      %v1062 = vadd.f32 0.0, %v1061
      %v1063 = vpop.f32.mrb[0].mxu0
      %1064 = vmatprep.mubr.bf16.mxu0 0
      %1065 = vmatmul.mubr.bf16.gmra.mrb[0].mxu0 %v880
      %v1066 = vpop.f32.mrb[0].mxu0
      %v1067 = vadd.f32 0.0, %v1066
      %v1068 = vpop.f32.mrb[0].mxu0
      %v1069 = vpop.f32.mrb[0].mxu0
      %v1070 = vadd.f32 0.0, %v1069
      %v1071 = vpop.f32.mrb[0].mxu0
      %1072 = vmatprep.mubr.bf16.mxu0 0
      %1073 = vmatmul.mubr.bf16.gmra.mrb[0].mxu0 %v882
      %v1074 = vpop.f32.mrb[0].mxu0
      %v1075 = vadd.f32 0.0, %v1074
      %v1076 = vpop.f32.mrb[0].mxu0
      %v1077 = vpop.f32.mrb[0].mxu0
      %v1078 = vadd.f32 0.0, %v1077
      %v1079 = vpop.f32.mrb[0].mxu0
      %1080 = vdwg.mxu0
      %v1081 = vadd.f32 %v732, %v979
      %v1082 = vadd.f32 %v735, %v982
      %v1083 = vadd.f32 %v740, %v987
      %v1084 = vadd.f32 %v743, %v990
      %v1085 = vadd.f32 %v748, %v995
      %v1086 = vadd.f32 %v751, %v998
      %v1087 = vadd.f32 %v756, %v1003
      %v1088 = vadd.f32 %v759, %v1006
      %v1089 = vadd.f32 %v764, %v1011
      %v1090 = vadd.f32 %v767, %v1014
      %v1091 = vadd.f32 %v772, %v1019
      %v1092 = vadd.f32 %v775, %v1022
      %v1093 = vadd.f32 %v780, %v1027
      %v1094 = vadd.f32 %v783, %v1030
      %v1095 = vadd.f32 %v788, %v1035
      %v1096 = vadd.f32 %v791, %v1038
      %v1097 = vadd.f32 %v796, %v1043
      %v1098 = vadd.f32 %v799, %v1046
      %v1099 = vadd.f32 %v804, %v1051
      %v1100 = vadd.f32 %v807, %v1054
      %v1101 = vadd.f32 %v812, %v1059
      %v1102 = vadd.f32 %v815, %v1062
      %v1103 = vadd.f32 %v820, %v1067
      %v1104 = vadd.f32 %v823, %v1070
      %v1105 = vadd.f32 %v828, %v1075
      %v1106 = vadd.f32 %v831, %v1078
      %v1107 = vld [vmem:[%s192 + $0x4] sm:$0x8]
      %v1108 = vld [vmem:[%s192 + $0x8] sm:$0xf]
      %v1109 = vld [vmem:[%s192 + $0xc] sm:$0xf]
      %v1110 = vld [vmem:[%s192 + $0x10] sm:$0xf]
      %v1111 = vld [vmem:[%s192 + $0x14] sm:$0xf]
      %v1112 = vld [vmem:[%s192 + $0x18] sm:$0xf]
      %v1113 = vld [vmem:[%s192 + $0x1c] sm:$0xf]
      %v1114 = vld [vmem:[%s192 + $0x20] sm:$0xf]
      %v1115 = vld [vmem:[%s192 + $0x24] sm:$0xf]
      %v1116 = vld [vmem:[%s192 + $0x28] sm:$0xf]
      %v1117 = vld [vmem:[%s192 + $0x2c] sm:$0xf]
      %v1118 = vld [vmem:[%s192 + $0x30] sm:$0xf]
      %v1119 = vld [vmem:[%s192 + $0x34] sm:$0xf]
      %v1120 = vld [vmem:[%s192 + $0x38] sm:$0xf]
      %v1121 = vld [vmem:[%s192 + $0x3c] sm:$0xf]
      %v1122 = vld [vmem:[%s192 + $0x40] sm:$0xf]
      %v1123 = vld [vmem:[%s192 + $0x44] sm:$0xf]
      %v1124 = vld [vmem:[%s192 + $0x48] sm:$0xf]
      %v1125 = vld [vmem:[%s192 + $0x4c] sm:$0xf]
      %v1126 = vld [vmem:[%s192 + $0x50] sm:$0xf]
      %v1127 = vld [vmem:[%s192 + $0x54] sm:$0xf]
      %v1128 = vld [vmem:[%s192 + $0x58] sm:$0xf]
      %v1129 = vld [vmem:[%s192 + $0x5c] sm:$0xf]
      %v1130 = vld [vmem:[%s192 + $0x60] sm:$0xf]
      %v1131 = vld [vmem:[%s192 + $0x64] sm:$0xf]
      %v1132 = vld [vmem:[%s192 + $0x68] sm:$0xf]
      %v1133 = vld [vmem:[%s192 + $0x6c] sm:$0xf]
      %s1134 = scalar_lea.vmem %s1, 192
      %v1135 = vld [vmem:[%s1134] sm:$0xf]
      %v1136 = vld [vmem:[%s1134 + $0x4] sm:$0xf]
      %v1137 = vld [vmem:[%s1134 + $0x8] sm:$0xf]
      %v1138 = vld [vmem:[%s1134 + $0xc] sm:$0xf]
      %v1139 = vld [vmem:[%s1134 + $0x10] sm:$0xf]
      %v1140 = vld [vmem:[%s1134 + $0x14] sm:$0xf]
      %v1141 = vld [vmem:[%s1134 + $0x18] sm:$0xf]
      %v1142 = vld [vmem:[%s1134 + $0x1c] sm:$0xf]
      %v1143 = vld [vmem:[%s1134 + $0x20] sm:$0xf]
      %v1144 = vld [vmem:[%s1134 + $0x24] sm:$0xf]
      %v1145 = vld [vmem:[%s1134 + $0x28] sm:$0xf]
      %v1146 = vld [vmem:[%s1134 + $0x2c] sm:$0xf]
      %v1147 = vld [vmem:[%s1134 + $0x30] sm:$0xf]
      %v1148 = vld [vmem:[%s1134 + $0x34] sm:$0xf]
      %v1149 = vld [vmem:[%s1134 + $0x38] sm:$0xf]
      %v1150 = vld [vmem:[%s1134 + $0x3c] sm:$0xf]
      %v1178 = vunpack.c.l.b16 %v1107
      %v1179 = vunpack.c.l.b16 %v1108
      %v1180 = vunpack.c.l.b16 %v1109
      %v1181 = vunpack.c.l.b16 %v1110
      %v1182 = vunpack.c.l.b16 %v1111
      %v1183 = vunpack.c.l.b16 %v1112
      %v1184 = vunpack.c.l.b16 %v1113
      %v1185 = vunpack.c.l.b16 %v1114
      %v1186 = vunpack.c.l.b16 %v1115
      %v1187 = vunpack.c.l.b16 %v1116
      %v1188 = vunpack.c.l.b16 %v1117
      %v1189 = vunpack.c.l.b16 %v1118
      %v1190 = vunpack.c.l.b16 %v1119
      %v1191 = vunpack.c.l.b16 %v1120
      %v1192 = vunpack.c.l.b16 %v1121
      %v1193 = vunpack.c.l.b16 %v1122
      %v1194 = vunpack.c.l.b16 %v1123
      %v1195 = vunpack.c.l.b16 %v1124
      %v1196 = vunpack.c.l.b16 %v1125
      %v1197 = vunpack.c.l.b16 %v1126
      %v1198 = vunpack.c.l.b16 %v1127
      %v1199 = vunpack.c.l.b16 %v1128
      %v1200 = vunpack.c.l.b16 %v1129
      %v1201 = vunpack.c.l.b16 %v1130
      %v1202 = vunpack.c.l.b16 %v1131
      %v1203 = vunpack.c.l.b16 %v1132
      %v1204 = vunpack.c.l.b16 %v1133
      %v1205 = vpack.c.b16 %v1179, %v1178
      %v1206 = vpack.c.b16 %v1181, %v1180
      %v1207 = vpack.c.b16 %v1183, %v1182
      %v1208 = vpack.c.b16 %v1185, %v1184
      %v1209 = vpack.c.b16 %v1187, %v1186
      %v1210 = vpack.c.b16 %v1189, %v1188
      %v1211 = vpack.c.b16 %v1191, %v1190
      %v1212 = vpack.c.b16 %v1193, %v1192
      %v1213 = vpack.c.b16 %v1195, %v1194
      %v1214 = vpack.c.b16 %v1197, %v1196
      %v1215 = vpack.c.b16 %v1199, %v1198
      %v1216 = vpack.c.b16 %v1201, %v1200
      %v1217 = vpack.c.b16 %v1203, %v1202
      %v1218 = vpack.c.b16 %v1204, %v1204
      %vm1219 = vsmask.f32 4352
      %v1221 = vshrl.u32 %v1205, 16
      %v1223 = vrot.slane %v1221, 3
      %v1224 = vshll.u32 %v1205, 16
      %v1226 = vrot.slane %v1224, 4
      %v1227 = vor.u32 %v1223, %v1226
      %v1229 = vshrl.u32 %v1206, 16
      %v1231 = vrot.slane %v1229, 3
      %v1232 = vshll.u32 %v1206, 16
      %v1234 = vrot.slane %v1232, 4
      %v1235 = vor.u32 %v1231, %v1234
      %v1236 = vsel %vm1219, %v1227, %v1235
      %v1238 = vshrl.u32 %v1207, 16
      %v1240 = vrot.slane %v1238, 3
      %v1241 = vshll.u32 %v1207, 16
      %v1243 = vrot.slane %v1241, 4
      %v1244 = vor.u32 %v1240, %v1243
      %v1245 = vsel %vm1219, %v1235, %v1244
      %v1247 = vshrl.u32 %v1208, 16
      %v1249 = vrot.slane %v1247, 3
      %v1250 = vshll.u32 %v1208, 16
      %v1252 = vrot.slane %v1250, 4
      %v1253 = vor.u32 %v1249, %v1252
      %v1254 = vsel %vm1219, %v1244, %v1253
      %v1256 = vshrl.u32 %v1209, 16
      %v1258 = vrot.slane %v1256, 3
      %v1259 = vshll.u32 %v1209, 16
      %v1261 = vrot.slane %v1259, 4
      %v1262 = vor.u32 %v1258, %v1261
      %v1263 = vsel %vm1219, %v1253, %v1262
      %v1265 = vshrl.u32 %v1210, 16
      %v1267 = vrot.slane %v1265, 3
      %v1268 = vshll.u32 %v1210, 16
      %v1270 = vrot.slane %v1268, 4
      %v1271 = vor.u32 %v1267, %v1270
      %v1272 = vsel %vm1219, %v1262, %v1271
      %v1274 = vshrl.u32 %v1211, 16
      %v1276 = vrot.slane %v1274, 3
      %v1277 = vshll.u32 %v1211, 16
      %v1279 = vrot.slane %v1277, 4
      %v1280 = vor.u32 %v1276, %v1279
      %v1281 = vsel %vm1219, %v1271, %v1280
      %v1283 = vshrl.u32 %v1212, 16
      %v1285 = vrot.slane %v1283, 3
      %v1286 = vshll.u32 %v1212, 16
      %v1288 = vrot.slane %v1286, 4
      %v1289 = vor.u32 %v1285, %v1288
      %v1290 = vsel %vm1219, %v1280, %v1289
      %v1292 = vshrl.u32 %v1213, 16
      %v1294 = vrot.slane %v1292, 3
      %v1295 = vshll.u32 %v1213, 16
      %v1297 = vrot.slane %v1295, 4
      %v1298 = vor.u32 %v1294, %v1297
      %v1299 = vsel %vm1219, %v1289, %v1298
      %v1301 = vshrl.u32 %v1214, 16
      %v1303 = vrot.slane %v1301, 3
      %v1304 = vshll.u32 %v1214, 16
      %v1306 = vrot.slane %v1304, 4
      %v1307 = vor.u32 %v1303, %v1306
      %v1308 = vsel %vm1219, %v1298, %v1307
      %v1310 = vshrl.u32 %v1215, 16
      %v1312 = vrot.slane %v1310, 3
      %v1313 = vshll.u32 %v1215, 16
      %v1315 = vrot.slane %v1313, 4
      %v1316 = vor.u32 %v1312, %v1315
      %v1317 = vsel %vm1219, %v1307, %v1316
      %v1319 = vshrl.u32 %v1216, 16
      %v1321 = vrot.slane %v1319, 3
      %v1322 = vshll.u32 %v1216, 16
      %v1324 = vrot.slane %v1322, 4
      %v1325 = vor.u32 %v1321, %v1324
      %v1326 = vsel %vm1219, %v1316, %v1325
      %v1328 = vshrl.u32 %v1217, 16
      %v1330 = vrot.slane %v1328, 3
      %v1331 = vshll.u32 %v1217, 16
      %v1333 = vrot.slane %v1331, 4
      %v1334 = vor.u32 %v1330, %v1333
      %v1335 = vsel %vm1219, %v1325, %v1334
      %v1337 = vshrl.u32 %v1218, 16
      %v1339 = vrot.slane %v1337, 3
      %v1340 = vshll.u32 %v1218, 16
      %v1342 = vrot.slane %v1340, 4
      %v1343 = vor.u32 %v1339, %v1342
      %v1344 = vsel %vm1219, %v1334, %v1343
      %v1374 = vunpack.c.l.b16 %v1135
      %v1375 = vunpack.c.l.b16 %v1136
      %v1376 = vunpack.c.l.b16 %v1137
      %v1377 = vunpack.c.l.b16 %v1138
      %v1378 = vunpack.c.l.b16 %v1139
      %v1379 = vunpack.c.l.b16 %v1140
      %v1380 = vunpack.c.l.b16 %v1141
      %v1381 = vunpack.c.l.b16 %v1142
      %v1382 = vunpack.c.l.b16 %v1143
      %v1383 = vunpack.c.l.b16 %v1144
      %v1384 = vunpack.c.l.b16 %v1145
      %v1385 = vunpack.c.l.b16 %v1146
      %v1386 = vunpack.c.l.b16 %v1147
      %v1387 = vunpack.c.l.b16 %v1148
      %v1388 = vunpack.c.l.b16 %v1149
      %v1389 = vunpack.c.l.b16 %v1150
      %v1390 = vpack.c.b16 %v1375, %v1374
      %v1391 = vpack.c.b16 %v1377, %v1376
      %v1392 = vpack.c.b16 %v1379, %v1378
      %v1393 = vpack.c.b16 %v1381, %v1380
      %v1394 = vpack.c.b16 %v1383, %v1382
      %v1395 = vpack.c.b16 %v1385, %v1384
      %v1396 = vpack.c.b16 %v1387, %v1386
      %v1397 = vpack.c.b16 %v1389, %v1388
      %1406 = vmatprep.subr.bf16.mxu0 0
      %1407 = vmatpush1.bf16.msra.mxu0 %v1390
      %1408 = vmatprep.subr.bf16.mxu0 0
      %1409 = vmatpush1.bf16.msra.mxu0 %v1391
      %1410 = vmatprep.subr.bf16.mxu0 0
      %1411 = vmatpush1.bf16.msra.mxu0 %v1392
      %1412 = vmatprep.subr.bf16.mxu0 0
      %1413 = vmatpush1.bf16.msra.mxu0 %v1393
      %1414 = vmatprep.subr.bf16.mxu0 0
      %1415 = vmatpush1.bf16.msra.mxu0 %v1394
      %1416 = vmatprep.subr.bf16.mxu0 0
      %1417 = vmatpush1.bf16.msra.mxu0 %v1395
      %1418 = vmatprep.subr.bf16.mxu0 0
      %1419 = vmatpush1.bf16.msra.mxu0 %v1396
      %1420 = vmatprep.subr.bf16.mxu0 0
      %1421 = vmatpush1.bf16.msra.mxu0 %v1397
      %1422 = vmatprep.subr.bf16.mxu0 0
      %1423 = vmatpush1.bf16.msra.mxu0 0
      %1424 = vmatprep.subr.bf16.mxu0 0
      %1425 = vmatpush1.bf16.msra.mxu0 0
      %1426 = vmatprep.subr.bf16.mxu0 0
      %1427 = vmatpush1.bf16.msra.mxu0 0
      %1428 = vmatprep.subr.bf16.mxu0 0
      %1429 = vmatpush1.bf16.msra.mxu0 0
      %1430 = vmatprep.subr.bf16.mxu0 0
      %1431 = vmatpush1.bf16.msra.mxu0 0
      %1432 = vmatprep.subr.bf16.mxu0 0
      %1433 = vmatpush1.bf16.msra.mxu0 0
      %1434 = vmatprep.subr.bf16.mxu0 0
      %1435 = vmatpush1.bf16.msra.mxu0 0
      %1436 = vmatprep.subr.bf16.mxu0 0
      %1437 = vmatpush1.bf16.msra.mxu0 0
      %1438 = vmatprep.mubr.bf16.mxu0 0
      %1439 = vmatmul.mubr.bf16.gmra.mrb[0].mxu0 %v1236
      %v1440 = vpop.f32.mrb[0].mxu0
      %v1441 = vadd.f32 0.0, %v1440
      %v1442 = vpop.f32.mrb[0].mxu0
      %v1443 = vpop.f32.mrb[0].mxu0
      %v1444 = vadd.f32 0.0, %v1443
      %v1445 = vpop.f32.mrb[0].mxu0
      %1446 = vmatprep.mubr.bf16.mxu0 0
      %1447 = vmatmul.mubr.bf16.gmra.mrb[0].mxu0 %v1245
      %v1448 = vpop.f32.mrb[0].mxu0
      %v1449 = vadd.f32 0.0, %v1448
      %v1450 = vpop.f32.mrb[0].mxu0
      %v1451 = vpop.f32.mrb[0].mxu0
      %v1452 = vadd.f32 0.0, %v1451
      %v1453 = vpop.f32.mrb[0].mxu0
      %1454 = vmatprep.mubr.bf16.mxu0 0
      %1455 = vmatmul.mubr.bf16.gmra.mrb[0].mxu0 %v1254
      %v1456 = vpop.f32.mrb[0].mxu0
      %v1457 = vadd.f32 0.0, %v1456
      %v1458 = vpop.f32.mrb[0].mxu0
      %v1459 = vpop.f32.mrb[0].mxu0
      %v1460 = vadd.f32 0.0, %v1459
      %v1461 = vpop.f32.mrb[0].mxu0
      %1462 = vmatprep.mubr.bf16.mxu0 0
      %1463 = vmatmul.mubr.bf16.gmra.mrb[0].mxu0 %v1263
      %v1464 = vpop.f32.mrb[0].mxu0
      %v1465 = vadd.f32 0.0, %v1464
      %v1466 = vpop.f32.mrb[0].mxu0
      %v1467 = vpop.f32.mrb[0].mxu0
      %v1468 = vadd.f32 0.0, %v1467
      %v1469 = vpop.f32.mrb[0].mxu0
      %1470 = vmatprep.mubr.bf16.mxu0 0
      %1471 = vmatmul.mubr.bf16.gmra.mrb[0].mxu0 %v1272
      %v1472 = vpop.f32.mrb[0].mxu0
      %v1473 = vadd.f32 0.0, %v1472
      %v1474 = vpop.f32.mrb[0].mxu0
      %v1475 = vpop.f32.mrb[0].mxu0
      %v1476 = vadd.f32 0.0, %v1475
      %v1477 = vpop.f32.mrb[0].mxu0
      %1478 = vmatprep.mubr.bf16.mxu0 0
      %1479 = vmatmul.mubr.bf16.gmra.mrb[0].mxu0 %v1281
      %v1480 = vpop.f32.mrb[0].mxu0
      %v1481 = vadd.f32 0.0, %v1480
      %v1482 = vpop.f32.mrb[0].mxu0
      %v1483 = vpop.f32.mrb[0].mxu0
      %v1484 = vadd.f32 0.0, %v1483
      %v1485 = vpop.f32.mrb[0].mxu0
      %1486 = vmatprep.mubr.bf16.mxu0 0
      %1487 = vmatmul.mubr.bf16.gmra.mrb[0].mxu0 %v1290
      %v1488 = vpop.f32.mrb[0].mxu0
      %v1489 = vadd.f32 0.0, %v1488
      %v1490 = vpop.f32.mrb[0].mxu0
      %v1491 = vpop.f32.mrb[0].mxu0
      %v1492 = vadd.f32 0.0, %v1491
      %v1493 = vpop.f32.mrb[0].mxu0
      %1494 = vmatprep.mubr.bf16.mxu0 0
      %1495 = vmatmul.mubr.bf16.gmra.mrb[0].mxu0 %v1299
      %v1496 = vpop.f32.mrb[0].mxu0
      %v1497 = vadd.f32 0.0, %v1496
      %v1498 = vpop.f32.mrb[0].mxu0
      %v1499 = vpop.f32.mrb[0].mxu0
      %v1500 = vadd.f32 0.0, %v1499
      %v1501 = vpop.f32.mrb[0].mxu0
      %1502 = vmatprep.mubr.bf16.mxu0 0
      %1503 = vmatmul.mubr.bf16.gmra.mrb[0].mxu0 %v1308
      %v1504 = vpop.f32.mrb[0].mxu0
      %v1505 = vadd.f32 0.0, %v1504
      %v1506 = vpop.f32.mrb[0].mxu0
      %v1507 = vpop.f32.mrb[0].mxu0
      %v1508 = vadd.f32 0.0, %v1507
      %v1509 = vpop.f32.mrb[0].mxu0
      %1510 = vmatprep.mubr.bf16.mxu0 0
      %1511 = vmatmul.mubr.bf16.gmra.mrb[0].mxu0 %v1317
      %v1512 = vpop.f32.mrb[0].mxu0
      %v1513 = vadd.f32 0.0, %v1512
      %v1514 = vpop.f32.mrb[0].mxu0
      %v1515 = vpop.f32.mrb[0].mxu0
      %v1516 = vadd.f32 0.0, %v1515
      %v1517 = vpop.f32.mrb[0].mxu0
      %1518 = vmatprep.mubr.bf16.mxu0 0
      %1519 = vmatmul.mubr.bf16.gmra.mrb[0].mxu0 %v1326
      %v1520 = vpop.f32.mrb[0].mxu0
      %v1521 = vadd.f32 0.0, %v1520
      %v1522 = vpop.f32.mrb[0].mxu0
      %v1523 = vpop.f32.mrb[0].mxu0
      %v1524 = vadd.f32 0.0, %v1523
      %v1525 = vpop.f32.mrb[0].mxu0
      %1526 = vmatprep.mubr.bf16.mxu0 0
      %1527 = vmatmul.mubr.bf16.gmra.mrb[0].mxu0 %v1335
      %v1528 = vpop.f32.mrb[0].mxu0
      %v1529 = vadd.f32 0.0, %v1528
      %v1530 = vpop.f32.mrb[0].mxu0
      %v1531 = vpop.f32.mrb[0].mxu0
      %v1532 = vadd.f32 0.0, %v1531
      %v1533 = vpop.f32.mrb[0].mxu0
      %1534 = vmatprep.mubr.bf16.mxu0 0
      %1535 = vmatmul.mubr.bf16.gmra.mrb[0].mxu0 %v1344
      %v1536 = vpop.f32.mrb[0].mxu0
      %v1537 = vadd.f32 0.0, %v1536
      %v1538 = vpop.f32.mrb[0].mxu0
      %v1539 = vpop.f32.mrb[0].mxu0
      %v1540 = vadd.f32 0.0, %v1539
      %v1541 = vpop.f32.mrb[0].mxu0
      %1542 = vdwg.mxu0
      %v1543 = vadd.f32 %v1081, %v1441
      %v1544 = vadd.f32 %v1082, %v1444
      %v1545 = vadd.f32 %v1083, %v1449
      %v1546 = vadd.f32 %v1084, %v1452
      %v1547 = vadd.f32 %v1085, %v1457
      %v1548 = vadd.f32 %v1086, %v1460
      %v1549 = vadd.f32 %v1087, %v1465
      %v1550 = vadd.f32 %v1088, %v1468
      %v1551 = vadd.f32 %v1089, %v1473
      %v1552 = vadd.f32 %v1090, %v1476
      %v1553 = vadd.f32 %v1091, %v1481
      %v1554 = vadd.f32 %v1092, %v1484
      %v1555 = vadd.f32 %v1093, %v1489
      %v1556 = vadd.f32 %v1094, %v1492
      %v1557 = vadd.f32 %v1095, %v1497
      %v1558 = vadd.f32 %v1096, %v1500
      %v1559 = vadd.f32 %v1097, %v1505
      %v1560 = vadd.f32 %v1098, %v1508
      %v1561 = vadd.f32 %v1099, %v1513
      %v1562 = vadd.f32 %v1100, %v1516
      %v1563 = vadd.f32 %v1101, %v1521
      %v1564 = vadd.f32 %v1102, %v1524
      %v1565 = vadd.f32 %v1103, %v1529
      %v1566 = vadd.f32 %v1104, %v1532
      %v1567 = vadd.f32 %v1105, %v1537
      %v1568 = vadd.f32 %v1106, %v1540
      %s1569 = scalar_lea.vmem %s1, 256
      %v1570 = vld [vmem:[%s1569] sm:$0xf]
      %v1571 = vld [vmem:[%s1569 + $0x4] sm:$0xf]
      %v1572 = vld [vmem:[%s1569 + $0x8] sm:$0xf]
      %v1573 = vld [vmem:[%s1569 + $0xc] sm:$0xf]
      %v1574 = vld [vmem:[%s1569 + $0x10] sm:$0xf]
      %v1575 = vld [vmem:[%s1569 + $0x14] sm:$0xf]
      %v1576 = vld [vmem:[%s1569 + $0x18] sm:$0xf]
      %v1577 = vld [vmem:[%s1569 + $0x1c] sm:$0xf]
      %v1578 = vld [vmem:[%s1569 + $0x20] sm:$0xf]
      %v1579 = vld [vmem:[%s1569 + $0x24] sm:$0xf]
      %v1580 = vld [vmem:[%s1569 + $0x28] sm:$0xf]
      %v1581 = vld [vmem:[%s1569 + $0x2c] sm:$0xf]
      %v1582 = vld [vmem:[%s1569 + $0x30] sm:$0xf]
      %v1583 = vld [vmem:[%s1569 + $0x34] sm:$0xf]
      %v1584 = vld [vmem:[%s1569 + $0x38] sm:$0xf]
      %v1585 = vld [vmem:[%s1569 + $0x3c] sm:$0xf]
      %v1586 = vpack.c.b16 %v1180, %v1179
      %v1587 = vpack.c.b16 %v1182, %v1181
      %v1588 = vpack.c.b16 %v1184, %v1183
      %v1589 = vpack.c.b16 %v1186, %v1185
      %v1590 = vpack.c.b16 %v1188, %v1187
      %v1591 = vpack.c.b16 %v1190, %v1189
      %v1592 = vpack.c.b16 %v1192, %v1191
      %v1593 = vpack.c.b16 %v1194, %v1193
      %v1594 = vpack.c.b16 %v1196, %v1195
      %v1595 = vpack.c.b16 %v1198, %v1197
      %v1596 = vpack.c.b16 %v1200, %v1199
      %v1597 = vpack.c.b16 %v1202, %v1201
      %v1598 = vpack.c.b16 %v1204, %v1203
      %v1628 = vunpack.c.l.b16 %v1570
      %v1629 = vunpack.c.l.b16 %v1571
      %v1630 = vunpack.c.l.b16 %v1572
      %v1631 = vunpack.c.l.b16 %v1573
      %v1632 = vunpack.c.l.b16 %v1574
      %v1633 = vunpack.c.l.b16 %v1575
      %v1634 = vunpack.c.l.b16 %v1576
      %v1635 = vunpack.c.l.b16 %v1577
      %v1636 = vunpack.c.l.b16 %v1578
      %v1637 = vunpack.c.l.b16 %v1579
      %v1638 = vunpack.c.l.b16 %v1580
      %v1639 = vunpack.c.l.b16 %v1581
      %v1640 = vunpack.c.l.b16 %v1582
      %v1641 = vunpack.c.l.b16 %v1583
      %v1642 = vunpack.c.l.b16 %v1584
      %v1643 = vunpack.c.l.b16 %v1585
      %v1644 = vpack.c.b16 %v1629, %v1628
      %v1645 = vpack.c.b16 %v1631, %v1630
      %v1646 = vpack.c.b16 %v1633, %v1632
      %v1647 = vpack.c.b16 %v1635, %v1634
      %v1648 = vpack.c.b16 %v1637, %v1636
      %v1649 = vpack.c.b16 %v1639, %v1638
      %v1650 = vpack.c.b16 %v1641, %v1640
      %v1651 = vpack.c.b16 %v1643, %v1642
      %1660 = vmatprep.subr.bf16.mxu0 0
      %1661 = vmatpush1.bf16.msra.mxu0 %v1644
      %1662 = vmatprep.subr.bf16.mxu0 0
      %1663 = vmatpush1.bf16.msra.mxu0 %v1645
      %1664 = vmatprep.subr.bf16.mxu0 0
      %1665 = vmatpush1.bf16.msra.mxu0 %v1646
      %1666 = vmatprep.subr.bf16.mxu0 0
      %1667 = vmatpush1.bf16.msra.mxu0 %v1647
      %1668 = vmatprep.subr.bf16.mxu0 0
      %1669 = vmatpush1.bf16.msra.mxu0 %v1648
      %1670 = vmatprep.subr.bf16.mxu0 0
      %1671 = vmatpush1.bf16.msra.mxu0 %v1649
      %1672 = vmatprep.subr.bf16.mxu0 0
      %1673 = vmatpush1.bf16.msra.mxu0 %v1650
      %1674 = vmatprep.subr.bf16.mxu0 0
      %1675 = vmatpush1.bf16.msra.mxu0 %v1651
      %1676 = vmatprep.subr.bf16.mxu0 0
      %1677 = vmatpush1.bf16.msra.mxu0 0
      %1678 = vmatprep.subr.bf16.mxu0 0
      %1679 = vmatpush1.bf16.msra.mxu0 0
      %1680 = vmatprep.subr.bf16.mxu0 0
      %1681 = vmatpush1.bf16.msra.mxu0 0
      %1682 = vmatprep.subr.bf16.mxu0 0
      %1683 = vmatpush1.bf16.msra.mxu0 0
      %1684 = vmatprep.subr.bf16.mxu0 0
      %1685 = vmatpush1.bf16.msra.mxu0 0
      %1686 = vmatprep.subr.bf16.mxu0 0
      %1687 = vmatpush1.bf16.msra.mxu0 0
      %1688 = vmatprep.subr.bf16.mxu0 0
      %1689 = vmatpush1.bf16.msra.mxu0 0
      %1690 = vmatprep.subr.bf16.mxu0 0
      %1691 = vmatpush1.bf16.msra.mxu0 0
      %1692 = vmatprep.mubr.bf16.mxu0 0
      %1693 = vmatmul.mubr.bf16.gmra.mrb[0].mxu0 %v1586
      %v1694 = vpop.f32.mrb[0].mxu0
      %v1695 = vadd.f32 0.0, %v1694
      %v1696 = vpop.f32.mrb[0].mxu0
      %v1697 = vpop.f32.mrb[0].mxu0
      %v1698 = vadd.f32 0.0, %v1697
      %v1699 = vpop.f32.mrb[0].mxu0
      %1700 = vmatprep.mubr.bf16.mxu0 0
      %1701 = vmatmul.mubr.bf16.gmra.mrb[0].mxu0 %v1587
      %v1702 = vpop.f32.mrb[0].mxu0
      %v1703 = vadd.f32 0.0, %v1702
      %v1704 = vpop.f32.mrb[0].mxu0
      %v1705 = vpop.f32.mrb[0].mxu0
      %v1706 = vadd.f32 0.0, %v1705
      %v1707 = vpop.f32.mrb[0].mxu0
      %1708 = vmatprep.mubr.bf16.mxu0 0
      %1709 = vmatmul.mubr.bf16.gmra.mrb[0].mxu0 %v1588
      %v1710 = vpop.f32.mrb[0].mxu0
      %v1711 = vadd.f32 0.0, %v1710
      %v1712 = vpop.f32.mrb[0].mxu0
      %v1713 = vpop.f32.mrb[0].mxu0
      %v1714 = vadd.f32 0.0, %v1713
      %v1715 = vpop.f32.mrb[0].mxu0
      %1716 = vmatprep.mubr.bf16.mxu0 0
      %1717 = vmatmul.mubr.bf16.gmra.mrb[0].mxu0 %v1589
      %v1718 = vpop.f32.mrb[0].mxu0
      %v1719 = vadd.f32 0.0, %v1718
      %v1720 = vpop.f32.mrb[0].mxu0
      %v1721 = vpop.f32.mrb[0].mxu0
      %v1722 = vadd.f32 0.0, %v1721
      %v1723 = vpop.f32.mrb[0].mxu0
      %1724 = vmatprep.mubr.bf16.mxu0 0
      %1725 = vmatmul.mubr.bf16.gmra.mrb[0].mxu0 %v1590
      %v1726 = vpop.f32.mrb[0].mxu0
      %v1727 = vadd.f32 0.0, %v1726
      %v1728 = vpop.f32.mrb[0].mxu0
      %v1729 = vpop.f32.mrb[0].mxu0
      %v1730 = vadd.f32 0.0, %v1729
      %v1731 = vpop.f32.mrb[0].mxu0
      %1732 = vmatprep.mubr.bf16.mxu0 0
      %1733 = vmatmul.mubr.bf16.gmra.mrb[0].mxu0 %v1591
      %v1734 = vpop.f32.mrb[0].mxu0
      %v1735 = vadd.f32 0.0, %v1734
      %v1736 = vpop.f32.mrb[0].mxu0
      %v1737 = vpop.f32.mrb[0].mxu0
      %v1738 = vadd.f32 0.0, %v1737
      %v1739 = vpop.f32.mrb[0].mxu0
      %1740 = vmatprep.mubr.bf16.mxu0 0
      %1741 = vmatmul.mubr.bf16.gmra.mrb[0].mxu0 %v1592
      %v1742 = vpop.f32.mrb[0].mxu0
      %v1743 = vadd.f32 0.0, %v1742
      %v1744 = vpop.f32.mrb[0].mxu0
      %v1745 = vpop.f32.mrb[0].mxu0
      %v1746 = vadd.f32 0.0, %v1745
      %v1747 = vpop.f32.mrb[0].mxu0
      %1748 = vmatprep.mubr.bf16.mxu0 0
      %1749 = vmatmul.mubr.bf16.gmra.mrb[0].mxu0 %v1593
      %v1750 = vpop.f32.mrb[0].mxu0
      %v1751 = vadd.f32 0.0, %v1750
      %v1752 = vpop.f32.mrb[0].mxu0
      %v1753 = vpop.f32.mrb[0].mxu0
      %v1754 = vadd.f32 0.0, %v1753
      %v1755 = vpop.f32.mrb[0].mxu0
      %1756 = vmatprep.mubr.bf16.mxu0 0
      %1757 = vmatmul.mubr.bf16.gmra.mrb[0].mxu0 %v1594
      %v1758 = vpop.f32.mrb[0].mxu0
      %v1759 = vadd.f32 0.0, %v1758
      %v1760 = vpop.f32.mrb[0].mxu0
      %v1761 = vpop.f32.mrb[0].mxu0
      %v1762 = vadd.f32 0.0, %v1761
      %v1763 = vpop.f32.mrb[0].mxu0
      %1764 = vmatprep.mubr.bf16.mxu0 0
      %1765 = vmatmul.mubr.bf16.gmra.mrb[0].mxu0 %v1595
      %v1766 = vpop.f32.mrb[0].mxu0
      %v1767 = vadd.f32 0.0, %v1766
      %v1768 = vpop.f32.mrb[0].mxu0
      %v1769 = vpop.f32.mrb[0].mxu0
      %v1770 = vadd.f32 0.0, %v1769
      %v1771 = vpop.f32.mrb[0].mxu0
      %1772 = vmatprep.mubr.bf16.mxu0 0
      %1773 = vmatmul.mubr.bf16.gmra.mrb[0].mxu0 %v1596
      %v1774 = vpop.f32.mrb[0].mxu0
      %v1775 = vadd.f32 0.0, %v1774
      %v1776 = vpop.f32.mrb[0].mxu0
      %v1777 = vpop.f32.mrb[0].mxu0
      %v1778 = vadd.f32 0.0, %v1777
      %v1779 = vpop.f32.mrb[0].mxu0
      %1780 = vmatprep.mubr.bf16.mxu0 0
      %1781 = vmatmul.mubr.bf16.gmra.mrb[0].mxu0 %v1597
      %v1782 = vpop.f32.mrb[0].mxu0
      %v1783 = vadd.f32 0.0, %v1782
      %v1784 = vpop.f32.mrb[0].mxu0
      %v1785 = vpop.f32.mrb[0].mxu0
      %v1786 = vadd.f32 0.0, %v1785
      %v1787 = vpop.f32.mrb[0].mxu0
      %1788 = vmatprep.mubr.bf16.mxu0 0
      %1789 = vmatmul.mubr.bf16.gmra.mrb[0].mxu0 %v1598
      %v1790 = vpop.f32.mrb[0].mxu0
      %v1791 = vadd.f32 0.0, %v1790
      %v1792 = vpop.f32.mrb[0].mxu0
      %v1793 = vpop.f32.mrb[0].mxu0
      %v1794 = vadd.f32 0.0, %v1793
      %v1795 = vpop.f32.mrb[0].mxu0
      %1796 = vdwg.mxu0
      %v1797 = vadd.f32 %v1543, %v1695
      %v1798 = vadd.f32 %v1544, %v1698
      %v1799 = vadd.f32 %v1545, %v1703
      %v1800 = vadd.f32 %v1546, %v1706
      %v1801 = vadd.f32 %v1547, %v1711
      %v1802 = vadd.f32 %v1548, %v1714
      %v1803 = vadd.f32 %v1549, %v1719
      %v1804 = vadd.f32 %v1550, %v1722
      %v1805 = vadd.f32 %v1551, %v1727
      %v1806 = vadd.f32 %v1552, %v1730
      %v1807 = vadd.f32 %v1553, %v1735
      %v1808 = vadd.f32 %v1554, %v1738
      %v1809 = vadd.f32 %v1555, %v1743
      %v1810 = vadd.f32 %v1556, %v1746
      %v1811 = vadd.f32 %v1557, %v1751
      %v1812 = vadd.f32 %v1558, %v1754
      %v1813 = vadd.f32 %v1559, %v1759
      %v1814 = vadd.f32 %v1560, %v1762
      %v1815 = vadd.f32 %v1561, %v1767
      %v1816 = vadd.f32 %v1562, %v1770
      %v1817 = vadd.f32 %v1563, %v1775
      %v1818 = vadd.f32 %v1564, %v1778
      %v1819 = vadd.f32 %v1565, %v1783
      %v1820 = vadd.f32 %v1566, %v1786
      %v1821 = vadd.f32 %v1567, %v1791
      %v1822 = vadd.f32 %v1568, %v1794
      %v1823 = vld [vmem:[%s192 + $0x8] sm:$0xf]
      %v1824 = vld [vmem:[%s192 + $0xc] sm:$0xf]
      %v1825 = vld [vmem:[%s192 + $0x10] sm:$0xf]
      %v1826 = vld [vmem:[%s192 + $0x14] sm:$0xf]
      %v1827 = vld [vmem:[%s192 + $0x18] sm:$0xf]
      %v1828 = vld [vmem:[%s192 + $0x1c] sm:$0xf]
      %v1829 = vld [vmem:[%s192 + $0x20] sm:$0xf]
      %v1830 = vld [vmem:[%s192 + $0x24] sm:$0xf]
      %v1831 = vld [vmem:[%s192 + $0x28] sm:$0xf]
      %v1832 = vld [vmem:[%s192 + $0x2c] sm:$0xf]
      %v1833 = vld [vmem:[%s192 + $0x30] sm:$0xf]
      %v1834 = vld [vmem:[%s192 + $0x34] sm:$0xf]
      %v1835 = vld [vmem:[%s192 + $0x38] sm:$0xf]
      %v1836 = vld [vmem:[%s192 + $0x3c] sm:$0xf]
      %v1837 = vld [vmem:[%s192 + $0x40] sm:$0xf]
      %v1838 = vld [vmem:[%s192 + $0x44] sm:$0xf]
      %v1839 = vld [vmem:[%s192 + $0x48] sm:$0xf]
      %v1840 = vld [vmem:[%s192 + $0x4c] sm:$0xf]
      %v1841 = vld [vmem:[%s192 + $0x50] sm:$0xf]
      %v1842 = vld [vmem:[%s192 + $0x54] sm:$0xf]
      %v1843 = vld [vmem:[%s192 + $0x58] sm:$0xf]
      %v1844 = vld [vmem:[%s192 + $0x5c] sm:$0xf]
      %v1845 = vld [vmem:[%s192 + $0x60] sm:$0xf]
      %v1846 = vld [vmem:[%s192 + $0x64] sm:$0xf]
      %v1847 = vld [vmem:[%s192 + $0x68] sm:$0xf]
      %v1848 = vld [vmem:[%s192 + $0x6c] sm:$0xf]
      %v1849 = vld [vmem:[%s192 + $0x70] sm:$0x1]
      %s1850 = scalar_lea.vmem %s1, 320
      %v1851 = vld [vmem:[%s1850] sm:$0xf]
      %v1852 = vld [vmem:[%s1850 + $0x4] sm:$0xf]
      %v1853 = vld [vmem:[%s1850 + $0x8] sm:$0xf]
      %v1854 = vld [vmem:[%s1850 + $0xc] sm:$0xf]
      %v1855 = vld [vmem:[%s1850 + $0x10] sm:$0xf]
      %v1856 = vld [vmem:[%s1850 + $0x14] sm:$0xf]
      %v1857 = vld [vmem:[%s1850 + $0x18] sm:$0xf]
      %v1858 = vld [vmem:[%s1850 + $0x1c] sm:$0xf]
      %v1859 = vld [vmem:[%s1850 + $0x20] sm:$0xf]
      %v1860 = vld [vmem:[%s1850 + $0x24] sm:$0xf]
      %v1861 = vld [vmem:[%s1850 + $0x28] sm:$0xf]
      %v1862 = vld [vmem:[%s1850 + $0x2c] sm:$0xf]
      %v1863 = vld [vmem:[%s1850 + $0x30] sm:$0xf]
      %v1864 = vld [vmem:[%s1850 + $0x34] sm:$0xf]
      %v1865 = vld [vmem:[%s1850 + $0x38] sm:$0xf]
      %v1866 = vld [vmem:[%s1850 + $0x3c] sm:$0xf]
      %v1894 = vunpack.c.l.b16 %v1823
      %v1895 = vunpack.c.l.b16 %v1824
      %v1896 = vunpack.c.l.b16 %v1825
      %v1897 = vunpack.c.l.b16 %v1826
      %v1898 = vunpack.c.l.b16 %v1827
      %v1899 = vunpack.c.l.b16 %v1828
      %v1900 = vunpack.c.l.b16 %v1829
      %v1901 = vunpack.c.l.b16 %v1830
      %v1902 = vunpack.c.l.b16 %v1831
      %v1903 = vunpack.c.l.b16 %v1832
      %v1904 = vunpack.c.l.b16 %v1833
      %v1905 = vunpack.c.l.b16 %v1834
      %v1906 = vunpack.c.l.b16 %v1835
      %v1907 = vunpack.c.l.b16 %v1836
      %v1908 = vunpack.c.l.b16 %v1837
      %v1909 = vunpack.c.l.b16 %v1838
      %v1910 = vunpack.c.l.b16 %v1839
      %v1911 = vunpack.c.l.b16 %v1840
      %v1912 = vunpack.c.l.b16 %v1841
      %v1913 = vunpack.c.l.b16 %v1842
      %v1914 = vunpack.c.l.b16 %v1843
      %v1915 = vunpack.c.l.b16 %v1844
      %v1916 = vunpack.c.l.b16 %v1845
      %v1917 = vunpack.c.l.b16 %v1846
      %v1918 = vunpack.c.l.b16 %v1847
      %v1919 = vunpack.c.l.b16 %v1848
      %v1920 = vunpack.c.l.b16 %v1849
      %v1921 = vpack.c.b16 %v1895, %v1894
      %v1922 = vpack.c.b16 %v1897, %v1896
      %v1923 = vpack.c.b16 %v1899, %v1898
      %v1924 = vpack.c.b16 %v1901, %v1900
      %v1925 = vpack.c.b16 %v1903, %v1902
      %v1926 = vpack.c.b16 %v1905, %v1904
      %v1927 = vpack.c.b16 %v1907, %v1906
      %v1928 = vpack.c.b16 %v1909, %v1908
      %v1929 = vpack.c.b16 %v1911, %v1910
      %v1930 = vpack.c.b16 %v1913, %v1912
      %v1931 = vpack.c.b16 %v1915, %v1914
      %v1932 = vpack.c.b16 %v1917, %v1916
      %v1933 = vpack.c.b16 %v1919, %v1918
      %v1934 = vpack.c.b16 %v1920, %v1920
      %v1936 = vshrl.u32 %v1921, 16
      %v1938 = vshll.u32 %v1921, 16
      %v1940 = vrot.slane %v1938, 1
      %v1941 = vor.u32 %v1936, %v1940
      %v1943 = vshll.u32 %v1922, 16
      %v1945 = vrot.slane %v1943, 1
      %v1946 = vsel %vm329, %v1941, %v1945
      %v1947 = vshrl.u32 %v1922, 16
      %v1949 = vor.u32 %v1947, %v1945
      %v1951 = vshll.u32 %v1923, 16
      %v1953 = vrot.slane %v1951, 1
      %v1954 = vsel %vm329, %v1949, %v1953
      %v1955 = vshrl.u32 %v1923, 16
      %v1957 = vor.u32 %v1955, %v1953
      %v1959 = vshll.u32 %v1924, 16
      %v1961 = vrot.slane %v1959, 1
      %v1962 = vsel %vm329, %v1957, %v1961
      %v1963 = vshrl.u32 %v1924, 16
      %v1965 = vor.u32 %v1963, %v1961
      %v1967 = vshll.u32 %v1925, 16
      %v1969 = vrot.slane %v1967, 1
      %v1970 = vsel %vm329, %v1965, %v1969
      %v1971 = vshrl.u32 %v1925, 16
      %v1973 = vor.u32 %v1971, %v1969
      %v1975 = vshll.u32 %v1926, 16
      %v1977 = vrot.slane %v1975, 1
      %v1978 = vsel %vm329, %v1973, %v1977
      %v1979 = vshrl.u32 %v1926, 16
      %v1981 = vor.u32 %v1979, %v1977
      %v1983 = vshll.u32 %v1927, 16
      %v1985 = vrot.slane %v1983, 1
      %v1986 = vsel %vm329, %v1981, %v1985
      %v1987 = vshrl.u32 %v1927, 16
      %v1989 = vor.u32 %v1987, %v1985
      %v1991 = vshll.u32 %v1928, 16
      %v1993 = vrot.slane %v1991, 1
      %v1994 = vsel %vm329, %v1989, %v1993
      %v1995 = vshrl.u32 %v1928, 16
      %v1997 = vor.u32 %v1995, %v1993
      %v1999 = vshll.u32 %v1929, 16
      %v2001 = vrot.slane %v1999, 1
      %v2002 = vsel %vm329, %v1997, %v2001
      %v2003 = vshrl.u32 %v1929, 16
      %v2005 = vor.u32 %v2003, %v2001
      %v2007 = vshll.u32 %v1930, 16
      %v2009 = vrot.slane %v2007, 1
      %v2010 = vsel %vm329, %v2005, %v2009
      %v2011 = vshrl.u32 %v1930, 16
      %v2013 = vor.u32 %v2011, %v2009
      %v2015 = vshll.u32 %v1931, 16
      %v2017 = vrot.slane %v2015, 1
      %v2018 = vsel %vm329, %v2013, %v2017
      %v2019 = vshrl.u32 %v1931, 16
      %v2021 = vor.u32 %v2019, %v2017
      %v2023 = vshll.u32 %v1932, 16
      %v2025 = vrot.slane %v2023, 1
      %v2026 = vsel %vm329, %v2021, %v2025
      %v2027 = vshrl.u32 %v1932, 16
      %v2029 = vor.u32 %v2027, %v2025
      %v2031 = vshll.u32 %v1933, 16
      %v2033 = vrot.slane %v2031, 1
      %v2034 = vsel %vm329, %v2029, %v2033
      %v2035 = vshrl.u32 %v1933, 16
      %v2037 = vor.u32 %v2035, %v2033
      %v2039 = vshll.u32 %v1934, 16
      %v2041 = vrot.slane %v2039, 1
      %v2042 = vsel %vm329, %v2037, %v2041
      %v2072 = vunpack.c.l.b16 %v1851
      %v2073 = vunpack.c.l.b16 %v1852
      %v2074 = vunpack.c.l.b16 %v1853
      %v2075 = vunpack.c.l.b16 %v1854
      %v2076 = vunpack.c.l.b16 %v1855
      %v2077 = vunpack.c.l.b16 %v1856
      %v2078 = vunpack.c.l.b16 %v1857
      %v2079 = vunpack.c.l.b16 %v1858
      %v2080 = vunpack.c.l.b16 %v1859
      %v2081 = vunpack.c.l.b16 %v1860
      %v2082 = vunpack.c.l.b16 %v1861
      %v2083 = vunpack.c.l.b16 %v1862
      %v2084 = vunpack.c.l.b16 %v1863
      %v2085 = vunpack.c.l.b16 %v1864
      %v2086 = vunpack.c.l.b16 %v1865
      %v2087 = vunpack.c.l.b16 %v1866
      %v2088 = vpack.c.b16 %v2073, %v2072
      %v2089 = vpack.c.b16 %v2075, %v2074
      %v2090 = vpack.c.b16 %v2077, %v2076
      %v2091 = vpack.c.b16 %v2079, %v2078
      %v2092 = vpack.c.b16 %v2081, %v2080
      %v2093 = vpack.c.b16 %v2083, %v2082
      %v2094 = vpack.c.b16 %v2085, %v2084
      %v2095 = vpack.c.b16 %v2087, %v2086
      %2104 = vmatprep.subr.bf16.mxu0 0
      %2105 = vmatpush1.bf16.msra.mxu0 %v2088
      %2106 = vmatprep.subr.bf16.mxu0 0
      %2107 = vmatpush1.bf16.msra.mxu0 %v2089
      %2108 = vmatprep.subr.bf16.mxu0 0
      %2109 = vmatpush1.bf16.msra.mxu0 %v2090
      %2110 = vmatprep.subr.bf16.mxu0 0
      %2111 = vmatpush1.bf16.msra.mxu0 %v2091
      %2112 = vmatprep.subr.bf16.mxu0 0
      %2113 = vmatpush1.bf16.msra.mxu0 %v2092
      %2114 = vmatprep.subr.bf16.mxu0 0
      %2115 = vmatpush1.bf16.msra.mxu0 %v2093
      %2116 = vmatprep.subr.bf16.mxu0 0
      %2117 = vmatpush1.bf16.msra.mxu0 %v2094
      %2118 = vmatprep.subr.bf16.mxu0 0
      %2119 = vmatpush1.bf16.msra.mxu0 %v2095
      %2120 = vmatprep.subr.bf16.mxu0 0
      %2121 = vmatpush1.bf16.msra.mxu0 0
      %2122 = vmatprep.subr.bf16.mxu0 0
      %2123 = vmatpush1.bf16.msra.mxu0 0
      %2124 = vmatprep.subr.bf16.mxu0 0
      %2125 = vmatpush1.bf16.msra.mxu0 0
      %2126 = vmatprep.subr.bf16.mxu0 0
      %2127 = vmatpush1.bf16.msra.mxu0 0
      %2128 = vmatprep.subr.bf16.mxu0 0
      %2129 = vmatpush1.bf16.msra.mxu0 0
      %2130 = vmatprep.subr.bf16.mxu0 0
      %2131 = vmatpush1.bf16.msra.mxu0 0
      %2132 = vmatprep.subr.bf16.mxu0 0
      %2133 = vmatpush1.bf16.msra.mxu0 0
      %2134 = vmatprep.subr.bf16.mxu0 0
      %2135 = vmatpush1.bf16.msra.mxu0 0
      %2136 = vmatprep.mubr.bf16.mxu0 0
      %2137 = vmatmul.mubr.bf16.gmra.mrb[0].mxu0 %v1946
      %v2138 = vpop.f32.mrb[0].mxu0
      %v2139 = vadd.f32 0.0, %v2138
      %v2140 = vpop.f32.mrb[0].mxu0
      %v2141 = vpop.f32.mrb[0].mxu0
      %v2142 = vadd.f32 0.0, %v2141
      %v2143 = vpop.f32.mrb[0].mxu0
      %2144 = vmatprep.mubr.bf16.mxu0 0
      %2145 = vmatmul.mubr.bf16.gmra.mrb[0].mxu0 %v1954
      %v2146 = vpop.f32.mrb[0].mxu0
      %v2147 = vadd.f32 0.0, %v2146
      %v2148 = vpop.f32.mrb[0].mxu0
      %v2149 = vpop.f32.mrb[0].mxu0
      %v2150 = vadd.f32 0.0, %v2149
      %v2151 = vpop.f32.mrb[0].mxu0
      %2152 = vmatprep.mubr.bf16.mxu0 0
      %2153 = vmatmul.mubr.bf16.gmra.mrb[0].mxu0 %v1962
      %v2154 = vpop.f32.mrb[0].mxu0
      %v2155 = vadd.f32 0.0, %v2154
      %v2156 = vpop.f32.mrb[0].mxu0
      %v2157 = vpop.f32.mrb[0].mxu0
      %v2158 = vadd.f32 0.0, %v2157
      %v2159 = vpop.f32.mrb[0].mxu0
      %2160 = vmatprep.mubr.bf16.mxu0 0
      %2161 = vmatmul.mubr.bf16.gmra.mrb[0].mxu0 %v1970
      %v2162 = vpop.f32.mrb[0].mxu0
      %v2163 = vadd.f32 0.0, %v2162
      %v2164 = vpop.f32.mrb[0].mxu0
      %v2165 = vpop.f32.mrb[0].mxu0
      %v2166 = vadd.f32 0.0, %v2165
      %v2167 = vpop.f32.mrb[0].mxu0
      %2168 = vmatprep.mubr.bf16.mxu0 0
      %2169 = vmatmul.mubr.bf16.gmra.mrb[0].mxu0 %v1978
      %v2170 = vpop.f32.mrb[0].mxu0
      %v2171 = vadd.f32 0.0, %v2170
      %v2172 = vpop.f32.mrb[0].mxu0
      %v2173 = vpop.f32.mrb[0].mxu0
      %v2174 = vadd.f32 0.0, %v2173
      %v2175 = vpop.f32.mrb[0].mxu0
      %2176 = vmatprep.mubr.bf16.mxu0 0
      %2177 = vmatmul.mubr.bf16.gmra.mrb[0].mxu0 %v1986
      %v2178 = vpop.f32.mrb[0].mxu0
      %v2179 = vadd.f32 0.0, %v2178
      %v2180 = vpop.f32.mrb[0].mxu0
      %v2181 = vpop.f32.mrb[0].mxu0
      %v2182 = vadd.f32 0.0, %v2181
      %v2183 = vpop.f32.mrb[0].mxu0
      %2184 = vmatprep.mubr.bf16.mxu0 0
      %2185 = vmatmul.mubr.bf16.gmra.mrb[0].mxu0 %v1994
      %v2186 = vpop.f32.mrb[0].mxu0
      %v2187 = vadd.f32 0.0, %v2186
      %v2188 = vpop.f32.mrb[0].mxu0
      %v2189 = vpop.f32.mrb[0].mxu0
      %v2190 = vadd.f32 0.0, %v2189
      %v2191 = vpop.f32.mrb[0].mxu0
      %2192 = vmatprep.mubr.bf16.mxu0 0
      %2193 = vmatmul.mubr.bf16.gmra.mrb[0].mxu0 %v2002
      %v2194 = vpop.f32.mrb[0].mxu0
      %v2195 = vadd.f32 0.0, %v2194
      %v2196 = vpop.f32.mrb[0].mxu0
      %v2197 = vpop.f32.mrb[0].mxu0
      %v2198 = vadd.f32 0.0, %v2197
      %v2199 = vpop.f32.mrb[0].mxu0
      %2200 = vmatprep.mubr.bf16.mxu0 0
      %2201 = vmatmul.mubr.bf16.gmra.mrb[0].mxu0 %v2010
      %v2202 = vpop.f32.mrb[0].mxu0
      %v2203 = vadd.f32 0.0, %v2202
      %v2204 = vpop.f32.mrb[0].mxu0
      %v2205 = vpop.f32.mrb[0].mxu0
      %v2206 = vadd.f32 0.0, %v2205
      %v2207 = vpop.f32.mrb[0].mxu0
      %2208 = vmatprep.mubr.bf16.mxu0 0
      %2209 = vmatmul.mubr.bf16.gmra.mrb[0].mxu0 %v2018
      %v2210 = vpop.f32.mrb[0].mxu0
      %v2211 = vadd.f32 0.0, %v2210
      %v2212 = vpop.f32.mrb[0].mxu0
      %v2213 = vpop.f32.mrb[0].mxu0
      %v2214 = vadd.f32 0.0, %v2213
      %v2215 = vpop.f32.mrb[0].mxu0
      %2216 = vmatprep.mubr.bf16.mxu0 0
      %2217 = vmatmul.mubr.bf16.gmra.mrb[0].mxu0 %v2026
      %v2218 = vpop.f32.mrb[0].mxu0
      %v2219 = vadd.f32 0.0, %v2218
      %v2220 = vpop.f32.mrb[0].mxu0
      %v2221 = vpop.f32.mrb[0].mxu0
      %v2222 = vadd.f32 0.0, %v2221
      %v2223 = vpop.f32.mrb[0].mxu0
      %2224 = vmatprep.mubr.bf16.mxu0 0
      %2225 = vmatmul.mubr.bf16.gmra.mrb[0].mxu0 %v2034
      %v2226 = vpop.f32.mrb[0].mxu0
      %v2227 = vadd.f32 0.0, %v2226
      %v2228 = vpop.f32.mrb[0].mxu0
      %v2229 = vpop.f32.mrb[0].mxu0
      %v2230 = vadd.f32 0.0, %v2229
      %v2231 = vpop.f32.mrb[0].mxu0
      %2232 = vmatprep.mubr.bf16.mxu0 0
      %2233 = vmatmul.mubr.bf16.gmra.mrb[0].mxu0 %v2042
      %v2234 = vpop.f32.mrb[0].mxu0
      %v2235 = vadd.f32 0.0, %v2234
      %v2236 = vpop.f32.mrb[0].mxu0
      %v2237 = vpop.f32.mrb[0].mxu0
      %v2238 = vadd.f32 0.0, %v2237
      %v2239 = vpop.f32.mrb[0].mxu0
      %2240 = vdwg.mxu0
      %v2241 = vadd.f32 %v1797, %v2139
      %v2242 = vadd.f32 %v1798, %v2142
      %v2243 = vadd.f32 %v1799, %v2147
      %v2244 = vadd.f32 %v1800, %v2150
      %v2245 = vadd.f32 %v1801, %v2155
      %v2246 = vadd.f32 %v1802, %v2158
      %v2247 = vadd.f32 %v1803, %v2163
      %v2248 = vadd.f32 %v1804, %v2166
      %v2249 = vadd.f32 %v1805, %v2171
      %v2250 = vadd.f32 %v1806, %v2174
      %v2251 = vadd.f32 %v1807, %v2179
      %v2252 = vadd.f32 %v1808, %v2182
      %v2253 = vadd.f32 %v1809, %v2187
      %v2254 = vadd.f32 %v1810, %v2190
      %v2255 = vadd.f32 %v1811, %v2195
      %v2256 = vadd.f32 %v1812, %v2198
      %v2257 = vadd.f32 %v1813, %v2203
      %v2258 = vadd.f32 %v1814, %v2206
      %v2259 = vadd.f32 %v1815, %v2211
      %v2260 = vadd.f32 %v1816, %v2214
      %v2261 = vadd.f32 %v1817, %v2219
      %v2262 = vadd.f32 %v1818, %v2222
      %v2263 = vadd.f32 %v1819, %v2227
      %v2264 = vadd.f32 %v1820, %v2230
      %v2265 = vadd.f32 %v1821, %v2235
      %v2266 = vadd.f32 %v1822, %v2238
      %v2267 = vld [vmem:[%s192 + $0xc] sm:$0x8]
      %v2268 = vld [vmem:[%s192 + $0x10] sm:$0xf]
      %v2269 = vld [vmem:[%s192 + $0x14] sm:$0xf]
      %v2270 = vld [vmem:[%s192 + $0x18] sm:$0xf]
      %v2271 = vld [vmem:[%s192 + $0x1c] sm:$0xf]
      %v2272 = vld [vmem:[%s192 + $0x20] sm:$0xf]
      %v2273 = vld [vmem:[%s192 + $0x24] sm:$0xf]
      %v2274 = vld [vmem:[%s192 + $0x28] sm:$0xf]
      %v2275 = vld [vmem:[%s192 + $0x2c] sm:$0xf]
      %v2276 = vld [vmem:[%s192 + $0x30] sm:$0xf]
      %v2277 = vld [vmem:[%s192 + $0x34] sm:$0xf]
      %v2278 = vld [vmem:[%s192 + $0x38] sm:$0xf]
      %v2279 = vld [vmem:[%s192 + $0x3c] sm:$0xf]
      %v2280 = vld [vmem:[%s192 + $0x40] sm:$0xf]
      %v2281 = vld [vmem:[%s192 + $0x44] sm:$0xf]
      %v2282 = vld [vmem:[%s192 + $0x48] sm:$0xf]
      %v2283 = vld [vmem:[%s192 + $0x4c] sm:$0xf]
      %v2284 = vld [vmem:[%s192 + $0x50] sm:$0xf]
      %v2285 = vld [vmem:[%s192 + $0x54] sm:$0xf]
      %v2286 = vld [vmem:[%s192 + $0x58] sm:$0xf]
      %v2287 = vld [vmem:[%s192 + $0x5c] sm:$0xf]
      %v2288 = vld [vmem:[%s192 + $0x60] sm:$0xf]
      %v2289 = vld [vmem:[%s192 + $0x64] sm:$0xf]
      %v2290 = vld [vmem:[%s192 + $0x68] sm:$0xf]
      %v2291 = vld [vmem:[%s192 + $0x6c] sm:$0xf]
      %v2292 = vld [vmem:[%s192 + $0x70] sm:$0xf]
      %v2293 = vld [vmem:[%s192 + $0x74] sm:$0x7]
      %s2294 = scalar_lea.vmem %s1, 384
      %v2295 = vld [vmem:[%s2294] sm:$0xf]
      %v2296 = vld [vmem:[%s2294 + $0x4] sm:$0xf]
      %v2297 = vld [vmem:[%s2294 + $0x8] sm:$0xf]
      %v2298 = vld [vmem:[%s2294 + $0xc] sm:$0xf]
      %v2299 = vld [vmem:[%s2294 + $0x10] sm:$0xf]
      %v2300 = vld [vmem:[%s2294 + $0x14] sm:$0xf]
      %v2301 = vld [vmem:[%s2294 + $0x18] sm:$0xf]
      %v2302 = vld [vmem:[%s2294 + $0x1c] sm:$0xf]
      %v2303 = vld [vmem:[%s2294 + $0x20] sm:$0xf]
      %v2304 = vld [vmem:[%s2294 + $0x24] sm:$0xf]
      %v2305 = vld [vmem:[%s2294 + $0x28] sm:$0xf]
      %v2306 = vld [vmem:[%s2294 + $0x2c] sm:$0xf]
      %v2307 = vld [vmem:[%s2294 + $0x30] sm:$0xf]
      %v2308 = vld [vmem:[%s2294 + $0x34] sm:$0xf]
      %v2309 = vld [vmem:[%s2294 + $0x38] sm:$0xf]
      %v2310 = vld [vmem:[%s2294 + $0x3c] sm:$0xf]
      %v2338 = vunpack.c.l.b16 %v2267
      %v2339 = vunpack.c.l.b16 %v2268
      %v2340 = vunpack.c.l.b16 %v2269
      %v2341 = vunpack.c.l.b16 %v2270
      %v2342 = vunpack.c.l.b16 %v2271
      %v2343 = vunpack.c.l.b16 %v2272
      %v2344 = vunpack.c.l.b16 %v2273
      %v2345 = vunpack.c.l.b16 %v2274
      %v2346 = vunpack.c.l.b16 %v2275
      %v2347 = vunpack.c.l.b16 %v2276
      %v2348 = vunpack.c.l.b16 %v2277
      %v2349 = vunpack.c.l.b16 %v2278
      %v2350 = vunpack.c.l.b16 %v2279
      %v2351 = vunpack.c.l.b16 %v2280
      %v2352 = vunpack.c.l.b16 %v2281
      %v2353 = vunpack.c.l.b16 %v2282
      %v2354 = vunpack.c.l.b16 %v2283
      %v2355 = vunpack.c.l.b16 %v2284
      %v2356 = vunpack.c.l.b16 %v2285
      %v2357 = vunpack.c.l.b16 %v2286
      %v2358 = vunpack.c.l.b16 %v2287
      %v2359 = vunpack.c.l.b16 %v2288
      %v2360 = vunpack.c.l.b16 %v2289
      %v2361 = vunpack.c.l.b16 %v2290
      %v2362 = vunpack.c.l.b16 %v2291
      %v2363 = vunpack.c.l.b16 %v2292
      %v2364 = vunpack.c.l.b16 %v2293
      %v2365 = vpack.c.b16 %v2339, %v2338
      %v2366 = vpack.c.b16 %v2341, %v2340
      %v2367 = vpack.c.b16 %v2343, %v2342
      %v2368 = vpack.c.b16 %v2345, %v2344
      %v2369 = vpack.c.b16 %v2347, %v2346
      %v2370 = vpack.c.b16 %v2349, %v2348
      %v2371 = vpack.c.b16 %v2351, %v2350
      %v2372 = vpack.c.b16 %v2353, %v2352
      %v2373 = vpack.c.b16 %v2355, %v2354
      %v2374 = vpack.c.b16 %v2357, %v2356
      %v2375 = vpack.c.b16 %v2359, %v2358
      %v2376 = vpack.c.b16 %v2361, %v2360
      %v2377 = vpack.c.b16 %v2363, %v2362
      %v2378 = vpack.c.b16 %v2364, %v2364
      %vm2379 = vcmask 1044480
      %v2380 = vrot.slane %v2365, 3
      %v2381 = vrot.slane %v2366, 3
      %v2382 = vsel %vm2379, %v2380, %v2381
      %v2383 = vrot.slane %v2367, 3
      %v2384 = vsel %vm2379, %v2381, %v2383
      %v2385 = vrot.slane %v2368, 3
      %v2386 = vsel %vm2379, %v2383, %v2385
      %v2387 = vrot.slane %v2369, 3
      %v2388 = vsel %vm2379, %v2385, %v2387
      %v2389 = vrot.slane %v2370, 3
      %v2390 = vsel %vm2379, %v2387, %v2389
      %v2391 = vrot.slane %v2371, 3
      %v2392 = vsel %vm2379, %v2389, %v2391
      %v2393 = vrot.slane %v2372, 3
      %v2394 = vsel %vm2379, %v2391, %v2393
      %v2395 = vrot.slane %v2373, 3
      %v2396 = vsel %vm2379, %v2393, %v2395
      %v2397 = vrot.slane %v2374, 3
      %v2398 = vsel %vm2379, %v2395, %v2397
      %v2399 = vrot.slane %v2375, 3
      %v2400 = vsel %vm2379, %v2397, %v2399
      %v2401 = vrot.slane %v2376, 3
      %v2402 = vsel %vm2379, %v2399, %v2401
      %v2403 = vrot.slane %v2377, 3
      %v2404 = vsel %vm2379, %v2401, %v2403
      %v2405 = vrot.slane %v2378, 3
      %v2406 = vsel %vm2379, %v2403, %v2405
      %v2436 = vunpack.c.l.b16 %v2295
      %v2437 = vunpack.c.l.b16 %v2296
      %v2438 = vunpack.c.l.b16 %v2297
      %v2439 = vunpack.c.l.b16 %v2298
      %v2440 = vunpack.c.l.b16 %v2299
      %v2441 = vunpack.c.l.b16 %v2300
      %v2442 = vunpack.c.l.b16 %v2301
      %v2443 = vunpack.c.l.b16 %v2302
      %v2444 = vunpack.c.l.b16 %v2303
      %v2445 = vunpack.c.l.b16 %v2304
      %v2446 = vunpack.c.l.b16 %v2305
      %v2447 = vunpack.c.l.b16 %v2306
      %v2448 = vunpack.c.l.b16 %v2307
      %v2449 = vunpack.c.l.b16 %v2308
      %v2450 = vunpack.c.l.b16 %v2309
      %v2451 = vunpack.c.l.b16 %v2310
      %v2452 = vpack.c.b16 %v2437, %v2436
      %v2453 = vpack.c.b16 %v2439, %v2438
      %v2454 = vpack.c.b16 %v2441, %v2440
      %v2455 = vpack.c.b16 %v2443, %v2442
      %v2456 = vpack.c.b16 %v2445, %v2444
      %v2457 = vpack.c.b16 %v2447, %v2446
      %v2458 = vpack.c.b16 %v2449, %v2448
      %v2459 = vpack.c.b16 %v2451, %v2450
      %2468 = vmatprep.subr.bf16.mxu0 0
      %2469 = vmatpush1.bf16.msra.mxu0 %v2452
      %2470 = vmatprep.subr.bf16.mxu0 0
      %2471 = vmatpush1.bf16.msra.mxu0 %v2453
      %2472 = vmatprep.subr.bf16.mxu0 0
      %2473 = vmatpush1.bf16.msra.mxu0 %v2454
      %2474 = vmatprep.subr.bf16.mxu0 0
      %2475 = vmatpush1.bf16.msra.mxu0 %v2455
      %2476 = vmatprep.subr.bf16.mxu0 0
      %2477 = vmatpush1.bf16.msra.mxu0 %v2456
      %2478 = vmatprep.subr.bf16.mxu0 0
      %2479 = vmatpush1.bf16.msra.mxu0 %v2457
      %2480 = vmatprep.subr.bf16.mxu0 0
      %2481 = vmatpush1.bf16.msra.mxu0 %v2458
      %2482 = vmatprep.subr.bf16.mxu0 0
      %2483 = vmatpush1.bf16.msra.mxu0 %v2459
      %2484 = vmatprep.subr.bf16.mxu0 0
      %2485 = vmatpush1.bf16.msra.mxu0 0
      %2486 = vmatprep.subr.bf16.mxu0 0
      %2487 = vmatpush1.bf16.msra.mxu0 0
      %2488 = vmatprep.subr.bf16.mxu0 0
      %2489 = vmatpush1.bf16.msra.mxu0 0
      %2490 = vmatprep.subr.bf16.mxu0 0
      %2491 = vmatpush1.bf16.msra.mxu0 0
      %2492 = vmatprep.subr.bf16.mxu0 0
      %2493 = vmatpush1.bf16.msra.mxu0 0
      %2494 = vmatprep.subr.bf16.mxu0 0
      %2495 = vmatpush1.bf16.msra.mxu0 0
      %2496 = vmatprep.subr.bf16.mxu0 0
      %2497 = vmatpush1.bf16.msra.mxu0 0
      %2498 = vmatprep.subr.bf16.mxu0 0
      %2499 = vmatpush1.bf16.msra.mxu0 0
      %2500 = vmatprep.mubr.bf16.mxu0 0
      %2501 = vmatmul.mubr.bf16.gmra.mrb[0].mxu0 %v2382
      %v2502 = vpop.f32.mrb[0].mxu0
      %v2503 = vadd.f32 0.0, %v2502
      %v2504 = vpop.f32.mrb[0].mxu0
      %v2505 = vpop.f32.mrb[0].mxu0
      %v2506 = vadd.f32 0.0, %v2505
      %v2507 = vpop.f32.mrb[0].mxu0
      %2508 = vmatprep.mubr.bf16.mxu0 0
      %2509 = vmatmul.mubr.bf16.gmra.mrb[0].mxu0 %v2384
      %v2510 = vpop.f32.mrb[0].mxu0
      %v2511 = vadd.f32 0.0, %v2510
      %v2512 = vpop.f32.mrb[0].mxu0
      %v2513 = vpop.f32.mrb[0].mxu0
      %v2514 = vadd.f32 0.0, %v2513
      %v2515 = vpop.f32.mrb[0].mxu0
      %2516 = vmatprep.mubr.bf16.mxu0 0
      %2517 = vmatmul.mubr.bf16.gmra.mrb[0].mxu0 %v2386
      %v2518 = vpop.f32.mrb[0].mxu0
      %v2519 = vadd.f32 0.0, %v2518
      %v2520 = vpop.f32.mrb[0].mxu0
      %v2521 = vpop.f32.mrb[0].mxu0
      %v2522 = vadd.f32 0.0, %v2521
      %v2523 = vpop.f32.mrb[0].mxu0
      %2524 = vmatprep.mubr.bf16.mxu0 0
      %2525 = vmatmul.mubr.bf16.gmra.mrb[0].mxu0 %v2388
      %v2526 = vpop.f32.mrb[0].mxu0
      %v2527 = vadd.f32 0.0, %v2526
      %v2528 = vpop.f32.mrb[0].mxu0
      %v2529 = vpop.f32.mrb[0].mxu0
      %v2530 = vadd.f32 0.0, %v2529
      %v2531 = vpop.f32.mrb[0].mxu0
      %2532 = vmatprep.mubr.bf16.mxu0 0
      %2533 = vmatmul.mubr.bf16.gmra.mrb[0].mxu0 %v2390
      %v2534 = vpop.f32.mrb[0].mxu0
      %v2535 = vadd.f32 0.0, %v2534
      %v2536 = vpop.f32.mrb[0].mxu0
      %v2537 = vpop.f32.mrb[0].mxu0
      %v2538 = vadd.f32 0.0, %v2537
      %v2539 = vpop.f32.mrb[0].mxu0
      %2540 = vmatprep.mubr.bf16.mxu0 0
      %2541 = vmatmul.mubr.bf16.gmra.mrb[0].mxu0 %v2392
      %v2542 = vpop.f32.mrb[0].mxu0
      %v2543 = vadd.f32 0.0, %v2542
      %v2544 = vpop.f32.mrb[0].mxu0
      %v2545 = vpop.f32.mrb[0].mxu0
      %v2546 = vadd.f32 0.0, %v2545
      %v2547 = vpop.f32.mrb[0].mxu0
      %2548 = vmatprep.mubr.bf16.mxu0 0
      %2549 = vmatmul.mubr.bf16.gmra.mrb[0].mxu0 %v2394
      %v2550 = vpop.f32.mrb[0].mxu0
      %v2551 = vadd.f32 0.0, %v2550
      %v2552 = vpop.f32.mrb[0].mxu0
      %v2553 = vpop.f32.mrb[0].mxu0
      %v2554 = vadd.f32 0.0, %v2553
      %v2555 = vpop.f32.mrb[0].mxu0
      %2556 = vmatprep.mubr.bf16.mxu0 0
      %2557 = vmatmul.mubr.bf16.gmra.mrb[0].mxu0 %v2396
      %v2558 = vpop.f32.mrb[0].mxu0
      %v2559 = vadd.f32 0.0, %v2558
      %v2560 = vpop.f32.mrb[0].mxu0
      %v2561 = vpop.f32.mrb[0].mxu0
      %v2562 = vadd.f32 0.0, %v2561
      %v2563 = vpop.f32.mrb[0].mxu0
      %2564 = vmatprep.mubr.bf16.mxu0 0
      %2565 = vmatmul.mubr.bf16.gmra.mrb[0].mxu0 %v2398
      %v2566 = vpop.f32.mrb[0].mxu0
      %v2567 = vadd.f32 0.0, %v2566
      %v2568 = vpop.f32.mrb[0].mxu0
      %v2569 = vpop.f32.mrb[0].mxu0
      %v2570 = vadd.f32 0.0, %v2569
      %v2571 = vpop.f32.mrb[0].mxu0
      %2572 = vmatprep.mubr.bf16.mxu0 0
      %2573 = vmatmul.mubr.bf16.gmra.mrb[0].mxu0 %v2400
      %v2574 = vpop.f32.mrb[0].mxu0
      %v2575 = vadd.f32 0.0, %v2574
      %v2576 = vpop.f32.mrb[0].mxu0
      %v2577 = vpop.f32.mrb[0].mxu0
      %v2578 = vadd.f32 0.0, %v2577
      %v2579 = vpop.f32.mrb[0].mxu0
      %2580 = vmatprep.mubr.bf16.mxu0 0
      %2581 = vmatmul.mubr.bf16.gmra.mrb[0].mxu0 %v2402
      %v2582 = vpop.f32.mrb[0].mxu0
      %v2583 = vadd.f32 0.0, %v2582
      %v2584 = vpop.f32.mrb[0].mxu0
      %v2585 = vpop.f32.mrb[0].mxu0
      %v2586 = vadd.f32 0.0, %v2585
      %v2587 = vpop.f32.mrb[0].mxu0
      %2588 = vmatprep.mubr.bf16.mxu0 0
      %2589 = vmatmul.mubr.bf16.gmra.mrb[0].mxu0 %v2404
      %v2590 = vpop.f32.mrb[0].mxu0
      %v2591 = vadd.f32 0.0, %v2590
      %v2592 = vpop.f32.mrb[0].mxu0
      %v2593 = vpop.f32.mrb[0].mxu0
      %v2594 = vadd.f32 0.0, %v2593
      %v2595 = vpop.f32.mrb[0].mxu0
      %2596 = vmatprep.mubr.bf16.mxu0 0
      %2597 = vmatmul.mubr.bf16.gmra.mrb[0].mxu0 %v2406
      %v2598 = vpop.f32.mrb[0].mxu0
      %v2599 = vadd.f32 0.0, %v2598
      %v2600 = vpop.f32.mrb[0].mxu0
      %v2601 = vpop.f32.mrb[0].mxu0
      %v2602 = vadd.f32 0.0, %v2601
      %v2603 = vpop.f32.mrb[0].mxu0
      %2604 = vdwg.mxu0
      %v2605 = vadd.f32 %v2241, %v2503
      %v2606 = vadd.f32 %v2242, %v2506
      %v2607 = vadd.f32 %v2243, %v2511
      %v2608 = vadd.f32 %v2244, %v2514
      %v2609 = vadd.f32 %v2245, %v2519
      %v2610 = vadd.f32 %v2246, %v2522
      %v2611 = vadd.f32 %v2247, %v2527
      %v2612 = vadd.f32 %v2248, %v2530
      %v2613 = vadd.f32 %v2249, %v2535
      %v2614 = vadd.f32 %v2250, %v2538
      %v2615 = vadd.f32 %v2251, %v2543
      %v2616 = vadd.f32 %v2252, %v2546
      %v2617 = vadd.f32 %v2253, %v2551
      %v2618 = vadd.f32 %v2254, %v2554
      %v2619 = vadd.f32 %v2255, %v2559
      %v2620 = vadd.f32 %v2256, %v2562
      %v2621 = vadd.f32 %v2257, %v2567
      %v2622 = vadd.f32 %v2258, %v2570
      %v2623 = vadd.f32 %v2259, %v2575
      %v2624 = vadd.f32 %v2260, %v2578
      %v2625 = vadd.f32 %v2261, %v2583
      %v2626 = vadd.f32 %v2262, %v2586
      %v2627 = vadd.f32 %v2263, %v2591
      %v2628 = vadd.f32 %v2264, %v2594
      %v2629 = vadd.f32 %v2265, %v2599
      %v2630 = vadd.f32 %v2266, %v2602
      %v2631 = vld [vmem:[%s192 + $0x74] sm:$0xf]
      %s2632 = scalar_lea.vmem %s1, 448
      %v2633 = vld [vmem:[%s2632] sm:$0xf]
      %v2634 = vld [vmem:[%s2632 + $0x4] sm:$0xf]
      %v2635 = vld [vmem:[%s2632 + $0x8] sm:$0xf]
      %v2636 = vld [vmem:[%s2632 + $0xc] sm:$0xf]
      %v2637 = vld [vmem:[%s2632 + $0x10] sm:$0xf]
      %v2638 = vld [vmem:[%s2632 + $0x14] sm:$0xf]
      %v2639 = vld [vmem:[%s2632 + $0x18] sm:$0xf]
      %v2640 = vld [vmem:[%s2632 + $0x1c] sm:$0xf]
      %v2641 = vld [vmem:[%s2632 + $0x20] sm:$0xf]
      %v2642 = vld [vmem:[%s2632 + $0x24] sm:$0xf]
      %v2643 = vld [vmem:[%s2632 + $0x28] sm:$0xf]
      %v2644 = vld [vmem:[%s2632 + $0x2c] sm:$0xf]
      %v2645 = vld [vmem:[%s2632 + $0x30] sm:$0xf]
      %v2646 = vld [vmem:[%s2632 + $0x34] sm:$0xf]
      %v2647 = vld [vmem:[%s2632 + $0x38] sm:$0xf]
      %v2648 = vld [vmem:[%s2632 + $0x3c] sm:$0xf]
      %v2650 = vunpack.c.l.b16 %v2631
      %v2651 = vpack.c.b16 %v2650, %v2650
      %v2653 = vshrl.u32 %v2365, 16
      %v2655 = vrot.slane %v2653, 3
      %v2656 = vshll.u32 %v2365, 16
      %v2658 = vrot.slane %v2656, 4
      %v2659 = vor.u32 %v2655, %v2658
      %v2661 = vshrl.u32 %v2366, 16
      %v2663 = vrot.slane %v2661, 3
      %v2664 = vshll.u32 %v2366, 16
      %v2666 = vrot.slane %v2664, 4
      %v2667 = vor.u32 %v2663, %v2666
      %v2668 = vsel %vm1219, %v2659, %v2667
      %v2670 = vshrl.u32 %v2367, 16
      %v2672 = vrot.slane %v2670, 3
      %v2673 = vshll.u32 %v2367, 16
      %v2675 = vrot.slane %v2673, 4
      %v2676 = vor.u32 %v2672, %v2675
      %v2677 = vsel %vm1219, %v2667, %v2676
      %v2679 = vshrl.u32 %v2368, 16
      %v2681 = vrot.slane %v2679, 3
      %v2682 = vshll.u32 %v2368, 16
      %v2684 = vrot.slane %v2682, 4
      %v2685 = vor.u32 %v2681, %v2684
      %v2686 = vsel %vm1219, %v2676, %v2685
      %v2688 = vshrl.u32 %v2369, 16
      %v2690 = vrot.slane %v2688, 3
      %v2691 = vshll.u32 %v2369, 16
      %v2693 = vrot.slane %v2691, 4
      %v2694 = vor.u32 %v2690, %v2693
      %v2695 = vsel %vm1219, %v2685, %v2694
      %v2697 = vshrl.u32 %v2370, 16
      %v2699 = vrot.slane %v2697, 3
      %v2700 = vshll.u32 %v2370, 16
      %v2702 = vrot.slane %v2700, 4
      %v2703 = vor.u32 %v2699, %v2702
      %v2704 = vsel %vm1219, %v2694, %v2703
      %v2706 = vshrl.u32 %v2371, 16
      %v2708 = vrot.slane %v2706, 3
      %v2709 = vshll.u32 %v2371, 16
      %v2711 = vrot.slane %v2709, 4
      %v2712 = vor.u32 %v2708, %v2711
      %v2713 = vsel %vm1219, %v2703, %v2712
      %v2715 = vshrl.u32 %v2372, 16
      %v2717 = vrot.slane %v2715, 3
      %v2718 = vshll.u32 %v2372, 16
      %v2720 = vrot.slane %v2718, 4
      %v2721 = vor.u32 %v2717, %v2720
      %v2722 = vsel %vm1219, %v2712, %v2721
      %v2724 = vshrl.u32 %v2373, 16
      %v2726 = vrot.slane %v2724, 3
      %v2727 = vshll.u32 %v2373, 16
      %v2729 = vrot.slane %v2727, 4
      %v2730 = vor.u32 %v2726, %v2729
      %v2731 = vsel %vm1219, %v2721, %v2730
      %v2733 = vshrl.u32 %v2374, 16
      %v2735 = vrot.slane %v2733, 3
      %v2736 = vshll.u32 %v2374, 16
      %v2738 = vrot.slane %v2736, 4
      %v2739 = vor.u32 %v2735, %v2738
      %v2740 = vsel %vm1219, %v2730, %v2739
      %v2742 = vshrl.u32 %v2375, 16
      %v2744 = vrot.slane %v2742, 3
      %v2745 = vshll.u32 %v2375, 16
      %v2747 = vrot.slane %v2745, 4
      %v2748 = vor.u32 %v2744, %v2747
      %v2749 = vsel %vm1219, %v2739, %v2748
      %v2751 = vshrl.u32 %v2376, 16
      %v2753 = vrot.slane %v2751, 3
      %v2754 = vshll.u32 %v2376, 16
      %v2756 = vrot.slane %v2754, 4
      %v2757 = vor.u32 %v2753, %v2756
      %v2758 = vsel %vm1219, %v2748, %v2757
      %v2760 = vshrl.u32 %v2377, 16
      %v2762 = vrot.slane %v2760, 3
      %v2763 = vshll.u32 %v2377, 16
      %v2765 = vrot.slane %v2763, 4
      %v2766 = vor.u32 %v2762, %v2765
      %v2767 = vsel %vm1219, %v2757, %v2766
      %v2769 = vshrl.u32 %v2651, 16
      %v2771 = vrot.slane %v2769, 3
      %v2772 = vshll.u32 %v2651, 16
      %v2774 = vrot.slane %v2772, 4
      %v2775 = vor.u32 %v2771, %v2774
      %v2776 = vsel %vm1219, %v2766, %v2775
      %v2806 = vunpack.c.l.b16 %v2633
      %v2807 = vunpack.c.l.b16 %v2634
      %v2808 = vunpack.c.l.b16 %v2635
      %v2809 = vunpack.c.l.b16 %v2636
      %v2810 = vunpack.c.l.b16 %v2637
      %v2811 = vunpack.c.l.b16 %v2638
      %v2812 = vunpack.c.l.b16 %v2639
      %v2813 = vunpack.c.l.b16 %v2640
      %v2814 = vunpack.c.l.b16 %v2641
      %v2815 = vunpack.c.l.b16 %v2642
      %v2816 = vunpack.c.l.b16 %v2643
      %v2817 = vunpack.c.l.b16 %v2644
      %v2818 = vunpack.c.l.b16 %v2645
      %v2819 = vunpack.c.l.b16 %v2646
      %v2820 = vunpack.c.l.b16 %v2647
      %v2821 = vunpack.c.l.b16 %v2648
      %v2822 = vpack.c.b16 %v2807, %v2806
      %v2823 = vpack.c.b16 %v2809, %v2808
      %v2824 = vpack.c.b16 %v2811, %v2810
      %v2825 = vpack.c.b16 %v2813, %v2812
      %v2826 = vpack.c.b16 %v2815, %v2814
      %v2827 = vpack.c.b16 %v2817, %v2816
      %v2828 = vpack.c.b16 %v2819, %v2818
      %v2829 = vpack.c.b16 %v2821, %v2820
      %2838 = vmatprep.subr.bf16.mxu0 0
      %2839 = vmatpush1.bf16.msra.mxu0 %v2822
      %2840 = vmatprep.subr.bf16.mxu0 0
      %2841 = vmatpush1.bf16.msra.mxu0 %v2823
      %2842 = vmatprep.subr.bf16.mxu0 0
      %2843 = vmatpush1.bf16.msra.mxu0 %v2824
      %2844 = vmatprep.subr.bf16.mxu0 0
      %2845 = vmatpush1.bf16.msra.mxu0 %v2825
      %2846 = vmatprep.subr.bf16.mxu0 0
      %2847 = vmatpush1.bf16.msra.mxu0 %v2826
      %2848 = vmatprep.subr.bf16.mxu0 0
      %2849 = vmatpush1.bf16.msra.mxu0 %v2827
      %2850 = vmatprep.subr.bf16.mxu0 0
      %2851 = vmatpush1.bf16.msra.mxu0 %v2828
      %2852 = vmatprep.subr.bf16.mxu0 0
      %2853 = vmatpush1.bf16.msra.mxu0 %v2829
      %2854 = vmatprep.subr.bf16.mxu0 0
      %2855 = vmatpush1.bf16.msra.mxu0 0
      %2856 = vmatprep.subr.bf16.mxu0 0
      %2857 = vmatpush1.bf16.msra.mxu0 0
      %2858 = vmatprep.subr.bf16.mxu0 0
      %2859 = vmatpush1.bf16.msra.mxu0 0
      %2860 = vmatprep.subr.bf16.mxu0 0
      %2861 = vmatpush1.bf16.msra.mxu0 0
      %2862 = vmatprep.subr.bf16.mxu0 0
      %2863 = vmatpush1.bf16.msra.mxu0 0
      %2864 = vmatprep.subr.bf16.mxu0 0
      %2865 = vmatpush1.bf16.msra.mxu0 0
      %2866 = vmatprep.subr.bf16.mxu0 0
      %2867 = vmatpush1.bf16.msra.mxu0 0
      %2868 = vmatprep.subr.bf16.mxu0 0
      %2869 = vmatpush1.bf16.msra.mxu0 0
      %2870 = vmatprep.mubr.bf16.mxu0 0
      %2871 = vmatmul.mubr.bf16.gmra.mrb[0].mxu0 %v2668
      %v2872 = vpop.f32.mrb[0].mxu0
      %v2873 = vadd.f32 0.0, %v2872
      %v2874 = vpop.f32.mrb[0].mxu0
      %v2875 = vpop.f32.mrb[0].mxu0
      %v2876 = vadd.f32 0.0, %v2875
      %v2877 = vpop.f32.mrb[0].mxu0
      %2878 = vmatprep.mubr.bf16.mxu0 0
      %2879 = vmatmul.mubr.bf16.gmra.mrb[0].mxu0 %v2677
      %v2880 = vpop.f32.mrb[0].mxu0
      %v2881 = vadd.f32 0.0, %v2880
      %v2882 = vpop.f32.mrb[0].mxu0
      %v2883 = vpop.f32.mrb[0].mxu0
      %v2884 = vadd.f32 0.0, %v2883
      %v2885 = vpop.f32.mrb[0].mxu0
      %2886 = vmatprep.mubr.bf16.mxu0 0
      %2887 = vmatmul.mubr.bf16.gmra.mrb[0].mxu0 %v2686
      %v2888 = vpop.f32.mrb[0].mxu0
      %v2889 = vadd.f32 0.0, %v2888
      %v2890 = vpop.f32.mrb[0].mxu0
      %v2891 = vpop.f32.mrb[0].mxu0
      %v2892 = vadd.f32 0.0, %v2891
      %v2893 = vpop.f32.mrb[0].mxu0
      %2894 = vmatprep.mubr.bf16.mxu0 0
      %2895 = vmatmul.mubr.bf16.gmra.mrb[0].mxu0 %v2695
      %v2896 = vpop.f32.mrb[0].mxu0
      %v2897 = vadd.f32 0.0, %v2896
      %v2898 = vpop.f32.mrb[0].mxu0
      %v2899 = vpop.f32.mrb[0].mxu0
      %v2900 = vadd.f32 0.0, %v2899
      %v2901 = vpop.f32.mrb[0].mxu0
      %2902 = vmatprep.mubr.bf16.mxu0 0
      %2903 = vmatmul.mubr.bf16.gmra.mrb[0].mxu0 %v2704
      %v2904 = vpop.f32.mrb[0].mxu0
      %v2905 = vadd.f32 0.0, %v2904
      %v2906 = vpop.f32.mrb[0].mxu0
      %v2907 = vpop.f32.mrb[0].mxu0
      %v2908 = vadd.f32 0.0, %v2907
      %v2909 = vpop.f32.mrb[0].mxu0
      %2910 = vmatprep.mubr.bf16.mxu0 0
      %2911 = vmatmul.mubr.bf16.gmra.mrb[0].mxu0 %v2713
      %v2912 = vpop.f32.mrb[0].mxu0
      %v2913 = vadd.f32 0.0, %v2912
      %v2914 = vpop.f32.mrb[0].mxu0
      %v2915 = vpop.f32.mrb[0].mxu0
      %v2916 = vadd.f32 0.0, %v2915
      %v2917 = vpop.f32.mrb[0].mxu0
      %2918 = vmatprep.mubr.bf16.mxu0 0
      %2919 = vmatmul.mubr.bf16.gmra.mrb[0].mxu0 %v2722
      %v2920 = vpop.f32.mrb[0].mxu0
      %v2921 = vadd.f32 0.0, %v2920
      %v2922 = vpop.f32.mrb[0].mxu0
      %v2923 = vpop.f32.mrb[0].mxu0
      %v2924 = vadd.f32 0.0, %v2923
      %v2925 = vpop.f32.mrb[0].mxu0
      %2926 = vmatprep.mubr.bf16.mxu0 0
      %2927 = vmatmul.mubr.bf16.gmra.mrb[0].mxu0 %v2731
      %v2928 = vpop.f32.mrb[0].mxu0
      %v2929 = vadd.f32 0.0, %v2928
      %v2930 = vpop.f32.mrb[0].mxu0
      %v2931 = vpop.f32.mrb[0].mxu0
      %v2932 = vadd.f32 0.0, %v2931
      %v2933 = vpop.f32.mrb[0].mxu0
      %2934 = vmatprep.mubr.bf16.mxu0 0
      %2935 = vmatmul.mubr.bf16.gmra.mrb[0].mxu0 %v2740
      %v2936 = vpop.f32.mrb[0].mxu0
      %v2937 = vadd.f32 0.0, %v2936
      %v2938 = vpop.f32.mrb[0].mxu0
      %v2939 = vpop.f32.mrb[0].mxu0
      %v2940 = vadd.f32 0.0, %v2939
      %v2941 = vpop.f32.mrb[0].mxu0
      %2942 = vmatprep.mubr.bf16.mxu0 0
      %2943 = vmatmul.mubr.bf16.gmra.mrb[0].mxu0 %v2749
      %v2944 = vpop.f32.mrb[0].mxu0
      %v2945 = vadd.f32 0.0, %v2944
      %v2946 = vpop.f32.mrb[0].mxu0
      %v2947 = vpop.f32.mrb[0].mxu0
      %v2948 = vadd.f32 0.0, %v2947
      %v2949 = vpop.f32.mrb[0].mxu0
      %2950 = vmatprep.mubr.bf16.mxu0 0
      %2951 = vmatmul.mubr.bf16.gmra.mrb[0].mxu0 %v2758
      %v2952 = vpop.f32.mrb[0].mxu0
      %v2953 = vadd.f32 0.0, %v2952
      %v2954 = vpop.f32.mrb[0].mxu0
      %v2955 = vpop.f32.mrb[0].mxu0
      %v2956 = vadd.f32 0.0, %v2955
      %v2957 = vpop.f32.mrb[0].mxu0
      %2958 = vmatprep.mubr.bf16.mxu0 0
      %2959 = vmatmul.mubr.bf16.gmra.mrb[0].mxu0 %v2767
      %v2960 = vpop.f32.mrb[0].mxu0
      %v2961 = vadd.f32 0.0, %v2960
      %v2962 = vpop.f32.mrb[0].mxu0
      %v2963 = vpop.f32.mrb[0].mxu0
      %v2964 = vadd.f32 0.0, %v2963
      %v2965 = vpop.f32.mrb[0].mxu0
      %2966 = vmatprep.mubr.bf16.mxu0 0
      %2967 = vmatmul.mubr.bf16.gmra.mrb[0].mxu0 %v2776
      %v2968 = vpop.f32.mrb[0].mxu0
      %v2969 = vadd.f32 0.0, %v2968
      %v2970 = vpop.f32.mrb[0].mxu0
      %v2971 = vpop.f32.mrb[0].mxu0
      %v2972 = vadd.f32 0.0, %v2971
      %v2973 = vpop.f32.mrb[0].mxu0
      %2974 = vdwg.mxu0
      %v2975 = vadd.f32 %v2605, %v2873
      %v2976 = vadd.f32 %v2606, %v2876
      %v2977 = vadd.f32 %v2607, %v2881
      %v2978 = vadd.f32 %v2608, %v2884
      %v2979 = vadd.f32 %v2609, %v2889
      %v2980 = vadd.f32 %v2610, %v2892
      %v2981 = vadd.f32 %v2611, %v2897
      %v2982 = vadd.f32 %v2612, %v2900
      %v2983 = vadd.f32 %v2613, %v2905
      %v2984 = vadd.f32 %v2614, %v2908
      %v2985 = vadd.f32 %v2615, %v2913
      %v2986 = vadd.f32 %v2616, %v2916
      %v2987 = vadd.f32 %v2617, %v2921
      %v2988 = vadd.f32 %v2618, %v2924
      %v2989 = vadd.f32 %v2619, %v2929
      %v2990 = vadd.f32 %v2620, %v2932
      %v2991 = vadd.f32 %v2621, %v2937
      %v2992 = vadd.f32 %v2622, %v2940
      %v2993 = vadd.f32 %v2623, %v2945
      %v2994 = vadd.f32 %v2624, %v2948
      %v2995 = vadd.f32 %v2625, %v2953
      %v2996 = vadd.f32 %v2626, %v2956
      %v2997 = vadd.f32 %v2627, %v2961
      %v2998 = vadd.f32 %v2628, %v2964
      %v2999 = vadd.f32 %v2629, %v2969
      %v3000 = vadd.f32 %v2630, %v2972
      %s3001 = scalar_lea.vmem %s1, 512
      %v3002 = vld [vmem:[%s3001] sm:$0xf]
      %v3003 = vld [vmem:[%s3001 + $0x4] sm:$0xf]
      %v3004 = vld [vmem:[%s3001 + $0x8] sm:$0xf]
      %v3005 = vld [vmem:[%s3001 + $0xc] sm:$0xf]
      %v3006 = vld [vmem:[%s3001 + $0x10] sm:$0xf]
      %v3007 = vld [vmem:[%s3001 + $0x14] sm:$0xf]
      %v3008 = vld [vmem:[%s3001 + $0x18] sm:$0xf]
      %v3009 = vld [vmem:[%s3001 + $0x1c] sm:$0xf]
      %v3010 = vld [vmem:[%s3001 + $0x20] sm:$0xf]
      %v3011 = vld [vmem:[%s3001 + $0x24] sm:$0xf]
      %v3012 = vld [vmem:[%s3001 + $0x28] sm:$0xf]
      %v3013 = vld [vmem:[%s3001 + $0x2c] sm:$0xf]
      %v3014 = vld [vmem:[%s3001 + $0x30] sm:$0xf]
      %v3015 = vld [vmem:[%s3001 + $0x34] sm:$0xf]
      %v3016 = vld [vmem:[%s3001 + $0x38] sm:$0xf]
      %v3017 = vld [vmem:[%s3001 + $0x3c] sm:$0xf]
      %v3018 = vpack.c.b16 %v2340, %v2339
      %v3019 = vpack.c.b16 %v2342, %v2341
      %v3020 = vpack.c.b16 %v2344, %v2343
      %v3021 = vpack.c.b16 %v2346, %v2345
      %v3022 = vpack.c.b16 %v2348, %v2347
      %v3023 = vpack.c.b16 %v2350, %v2349
      %v3024 = vpack.c.b16 %v2352, %v2351
      %v3025 = vpack.c.b16 %v2354, %v2353
      %v3026 = vpack.c.b16 %v2356, %v2355
      %v3027 = vpack.c.b16 %v2358, %v2357
      %v3028 = vpack.c.b16 %v2360, %v2359
      %v3029 = vpack.c.b16 %v2362, %v2361
      %v3030 = vpack.c.b16 %v2650, %v2363
      %v3060 = vunpack.c.l.b16 %v3002
      %v3061 = vunpack.c.l.b16 %v3003
      %v3062 = vunpack.c.l.b16 %v3004
      %v3063 = vunpack.c.l.b16 %v3005
      %v3064 = vunpack.c.l.b16 %v3006
      %v3065 = vunpack.c.l.b16 %v3007
      %v3066 = vunpack.c.l.b16 %v3008
      %v3067 = vunpack.c.l.b16 %v3009
      %v3068 = vunpack.c.l.b16 %v3010
      %v3069 = vunpack.c.l.b16 %v3011
      %v3070 = vunpack.c.l.b16 %v3012
      %v3071 = vunpack.c.l.b16 %v3013
      %v3072 = vunpack.c.l.b16 %v3014
      %v3073 = vunpack.c.l.b16 %v3015
      %v3074 = vunpack.c.l.b16 %v3016
      %v3075 = vunpack.c.l.b16 %v3017
      %v3076 = vpack.c.b16 %v3061, %v3060
      %v3077 = vpack.c.b16 %v3063, %v3062
      %v3078 = vpack.c.b16 %v3065, %v3064
      %v3079 = vpack.c.b16 %v3067, %v3066
      %v3080 = vpack.c.b16 %v3069, %v3068
      %v3081 = vpack.c.b16 %v3071, %v3070
      %v3082 = vpack.c.b16 %v3073, %v3072
      %v3083 = vpack.c.b16 %v3075, %v3074
      %3092 = vmatprep.subr.bf16.mxu0 0
      %3093 = vmatpush1.bf16.msra.mxu0 %v3076
      %3094 = vmatprep.subr.bf16.mxu0 0
      %3095 = vmatpush1.bf16.msra.mxu0 %v3077
      %3096 = vmatprep.subr.bf16.mxu0 0
      %3097 = vmatpush1.bf16.msra.mxu0 %v3078
      %3098 = vmatprep.subr.bf16.mxu0 0
      %3099 = vmatpush1.bf16.msra.mxu0 %v3079
      %3100 = vmatprep.subr.bf16.mxu0 0
      %3101 = vmatpush1.bf16.msra.mxu0 %v3080
      %3102 = vmatprep.subr.bf16.mxu0 0
      %3103 = vmatpush1.bf16.msra.mxu0 %v3081
      %3104 = vmatprep.subr.bf16.mxu0 0
      %3105 = vmatpush1.bf16.msra.mxu0 %v3082
      %3106 = vmatprep.subr.bf16.mxu0 0
      %3107 = vmatpush1.bf16.msra.mxu0 %v3083
      %3108 = vmatprep.subr.bf16.mxu0 0
      %3109 = vmatpush1.bf16.msra.mxu0 0
      %3110 = vmatprep.subr.bf16.mxu0 0
      %3111 = vmatpush1.bf16.msra.mxu0 0
      %3112 = vmatprep.subr.bf16.mxu0 0
      %3113 = vmatpush1.bf16.msra.mxu0 0
      %3114 = vmatprep.subr.bf16.mxu0 0
      %3115 = vmatpush1.bf16.msra.mxu0 0
      %3116 = vmatprep.subr.bf16.mxu0 0
      %3117 = vmatpush1.bf16.msra.mxu0 0
      %3118 = vmatprep.subr.bf16.mxu0 0
      %3119 = vmatpush1.bf16.msra.mxu0 0
      %3120 = vmatprep.subr.bf16.mxu0 0
      %3121 = vmatpush1.bf16.msra.mxu0 0
      %3122 = vmatprep.subr.bf16.mxu0 0
      %3123 = vmatpush1.bf16.msra.mxu0 0
      %3124 = vmatprep.mubr.bf16.mxu0 0
      %3125 = vmatmul.mubr.bf16.gmra.mrb[0].mxu0 %v3018
      %v3126 = vpop.f32.mrb[0].mxu0
      %v3127 = vadd.f32 0.0, %v3126
      %v3128 = vpop.f32.mrb[0].mxu0
      %v3129 = vpop.f32.mrb[0].mxu0
      %v3130 = vadd.f32 0.0, %v3129
      %v3131 = vpop.f32.mrb[0].mxu0
      %3132 = vmatprep.mubr.bf16.mxu0 0
      %3133 = vmatmul.mubr.bf16.gmra.mrb[0].mxu0 %v3019
      %v3134 = vpop.f32.mrb[0].mxu0
      %v3135 = vadd.f32 0.0, %v3134
      %v3136 = vpop.f32.mrb[0].mxu0
      %v3137 = vpop.f32.mrb[0].mxu0
      %v3138 = vadd.f32 0.0, %v3137
      %v3139 = vpop.f32.mrb[0].mxu0
      %3140 = vmatprep.mubr.bf16.mxu0 0
      %3141 = vmatmul.mubr.bf16.gmra.mrb[0].mxu0 %v3020
      %v3142 = vpop.f32.mrb[0].mxu0
      %v3143 = vadd.f32 0.0, %v3142
      %v3144 = vpop.f32.mrb[0].mxu0
      %v3145 = vpop.f32.mrb[0].mxu0
      %v3146 = vadd.f32 0.0, %v3145
      %v3147 = vpop.f32.mrb[0].mxu0
      %3148 = vmatprep.mubr.bf16.mxu0 0
      %3149 = vmatmul.mubr.bf16.gmra.mrb[0].mxu0 %v3021
      %v3150 = vpop.f32.mrb[0].mxu0
      %v3151 = vadd.f32 0.0, %v3150
      %v3152 = vpop.f32.mrb[0].mxu0
      %v3153 = vpop.f32.mrb[0].mxu0
      %v3154 = vadd.f32 0.0, %v3153
      %v3155 = vpop.f32.mrb[0].mxu0
      %3156 = vmatprep.mubr.bf16.mxu0 0
      %3157 = vmatmul.mubr.bf16.gmra.mrb[0].mxu0 %v3022
      %v3158 = vpop.f32.mrb[0].mxu0
      %v3159 = vadd.f32 0.0, %v3158
      %v3160 = vpop.f32.mrb[0].mxu0
      %v3161 = vpop.f32.mrb[0].mxu0
      %v3162 = vadd.f32 0.0, %v3161
      %v3163 = vpop.f32.mrb[0].mxu0
      %3164 = vmatprep.mubr.bf16.mxu0 0
      %3165 = vmatmul.mubr.bf16.gmra.mrb[0].mxu0 %v3023
      %v3166 = vpop.f32.mrb[0].mxu0
      %v3167 = vadd.f32 0.0, %v3166
      %v3168 = vpop.f32.mrb[0].mxu0
      %v3169 = vpop.f32.mrb[0].mxu0
      %v3170 = vadd.f32 0.0, %v3169
      %v3171 = vpop.f32.mrb[0].mxu0
      %3172 = vmatprep.mubr.bf16.mxu0 0
      %3173 = vmatmul.mubr.bf16.gmra.mrb[0].mxu0 %v3024
      %v3174 = vpop.f32.mrb[0].mxu0
      %v3175 = vadd.f32 0.0, %v3174
      %v3176 = vpop.f32.mrb[0].mxu0
      %v3177 = vpop.f32.mrb[0].mxu0
      %v3178 = vadd.f32 0.0, %v3177
      %v3179 = vpop.f32.mrb[0].mxu0
      %3180 = vmatprep.mubr.bf16.mxu0 0
      %3181 = vmatmul.mubr.bf16.gmra.mrb[0].mxu0 %v3025
      %v3182 = vpop.f32.mrb[0].mxu0
      %v3183 = vadd.f32 0.0, %v3182
      %v3184 = vpop.f32.mrb[0].mxu0
      %v3185 = vpop.f32.mrb[0].mxu0
      %v3186 = vadd.f32 0.0, %v3185
      %v3187 = vpop.f32.mrb[0].mxu0
      %3188 = vmatprep.mubr.bf16.mxu0 0
      %3189 = vmatmul.mubr.bf16.gmra.mrb[0].mxu0 %v3026
      %v3190 = vpop.f32.mrb[0].mxu0
      %v3191 = vadd.f32 0.0, %v3190
      %v3192 = vpop.f32.mrb[0].mxu0
      %v3193 = vpop.f32.mrb[0].mxu0
      %v3194 = vadd.f32 0.0, %v3193
      %v3195 = vpop.f32.mrb[0].mxu0
      %3196 = vmatprep.mubr.bf16.mxu0 0
      %3197 = vmatmul.mubr.bf16.gmra.mrb[0].mxu0 %v3027
      %v3198 = vpop.f32.mrb[0].mxu0
      %v3199 = vadd.f32 0.0, %v3198
      %v3200 = vpop.f32.mrb[0].mxu0
      %v3201 = vpop.f32.mrb[0].mxu0
      %v3202 = vadd.f32 0.0, %v3201
      %v3203 = vpop.f32.mrb[0].mxu0
      %3204 = vmatprep.mubr.bf16.mxu0 0
      %3205 = vmatmul.mubr.bf16.gmra.mrb[0].mxu0 %v3028
      %v3206 = vpop.f32.mrb[0].mxu0
      %v3207 = vadd.f32 0.0, %v3206
      %v3208 = vpop.f32.mrb[0].mxu0
      %v3209 = vpop.f32.mrb[0].mxu0
      %v3210 = vadd.f32 0.0, %v3209
      %v3211 = vpop.f32.mrb[0].mxu0
      %3212 = vmatprep.mubr.bf16.mxu0 0
      %3213 = vmatmul.mubr.bf16.gmra.mrb[0].mxu0 %v3029
      %v3214 = vpop.f32.mrb[0].mxu0
      %v3215 = vadd.f32 0.0, %v3214
      %v3216 = vpop.f32.mrb[0].mxu0
      %v3217 = vpop.f32.mrb[0].mxu0
      %v3218 = vadd.f32 0.0, %v3217
      %v3219 = vpop.f32.mrb[0].mxu0
      %3220 = vmatprep.mubr.bf16.mxu0 0
      %3221 = vmatmul.mubr.bf16.gmra.mrb[0].mxu0 %v3030
      %v3222 = vpop.f32.mrb[0].mxu0
      %v3223 = vadd.f32 0.0, %v3222
      %v3224 = vpop.f32.mrb[0].mxu0
      %v3225 = vpop.f32.mrb[0].mxu0
      %v3226 = vadd.f32 0.0, %v3225
      %v3227 = vpop.f32.mrb[0].mxu0
      %3228 = vdwg.mxu0
      %v3229 = vadd.f32 %v2975, %v3127
      %v3230 = vadd.f32 %v2976, %v3130
      %v3231 = vadd.f32 %v2977, %v3135
      %v3232 = vadd.f32 %v2978, %v3138
      %v3233 = vadd.f32 %v2979, %v3143
      %v3234 = vadd.f32 %v2980, %v3146
      %v3235 = vadd.f32 %v2981, %v3151
      %v3236 = vadd.f32 %v2982, %v3154
      %v3237 = vadd.f32 %v2983, %v3159
      %v3238 = vadd.f32 %v2984, %v3162
      %v3239 = vadd.f32 %v2985, %v3167
      %v3240 = vadd.f32 %v2986, %v3170
      %v3241 = vadd.f32 %v2987, %v3175
      %v3242 = vadd.f32 %v2988, %v3178
      %v3243 = vadd.f32 %v2989, %v3183
      %v3244 = vadd.f32 %v2990, %v3186
      %v3245 = vadd.f32 %v2991, %v3191
      %v3246 = vadd.f32 %v2992, %v3194
      %v3247 = vadd.f32 %v2993, %v3199
      %v3248 = vadd.f32 %v2994, %v3202
      %v3249 = vadd.f32 %v2995, %v3207
      %v3250 = vadd.f32 %v2996, %v3210
      %v3251 = vadd.f32 %v2997, %v3215
      %v3252 = vadd.f32 %v2998, %v3218
      %v3253 = vadd.f32 %v2999, %v3223
      %v3254 = vadd.f32 %v3000, %v3226
      %v3256 = vlaneseq
      %v3257 = vshrl.u32 %v3256, 7
      %v3258 = vsub.s32 0, %v3257
      %v3259 = vrot.slane %v199, %v3258
      %v3261 = vmul.f32 %v3229, %v3259
      %v3262 = vmul.f32 %v3230, %v3259
      %v3263 = vmul.f32 %v3231, %v3259
      %v3264 = vmul.f32 %v3232, %v3259
      %v3265 = vmul.f32 %v3233, %v3259
      %v3266 = vmul.f32 %v3234, %v3259
      %v3267 = vmul.f32 %v3235, %v3259
      %v3268 = vmul.f32 %v3236, %v3259
      %v3269 = vmul.f32 %v3237, %v3259
      %v3270 = vmul.f32 %v3238, %v3259
      %v3271 = vmul.f32 %v3239, %v3259
      %v3272 = vmul.f32 %v3240, %v3259
      %v3273 = vmul.f32 %v3241, %v3259
      %v3274 = vmul.f32 %v3242, %v3259
      %v3275 = vmul.f32 %v3243, %v3259
      %v3276 = vmul.f32 %v3244, %v3259
      %v3277 = vmul.f32 %v3245, %v3259
      %v3278 = vmul.f32 %v3246, %v3259
      %v3279 = vmul.f32 %v3247, %v3259
      %v3280 = vmul.f32 %v3248, %v3259
      %v3281 = vmul.f32 %v3249, %v3259
      %v3282 = vmul.f32 %v3250, %v3259
      %v3283 = vmul.f32 %v3251, %v3259
      %v3284 = vmul.f32 %v3252, %v3259
      %v3285 = vmul.f32 %v3253, %v3259
      %v3286 = vmul.f32 %v3254, %v3259
      %v3288 = vlaneseq
      %v3289 = vshrl.u32 %v3288, 7
      %v3290 = vsub.s32 0, %v3289
      %v3291 = vrot.slane %v200, %v3290
      %v3293 = vadd.f32 %v3261, %v3291
      %v3294 = vadd.f32 %v3262, %v3291
      %v3295 = vadd.f32 %v3263, %v3291
      %v3296 = vadd.f32 %v3264, %v3291
      %v3297 = vadd.f32 %v3265, %v3291
      %v3298 = vadd.f32 %v3266, %v3291
      %v3299 = vadd.f32 %v3267, %v3291
      %v3300 = vadd.f32 %v3268, %v3291
      %v3301 = vadd.f32 %v3269, %v3291
      %v3302 = vadd.f32 %v3270, %v3291
      %v3303 = vadd.f32 %v3271, %v3291
      %v3304 = vadd.f32 %v3272, %v3291
      %v3305 = vadd.f32 %v3273, %v3291
      %v3306 = vadd.f32 %v3274, %v3291
      %v3307 = vadd.f32 %v3275, %v3291
      %v3308 = vadd.f32 %v3276, %v3291
      %v3309 = vadd.f32 %v3277, %v3291
      %v3310 = vadd.f32 %v3278, %v3291
      %v3311 = vadd.f32 %v3279, %v3291
      %v3312 = vadd.f32 %v3280, %v3291
      %v3313 = vadd.f32 %v3281, %v3291
      %v3314 = vadd.f32 %v3282, %v3291
      %v3315 = vadd.f32 %v3283, %v3291
      %v3316 = vadd.f32 %v3284, %v3291
      %v3317 = vadd.f32 %v3285, %v3291
      %v3318 = vadd.f32 %v3286, %v3291
      %v3319 = vmax.f32 %v3293, 0.0
      %v3320 = vmax.f32 %v3294, 0.0
      %v3321 = vmax.f32 %v3295, 0.0
      %v3322 = vmax.f32 %v3296, 0.0
      %v3323 = vmax.f32 %v3297, 0.0
      %v3324 = vmax.f32 %v3298, 0.0
      %v3325 = vmax.f32 %v3299, 0.0
      %v3326 = vmax.f32 %v3300, 0.0
      %v3327 = vmax.f32 %v3301, 0.0
      %v3328 = vmax.f32 %v3302, 0.0
      %v3329 = vmax.f32 %v3303, 0.0
      %v3330 = vmax.f32 %v3304, 0.0
      %v3331 = vmax.f32 %v3305, 0.0
      %v3332 = vmax.f32 %v3306, 0.0
      %v3333 = vmax.f32 %v3307, 0.0
      %v3334 = vmax.f32 %v3308, 0.0
      %v3335 = vmax.f32 %v3309, 0.0
      %v3336 = vmax.f32 %v3310, 0.0
      %v3337 = vmax.f32 %v3311, 0.0
      %v3338 = vmax.f32 %v3312, 0.0
      %v3339 = vmax.f32 %v3313, 0.0
      %v3340 = vmax.f32 %v3314, 0.0
      %v3341 = vmax.f32 %v3315, 0.0
      %v3342 = vmax.f32 %v3316, 0.0
      %v3343 = vmax.f32 %v3317, 0.0
      %v3344 = vmax.f32 %v3318, 0.0
      %v3345 = vpack.c.bf16 %v3320, %v3319
      %v3346 = vpack.c.bf16 %v3322, %v3321
      %v3347 = vpack.c.bf16 %v3324, %v3323
      %v3348 = vpack.c.bf16 %v3326, %v3325
      %v3349 = vpack.c.bf16 %v3328, %v3327
      %v3350 = vpack.c.bf16 %v3330, %v3329
      %v3351 = vpack.c.bf16 %v3332, %v3331
      %v3352 = vpack.c.bf16 %v3334, %v3333
      %v3353 = vpack.c.bf16 %v3336, %v3335
      %v3354 = vpack.c.bf16 %v3338, %v3337
      %v3355 = vpack.c.bf16 %v3340, %v3339
      %v3356 = vpack.c.bf16 %v3342, %v3341
      %v3357 = vpack.c.bf16 %v3344, %v3343
      %v3371 = vunpack.c.l.b16 %v3345
      %v3372 = vunpack.c.h.b16 %v3345
      %v3373 = vunpack.c.l.b16 %v3346
      %v3374 = vunpack.c.h.b16 %v3346
      %v3375 = vunpack.c.l.b16 %v3347
      %v3376 = vunpack.c.h.b16 %v3347
      %v3377 = vunpack.c.l.b16 %v3348
      %v3378 = vunpack.c.h.b16 %v3348
      %v3379 = vunpack.c.l.b16 %v3349
      %v3380 = vunpack.c.h.b16 %v3349
      %v3381 = vunpack.c.l.b16 %v3350
      %v3382 = vunpack.c.h.b16 %v3350
      %v3383 = vunpack.c.l.b16 %v3351
      %v3384 = vunpack.c.h.b16 %v3351
      %v3385 = vunpack.c.l.b16 %v3352
      %v3386 = vunpack.c.h.b16 %v3352
      %v3387 = vunpack.c.l.b16 %v3353
      %v3388 = vunpack.c.h.b16 %v3353
      %v3389 = vunpack.c.l.b16 %v3354
      %v3390 = vunpack.c.h.b16 %v3354
      %v3391 = vunpack.c.l.b16 %v3355
      %v3392 = vunpack.c.h.b16 %v3355
      %v3393 = vunpack.c.l.b16 %v3356
      %v3394 = vunpack.c.h.b16 %v3356
      %v3395 = vunpack.c.l.b16 %v3357
      %v3396 = vunpack.c.h.b16 %v3357
      %v3397 = vpack.c.b16 %v3371, %v3371
      %v3398 = vpack.c.b16 %v3372, %v3372
      %v3399 = vpack.c.b16 %v3373, %v3373
      %v3400 = vpack.c.b16 %v3374, %v3374
      %v3401 = vpack.c.b16 %v3375, %v3375
      %v3402 = vpack.c.b16 %v3376, %v3376
      %v3403 = vpack.c.b16 %v3377, %v3377
      %v3404 = vpack.c.b16 %v3378, %v3378
      %v3405 = vpack.c.b16 %v3379, %v3379
      %v3406 = vpack.c.b16 %v3380, %v3380
      %v3407 = vpack.c.b16 %v3381, %v3381
      %v3408 = vpack.c.b16 %v3382, %v3382
      %v3409 = vpack.c.b16 %v3383, %v3383
      %v3410 = vpack.c.b16 %v3384, %v3384
      %v3411 = vpack.c.b16 %v3385, %v3385
      %v3412 = vpack.c.b16 %v3386, %v3386
      %v3413 = vpack.c.b16 %v3387, %v3387
      %v3414 = vpack.c.b16 %v3388, %v3388
      %v3415 = vpack.c.b16 %v3389, %v3389
      %v3416 = vpack.c.b16 %v3390, %v3390
      %v3417 = vpack.c.b16 %v3391, %v3391
      %v3418 = vpack.c.b16 %v3392, %v3392
      %v3419 = vpack.c.b16 %v3393, %v3393
      %v3420 = vpack.c.b16 %v3394, %v3394
      %v3421 = vpack.c.b16 %v3395, %v3395
      %v3422 = vpack.c.b16 %v3396, %v3396
      %3449 = vst [vmem:[%s197] sm:$0xf] %v3397
      %3450 = vst [vmem:[%s197 + $0x4] sm:$0xf] %v3398
      %3451 = vst [vmem:[%s197 + $0x8] sm:$0xf] %v3399
      %3452 = vst [vmem:[%s197 + $0xc] sm:$0xf] %v3400
      %3453 = vst [vmem:[%s197 + $0x10] sm:$0xf] %v3401
      %3454 = vst [vmem:[%s197 + $0x14] sm:$0xf] %v3402
      %3455 = vst [vmem:[%s197 + $0x18] sm:$0xf] %v3403
      %3456 = vst [vmem:[%s197 + $0x1c] sm:$0xf] %v3404
      %3457 = vst [vmem:[%s197 + $0x20] sm:$0xf] %v3405
      %3458 = vst [vmem:[%s197 + $0x24] sm:$0xf] %v3406
      %3459 = vst [vmem:[%s197 + $0x28] sm:$0xf] %v3407
      %3460 = vst [vmem:[%s197 + $0x2c] sm:$0xf] %v3408
      %3461 = vst [vmem:[%s197 + $0x30] sm:$0xf] %v3409
      %3462 = vst [vmem:[%s197 + $0x34] sm:$0xf] %v3410
      %3463 = vst [vmem:[%s197 + $0x38] sm:$0xf] %v3411
      %3464 = vst [vmem:[%s197 + $0x3c] sm:$0xf] %v3412
      %3465 = vst [vmem:[%s197 + $0x40] sm:$0xf] %v3413
      %3466 = vst [vmem:[%s197 + $0x44] sm:$0xf] %v3414
      %3467 = vst [vmem:[%s197 + $0x48] sm:$0xf] %v3415
      %3468 = vst [vmem:[%s197 + $0x4c] sm:$0xf] %v3416
      %3469 = vst [vmem:[%s197 + $0x50] sm:$0xf] %v3417
      %3470 = vst [vmem:[%s197 + $0x54] sm:$0xf] %v3418
      %3471 = vst [vmem:[%s197 + $0x58] sm:$0xf] %v3419
      %3472 = vst [vmem:[%s197 + $0x5c] sm:$0xf] %v3420
      %3473 = vst [vmem:[%s197 + $0x60] sm:$0xf] %v3421
      %3474 = vst [vmem:[%s197 + $0x64] sm:$0xf] %v3422
      %p3475 = scmp.lt.s32.totalorder %s15, 1
      %s3476 = scalar_select %p3475, %s15, 1
      %s3477 = smul.addr %s3476, 26
      %s3478 = smul.addr %s3477, 4
      %s3479 = scalar_lea.vmem %s4, %s3478
      // Predicated region
      $region37: #{small_conv_forward.5} parent=35 // pred_check
        %p3480 = pneg %p122
      $region38: #{small_conv_forward.5} parent=35 // pred_check_branch
        %3482 = sbr.rel (%p3480) target = $region40
      $region39: #{small_conv_forward.5} parent=35 // pred_region
        _
      $region40: #{small_conv_forward.5} parent=35 // pred_fallthru
        _
    $region36: #{small_conv_forward.5} parent=5 // pred_fallthru
      _
    %p3483 = scmp.le.s32.totalorder 2, %s10
    // Predicated region
    $region41: #{small_conv_forward.5} parent=5 // pred_check
      %p3484 = pneg %p3483
    $region42: #{small_conv_forward.5} parent=5 // pred_check_branch
      %3486 = sbr.rel (%p3484) target = $region44
    $region43: #{small_conv_forward.5} parent=5 // pred_region
      %s3487 = ssub.s32 %s10, 2
      // Predicated region
      $region45: #{small_conv_forward.5} parent=43 // pred_check
        %p3488 = pneg %p128
      $region46: #{small_conv_forward.5} parent=43 // pred_check_branch
        %3490 = sbr.rel (%p3488) target = $region48
      $region47: #{small_conv_forward.5} parent=43 // pred_region
        %p3491 = scmp.lt.s32.totalorder %s16, 1
        %s3492 = scalar_select %p3491, %s16, 1
        %s3493 = smul.addr %s3492, 26
        %s3494 = smul.addr %s3493, 4
        %s3495 = scalar_lea.vmem %s4, %s3494
      $region48: #{small_conv_forward.5} parent=43 // pred_fallthru
        _
    $region44: #{small_conv_forward.5} parent=5 // pred_fallthru
      _
  $region6: #{small_conv_forward.5} parent=0 // loop_footer
    %s14 = sadd.s32 1, %s10
  $region7: #{small_conv_forward.5} parent=0 // loop_footer_branch
    %9 = sbr.rel target = $region3
  $region8: #{small_conv_forward.5} parent=0 // loop_exit
    _

</llo_original>
